<compile_context>
chip_gen: v7x
topology: tpu7x:2x2x1
jax: 0.10.0
libtpu: 0.0.40
codegen_flags: <defaults>
</compile_context>

<pallas_src>
import functools
import math

import jax
import jax.numpy as jnp
from jax.experimental import pallas as pl
from jax.experimental.pallas import tpu as pltpu

# ----------------------------- model configuration -----------------------------
HIDDEN = 32
NUM_HEADS = 4
INTERMEDIATE = 64
NUM_TF_LAYERS = 2
QUANT_FACTOR = 2
SEQ_LEN = 8          # sequence_length in the config (final decoded length)
OUT_DIM = 16
BATCH = 2
T0 = SEQ_LEN // (2 ** QUANT_FACTOR)   # input sequence length to the decoder


# --------------------- selection matrices (time-axis plumbing as matmuls) -------
def _sel_zero_insert_pad(t0):
    """(2*t0+4, t0): stride-2 zero-insert + zero pad (2, 3) for the ConvTranspose1d."""
    pos = jnp.arange(2 * t0 + 4)
    q = pos - 2
    idx = jnp.where((q >= 0) & (q % 2 == 0) & ((q // 2) < t0), q // 2, -1)
    return jax.nn.one_hot(idx, t0, dtype=jnp.float32)


def _sel_replicate_pad(length):
    """(length+4, length): replicate padding of 2 on each side."""
    idx = jnp.clip(jnp.arange(length + 4) - 2, 0, length - 1)
    return jax.nn.one_hot(idx, length, dtype=jnp.float32)


def _sel_zero_pad(length):
    """(length+4, length): zero padding of 2 on each side."""
    idx = jnp.arange(length + 4) - 2
    return jax.nn.one_hot(idx, length, dtype=jnp.float32)   # OOB indices -> zero rows


def _sel_repeat2(length):
    """(2*length, length): repeat_interleave(2) along time."""
    idx = jnp.repeat(jnp.arange(length), 2)
    return jax.nn.one_hot(idx, length, dtype=jnp.float32)


# ----------------------------- the fused Pallas kernel --------------------------
def _fused_decoder_kernel(*refs, treedef, n_params):
    x_ref = refs[0]
    p = jax.tree_util.tree_unflatten(treedef, list(refs[1:1 + n_params]))
    o_ref = refs[1 + n_params]
    act_ref = refs[2 + n_params]      # (B*SEQ_LEN, HIDDEN) staging scratch (VMEM)
    attn_ref = refs[3 + n_params]     # (B*SEQ_LEN, HIDDEN) per-head attn output (VMEM)

    t0 = x_ref.shape[1]
    T = SEQ_LEN
    dh = HIDDEN // NUM_HEADS

    def leaky(v):
        return jnp.where(v >= 0.0, v, 0.2 * v)

    def conv5(xpad, w_ref, bias, t_out):
        # 5 shifted matmuls on fully VMEM-resident data (im2col gains nothing at T<=8).
        c_out = w_ref.shape[2]
        acc = jnp.zeros((t_out, c_out), jnp.float32)
        for k in range(5):
            acc = acc + jnp.dot(xpad[k:k + t_out, :], w_ref[k],
                                preferred_element_type=jnp.float32)
        return acc + bias

    def layer_norm(v, g, bvec):
        mu = jnp.mean(v, axis=-1, keepdims=True)
        var = jnp.mean(jnp.square(v - mu), axis=-1, keepdims=True)
        return (v - mu) * jax.lax.rsqrt(var + 1e-5) * g + bvec

    # ---- stage 1: expander convs + linear / positional embedding (per batch row block)
    for b in range(BATCH):
        xb = x_ref[b].astype(jnp.float32)                                  # (t0, C)
        e0 = p["expander0"]
        # ConvTranspose1d(stride=2,k=5,pad=2,out_pad=1): zero-insert + pad via matmul
        xp = jnp.dot(p["sel_up"][...], xb, preferred_element_type=jnp.float32)
        cur = conv5(xp, e0["w"], e0["b"][...], 2 * t0)
        cur = leaky(cur) * e0["scale"][...] + e0["shift"][...]             # LeakyReLU -> BN(eval)
        for ep in p["expander"]:
            length = cur.shape[0]
            hp = jnp.dot(ep["s_pad"][...], cur, preferred_element_type=jnp.float32)
            cur = conv5(hp, ep["w"], ep["b"][...], length)
            cur = leaky(cur) * ep["scale"][...] + ep["shift"][...]
            cur = jnp.dot(ep["s_rep"][...], cur, preferred_element_type=jnp.float32)
        # decoder_linear_embedding + decoder_pos_embedding
        cur = jnp.dot(cur, p["lin_w"][...], preferred_element_type=jnp.float32) + p["lin_b"][...]
        cur = cur + p["pos"][...]
        act_ref[pl.ds(b * T, T), :] = cur

    # ---- stage 2: pre-LN transformer encoder stack (dummy mask -> no masking)
    feat = act_ref[...]                                                    # (B*T, C)
    attn_scale = 1.0 / math.sqrt(dh)
    for lp in p["layers"]:
        h = layer_norm(feat, lp["ln1_g"][...], lp["ln1_b"][...])
        qkv = jnp.dot(h, lp["wqkv"][...], preferred_element_type=jnp.float32) + lp["bqkv"][...]
        for b in range(BATCH):
            for hd in range(NUM_HEADS):
                r0, c0 = b * T, hd * dh
                q = qkv[r0:r0 + T, c0:c0 + dh]
                k = qkv[r0:r0 + T, HIDDEN + c0:HIDDEN + c0 + dh]
                v = qkv[r0:r0 + T, 2 * HIDDEN + c0:2 * HIDDEN + c0 + dh]
                s = jax.lax.dot_general(q, k, (((1,), (1,)), ((), ())),
                                        preferred_element_type=jnp.float32) * attn_scale
                s = s - jnp.max(s, axis=-1, keepdims=True)
                pr = jnp.exp(s)
                pr = pr * pl.reciprocal(jnp.sum(pr, axis=-1, keepdims=True), approx=True)
                attn_ref[pl.ds(r0, T), pl.ds(c0, dh)] = jnp.dot(
                    pr, v, preferred_element_type=jnp.float32)
        a = jnp.dot(attn_ref[...], lp["wo"][...],
                    preferred_element_type=jnp.float32) + lp["bo"][...]
        feat = feat + a
        h = layer_norm(feat, lp["ln2_g"][...], lp["ln2_b"][...])
        f = jnp.maximum(
            jnp.dot(h, lp["w1"][...], preferred_element_type=jnp.float32) + lp["b1"][...], 0.0)
        f = jnp.dot(f, lp["w2"][...], preferred_element_type=jnp.float32) + lp["b2"][...]
        feat = feat + f

    # ---- stage 3: cross_smooth_layer Conv1d(hidden -> out_dim, k=5, zero pad 2)
    for b in range(BATCH):
        xb = feat[b * T:(b + 1) * T, :]
        xp = jnp.dot(p["sel_cs"][...], xb, preferred_element_type=jnp.float32)
        y = conv5(xp, p["cs_w"], p["cs_b"][...], T)        # no activation / BN here
        o_ref[b] = y.astype(o_ref.dtype)


# ----------------------------- wrapper --------------------------------------------
@jax.jit
def transformer_decoder_forward(params, x):
    flat, treedef = jax.tree_util.tree_flatten(params)
    all_inputs = [x] + flat

    kernel = functools.partial(_fused_decoder_kernel, treedef=treedef,
                               n_params=len(flat))

    def _full_spec(a):
        return pl.BlockSpec(a.shape, lambda i, _nd=a.ndim: (0,) * _nd)

    b = x.shape[0]
    out = pl.pallas_call(
        kernel,
        out_shape=jax.ShapeDtypeStruct((b, SEQ_LEN, OUT_DIM), jnp.float32),
        grid=(1,),
        in_specs=[_full_spec(a) for a in all_inputs],
        out_specs=pl.BlockSpec((b, SEQ_LEN, OUT_DIM), lambda i: (0, 0, 0)),
        scratch_shapes=[
            pltpu.VMEM((b * SEQ_LEN, HIDDEN), jnp.float32),   # post-expander features
            pltpu.VMEM((b * SEQ_LEN, HIDDEN), jnp.float32),   # per-head attention output
        ],
        compiler_params=pltpu.CompilerParams(dimension_semantics=("arbitrary",)),
    )(*all_inputs)
    return out


# ----------------------------- parameter init -----------------------------------
def init_params(key):
    keys = iter(jax.random.split(key, 256))

    def nrm(shape, scale=0.05):
        return scale * jax.random.normal(next(keys), shape, jnp.float32)

    def bn_affine(c):
        gamma = 1.0 + nrm((1, c))
        beta = nrm((1, c))
        rm = nrm((1, c))
        rv = 1.0 + 0.1 * jnp.abs(nrm((1, c)))
        scale = gamma / jnp.sqrt(rv + 1e-5)
        shift = beta - rm * scale
        return scale, shift

    c = HIDDEN
    params = {}

    # constant selection matrices (time-axis plumbing done as matmuls in-kernel)
    params["sel_up"] = _sel_zero_insert_pad(T0)        # (2*T0+4, T0)
    params["sel_cs"] = _sel_zero_pad(SEQ_LEN)          # (SEQ_LEN+4, SEQ_LEN)

    # expander[0]: ConvTranspose1d weight (C_in, C_out, 5) -> flipped -> (5, C_in, C_out)
    wt = nrm((c, c, 5))
    w0 = jnp.transpose(jnp.flip(wt, axis=2), (2, 0, 1))
    s0, sh0 = bn_affine(c)
    params["expander0"] = {"w": w0, "b": nrm((1, c)), "scale": s0, "shift": sh0}

    # expander[1:]: Conv1d weight (C_out, C_in, 5) -> (5, C_in, C_out) + pad/repeat matrices
    exp_layers = []
    length = 2 * T0
    for _ in range(1, QUANT_FACTOR):
        wc = nrm((c, c, 5))
        si, shi = bn_affine(c)
        exp_layers.append({
            "w": jnp.transpose(wc, (2, 1, 0)), "b": nrm((1, c)),
            "scale": si, "shift": shi,
            "s_pad": _sel_replicate_pad(length),
            "s_rep": _sel_repeat2(length),
        })
        length *= 2
    params["expander"] = exp_layers

    params["lin_w"] = nrm((c, c))
    params["lin_b"] = nrm((1, c))
    params["pos"] = nrm((SEQ_LEN, c))

    layers = []
    for _ in range(NUM_TF_LAYERS):
        layers.append({
            "ln1_g": 1.0 + nrm((1, c)), "ln1_b": nrm((1, c)),
            "wqkv": nrm((c, 3 * c)), "bqkv": nrm((1, 3 * c)),   # fused Q|K|V projection
            "wo": nrm((c, c)), "bo": nrm((1, c)),
            "ln2_g": 1.0 + nrm((1, c)), "ln2_b": nrm((1, c)),
            "w1": nrm((c, INTERMEDIATE)), "b1": nrm((1, INTERMEDIATE)),
            "w2": nrm((INTERMEDIATE, c)), "b2": nrm((1, c)),
        })
    params["layers"] = layers

    wcs = nrm((OUT_DIM, c, 5))                           # PyTorch Conv1d weight layout
    params["cs_w"] = jnp.transpose(wcs, (2, 1, 0))       # -> (5, C_in, out_dim)
    params["cs_b"] = nrm((1, OUT_DIM))
    return params


# ----------------------------- driver --------------------------------------------
if __name__ == "__main__":
    key = jax.random.PRNGKey(0)
    pkey, xkey = jax.random.split(key)
    params = init_params(pkey)
    inputs = jax.random.normal(xkey, (BATCH, T0, HIDDEN), jnp.float32)

    out = transformer_decoder_forward(params, inputs)
    out = jax.block_until_ready(out)

    assert out.shape == (BATCH, SEQ_LEN, OUT_DIM), out.shape
    assert bool(jnp.all(jnp.isfinite(out)))
    print("KERNEL_OK")
</pallas_src>

<mosaic_0001>
module attributes {stable_mosaic.version = 11 : i64} {
  func.func @_fused_decoder_kernel(%arg0: i32, %arg1: memref<2x2x32xf32, #tpu.memory_space<vmem>>, %arg2: memref<1x16xf32, #tpu.memory_space<vmem>>, %arg3: memref<5x32x16xf32, #tpu.memory_space<vmem>>, %arg4: memref<1x32xf32, #tpu.memory_space<vmem>>, %arg5: memref<8x4xf32, #tpu.memory_space<vmem>>, %arg6: memref<8x4xf32, #tpu.memory_space<vmem>>, %arg7: memref<1x32xf32, #tpu.memory_space<vmem>>, %arg8: memref<1x32xf32, #tpu.memory_space<vmem>>, %arg9: memref<5x32x32xf32, #tpu.memory_space<vmem>>, %arg10: memref<1x32xf32, #tpu.memory_space<vmem>>, %arg11: memref<1x32xf32, #tpu.memory_space<vmem>>, %arg12: memref<1x32xf32, #tpu.memory_space<vmem>>, %arg13: memref<5x32x32xf32, #tpu.memory_space<vmem>>, %arg14: memref<1x64xf32, #tpu.memory_space<vmem>>, %arg15: memref<1x32xf32, #tpu.memory_space<vmem>>, %arg16: memref<1x32xf32, #tpu.memory_space<vmem>>, %arg17: memref<1x96xf32, #tpu.memory_space<vmem>>, %arg18: memref<1x32xf32, #tpu.memory_space<vmem>>, %arg19: memref<1x32xf32, #tpu.memory_space<vmem>>, %arg20: memref<1x32xf32, #tpu.memory_space<vmem>>, %arg21: memref<1x32xf32, #tpu.memory_space<vmem>>, %arg22: memref<32x64xf32, #tpu.memory_space<vmem>>, %arg23: memref<64x32xf32, #tpu.memory_space<vmem>>, %arg24: memref<32x32xf32, #tpu.memory_space<vmem>>, %arg25: memref<32x96xf32, #tpu.memory_space<vmem>>, %arg26: memref<1x64xf32, #tpu.memory_space<vmem>>, %arg27: memref<1x32xf32, #tpu.memory_space<vmem>>, %arg28: memref<1x32xf32, #tpu.memory_space<vmem>>, %arg29: memref<1x96xf32, #tpu.memory_space<vmem>>, %arg30: memref<1x32xf32, #tpu.memory_space<vmem>>, %arg31: memref<1x32xf32, #tpu.memory_space<vmem>>, %arg32: memref<1x32xf32, #tpu.memory_space<vmem>>, %arg33: memref<1x32xf32, #tpu.memory_space<vmem>>, %arg34: memref<32x64xf32, #tpu.memory_space<vmem>>, %arg35: memref<64x32xf32, #tpu.memory_space<vmem>>, %arg36: memref<32x32xf32, #tpu.memory_space<vmem>>, %arg37: memref<32x96xf32, #tpu.memory_space<vmem>>, %arg38: memref<1x32xf32, #tpu.memory_space<vmem>>, %arg39: memref<32x32xf32, #tpu.memory_space<vmem>>, %arg40: memref<8x32xf32, #tpu.memory_space<vmem>>, %arg41: memref<12x8xf32, #tpu.memory_space<vmem>>, %arg42: memref<8x2xf32, #tpu.memory_space<vmem>>, %arg43: memref<2x8x16xf32, #tpu.memory_space<vmem>>, %arg44: memref<16x32xf32, #tpu.memory_space<vmem>>, %arg45: memref<16x32xf32, #tpu.memory_space<vmem>>) attributes {dimension_semantics = [#tpu.dimension_semantics<arbitrary>], iteration_bounds = array<i64: 1>, scalar_prefetch = 0 : i64, scratch_operands = 2 : i64, tpu.core_type = #tpu.core_type<tc>, window_params = [{pipeline_mode = #tpu.pipeline_mode<synchronous>, transform_indices = @transform_0, window_bounds = array<i64: 2, 2, 32>}, {pipeline_mode = #tpu.pipeline_mode<synchronous>, transform_indices = @transform_1, window_bounds = array<i64: 1, 16>}, {pipeline_mode = #tpu.pipeline_mode<synchronous>, transform_indices = @transform_2, window_bounds = array<i64: 5, 32, 16>}, {pipeline_mode = #tpu.pipeline_mode<synchronous>, transform_indices = @transform_3, window_bounds = array<i64: 1, 32>}, {pipeline_mode = #tpu.pipeline_mode<synchronous>, transform_indices = @transform_4, window_bounds = array<i64: 8, 4>}, {pipeline_mode = #tpu.pipeline_mode<synchronous>, transform_indices = @transform_5, window_bounds = array<i64: 8, 4>}, {pipeline_mode = #tpu.pipeline_mode<synchronous>, transform_indices = @transform_6, window_bounds = array<i64: 1, 32>}, {pipeline_mode = #tpu.pipeline_mode<synchronous>, transform_indices = @transform_7, window_bounds = array<i64: 1, 32>}, {pipeline_mode = #tpu.pipeline_mode<synchronous>, transform_indices = @transform_8, window_bounds = array<i64: 5, 32, 32>}, {pipeline_mode = #tpu.pipeline_mode<synchronous>, transform_indices = @transform_9, window_bounds = array<i64: 1, 32>}, {pipeline_mode = #tpu.pipeline_mode<synchronous>, transform_indices = @transform_10, window_bounds = array<i64: 1, 32>}, {pipeline_mode = #tpu.pipeline_mode<synchronous>, transform_indices = @transform_11, window_bounds = array<i64: 1, 32>}, {pipeline_mode = #tpu.pipeline_mode<synchronous>, transform_indices = @transform_12, window_bounds = array<i64: 5, 32, 32>}, {pipeline_mode = #tpu.pipeline_mode<synchronous>, transform_indices = @transform_13, window_bounds = array<i64: 1, 64>}, {pipeline_mode = #tpu.pipeline_mode<synchronous>, transform_indices = @transform_14, window_bounds = array<i64: 1, 32>}, {pipeline_mode = #tpu.pipeline_mode<synchronous>, transform_indices = @transform_15, window_bounds = array<i64: 1, 32>}, {pipeline_mode = #tpu.pipeline_mode<synchronous>, transform_indices = @transform_16, window_bounds = array<i64: 1, 96>}, {pipeline_mode = #tpu.pipeline_mode<synchronous>, transform_indices = @transform_17, window_bounds = array<i64: 1, 32>}, {pipeline_mode = #tpu.pipeline_mode<synchronous>, transform_indices = @transform_18, window_bounds = array<i64: 1, 32>}, {pipeline_mode = #tpu.pipeline_mode<synchronous>, transform_indices = @transform_19, window_bounds = array<i64: 1, 32>}, {pipeline_mode = #tpu.pipeline_mode<synchronous>, transform_indices = @transform_20, window_bounds = array<i64: 1, 32>}, {pipeline_mode = #tpu.pipeline_mode<synchronous>, transform_indices = @transform_21, window_bounds = array<i64: 32, 64>}, {pipeline_mode = #tpu.pipeline_mode<synchronous>, transform_indices = @transform_22, window_bounds = array<i64: 64, 32>}, {pipeline_mode = #tpu.pipeline_mode<synchronous>, transform_indices = @transform_23, window_bounds = array<i64: 32, 32>}, {pipeline_mode = #tpu.pipeline_mode<synchronous>, transform_indices = @transform_24, window_bounds = array<i64: 32, 96>}, {pipeline_mode = #tpu.pipeline_mode<synchronous>, transform_indices = @transform_25, window_bounds = array<i64: 1, 64>}, {pipeline_mode = #tpu.pipeline_mode<synchronous>, transform_indices = @transform_26, window_bounds = array<i64: 1, 32>}, {pipeline_mode = #tpu.pipeline_mode<synchronous>, transform_indices = @transform_27, window_bounds = array<i64: 1, 32>}, {pipeline_mode = #tpu.pipeline_mode<synchronous>, transform_indices = @transform_28, window_bounds = array<i64: 1, 96>}, {pipeline_mode = #tpu.pipeline_mode<synchronous>, transform_indices = @transform_29, window_bounds = array<i64: 1, 32>}, {pipeline_mode = #tpu.pipeline_mode<synchronous>, transform_indices = @transform_30, window_bounds = array<i64: 1, 32>}, {pipeline_mode = #tpu.pipeline_mode<synchronous>, transform_indices = @transform_31, window_bounds = array<i64: 1, 32>}, {pipeline_mode = #tpu.pipeline_mode<synchronous>, transform_indices = @transform_32, window_bounds = array<i64: 1, 32>}, {pipeline_mode = #tpu.pipeline_mode<synchronous>, transform_indices = @transform_33, window_bounds = array<i64: 32, 64>}, {pipeline_mode = #tpu.pipeline_mode<synchronous>, transform_indices = @transform_34, window_bounds = array<i64: 64, 32>}, {pipeline_mode = #tpu.pipeline_mode<synchronous>, transform_indices = @transform_35, window_bounds = array<i64: 32, 32>}, {pipeline_mode = #tpu.pipeline_mode<synchronous>, transform_indices = @transform_36, window_bounds = array<i64: 32, 96>}, {pipeline_mode = #tpu.pipeline_mode<synchronous>, transform_indices = @transform_37, window_bounds = array<i64: 1, 32>}, {pipeline_mode = #tpu.pipeline_mode<synchronous>, transform_indices = @transform_38, window_bounds = array<i64: 32, 32>}, {pipeline_mode = #tpu.pipeline_mode<synchronous>, transform_indices = @transform_39, window_bounds = array<i64: 8, 32>}, {pipeline_mode = #tpu.pipeline_mode<synchronous>, transform_indices = @transform_40, window_bounds = array<i64: 12, 8>}, {pipeline_mode = #tpu.pipeline_mode<synchronous>, transform_indices = @transform_41, window_bounds = array<i64: 8, 2>}, {pipeline_mode = #tpu.pipeline_mode<synchronous>, transform_indices = @transform_42, window_bounds = array<i64: 2, 8, 16>}]} {
    %c0 = arith.constant 0 : index
    %c0_0 = arith.constant 0 : index
    %c0_1 = arith.constant 0 : index
    %0 = vector.load %arg1[%c0, %c0_0, %c0_1] : memref<2x2x32xf32, #tpu.memory_space<vmem>>, vector<1x2x32xf32>
    %1 = vector.shape_cast %0 : vector<1x2x32xf32> to vector<2x32xf32>
    %c0_2 = arith.constant 0 : index
    %c0_3 = arith.constant 0 : index
    %2 = vector.load %arg42[%c0_2, %c0_3] : memref<8x2xf32, #tpu.memory_space<vmem>>, vector<8x2xf32>
    %cst = arith.constant dense<0.000000e+00> : vector<8x32xf32>
    %3 = tpu.matmul %2, %1, %cst {dimension_numbers = #tpu.dot_dimension_numbers<[1], [0], [0], [1], [0, 0, 1, 1], [], []>} : vector<8x2xf32>, vector<2x32xf32>, vector<8x32xf32> -> vector<8x32xf32>
    %c0_4 = arith.constant 0 : index
    %c0_5 = arith.constant 0 : index
    %4 = vector.load %arg10[%c0_4, %c0_5] : memref<1x32xf32, #tpu.memory_space<vmem>>, vector<1x32xf32>
    %cst_6 = arith.constant 0.000000e+00 : f32
    %5 = vector.broadcast %cst_6 : f32 to vector<4x32xf32>
    %6 = vector.extract_strided_slice %3 {offsets = [0, 0], sizes = [4, 32], strides = [1, 1]} : vector<8x32xf32> to vector<4x32xf32>
    %c0_7 = arith.constant 0 : index
    %c0_8 = arith.constant 0 : index
    %c0_9 = arith.constant 0 : index
    %7 = vector.load %arg13[%c0_7, %c0_8, %c0_9] : memref<5x32x32xf32, #tpu.memory_space<vmem>>, vector<1x32x32xf32>
    %8 = vector.shape_cast %7 : vector<1x32x32xf32> to vector<32x32xf32>
    %cst_10 = arith.constant dense<0.000000e+00> : vector<4x32xf32>
    %9 = tpu.matmul %6, %8, %cst_10 {dimension_numbers = #tpu.dot_dimension_numbers<[1], [0], [0], [1], [0, 0, 1, 1], [], []>} : vector<4x32xf32>, vector<32x32xf32>, vector<4x32xf32> -> vector<4x32xf32>
    %10 = arith.addf %5, %9 : vector<4x32xf32>
    %11 = vector.extract_strided_slice %3 {offsets = [1, 0], sizes = [4, 32], strides = [1, 1]} : vector<8x32xf32> to vector<4x32xf32>
    %c1 = arith.constant 1 : index
    %c0_11 = arith.constant 0 : index
    %c0_12 = arith.constant 0 : index
    %12 = vector.load %arg13[%c1, %c0_11, %c0_12] : memref<5x32x32xf32, #tpu.memory_space<vmem>>, vector<1x32x32xf32>
    %13 = vector.shape_cast %12 : vector<1x32x32xf32> to vector<32x32xf32>
    %cst_13 = arith.constant dense<0.000000e+00> : vector<4x32xf32>
    %14 = tpu.matmul %11, %13, %cst_13 {dimension_numbers = #tpu.dot_dimension_numbers<[1], [0], [0], [1], [0, 0, 1, 1], [], []>} : vector<4x32xf32>, vector<32x32xf32>, vector<4x32xf32> -> vector<4x32xf32>
    %15 = arith.addf %10, %14 : vector<4x32xf32>
    %16 = vector.extract_strided_slice %3 {offsets = [2, 0], sizes = [4, 32], strides = [1, 1]} : vector<8x32xf32> to vector<4x32xf32>
    %c2 = arith.constant 2 : index
    %c0_14 = arith.constant 0 : index
    %c0_15 = arith.constant 0 : index
    %17 = vector.load %arg13[%c2, %c0_14, %c0_15] : memref<5x32x32xf32, #tpu.memory_space<vmem>>, vector<1x32x32xf32>
    %18 = vector.shape_cast %17 : vector<1x32x32xf32> to vector<32x32xf32>
    %cst_16 = arith.constant dense<0.000000e+00> : vector<4x32xf32>
    %19 = tpu.matmul %16, %18, %cst_16 {dimension_numbers = #tpu.dot_dimension_numbers<[1], [0], [0], [1], [0, 0, 1, 1], [], []>} : vector<4x32xf32>, vector<32x32xf32>, vector<4x32xf32> -> vector<4x32xf32>
    %20 = arith.addf %15, %19 : vector<4x32xf32>
    %21 = vector.extract_strided_slice %3 {offsets = [3, 0], sizes = [4, 32], strides = [1, 1]} : vector<8x32xf32> to vector<4x32xf32>
    %c3 = arith.constant 3 : index
    %c0_17 = arith.constant 0 : index
    %c0_18 = arith.constant 0 : index
    %22 = vector.load %arg13[%c3, %c0_17, %c0_18] : memref<5x32x32xf32, #tpu.memory_space<vmem>>, vector<1x32x32xf32>
    %23 = vector.shape_cast %22 : vector<1x32x32xf32> to vector<32x32xf32>
    %cst_19 = arith.constant dense<0.000000e+00> : vector<4x32xf32>
    %24 = tpu.matmul %21, %23, %cst_19 {dimension_numbers = #tpu.dot_dimension_numbers<[1], [0], [0], [1], [0, 0, 1, 1], [], []>} : vector<4x32xf32>, vector<32x32xf32>, vector<4x32xf32> -> vector<4x32xf32>
    %25 = arith.addf %20, %24 : vector<4x32xf32>
    %26 = vector.extract_strided_slice %3 {offsets = [4, 0], sizes = [4, 32], strides = [1, 1]} : vector<8x32xf32> to vector<4x32xf32>
    %c4 = arith.constant 4 : index
    %c0_20 = arith.constant 0 : index
    %c0_21 = arith.constant 0 : index
    %27 = vector.load %arg13[%c4, %c0_20, %c0_21] : memref<5x32x32xf32, #tpu.memory_space<vmem>>, vector<1x32x32xf32>
    %28 = vector.shape_cast %27 : vector<1x32x32xf32> to vector<32x32xf32>
    %cst_22 = arith.constant dense<0.000000e+00> : vector<4x32xf32>
    %29 = tpu.matmul %26, %28, %cst_22 {dimension_numbers = #tpu.dot_dimension_numbers<[1], [0], [0], [1], [0, 0, 1, 1], [], []>} : vector<4x32xf32>, vector<32x32xf32>, vector<4x32xf32> -> vector<4x32xf32>
    %30 = arith.addf %25, %29 : vector<4x32xf32>
    %31 = vector.broadcast %4 : vector<1x32xf32> to vector<4x32xf32>
    %32 = arith.addf %30, %31 : vector<4x32xf32>
    %cst_23 = arith.constant 0.000000e+00 : f32
    %33 = vector.broadcast %cst_23 : f32 to vector<4x32xf32>
    %34 = arith.cmpf oge, %32, %33 : vector<4x32xf32>
    %cst_24 = arith.constant 2.000000e-01 : f32
    %35 = vector.broadcast %cst_24 : f32 to vector<4x32xf32>
    %36 = arith.mulf %35, %32 : vector<4x32xf32>
    %37 = arith.select %34, %32, %36 : vector<4x32xi1>, vector<4x32xf32>
    %c0_25 = arith.constant 0 : index
    %c0_26 = arith.constant 0 : index
    %38 = vector.load %arg11[%c0_25, %c0_26] : memref<1x32xf32, #tpu.memory_space<vmem>>, vector<1x32xf32>
    %39 = vector.broadcast %38 : vector<1x32xf32> to vector<4x32xf32>
    %40 = arith.mulf %37, %39 : vector<4x32xf32>
    %c0_27 = arith.constant 0 : index
    %c0_28 = arith.constant 0 : index
    %41 = vector.load %arg12[%c0_27, %c0_28] : memref<1x32xf32, #tpu.memory_space<vmem>>, vector<1x32xf32>
    %42 = vector.broadcast %41 : vector<1x32xf32> to vector<4x32xf32>
    %43 = arith.addf %40, %42 : vector<4x32xf32>
    %c0_29 = arith.constant 0 : index
    %c0_30 = arith.constant 0 : index
    %44 = vector.load %arg5[%c0_29, %c0_30] : memref<8x4xf32, #tpu.memory_space<vmem>>, vector<8x4xf32>
    %cst_31 = arith.constant dense<0.000000e+00> : vector<8x32xf32>
    %45 = tpu.matmul %44, %43, %cst_31 {dimension_numbers = #tpu.dot_dimension_numbers<[1], [0], [0], [1], [0, 0, 1, 1], [], []>} : vector<8x4xf32>, vector<4x32xf32>, vector<8x32xf32> -> vector<8x32xf32>
    %c0_32 = arith.constant 0 : index
    %c0_33 = arith.constant 0 : index
    %46 = vector.load %arg4[%c0_32, %c0_33] : memref<1x32xf32, #tpu.memory_space<vmem>>, vector<1x32xf32>
    %cst_34 = arith.constant 0.000000e+00 : f32
    %47 = vector.broadcast %cst_34 : f32 to vector<4x32xf32>
    %48 = vector.extract_strided_slice %45 {offsets = [0, 0], sizes = [4, 32], strides = [1, 1]} : vector<8x32xf32> to vector<4x32xf32>
    %c0_35 = arith.constant 0 : index
    %c0_36 = arith.constant 0 : index
    %c0_37 = arith.constant 0 : index
    %49 = vector.load %arg9[%c0_35, %c0_36, %c0_37] : memref<5x32x32xf32, #tpu.memory_space<vmem>>, vector<1x32x32xf32>
    %50 = vector.shape_cast %49 : vector<1x32x32xf32> to vector<32x32xf32>
    %cst_38 = arith.constant dense<0.000000e+00> : vector<4x32xf32>
    %51 = tpu.matmul %48, %50, %cst_38 {dimension_numbers = #tpu.dot_dimension_numbers<[1], [0], [0], [1], [0, 0, 1, 1], [], []>} : vector<4x32xf32>, vector<32x32xf32>, vector<4x32xf32> -> vector<4x32xf32>
    %52 = arith.addf %47, %51 : vector<4x32xf32>
    %53 = vector.extract_strided_slice %45 {offsets = [1, 0], sizes = [4, 32], strides = [1, 1]} : vector<8x32xf32> to vector<4x32xf32>
    %c1_39 = arith.constant 1 : index
    %c0_40 = arith.constant 0 : index
    %c0_41 = arith.constant 0 : index
    %54 = vector.load %arg9[%c1_39, %c0_40, %c0_41] : memref<5x32x32xf32, #tpu.memory_space<vmem>>, vector<1x32x32xf32>
    %55 = vector.shape_cast %54 : vector<1x32x32xf32> to vector<32x32xf32>
    %cst_42 = arith.constant dense<0.000000e+00> : vector<4x32xf32>
    %56 = tpu.matmul %53, %55, %cst_42 {dimension_numbers = #tpu.dot_dimension_numbers<[1], [0], [0], [1], [0, 0, 1, 1], [], []>} : vector<4x32xf32>, vector<32x32xf32>, vector<4x32xf32> -> vector<4x32xf32>
    %57 = arith.addf %52, %56 : vector<4x32xf32>
    %58 = vector.extract_strided_slice %45 {offsets = [2, 0], sizes = [4, 32], strides = [1, 1]} : vector<8x32xf32> to vector<4x32xf32>
    %c2_43 = arith.constant 2 : index
    %c0_44 = arith.constant 0 : index
    %c0_45 = arith.constant 0 : index
    %59 = vector.load %arg9[%c2_43, %c0_44, %c0_45] : memref<5x32x32xf32, #tpu.memory_space<vmem>>, vector<1x32x32xf32>
    %60 = vector.shape_cast %59 : vector<1x32x32xf32> to vector<32x32xf32>
    %cst_46 = arith.constant dense<0.000000e+00> : vector<4x32xf32>
    %61 = tpu.matmul %58, %60, %cst_46 {dimension_numbers = #tpu.dot_dimension_numbers<[1], [0], [0], [1], [0, 0, 1, 1], [], []>} : vector<4x32xf32>, vector<32x32xf32>, vector<4x32xf32> -> vector<4x32xf32>
    %62 = arith.addf %57, %61 : vector<4x32xf32>
    %63 = vector.extract_strided_slice %45 {offsets = [3, 0], sizes = [4, 32], strides = [1, 1]} : vector<8x32xf32> to vector<4x32xf32>
    %c3_47 = arith.constant 3 : index
    %c0_48 = arith.constant 0 : index
    %c0_49 = arith.constant 0 : index
    %64 = vector.load %arg9[%c3_47, %c0_48, %c0_49] : memref<5x32x32xf32, #tpu.memory_space<vmem>>, vector<1x32x32xf32>
    %65 = vector.shape_cast %64 : vector<1x32x32xf32> to vector<32x32xf32>
    %cst_50 = arith.constant dense<0.000000e+00> : vector<4x32xf32>
    %66 = tpu.matmul %63, %65, %cst_50 {dimension_numbers = #tpu.dot_dimension_numbers<[1], [0], [0], [1], [0, 0, 1, 1], [], []>} : vector<4x32xf32>, vector<32x32xf32>, vector<4x32xf32> -> vector<4x32xf32>
    %67 = arith.addf %62, %66 : vector<4x32xf32>
    %68 = vector.extract_strided_slice %45 {offsets = [4, 0], sizes = [4, 32], strides = [1, 1]} : vector<8x32xf32> to vector<4x32xf32>
    %c4_51 = arith.constant 4 : index
    %c0_52 = arith.constant 0 : index
    %c0_53 = arith.constant 0 : index
    %69 = vector.load %arg9[%c4_51, %c0_52, %c0_53] : memref<5x32x32xf32, #tpu.memory_space<vmem>>, vector<1x32x32xf32>
    %70 = vector.shape_cast %69 : vector<1x32x32xf32> to vector<32x32xf32>
    %cst_54 = arith.constant dense<0.000000e+00> : vector<4x32xf32>
    %71 = tpu.matmul %68, %70, %cst_54 {dimension_numbers = #tpu.dot_dimension_numbers<[1], [0], [0], [1], [0, 0, 1, 1], [], []>} : vector<4x32xf32>, vector<32x32xf32>, vector<4x32xf32> -> vector<4x32xf32>
    %72 = arith.addf %67, %71 : vector<4x32xf32>
    %73 = vector.broadcast %46 : vector<1x32xf32> to vector<4x32xf32>
    %74 = arith.addf %72, %73 : vector<4x32xf32>
    %cst_55 = arith.constant 0.000000e+00 : f32
    %75 = vector.broadcast %cst_55 : f32 to vector<4x32xf32>
    %76 = arith.cmpf oge, %74, %75 : vector<4x32xf32>
    %cst_56 = arith.constant 2.000000e-01 : f32
    %77 = vector.broadcast %cst_56 : f32 to vector<4x32xf32>
    %78 = arith.mulf %77, %74 : vector<4x32xf32>
    %79 = arith.select %76, %74, %78 : vector<4x32xi1>, vector<4x32xf32>
    %c0_57 = arith.constant 0 : index
    %c0_58 = arith.constant 0 : index
    %80 = vector.load %arg7[%c0_57, %c0_58] : memref<1x32xf32, #tpu.memory_space<vmem>>, vector<1x32xf32>
    %81 = vector.broadcast %80 : vector<1x32xf32> to vector<4x32xf32>
    %82 = arith.mulf %79, %81 : vector<4x32xf32>
    %c0_59 = arith.constant 0 : index
    %c0_60 = arith.constant 0 : index
    %83 = vector.load %arg8[%c0_59, %c0_60] : memref<1x32xf32, #tpu.memory_space<vmem>>, vector<1x32xf32>
    %84 = vector.broadcast %83 : vector<1x32xf32> to vector<4x32xf32>
    %85 = arith.addf %82, %84 : vector<4x32xf32>
    %c0_61 = arith.constant 0 : index
    %c0_62 = arith.constant 0 : index
    %86 = vector.load %arg6[%c0_61, %c0_62] : memref<8x4xf32, #tpu.memory_space<vmem>>, vector<8x4xf32>
    %cst_63 = arith.constant dense<0.000000e+00> : vector<8x32xf32>
    %87 = tpu.matmul %86, %85, %cst_63 {dimension_numbers = #tpu.dot_dimension_numbers<[1], [0], [0], [1], [0, 0, 1, 1], [], []>} : vector<8x4xf32>, vector<4x32xf32>, vector<8x32xf32> -> vector<8x32xf32>
    %c0_64 = arith.constant 0 : index
    %c0_65 = arith.constant 0 : index
    %88 = vector.load %arg39[%c0_64, %c0_65] : memref<32x32xf32, #tpu.memory_space<vmem>>, vector<32x32xf32>
    %cst_66 = arith.constant dense<0.000000e+00> : vector<8x32xf32>
    %89 = tpu.matmul %87, %88, %cst_66 {dimension_numbers = #tpu.dot_dimension_numbers<[1], [0], [0], [1], [0, 0, 1, 1], [], []>} : vector<8x32xf32>, vector<32x32xf32>, vector<8x32xf32> -> vector<8x32xf32>
    %c0_67 = arith.constant 0 : index
    %c0_68 = arith.constant 0 : index
    %90 = vector.load %arg38[%c0_67, %c0_68] : memref<1x32xf32, #tpu.memory_space<vmem>>, vector<1x32xf32>
    %91 = vector.broadcast %90 : vector<1x32xf32> to vector<8x32xf32>
    %92 = arith.addf %89, %91 : vector<8x32xf32>
    %c0_69 = arith.constant 0 : index
    %c0_70 = arith.constant 0 : index
    %93 = vector.load %arg40[%c0_69, %c0_70] : memref<8x32xf32, #tpu.memory_space<vmem>>, vector<8x32xf32>
    %94 = arith.addf %92, %93 : vector<8x32xf32>
    %c0_71 = arith.constant 0 : index
    %c0_72 = arith.constant 0 : index
    %95 = vector.load %arg44[%c0_71, %c0_72] : memref<16x32xf32, #tpu.memory_space<vmem>>, vector<8x32xf32>
    tpu.vector_store %arg44[%c0_71, %c0_72], %94 {strides = array<i32>} : memref<16x32xf32, #tpu.memory_space<vmem>>, vector<8x32xf32>,
    %c1_73 = arith.constant 1 : index
    %c0_74 = arith.constant 0 : index
    %c0_75 = arith.constant 0 : index
    %96 = vector.load %arg1[%c1_73, %c0_74, %c0_75] : memref<2x2x32xf32, #tpu.memory_space<vmem>>, vector<1x2x32xf32>
    %97 = vector.shape_cast %96 : vector<1x2x32xf32> to vector<2x32xf32>
    %c0_76 = arith.constant 0 : index
    %c0_77 = arith.constant 0 : index
    %98 = vector.load %arg42[%c0_76, %c0_77] : memref<8x2xf32, #tpu.memory_space<vmem>>, vector<8x2xf32>
    %cst_78 = arith.constant dense<0.000000e+00> : vector<8x32xf32>
    %99 = tpu.matmul %98, %97, %cst_78 {dimension_numbers = #tpu.dot_dimension_numbers<[1], [0], [0], [1], [0, 0, 1, 1], [], []>} : vector<8x2xf32>, vector<2x32xf32>, vector<8x32xf32> -> vector<8x32xf32>
    %c0_79 = arith.constant 0 : index
    %c0_80 = arith.constant 0 : index
    %100 = vector.load %arg10[%c0_79, %c0_80] : memref<1x32xf32, #tpu.memory_space<vmem>>, vector<1x32xf32>
    %cst_81 = arith.constant 0.000000e+00 : f32
    %101 = vector.broadcast %cst_81 : f32 to vector<4x32xf32>
    %102 = vector.extract_strided_slice %99 {offsets = [0, 0], sizes = [4, 32], strides = [1, 1]} : vector<8x32xf32> to vector<4x32xf32>
    %c0_82 = arith.constant 0 : index
    %c0_83 = arith.constant 0 : index
    %c0_84 = arith.constant 0 : index
    %103 = vector.load %arg13[%c0_82, %c0_83, %c0_84] : memref<5x32x32xf32, #tpu.memory_space<vmem>>, vector<1x32x32xf32>
    %104 = vector.shape_cast %103 : vector<1x32x32xf32> to vector<32x32xf32>
    %cst_85 = arith.constant dense<0.000000e+00> : vector<4x32xf32>
    %105 = tpu.matmul %102, %104, %cst_85 {dimension_numbers = #tpu.dot_dimension_numbers<[1], [0], [0], [1], [0, 0, 1, 1], [], []>} : vector<4x32xf32>, vector<32x32xf32>, vector<4x32xf32> -> vector<4x32xf32>
    %106 = arith.addf %101, %105 : vector<4x32xf32>
    %107 = vector.extract_strided_slice %99 {offsets = [1, 0], sizes = [4, 32], strides = [1, 1]} : vector<8x32xf32> to vector<4x32xf32>
    %c1_86 = arith.constant 1 : index
    %c0_87 = arith.constant 0 : index
    %c0_88 = arith.constant 0 : index
    %108 = vector.load %arg13[%c1_86, %c0_87, %c0_88] : memref<5x32x32xf32, #tpu.memory_space<vmem>>, vector<1x32x32xf32>
    %109 = vector.shape_cast %108 : vector<1x32x32xf32> to vector<32x32xf32>
    %cst_89 = arith.constant dense<0.000000e+00> : vector<4x32xf32>
    %110 = tpu.matmul %107, %109, %cst_89 {dimension_numbers = #tpu.dot_dimension_numbers<[1], [0], [0], [1], [0, 0, 1, 1], [], []>} : vector<4x32xf32>, vector<32x32xf32>, vector<4x32xf32> -> vector<4x32xf32>
    %111 = arith.addf %106, %110 : vector<4x32xf32>
    %112 = vector.extract_strided_slice %99 {offsets = [2, 0], sizes = [4, 32], strides = [1, 1]} : vector<8x32xf32> to vector<4x32xf32>
    %c2_90 = arith.constant 2 : index
    %c0_91 = arith.constant 0 : index
    %c0_92 = arith.constant 0 : index
    %113 = vector.load %arg13[%c2_90, %c0_91, %c0_92] : memref<5x32x32xf32, #tpu.memory_space<vmem>>, vector<1x32x32xf32>
    %114 = vector.shape_cast %113 : vector<1x32x32xf32> to vector<32x32xf32>
    %cst_93 = arith.constant dense<0.000000e+00> : vector<4x32xf32>
    %115 = tpu.matmul %112, %114, %cst_93 {dimension_numbers = #tpu.dot_dimension_numbers<[1], [0], [0], [1], [0, 0, 1, 1], [], []>} : vector<4x32xf32>, vector<32x32xf32>, vector<4x32xf32> -> vector<4x32xf32>
    %116 = arith.addf %111, %115 : vector<4x32xf32>
    %117 = vector.extract_strided_slice %99 {offsets = [3, 0], sizes = [4, 32], strides = [1, 1]} : vector<8x32xf32> to vector<4x32xf32>
    %c3_94 = arith.constant 3 : index
    %c0_95 = arith.constant 0 : index
    %c0_96 = arith.constant 0 : index
    %118 = vector.load %arg13[%c3_94, %c0_95, %c0_96] : memref<5x32x32xf32, #tpu.memory_space<vmem>>, vector<1x32x32xf32>
    %119 = vector.shape_cast %118 : vector<1x32x32xf32> to vector<32x32xf32>
    %cst_97 = arith.constant dense<0.000000e+00> : vector<4x32xf32>
    %120 = tpu.matmul %117, %119, %cst_97 {dimension_numbers = #tpu.dot_dimension_numbers<[1], [0], [0], [1], [0, 0, 1, 1], [], []>} : vector<4x32xf32>, vector<32x32xf32>, vector<4x32xf32> -> vector<4x32xf32>
    %121 = arith.addf %116, %120 : vector<4x32xf32>
    %122 = vector.extract_strided_slice %99 {offsets = [4, 0], sizes = [4, 32], strides = [1, 1]} : vector<8x32xf32> to vector<4x32xf32>
    %c4_98 = arith.constant 4 : index
    %c0_99 = arith.constant 0 : index
    %c0_100 = arith.constant 0 : index
    %123 = vector.load %arg13[%c4_98, %c0_99, %c0_100] : memref<5x32x32xf32, #tpu.memory_space<vmem>>, vector<1x32x32xf32>
    %124 = vector.shape_cast %123 : vector<1x32x32xf32> to vector<32x32xf32>
    %cst_101 = arith.constant dense<0.000000e+00> : vector<4x32xf32>
    %125 = tpu.matmul %122, %124, %cst_101 {dimension_numbers = #tpu.dot_dimension_numbers<[1], [0], [0], [1], [0, 0, 1, 1], [], []>} : vector<4x32xf32>, vector<32x32xf32>, vector<4x32xf32> -> vector<4x32xf32>
    %126 = arith.addf %121, %125 : vector<4x32xf32>
    %127 = vector.broadcast %100 : vector<1x32xf32> to vector<4x32xf32>
    %128 = arith.addf %126, %127 : vector<4x32xf32>
    %cst_102 = arith.constant 0.000000e+00 : f32
    %129 = vector.broadcast %cst_102 : f32 to vector<4x32xf32>
    %130 = arith.cmpf oge, %128, %129 : vector<4x32xf32>
    %cst_103 = arith.constant 2.000000e-01 : f32
    %131 = vector.broadcast %cst_103 : f32 to vector<4x32xf32>
    %132 = arith.mulf %131, %128 : vector<4x32xf32>
    %133 = arith.select %130, %128, %132 : vector<4x32xi1>, vector<4x32xf32>
    %c0_104 = arith.constant 0 : index
    %c0_105 = arith.constant 0 : index
    %134 = vector.load %arg11[%c0_104, %c0_105] : memref<1x32xf32, #tpu.memory_space<vmem>>, vector<1x32xf32>
    %135 = vector.broadcast %134 : vector<1x32xf32> to vector<4x32xf32>
    %136 = arith.mulf %133, %135 : vector<4x32xf32>
    %c0_106 = arith.constant 0 : index
    %c0_107 = arith.constant 0 : index
    %137 = vector.load %arg12[%c0_106, %c0_107] : memref<1x32xf32, #tpu.memory_space<vmem>>, vector<1x32xf32>
    %138 = vector.broadcast %137 : vector<1x32xf32> to vector<4x32xf32>
    %139 = arith.addf %136, %138 : vector<4x32xf32>
    %c0_108 = arith.constant 0 : index
    %c0_109 = arith.constant 0 : index
    %140 = vector.load %arg5[%c0_108, %c0_109] : memref<8x4xf32, #tpu.memory_space<vmem>>, vector<8x4xf32>
    %cst_110 = arith.constant dense<0.000000e+00> : vector<8x32xf32>
    %141 = tpu.matmul %140, %139, %cst_110 {dimension_numbers = #tpu.dot_dimension_numbers<[1], [0], [0], [1], [0, 0, 1, 1], [], []>} : vector<8x4xf32>, vector<4x32xf32>, vector<8x32xf32> -> vector<8x32xf32>
    %c0_111 = arith.constant 0 : index
    %c0_112 = arith.constant 0 : index
    %142 = vector.load %arg4[%c0_111, %c0_112] : memref<1x32xf32, #tpu.memory_space<vmem>>, vector<1x32xf32>
    %cst_113 = arith.constant 0.000000e+00 : f32
    %143 = vector.broadcast %cst_113 : f32 to vector<4x32xf32>
    %144 = vector.extract_strided_slice %141 {offsets = [0, 0], sizes = [4, 32], strides = [1, 1]} : vector<8x32xf32> to vector<4x32xf32>
    %c0_114 = arith.constant 0 : index
    %c0_115 = arith.constant 0 : index
    %c0_116 = arith.constant 0 : index
    %145 = vector.load %arg9[%c0_114, %c0_115, %c0_116] : memref<5x32x32xf32, #tpu.memory_space<vmem>>, vector<1x32x32xf32>
    %146 = vector.shape_cast %145 : vector<1x32x32xf32> to vector<32x32xf32>
    %cst_117 = arith.constant dense<0.000000e+00> : vector<4x32xf32>
    %147 = tpu.matmul %144, %146, %cst_117 {dimension_numbers = #tpu.dot_dimension_numbers<[1], [0], [0], [1], [0, 0, 1, 1], [], []>} : vector<4x32xf32>, vector<32x32xf32>, vector<4x32xf32> -> vector<4x32xf32>
    %148 = arith.addf %143, %147 : vector<4x32xf32>
    %149 = vector.extract_strided_slice %141 {offsets = [1, 0], sizes = [4, 32], strides = [1, 1]} : vector<8x32xf32> to vector<4x32xf32>
    %c1_118 = arith.constant 1 : index
    %c0_119 = arith.constant 0 : index
    %c0_120 = arith.constant 0 : index
    %150 = vector.load %arg9[%c1_118, %c0_119, %c0_120] : memref<5x32x32xf32, #tpu.memory_space<vmem>>, vector<1x32x32xf32>
    %151 = vector.shape_cast %150 : vector<1x32x32xf32> to vector<32x32xf32>
    %cst_121 = arith.constant dense<0.000000e+00> : vector<4x32xf32>
    %152 = tpu.matmul %149, %151, %cst_121 {dimension_numbers = #tpu.dot_dimension_numbers<[1], [0], [0], [1], [0, 0, 1, 1], [], []>} : vector<4x32xf32>, vector<32x32xf32>, vector<4x32xf32> -> vector<4x32xf32>
    %153 = arith.addf %148, %152 : vector<4x32xf32>
    %154 = vector.extract_strided_slice %141 {offsets = [2, 0], sizes = [4, 32], strides = [1, 1]} : vector<8x32xf32> to vector<4x32xf32>
    %c2_122 = arith.constant 2 : index
    %c0_123 = arith.constant 0 : index
    %c0_124 = arith.constant 0 : index
    %155 = vector.load %arg9[%c2_122, %c0_123, %c0_124] : memref<5x32x32xf32, #tpu.memory_space<vmem>>, vector<1x32x32xf32>
    %156 = vector.shape_cast %155 : vector<1x32x32xf32> to vector<32x32xf32>
    %cst_125 = arith.constant dense<0.000000e+00> : vector<4x32xf32>
    %157 = tpu.matmul %154, %156, %cst_125 {dimension_numbers = #tpu.dot_dimension_numbers<[1], [0], [0], [1], [0, 0, 1, 1], [], []>} : vector<4x32xf32>, vector<32x32xf32>, vector<4x32xf32> -> vector<4x32xf32>
    %158 = arith.addf %153, %157 : vector<4x32xf32>
    %159 = vector.extract_strided_slice %141 {offsets = [3, 0], sizes = [4, 32], strides = [1, 1]} : vector<8x32xf32> to vector<4x32xf32>
    %c3_126 = arith.constant 3 : index
    %c0_127 = arith.constant 0 : index
    %c0_128 = arith.constant 0 : index
    %160 = vector.load %arg9[%c3_126, %c0_127, %c0_128] : memref<5x32x32xf32, #tpu.memory_space<vmem>>, vector<1x32x32xf32>
    %161 = vector.shape_cast %160 : vector<1x32x32xf32> to vector<32x32xf32>
    %cst_129 = arith.constant dense<0.000000e+00> : vector<4x32xf32>
    %162 = tpu.matmul %159, %161, %cst_129 {dimension_numbers = #tpu.dot_dimension_numbers<[1], [0], [0], [1], [0, 0, 1, 1], [], []>} : vector<4x32xf32>, vector<32x32xf32>, vector<4x32xf32> -> vector<4x32xf32>
    %163 = arith.addf %158, %162 : vector<4x32xf32>
    %164 = vector.extract_strided_slice %141 {offsets = [4, 0], sizes = [4, 32], strides = [1, 1]} : vector<8x32xf32> to vector<4x32xf32>
    %c4_130 = arith.constant 4 : index
    %c0_131 = arith.constant 0 : index
    %c0_132 = arith.constant 0 : index
    %165 = vector.load %arg9[%c4_130, %c0_131, %c0_132] : memref<5x32x32xf32, #tpu.memory_space<vmem>>, vector<1x32x32xf32>
    %166 = vector.shape_cast %165 : vector<1x32x32xf32> to vector<32x32xf32>
    %cst_133 = arith.constant dense<0.000000e+00> : vector<4x32xf32>
    %167 = tpu.matmul %164, %166, %cst_133 {dimension_numbers = #tpu.dot_dimension_numbers<[1], [0], [0], [1], [0, 0, 1, 1], [], []>} : vector<4x32xf32>, vector<32x32xf32>, vector<4x32xf32> -> vector<4x32xf32>
    %168 = arith.addf %163, %167 : vector<4x32xf32>
    %169 = vector.broadcast %142 : vector<1x32xf32> to vector<4x32xf32>
    %170 = arith.addf %168, %169 : vector<4x32xf32>
    %cst_134 = arith.constant 0.000000e+00 : f32
    %171 = vector.broadcast %cst_134 : f32 to vector<4x32xf32>
    %172 = arith.cmpf oge, %170, %171 : vector<4x32xf32>
    %cst_135 = arith.constant 2.000000e-01 : f32
    %173 = vector.broadcast %cst_135 : f32 to vector<4x32xf32>
    %174 = arith.mulf %173, %170 : vector<4x32xf32>
    %175 = arith.select %172, %170, %174 : vector<4x32xi1>, vector<4x32xf32>
    %c0_136 = arith.constant 0 : index
    %c0_137 = arith.constant 0 : index
    %176 = vector.load %arg7[%c0_136, %c0_137] : memref<1x32xf32, #tpu.memory_space<vmem>>, vector<1x32xf32>
    %177 = vector.broadcast %176 : vector<1x32xf32> to vector<4x32xf32>
    %178 = arith.mulf %175, %177 : vector<4x32xf32>
    %c0_138 = arith.constant 0 : index
    %c0_139 = arith.constant 0 : index
    %179 = vector.load %arg8[%c0_138, %c0_139] : memref<1x32xf32, #tpu.memory_space<vmem>>, vector<1x32xf32>
    %180 = vector.broadcast %179 : vector<1x32xf32> to vector<4x32xf32>
    %181 = arith.addf %178, %180 : vector<4x32xf32>
    %c0_140 = arith.constant 0 : index
    %c0_141 = arith.constant 0 : index
    %182 = vector.load %arg6[%c0_140, %c0_141] : memref<8x4xf32, #tpu.memory_space<vmem>>, vector<8x4xf32>
    %cst_142 = arith.constant dense<0.000000e+00> : vector<8x32xf32>
    %183 = tpu.matmul %182, %181, %cst_142 {dimension_numbers = #tpu.dot_dimension_numbers<[1], [0], [0], [1], [0, 0, 1, 1], [], []>} : vector<8x4xf32>, vector<4x32xf32>, vector<8x32xf32> -> vector<8x32xf32>
    %c0_143 = arith.constant 0 : index
    %c0_144 = arith.constant 0 : index
    %184 = vector.load %arg39[%c0_143, %c0_144] : memref<32x32xf32, #tpu.memory_space<vmem>>, vector<32x32xf32>
    %cst_145 = arith.constant dense<0.000000e+00> : vector<8x32xf32>
    %185 = tpu.matmul %183, %184, %cst_145 {dimension_numbers = #tpu.dot_dimension_numbers<[1], [0], [0], [1], [0, 0, 1, 1], [], []>} : vector<8x32xf32>, vector<32x32xf32>, vector<8x32xf32> -> vector<8x32xf32>
    %c0_146 = arith.constant 0 : index
    %c0_147 = arith.constant 0 : index
    %186 = vector.load %arg38[%c0_146, %c0_147] : memref<1x32xf32, #tpu.memory_space<vmem>>, vector<1x32xf32>
    %187 = vector.broadcast %186 : vector<1x32xf32> to vector<8x32xf32>
    %188 = arith.addf %185, %187 : vector<8x32xf32>
    %c0_148 = arith.constant 0 : index
    %c0_149 = arith.constant 0 : index
    %189 = vector.load %arg40[%c0_148, %c0_149] : memref<8x32xf32, #tpu.memory_space<vmem>>, vector<8x32xf32>
    %190 = arith.addf %188, %189 : vector<8x32xf32>
    %c8 = arith.constant 8 : index
    %c0_150 = arith.constant 0 : index
    %191 = vector.load %arg44[%c8, %c0_150] : memref<16x32xf32, #tpu.memory_space<vmem>>, vector<8x32xf32>
    tpu.vector_store %arg44[%c8, %c0_150], %190 {strides = array<i32>} : memref<16x32xf32, #tpu.memory_space<vmem>>, vector<8x32xf32>,
    %c0_151 = arith.constant 0 : index
    %c0_152 = arith.constant 0 : index
    %192 = vector.load %arg44[%c0_151, %c0_152] : memref<16x32xf32, #tpu.memory_space<vmem>>, vector<16x32xf32>
    %c0_153 = arith.constant 0 : index
    %c0_154 = arith.constant 0 : index
    %193 = vector.load %arg19[%c0_153, %c0_154] : memref<1x32xf32, #tpu.memory_space<vmem>>, vector<1x32xf32>
    %c0_155 = arith.constant 0 : index
    %c0_156 = arith.constant 0 : index
    %194 = vector.load %arg18[%c0_155, %c0_156] : memref<1x32xf32, #tpu.memory_space<vmem>>, vector<1x32xf32>
    %cst_157 = arith.constant dense<0.000000e+00> : vector<16xf32>
    %195 = vector.multi_reduction <add>, %192, %cst_157 [1] : vector<16x32xf32> to vector<16xf32>
    %196 = vector.shape_cast %195 : vector<16xf32> to vector<16x1xf32>
    %cst_158 = arith.constant 3.200000e+01 : f32
    %197 = vector.broadcast %cst_158 : f32 to vector<16x1xf32>
    %198 = arith.divf %196, %197 : vector<16x1xf32>
    %199 = vector.broadcast %198 : vector<16x1xf32> to vector<16x32xf32>
    %200 = arith.subf %192, %199 : vector<16x32xf32>
    %201 = arith.mulf %200, %200 : vector<16x32xf32>
    %cst_159 = arith.constant dense<0.000000e+00> : vector<16xf32>
    %202 = vector.multi_reduction <add>, %201, %cst_159 [1] : vector<16x32xf32> to vector<16xf32>
    %203 = vector.shape_cast %202 : vector<16xf32> to vector<16x1xf32>
    %cst_160 = arith.constant 3.200000e+01 : f32
    %204 = vector.broadcast %cst_160 : f32 to vector<16x1xf32>
    %205 = arith.divf %203, %204 : vector<16x1xf32>
    %206 = vector.broadcast %198 : vector<16x1xf32> to vector<16x32xf32>
    %207 = arith.subf %192, %206 : vector<16x32xf32>
    %cst_161 = arith.constant 9.99999974E-6 : f32
    %208 = vector.broadcast %cst_161 : f32 to vector<16x1xf32>
    %209 = arith.addf %205, %208 : vector<16x1xf32>
    %210 = math.rsqrt %209 : vector<16x1xf32>
    %211 = vector.broadcast %210 : vector<16x1xf32> to vector<16x32xf32>
    %212 = arith.mulf %207, %211 : vector<16x32xf32>
    %213 = vector.broadcast %193 : vector<1x32xf32> to vector<16x32xf32>
    %214 = arith.mulf %212, %213 : vector<16x32xf32>
    %215 = vector.broadcast %194 : vector<1x32xf32> to vector<16x32xf32>
    %216 = arith.addf %214, %215 : vector<16x32xf32>
    %c0_162 = arith.constant 0 : index
    %c0_163 = arith.constant 0 : index
    %217 = vector.load %arg25[%c0_162, %c0_163] : memref<32x96xf32, #tpu.memory_space<vmem>>, vector<32x96xf32>
    %cst_164 = arith.constant dense<0.000000e+00> : vector<16x96xf32>
    %218 = tpu.matmul %216, %217, %cst_164 {dimension_numbers = #tpu.dot_dimension_numbers<[1], [0], [0], [1], [0, 0, 1, 1], [], []>} : vector<16x32xf32>, vector<32x96xf32>, vector<16x96xf32> -> vector<16x96xf32>
    %c0_165 = arith.constant 0 : index
    %c0_166 = arith.constant 0 : index
    %219 = vector.load %arg17[%c0_165, %c0_166] : memref<1x96xf32, #tpu.memory_space<vmem>>, vector<1x96xf32>
    %220 = vector.broadcast %219 : vector<1x96xf32> to vector<16x96xf32>
    %221 = arith.addf %218, %220 : vector<16x96xf32>
    %222 = vector.extract_strided_slice %221 {offsets = [0, 0], sizes = [8, 8], strides = [1, 1]} : vector<16x96xf32> to vector<8x8xf32>
    %223 = vector.extract_strided_slice %221 {offsets = [0, 32], sizes = [8, 8], strides = [1, 1]} : vector<16x96xf32> to vector<8x8xf32>
    %224 = vector.extract_strided_slice %221 {offsets = [0, 64], sizes = [8, 8], strides = [1, 1]} : vector<16x96xf32> to vector<8x8xf32>
    %cst_167 = arith.constant dense<0.000000e+00> : vector<8x8xf32>
    %225 = tpu.matmul %222, %223, %cst_167 {dimension_numbers = #tpu.dot_dimension_numbers<[1], [1], [0], [0], [0, 0, 1, 0], [], []>} : vector<8x8xf32>, vector<8x8xf32>, vector<8x8xf32> -> vector<8x8xf32>
    %cst_168 = arith.constant 0.353553385 : f32
    %226 = vector.broadcast %cst_168 : f32 to vector<8x8xf32>
    %227 = arith.mulf %225, %226 : vector<8x8xf32>
    %cst_169 = arith.constant dense<0xFF800000> : vector<8xf32>
    %228 = vector.multi_reduction <maximumf>, %227, %cst_169 [1] : vector<8x8xf32> to vector<8xf32>
    %229 = vector.shape_cast %228 : vector<8xf32> to vector<8x1xf32>
    %230 = vector.broadcast %229 : vector<8x1xf32> to vector<8x8xf32>
    %231 = arith.subf %227, %230 : vector<8x8xf32>
    %232 = math.exp %231 : vector<8x8xf32>
    %cst_170 = arith.constant dense<0.000000e+00> : vector<8xf32>
    %233 = vector.multi_reduction <add>, %232, %cst_170 [1] : vector<8x8xf32> to vector<8xf32>
    %234 = vector.shape_cast %233 : vector<8xf32> to vector<8x1xf32>
    %235 = tpu.reciprocal %234 {approx = true} : vector<8x1xf32> -> vector<8x1xf32>
    %236 = vector.broadcast %235 : vector<8x1xf32> to vector<8x8xf32>
    %237 = arith.mulf %232, %236 : vector<8x8xf32>
    %cst_171 = arith.constant dense<0.000000e+00> : vector<8x8xf32>
    %238 = tpu.matmul %237, %224, %cst_171 {dimension_numbers = #tpu.dot_dimension_numbers<[1], [0], [0], [1], [0, 0, 1, 1], [], []>} : vector<8x8xf32>, vector<8x8xf32>, vector<8x8xf32> -> vector<8x8xf32>
    %c0_172 = arith.constant 0 : index
    %c0_173 = arith.constant 0 : index
    %239 = vector.load %arg45[%c0_172, %c0_173] : memref<16x32xf32, #tpu.memory_space<vmem>>, vector<8x8xf32>
    tpu.vector_store %arg45[%c0_172, %c0_173], %238 {strides = array<i32>} : memref<16x32xf32, #tpu.memory_space<vmem>>, vector<8x8xf32>,
    %240 = vector.extract_strided_slice %221 {offsets = [0, 8], sizes = [8, 8], strides = [1, 1]} : vector<16x96xf32> to vector<8x8xf32>
    %241 = vector.extract_strided_slice %221 {offsets = [0, 40], sizes = [8, 8], strides = [1, 1]} : vector<16x96xf32> to vector<8x8xf32>
    %242 = vector.extract_strided_slice %221 {offsets = [0, 72], sizes = [8, 8], strides = [1, 1]} : vector<16x96xf32> to vector<8x8xf32>
    %cst_174 = arith.constant dense<0.000000e+00> : vector<8x8xf32>
    %243 = tpu.matmul %240, %241, %cst_174 {dimension_numbers = #tpu.dot_dimension_numbers<[1], [1], [0], [0], [0, 0, 1, 0], [], []>} : vector<8x8xf32>, vector<8x8xf32>, vector<8x8xf32> -> vector<8x8xf32>
    %cst_175 = arith.constant 0.353553385 : f32
    %244 = vector.broadcast %cst_175 : f32 to vector<8x8xf32>
    %245 = arith.mulf %243, %244 : vector<8x8xf32>
    %cst_176 = arith.constant dense<0xFF800000> : vector<8xf32>
    %246 = vector.multi_reduction <maximumf>, %245, %cst_176 [1] : vector<8x8xf32> to vector<8xf32>
    %247 = vector.shape_cast %246 : vector<8xf32> to vector<8x1xf32>
    %248 = vector.broadcast %247 : vector<8x1xf32> to vector<8x8xf32>
    %249 = arith.subf %245, %248 : vector<8x8xf32>
    %250 = math.exp %249 : vector<8x8xf32>
    %cst_177 = arith.constant dense<0.000000e+00> : vector<8xf32>
    %251 = vector.multi_reduction <add>, %250, %cst_177 [1] : vector<8x8xf32> to vector<8xf32>
    %252 = vector.shape_cast %251 : vector<8xf32> to vector<8x1xf32>
    %253 = tpu.reciprocal %252 {approx = true} : vector<8x1xf32> -> vector<8x1xf32>
    %254 = vector.broadcast %253 : vector<8x1xf32> to vector<8x8xf32>
    %255 = arith.mulf %250, %254 : vector<8x8xf32>
    %cst_178 = arith.constant dense<0.000000e+00> : vector<8x8xf32>
    %256 = tpu.matmul %255, %242, %cst_178 {dimension_numbers = #tpu.dot_dimension_numbers<[1], [0], [0], [1], [0, 0, 1, 1], [], []>} : vector<8x8xf32>, vector<8x8xf32>, vector<8x8xf32> -> vector<8x8xf32>
    %c0_179 = arith.constant 0 : index
    %c8_180 = arith.constant 8 : index
    %257 = vector.load %arg45[%c0_179, %c8_180] : memref<16x32xf32, #tpu.memory_space<vmem>>, vector<8x8xf32>
    tpu.vector_store %arg45[%c0_179, %c8_180], %256 {strides = array<i32>} : memref<16x32xf32, #tpu.memory_space<vmem>>, vector<8x8xf32>,
    %258 = vector.extract_strided_slice %221 {offsets = [0, 16], sizes = [8, 8], strides = [1, 1]} : vector<16x96xf32> to vector<8x8xf32>
    %259 = vector.extract_strided_slice %221 {offsets = [0, 48], sizes = [8, 8], strides = [1, 1]} : vector<16x96xf32> to vector<8x8xf32>
    %260 = vector.extract_strided_slice %221 {offsets = [0, 80], sizes = [8, 8], strides = [1, 1]} : vector<16x96xf32> to vector<8x8xf32>
    %cst_181 = arith.constant dense<0.000000e+00> : vector<8x8xf32>
    %261 = tpu.matmul %258, %259, %cst_181 {dimension_numbers = #tpu.dot_dimension_numbers<[1], [1], [0], [0], [0, 0, 1, 0], [], []>} : vector<8x8xf32>, vector<8x8xf32>, vector<8x8xf32> -> vector<8x8xf32>
    %cst_182 = arith.constant 0.353553385 : f32
    %262 = vector.broadcast %cst_182 : f32 to vector<8x8xf32>
    %263 = arith.mulf %261, %262 : vector<8x8xf32>
    %cst_183 = arith.constant dense<0xFF800000> : vector<8xf32>
    %264 = vector.multi_reduction <maximumf>, %263, %cst_183 [1] : vector<8x8xf32> to vector<8xf32>
    %265 = vector.shape_cast %264 : vector<8xf32> to vector<8x1xf32>
    %266 = vector.broadcast %265 : vector<8x1xf32> to vector<8x8xf32>
    %267 = arith.subf %263, %266 : vector<8x8xf32>
    %268 = math.exp %267 : vector<8x8xf32>
    %cst_184 = arith.constant dense<0.000000e+00> : vector<8xf32>
    %269 = vector.multi_reduction <add>, %268, %cst_184 [1] : vector<8x8xf32> to vector<8xf32>
    %270 = vector.shape_cast %269 : vector<8xf32> to vector<8x1xf32>
    %271 = tpu.reciprocal %270 {approx = true} : vector<8x1xf32> -> vector<8x1xf32>
    %272 = vector.broadcast %271 : vector<8x1xf32> to vector<8x8xf32>
    %273 = arith.mulf %268, %272 : vector<8x8xf32>
    %cst_185 = arith.constant dense<0.000000e+00> : vector<8x8xf32>
    %274 = tpu.matmul %273, %260, %cst_185 {dimension_numbers = #tpu.dot_dimension_numbers<[1], [0], [0], [1], [0, 0, 1, 1], [], []>} : vector<8x8xf32>, vector<8x8xf32>, vector<8x8xf32> -> vector<8x8xf32>
    %c0_186 = arith.constant 0 : index
    %c16 = arith.constant 16 : index
    %275 = vector.load %arg45[%c0_186, %c16] : memref<16x32xf32, #tpu.memory_space<vmem>>, vector<8x8xf32>
    tpu.vector_store %arg45[%c0_186, %c16], %274 {strides = array<i32>} : memref<16x32xf32, #tpu.memory_space<vmem>>, vector<8x8xf32>,
    %276 = vector.extract_strided_slice %221 {offsets = [0, 24], sizes = [8, 8], strides = [1, 1]} : vector<16x96xf32> to vector<8x8xf32>
    %277 = vector.extract_strided_slice %221 {offsets = [0, 56], sizes = [8, 8], strides = [1, 1]} : vector<16x96xf32> to vector<8x8xf32>
    %278 = vector.extract_strided_slice %221 {offsets = [0, 88], sizes = [8, 8], strides = [1, 1]} : vector<16x96xf32> to vector<8x8xf32>
    %cst_187 = arith.constant dense<0.000000e+00> : vector<8x8xf32>
    %279 = tpu.matmul %276, %277, %cst_187 {dimension_numbers = #tpu.dot_dimension_numbers<[1], [1], [0], [0], [0, 0, 1, 0], [], []>} : vector<8x8xf32>, vector<8x8xf32>, vector<8x8xf32> -> vector<8x8xf32>
    %cst_188 = arith.constant 0.353553385 : f32
    %280 = vector.broadcast %cst_188 : f32 to vector<8x8xf32>
    %281 = arith.mulf %279, %280 : vector<8x8xf32>
    %cst_189 = arith.constant dense<0xFF800000> : vector<8xf32>
    %282 = vector.multi_reduction <maximumf>, %281, %cst_189 [1] : vector<8x8xf32> to vector<8xf32>
    %283 = vector.shape_cast %282 : vector<8xf32> to vector<8x1xf32>
    %284 = vector.broadcast %283 : vector<8x1xf32> to vector<8x8xf32>
    %285 = arith.subf %281, %284 : vector<8x8xf32>
    %286 = math.exp %285 : vector<8x8xf32>
    %cst_190 = arith.constant dense<0.000000e+00> : vector<8xf32>
    %287 = vector.multi_reduction <add>, %286, %cst_190 [1] : vector<8x8xf32> to vector<8xf32>
    %288 = vector.shape_cast %287 : vector<8xf32> to vector<8x1xf32>
    %289 = tpu.reciprocal %288 {approx = true} : vector<8x1xf32> -> vector<8x1xf32>
    %290 = vector.broadcast %289 : vector<8x1xf32> to vector<8x8xf32>
    %291 = arith.mulf %286, %290 : vector<8x8xf32>
    %cst_191 = arith.constant dense<0.000000e+00> : vector<8x8xf32>
    %292 = tpu.matmul %291, %278, %cst_191 {dimension_numbers = #tpu.dot_dimension_numbers<[1], [0], [0], [1], [0, 0, 1, 1], [], []>} : vector<8x8xf32>, vector<8x8xf32>, vector<8x8xf32> -> vector<8x8xf32>
    %c0_192 = arith.constant 0 : index
    %c24 = arith.constant 24 : index
    %293 = vector.load %arg45[%c0_192, %c24] : memref<16x32xf32, #tpu.memory_space<vmem>>, vector<8x8xf32>
    tpu.vector_store %arg45[%c0_192, %c24], %292 {strides = array<i32>} : memref<16x32xf32, #tpu.memory_space<vmem>>, vector<8x8xf32>,
    %294 = vector.extract_strided_slice %221 {offsets = [8, 0], sizes = [8, 8], strides = [1, 1]} : vector<16x96xf32> to vector<8x8xf32>
    %295 = vector.extract_strided_slice %221 {offsets = [8, 32], sizes = [8, 8], strides = [1, 1]} : vector<16x96xf32> to vector<8x8xf32>
    %296 = vector.extract_strided_slice %221 {offsets = [8, 64], sizes = [8, 8], strides = [1, 1]} : vector<16x96xf32> to vector<8x8xf32>
    %cst_193 = arith.constant dense<0.000000e+00> : vector<8x8xf32>
    %297 = tpu.matmul %294, %295, %cst_193 {dimension_numbers = #tpu.dot_dimension_numbers<[1], [1], [0], [0], [0, 0, 1, 0], [], []>} : vector<8x8xf32>, vector<8x8xf32>, vector<8x8xf32> -> vector<8x8xf32>
    %cst_194 = arith.constant 0.353553385 : f32
    %298 = vector.broadcast %cst_194 : f32 to vector<8x8xf32>
    %299 = arith.mulf %297, %298 : vector<8x8xf32>
    %cst_195 = arith.constant dense<0xFF800000> : vector<8xf32>
    %300 = vector.multi_reduction <maximumf>, %299, %cst_195 [1] : vector<8x8xf32> to vector<8xf32>
    %301 = vector.shape_cast %300 : vector<8xf32> to vector<8x1xf32>
    %302 = vector.broadcast %301 : vector<8x1xf32> to vector<8x8xf32>
    %303 = arith.subf %299, %302 : vector<8x8xf32>
    %304 = math.exp %303 : vector<8x8xf32>
    %cst_196 = arith.constant dense<0.000000e+00> : vector<8xf32>
    %305 = vector.multi_reduction <add>, %304, %cst_196 [1] : vector<8x8xf32> to vector<8xf32>
    %306 = vector.shape_cast %305 : vector<8xf32> to vector<8x1xf32>
    %307 = tpu.reciprocal %306 {approx = true} : vector<8x1xf32> -> vector<8x1xf32>
    %308 = vector.broadcast %307 : vector<8x1xf32> to vector<8x8xf32>
    %309 = arith.mulf %304, %308 : vector<8x8xf32>
    %cst_197 = arith.constant dense<0.000000e+00> : vector<8x8xf32>
    %310 = tpu.matmul %309, %296, %cst_197 {dimension_numbers = #tpu.dot_dimension_numbers<[1], [0], [0], [1], [0, 0, 1, 1], [], []>} : vector<8x8xf32>, vector<8x8xf32>, vector<8x8xf32> -> vector<8x8xf32>
    %c8_198 = arith.constant 8 : index
    %c0_199 = arith.constant 0 : index
    %311 = vector.load %arg45[%c8_198, %c0_199] : memref<16x32xf32, #tpu.memory_space<vmem>>, vector<8x8xf32>
    tpu.vector_store %arg45[%c8_198, %c0_199], %310 {strides = array<i32>} : memref<16x32xf32, #tpu.memory_space<vmem>>, vector<8x8xf32>,
    %312 = vector.extract_strided_slice %221 {offsets = [8, 8], sizes = [8, 8], strides = [1, 1]} : vector<16x96xf32> to vector<8x8xf32>
    %313 = vector.extract_strided_slice %221 {offsets = [8, 40], sizes = [8, 8], strides = [1, 1]} : vector<16x96xf32> to vector<8x8xf32>
    %314 = vector.extract_strided_slice %221 {offsets = [8, 72], sizes = [8, 8], strides = [1, 1]} : vector<16x96xf32> to vector<8x8xf32>
    %cst_200 = arith.constant dense<0.000000e+00> : vector<8x8xf32>
    %315 = tpu.matmul %312, %313, %cst_200 {dimension_numbers = #tpu.dot_dimension_numbers<[1], [1], [0], [0], [0, 0, 1, 0], [], []>} : vector<8x8xf32>, vector<8x8xf32>, vector<8x8xf32> -> vector<8x8xf32>
    %cst_201 = arith.constant 0.353553385 : f32
    %316 = vector.broadcast %cst_201 : f32 to vector<8x8xf32>
    %317 = arith.mulf %315, %316 : vector<8x8xf32>
    %cst_202 = arith.constant dense<0xFF800000> : vector<8xf32>
    %318 = vector.multi_reduction <maximumf>, %317, %cst_202 [1] : vector<8x8xf32> to vector<8xf32>
    %319 = vector.shape_cast %318 : vector<8xf32> to vector<8x1xf32>
    %320 = vector.broadcast %319 : vector<8x1xf32> to vector<8x8xf32>
    %321 = arith.subf %317, %320 : vector<8x8xf32>
    %322 = math.exp %321 : vector<8x8xf32>
    %cst_203 = arith.constant dense<0.000000e+00> : vector<8xf32>
    %323 = vector.multi_reduction <add>, %322, %cst_203 [1] : vector<8x8xf32> to vector<8xf32>
    %324 = vector.shape_cast %323 : vector<8xf32> to vector<8x1xf32>
    %325 = tpu.reciprocal %324 {approx = true} : vector<8x1xf32> -> vector<8x1xf32>
    %326 = vector.broadcast %325 : vector<8x1xf32> to vector<8x8xf32>
    %327 = arith.mulf %322, %326 : vector<8x8xf32>
    %cst_204 = arith.constant dense<0.000000e+00> : vector<8x8xf32>
    %328 = tpu.matmul %327, %314, %cst_204 {dimension_numbers = #tpu.dot_dimension_numbers<[1], [0], [0], [1], [0, 0, 1, 1], [], []>} : vector<8x8xf32>, vector<8x8xf32>, vector<8x8xf32> -> vector<8x8xf32>
    %c8_205 = arith.constant 8 : index
    %c8_206 = arith.constant 8 : index
    %329 = vector.load %arg45[%c8_205, %c8_206] : memref<16x32xf32, #tpu.memory_space<vmem>>, vector<8x8xf32>
    tpu.vector_store %arg45[%c8_205, %c8_206], %328 {strides = array<i32>} : memref<16x32xf32, #tpu.memory_space<vmem>>, vector<8x8xf32>,
    %330 = vector.extract_strided_slice %221 {offsets = [8, 16], sizes = [8, 8], strides = [1, 1]} : vector<16x96xf32> to vector<8x8xf32>
    %331 = vector.extract_strided_slice %221 {offsets = [8, 48], sizes = [8, 8], strides = [1, 1]} : vector<16x96xf32> to vector<8x8xf32>
    %332 = vector.extract_strided_slice %221 {offsets = [8, 80], sizes = [8, 8], strides = [1, 1]} : vector<16x96xf32> to vector<8x8xf32>
    %cst_207 = arith.constant dense<0.000000e+00> : vector<8x8xf32>
    %333 = tpu.matmul %330, %331, %cst_207 {dimension_numbers = #tpu.dot_dimension_numbers<[1], [1], [0], [0], [0, 0, 1, 0], [], []>} : vector<8x8xf32>, vector<8x8xf32>, vector<8x8xf32> -> vector<8x8xf32>
    %cst_208 = arith.constant 0.353553385 : f32
    %334 = vector.broadcast %cst_208 : f32 to vector<8x8xf32>
    %335 = arith.mulf %333, %334 : vector<8x8xf32>
    %cst_209 = arith.constant dense<0xFF800000> : vector<8xf32>
    %336 = vector.multi_reduction <maximumf>, %335, %cst_209 [1] : vector<8x8xf32> to vector<8xf32>
    %337 = vector.shape_cast %336 : vector<8xf32> to vector<8x1xf32>
    %338 = vector.broadcast %337 : vector<8x1xf32> to vector<8x8xf32>
    %339 = arith.subf %335, %338 : vector<8x8xf32>
    %340 = math.exp %339 : vector<8x8xf32>
    %cst_210 = arith.constant dense<0.000000e+00> : vector<8xf32>
    %341 = vector.multi_reduction <add>, %340, %cst_210 [1] : vector<8x8xf32> to vector<8xf32>
    %342 = vector.shape_cast %341 : vector<8xf32> to vector<8x1xf32>
    %343 = tpu.reciprocal %342 {approx = true} : vector<8x1xf32> -> vector<8x1xf32>
    %344 = vector.broadcast %343 : vector<8x1xf32> to vector<8x8xf32>
    %345 = arith.mulf %340, %344 : vector<8x8xf32>
    %cst_211 = arith.constant dense<0.000000e+00> : vector<8x8xf32>
    %346 = tpu.matmul %345, %332, %cst_211 {dimension_numbers = #tpu.dot_dimension_numbers<[1], [0], [0], [1], [0, 0, 1, 1], [], []>} : vector<8x8xf32>, vector<8x8xf32>, vector<8x8xf32> -> vector<8x8xf32>
    %c8_212 = arith.constant 8 : index
    %c16_213 = arith.constant 16 : index
    %347 = vector.load %arg45[%c8_212, %c16_213] : memref<16x32xf32, #tpu.memory_space<vmem>>, vector<8x8xf32>
    tpu.vector_store %arg45[%c8_212, %c16_213], %346 {strides = array<i32>} : memref<16x32xf32, #tpu.memory_space<vmem>>, vector<8x8xf32>,
    %348 = vector.extract_strided_slice %221 {offsets = [8, 24], sizes = [8, 8], strides = [1, 1]} : vector<16x96xf32> to vector<8x8xf32>
    %349 = vector.extract_strided_slice %221 {offsets = [8, 56], sizes = [8, 8], strides = [1, 1]} : vector<16x96xf32> to vector<8x8xf32>
    %350 = vector.extract_strided_slice %221 {offsets = [8, 88], sizes = [8, 8], strides = [1, 1]} : vector<16x96xf32> to vector<8x8xf32>
    %cst_214 = arith.constant dense<0.000000e+00> : vector<8x8xf32>
    %351 = tpu.matmul %348, %349, %cst_214 {dimension_numbers = #tpu.dot_dimension_numbers<[1], [1], [0], [0], [0, 0, 1, 0], [], []>} : vector<8x8xf32>, vector<8x8xf32>, vector<8x8xf32> -> vector<8x8xf32>
    %cst_215 = arith.constant 0.353553385 : f32
    %352 = vector.broadcast %cst_215 : f32 to vector<8x8xf32>
    %353 = arith.mulf %351, %352 : vector<8x8xf32>
    %cst_216 = arith.constant dense<0xFF800000> : vector<8xf32>
    %354 = vector.multi_reduction <maximumf>, %353, %cst_216 [1] : vector<8x8xf32> to vector<8xf32>
    %355 = vector.shape_cast %354 : vector<8xf32> to vector<8x1xf32>
    %356 = vector.broadcast %355 : vector<8x1xf32> to vector<8x8xf32>
    %357 = arith.subf %353, %356 : vector<8x8xf32>
    %358 = math.exp %357 : vector<8x8xf32>
    %cst_217 = arith.constant dense<0.000000e+00> : vector<8xf32>
    %359 = vector.multi_reduction <add>, %358, %cst_217 [1] : vector<8x8xf32> to vector<8xf32>
    %360 = vector.shape_cast %359 : vector<8xf32> to vector<8x1xf32>
    %361 = tpu.reciprocal %360 {approx = true} : vector<8x1xf32> -> vector<8x1xf32>
    %362 = vector.broadcast %361 : vector<8x1xf32> to vector<8x8xf32>
    %363 = arith.mulf %358, %362 : vector<8x8xf32>
    %cst_218 = arith.constant dense<0.000000e+00> : vector<8x8xf32>
    %364 = tpu.matmul %363, %350, %cst_218 {dimension_numbers = #tpu.dot_dimension_numbers<[1], [0], [0], [1], [0, 0, 1, 1], [], []>} : vector<8x8xf32>, vector<8x8xf32>, vector<8x8xf32> -> vector<8x8xf32>
    %c8_219 = arith.constant 8 : index
    %c24_220 = arith.constant 24 : index
    %365 = vector.load %arg45[%c8_219, %c24_220] : memref<16x32xf32, #tpu.memory_space<vmem>>, vector<8x8xf32>
    tpu.vector_store %arg45[%c8_219, %c24_220], %364 {strides = array<i32>} : memref<16x32xf32, #tpu.memory_space<vmem>>, vector<8x8xf32>,
    %c0_221 = arith.constant 0 : index
    %c0_222 = arith.constant 0 : index
    %366 = vector.load %arg45[%c0_221, %c0_222] : memref<16x32xf32, #tpu.memory_space<vmem>>, vector<16x32xf32>
    %c0_223 = arith.constant 0 : index
    %c0_224 = arith.constant 0 : index
    %367 = vector.load %arg24[%c0_223, %c0_224] : memref<32x32xf32, #tpu.memory_space<vmem>>, vector<32x32xf32>
    %cst_225 = arith.constant dense<0.000000e+00> : vector<16x32xf32>
    %368 = tpu.matmul %366, %367, %cst_225 {dimension_numbers = #tpu.dot_dimension_numbers<[1], [0], [0], [1], [0, 0, 1, 1], [], []>} : vector<16x32xf32>, vector<32x32xf32>, vector<16x32xf32> -> vector<16x32xf32>
    %c0_226 = arith.constant 0 : index
    %c0_227 = arith.constant 0 : index
    %369 = vector.load %arg16[%c0_226, %c0_227] : memref<1x32xf32, #tpu.memory_space<vmem>>, vector<1x32xf32>
    %370 = vector.broadcast %369 : vector<1x32xf32> to vector<16x32xf32>
    %371 = arith.addf %368, %370 : vector<16x32xf32>
    %372 = arith.addf %192, %371 : vector<16x32xf32>
    %c0_228 = arith.constant 0 : index
    %c0_229 = arith.constant 0 : index
    %373 = vector.load %arg21[%c0_228, %c0_229] : memref<1x32xf32, #tpu.memory_space<vmem>>, vector<1x32xf32>
    %c0_230 = arith.constant 0 : index
    %c0_231 = arith.constant 0 : index
    %374 = vector.load %arg20[%c0_230, %c0_231] : memref<1x32xf32, #tpu.memory_space<vmem>>, vector<1x32xf32>
    %cst_232 = arith.constant dense<0.000000e+00> : vector<16xf32>
    %375 = vector.multi_reduction <add>, %372, %cst_232 [1] : vector<16x32xf32> to vector<16xf32>
    %376 = vector.shape_cast %375 : vector<16xf32> to vector<16x1xf32>
    %cst_233 = arith.constant 3.200000e+01 : f32
    %377 = vector.broadcast %cst_233 : f32 to vector<16x1xf32>
    %378 = arith.divf %376, %377 : vector<16x1xf32>
    %379 = vector.broadcast %378 : vector<16x1xf32> to vector<16x32xf32>
    %380 = arith.subf %372, %379 : vector<16x32xf32>
    %381 = arith.mulf %380, %380 : vector<16x32xf32>
    %cst_234 = arith.constant dense<0.000000e+00> : vector<16xf32>
    %382 = vector.multi_reduction <add>, %381, %cst_234 [1] : vector<16x32xf32> to vector<16xf32>
    %383 = vector.shape_cast %382 : vector<16xf32> to vector<16x1xf32>
    %cst_235 = arith.constant 3.200000e+01 : f32
    %384 = vector.broadcast %cst_235 : f32 to vector<16x1xf32>
    %385 = arith.divf %383, %384 : vector<16x1xf32>
    %386 = vector.broadcast %378 : vector<16x1xf32> to vector<16x32xf32>
    %387 = arith.subf %372, %386 : vector<16x32xf32>
    %cst_236 = arith.constant 9.99999974E-6 : f32
    %388 = vector.broadcast %cst_236 : f32 to vector<16x1xf32>
    %389 = arith.addf %385, %388 : vector<16x1xf32>
    %390 = math.rsqrt %389 : vector<16x1xf32>
    %391 = vector.broadcast %390 : vector<16x1xf32> to vector<16x32xf32>
    %392 = arith.mulf %387, %391 : vector<16x32xf32>
    %393 = vector.broadcast %373 : vector<1x32xf32> to vector<16x32xf32>
    %394 = arith.mulf %392, %393 : vector<16x32xf32>
    %395 = vector.broadcast %374 : vector<1x32xf32> to vector<16x32xf32>
    %396 = arith.addf %394, %395 : vector<16x32xf32>
    %c0_237 = arith.constant 0 : index
    %c0_238 = arith.constant 0 : index
    %397 = vector.load %arg22[%c0_237, %c0_238] : memref<32x64xf32, #tpu.memory_space<vmem>>, vector<32x64xf32>
    %cst_239 = arith.constant dense<0.000000e+00> : vector<16x64xf32>
    %398 = tpu.matmul %396, %397, %cst_239 {dimension_numbers = #tpu.dot_dimension_numbers<[1], [0], [0], [1], [0, 0, 1, 1], [], []>} : vector<16x32xf32>, vector<32x64xf32>, vector<16x64xf32> -> vector<16x64xf32>
    %c0_240 = arith.constant 0 : index
    %c0_241 = arith.constant 0 : index
    %399 = vector.load %arg14[%c0_240, %c0_241] : memref<1x64xf32, #tpu.memory_space<vmem>>, vector<1x64xf32>
    %400 = vector.broadcast %399 : vector<1x64xf32> to vector<16x64xf32>
    %401 = arith.addf %398, %400 : vector<16x64xf32>
    %cst_242 = arith.constant 0.000000e+00 : f32
    %402 = vector.broadcast %cst_242 : f32 to vector<16x64xf32>
    %403 = arith.maximumf %401, %402 : vector<16x64xf32>
    %c0_243 = arith.constant 0 : index
    %c0_244 = arith.constant 0 : index
    %404 = vector.load %arg23[%c0_243, %c0_244] : memref<64x32xf32, #tpu.memory_space<vmem>>, vector<64x32xf32>
    %cst_245 = arith.constant dense<0.000000e+00> : vector<16x32xf32>
    %405 = tpu.matmul %403, %404, %cst_245 {dimension_numbers = #tpu.dot_dimension_numbers<[1], [0], [0], [1], [0, 0, 1, 1], [], []>} : vector<16x64xf32>, vector<64x32xf32>, vector<16x32xf32> -> vector<16x32xf32>
    %c0_246 = arith.constant 0 : index
    %c0_247 = arith.constant 0 : index
    %406 = vector.load %arg15[%c0_246, %c0_247] : memref<1x32xf32, #tpu.memory_space<vmem>>, vector<1x32xf32>
    %407 = vector.broadcast %406 : vector<1x32xf32> to vector<16x32xf32>
    %408 = arith.addf %405, %407 : vector<16x32xf32>
    %409 = arith.addf %372, %408 : vector<16x32xf32>
    %c0_248 = arith.constant 0 : index
    %c0_249 = arith.constant 0 : index
    %410 = vector.load %arg31[%c0_248, %c0_249] : memref<1x32xf32, #tpu.memory_space<vmem>>, vector<1x32xf32>
    %c0_250 = arith.constant 0 : index
    %c0_251 = arith.constant 0 : index
    %411 = vector.load %arg30[%c0_250, %c0_251] : memref<1x32xf32, #tpu.memory_space<vmem>>, vector<1x32xf32>
    %cst_252 = arith.constant dense<0.000000e+00> : vector<16xf32>
    %412 = vector.multi_reduction <add>, %409, %cst_252 [1] : vector<16x32xf32> to vector<16xf32>
    %413 = vector.shape_cast %412 : vector<16xf32> to vector<16x1xf32>
    %cst_253 = arith.constant 3.200000e+01 : f32
    %414 = vector.broadcast %cst_253 : f32 to vector<16x1xf32>
    %415 = arith.divf %413, %414 : vector<16x1xf32>
    %416 = vector.broadcast %415 : vector<16x1xf32> to vector<16x32xf32>
    %417 = arith.subf %409, %416 : vector<16x32xf32>
    %418 = arith.mulf %417, %417 : vector<16x32xf32>
    %cst_254 = arith.constant dense<0.000000e+00> : vector<16xf32>
    %419 = vector.multi_reduction <add>, %418, %cst_254 [1] : vector<16x32xf32> to vector<16xf32>
    %420 = vector.shape_cast %419 : vector<16xf32> to vector<16x1xf32>
    %cst_255 = arith.constant 3.200000e+01 : f32
    %421 = vector.broadcast %cst_255 : f32 to vector<16x1xf32>
    %422 = arith.divf %420, %421 : vector<16x1xf32>
    %423 = vector.broadcast %415 : vector<16x1xf32> to vector<16x32xf32>
    %424 = arith.subf %409, %423 : vector<16x32xf32>
    %cst_256 = arith.constant 9.99999974E-6 : f32
    %425 = vector.broadcast %cst_256 : f32 to vector<16x1xf32>
    %426 = arith.addf %422, %425 : vector<16x1xf32>
    %427 = math.rsqrt %426 : vector<16x1xf32>
    %428 = vector.broadcast %427 : vector<16x1xf32> to vector<16x32xf32>
    %429 = arith.mulf %424, %428 : vector<16x32xf32>
    %430 = vector.broadcast %410 : vector<1x32xf32> to vector<16x32xf32>
    %431 = arith.mulf %429, %430 : vector<16x32xf32>
    %432 = vector.broadcast %411 : vector<1x32xf32> to vector<16x32xf32>
    %433 = arith.addf %431, %432 : vector<16x32xf32>
    %c0_257 = arith.constant 0 : index
    %c0_258 = arith.constant 0 : index
    %434 = vector.load %arg37[%c0_257, %c0_258] : memref<32x96xf32, #tpu.memory_space<vmem>>, vector<32x96xf32>
    %cst_259 = arith.constant dense<0.000000e+00> : vector<16x96xf32>
    %435 = tpu.matmul %433, %434, %cst_259 {dimension_numbers = #tpu.dot_dimension_numbers<[1], [0], [0], [1], [0, 0, 1, 1], [], []>} : vector<16x32xf32>, vector<32x96xf32>, vector<16x96xf32> -> vector<16x96xf32>
    %c0_260 = arith.constant 0 : index
    %c0_261 = arith.constant 0 : index
    %436 = vector.load %arg29[%c0_260, %c0_261] : memref<1x96xf32, #tpu.memory_space<vmem>>, vector<1x96xf32>
    %437 = vector.broadcast %436 : vector<1x96xf32> to vector<16x96xf32>
    %438 = arith.addf %435, %437 : vector<16x96xf32>
    %439 = vector.extract_strided_slice %438 {offsets = [0, 0], sizes = [8, 8], strides = [1, 1]} : vector<16x96xf32> to vector<8x8xf32>
    %440 = vector.extract_strided_slice %438 {offsets = [0, 32], sizes = [8, 8], strides = [1, 1]} : vector<16x96xf32> to vector<8x8xf32>
    %441 = vector.extract_strided_slice %438 {offsets = [0, 64], sizes = [8, 8], strides = [1, 1]} : vector<16x96xf32> to vector<8x8xf32>
    %cst_262 = arith.constant dense<0.000000e+00> : vector<8x8xf32>
    %442 = tpu.matmul %439, %440, %cst_262 {dimension_numbers = #tpu.dot_dimension_numbers<[1], [1], [0], [0], [0, 0, 1, 0], [], []>} : vector<8x8xf32>, vector<8x8xf32>, vector<8x8xf32> -> vector<8x8xf32>
    %cst_263 = arith.constant 0.353553385 : f32
    %443 = vector.broadcast %cst_263 : f32 to vector<8x8xf32>
    %444 = arith.mulf %442, %443 : vector<8x8xf32>
    %cst_264 = arith.constant dense<0xFF800000> : vector<8xf32>
    %445 = vector.multi_reduction <maximumf>, %444, %cst_264 [1] : vector<8x8xf32> to vector<8xf32>
    %446 = vector.shape_cast %445 : vector<8xf32> to vector<8x1xf32>
    %447 = vector.broadcast %446 : vector<8x1xf32> to vector<8x8xf32>
    %448 = arith.subf %444, %447 : vector<8x8xf32>
    %449 = math.exp %448 : vector<8x8xf32>
    %cst_265 = arith.constant dense<0.000000e+00> : vector<8xf32>
    %450 = vector.multi_reduction <add>, %449, %cst_265 [1] : vector<8x8xf32> to vector<8xf32>
    %451 = vector.shape_cast %450 : vector<8xf32> to vector<8x1xf32>
    %452 = tpu.reciprocal %451 {approx = true} : vector<8x1xf32> -> vector<8x1xf32>
    %453 = vector.broadcast %452 : vector<8x1xf32> to vector<8x8xf32>
    %454 = arith.mulf %449, %453 : vector<8x8xf32>
    %cst_266 = arith.constant dense<0.000000e+00> : vector<8x8xf32>
    %455 = tpu.matmul %454, %441, %cst_266 {dimension_numbers = #tpu.dot_dimension_numbers<[1], [0], [0], [1], [0, 0, 1, 1], [], []>} : vector<8x8xf32>, vector<8x8xf32>, vector<8x8xf32> -> vector<8x8xf32>
    %c0_267 = arith.constant 0 : index
    %c0_268 = arith.constant 0 : index
    %456 = vector.load %arg45[%c0_267, %c0_268] : memref<16x32xf32, #tpu.memory_space<vmem>>, vector<8x8xf32>
    tpu.vector_store %arg45[%c0_267, %c0_268], %455 {strides = array<i32>} : memref<16x32xf32, #tpu.memory_space<vmem>>, vector<8x8xf32>,
    %457 = vector.extract_strided_slice %438 {offsets = [0, 8], sizes = [8, 8], strides = [1, 1]} : vector<16x96xf32> to vector<8x8xf32>
    %458 = vector.extract_strided_slice %438 {offsets = [0, 40], sizes = [8, 8], strides = [1, 1]} : vector<16x96xf32> to vector<8x8xf32>
    %459 = vector.extract_strided_slice %438 {offsets = [0, 72], sizes = [8, 8], strides = [1, 1]} : vector<16x96xf32> to vector<8x8xf32>
    %cst_269 = arith.constant dense<0.000000e+00> : vector<8x8xf32>
    %460 = tpu.matmul %457, %458, %cst_269 {dimension_numbers = #tpu.dot_dimension_numbers<[1], [1], [0], [0], [0, 0, 1, 0], [], []>} : vector<8x8xf32>, vector<8x8xf32>, vector<8x8xf32> -> vector<8x8xf32>
    %cst_270 = arith.constant 0.353553385 : f32
    %461 = vector.broadcast %cst_270 : f32 to vector<8x8xf32>
    %462 = arith.mulf %460, %461 : vector<8x8xf32>
    %cst_271 = arith.constant dense<0xFF800000> : vector<8xf32>
    %463 = vector.multi_reduction <maximumf>, %462, %cst_271 [1] : vector<8x8xf32> to vector<8xf32>
    %464 = vector.shape_cast %463 : vector<8xf32> to vector<8x1xf32>
    %465 = vector.broadcast %464 : vector<8x1xf32> to vector<8x8xf32>
    %466 = arith.subf %462, %465 : vector<8x8xf32>
    %467 = math.exp %466 : vector<8x8xf32>
    %cst_272 = arith.constant dense<0.000000e+00> : vector<8xf32>
    %468 = vector.multi_reduction <add>, %467, %cst_272 [1] : vector<8x8xf32> to vector<8xf32>
    %469 = vector.shape_cast %468 : vector<8xf32> to vector<8x1xf32>
    %470 = tpu.reciprocal %469 {approx = true} : vector<8x1xf32> -> vector<8x1xf32>
    %471 = vector.broadcast %470 : vector<8x1xf32> to vector<8x8xf32>
    %472 = arith.mulf %467, %471 : vector<8x8xf32>
    %cst_273 = arith.constant dense<0.000000e+00> : vector<8x8xf32>
    %473 = tpu.matmul %472, %459, %cst_273 {dimension_numbers = #tpu.dot_dimension_numbers<[1], [0], [0], [1], [0, 0, 1, 1], [], []>} : vector<8x8xf32>, vector<8x8xf32>, vector<8x8xf32> -> vector<8x8xf32>
    %c0_274 = arith.constant 0 : index
    %c8_275 = arith.constant 8 : index
    %474 = vector.load %arg45[%c0_274, %c8_275] : memref<16x32xf32, #tpu.memory_space<vmem>>, vector<8x8xf32>
    tpu.vector_store %arg45[%c0_274, %c8_275], %473 {strides = array<i32>} : memref<16x32xf32, #tpu.memory_space<vmem>>, vector<8x8xf32>,
    %475 = vector.extract_strided_slice %438 {offsets = [0, 16], sizes = [8, 8], strides = [1, 1]} : vector<16x96xf32> to vector<8x8xf32>
    %476 = vector.extract_strided_slice %438 {offsets = [0, 48], sizes = [8, 8], strides = [1, 1]} : vector<16x96xf32> to vector<8x8xf32>
    %477 = vector.extract_strided_slice %438 {offsets = [0, 80], sizes = [8, 8], strides = [1, 1]} : vector<16x96xf32> to vector<8x8xf32>
    %cst_276 = arith.constant dense<0.000000e+00> : vector<8x8xf32>
    %478 = tpu.matmul %475, %476, %cst_276 {dimension_numbers = #tpu.dot_dimension_numbers<[1], [1], [0], [0], [0, 0, 1, 0], [], []>} : vector<8x8xf32>, vector<8x8xf32>, vector<8x8xf32> -> vector<8x8xf32>
    %cst_277 = arith.constant 0.353553385 : f32
    %479 = vector.broadcast %cst_277 : f32 to vector<8x8xf32>
    %480 = arith.mulf %478, %479 : vector<8x8xf32>
    %cst_278 = arith.constant dense<0xFF800000> : vector<8xf32>
    %481 = vector.multi_reduction <maximumf>, %480, %cst_278 [1] : vector<8x8xf32> to vector<8xf32>
    %482 = vector.shape_cast %481 : vector<8xf32> to vector<8x1xf32>
    %483 = vector.broadcast %482 : vector<8x1xf32> to vector<8x8xf32>
    %484 = arith.subf %480, %483 : vector<8x8xf32>
    %485 = math.exp %484 : vector<8x8xf32>
    %cst_279 = arith.constant dense<0.000000e+00> : vector<8xf32>
    %486 = vector.multi_reduction <add>, %485, %cst_279 [1] : vector<8x8xf32> to vector<8xf32>
    %487 = vector.shape_cast %486 : vector<8xf32> to vector<8x1xf32>
    %488 = tpu.reciprocal %487 {approx = true} : vector<8x1xf32> -> vector<8x1xf32>
    %489 = vector.broadcast %488 : vector<8x1xf32> to vector<8x8xf32>
    %490 = arith.mulf %485, %489 : vector<8x8xf32>
    %cst_280 = arith.constant dense<0.000000e+00> : vector<8x8xf32>
    %491 = tpu.matmul %490, %477, %cst_280 {dimension_numbers = #tpu.dot_dimension_numbers<[1], [0], [0], [1], [0, 0, 1, 1], [], []>} : vector<8x8xf32>, vector<8x8xf32>, vector<8x8xf32> -> vector<8x8xf32>
    %c0_281 = arith.constant 0 : index
    %c16_282 = arith.constant 16 : index
    %492 = vector.load %arg45[%c0_281, %c16_282] : memref<16x32xf32, #tpu.memory_space<vmem>>, vector<8x8xf32>
    tpu.vector_store %arg45[%c0_281, %c16_282], %491 {strides = array<i32>} : memref<16x32xf32, #tpu.memory_space<vmem>>, vector<8x8xf32>,
    %493 = vector.extract_strided_slice %438 {offsets = [0, 24], sizes = [8, 8], strides = [1, 1]} : vector<16x96xf32> to vector<8x8xf32>
    %494 = vector.extract_strided_slice %438 {offsets = [0, 56], sizes = [8, 8], strides = [1, 1]} : vector<16x96xf32> to vector<8x8xf32>
    %495 = vector.extract_strided_slice %438 {offsets = [0, 88], sizes = [8, 8], strides = [1, 1]} : vector<16x96xf32> to vector<8x8xf32>
    %cst_283 = arith.constant dense<0.000000e+00> : vector<8x8xf32>
    %496 = tpu.matmul %493, %494, %cst_283 {dimension_numbers = #tpu.dot_dimension_numbers<[1], [1], [0], [0], [0, 0, 1, 0], [], []>} : vector<8x8xf32>, vector<8x8xf32>, vector<8x8xf32> -> vector<8x8xf32>
    %cst_284 = arith.constant 0.353553385 : f32
    %497 = vector.broadcast %cst_284 : f32 to vector<8x8xf32>
    %498 = arith.mulf %496, %497 : vector<8x8xf32>
    %cst_285 = arith.constant dense<0xFF800000> : vector<8xf32>
    %499 = vector.multi_reduction <maximumf>, %498, %cst_285 [1] : vector<8x8xf32> to vector<8xf32>
    %500 = vector.shape_cast %499 : vector<8xf32> to vector<8x1xf32>
    %501 = vector.broadcast %500 : vector<8x1xf32> to vector<8x8xf32>
    %502 = arith.subf %498, %501 : vector<8x8xf32>
    %503 = math.exp %502 : vector<8x8xf32>
    %cst_286 = arith.constant dense<0.000000e+00> : vector<8xf32>
    %504 = vector.multi_reduction <add>, %503, %cst_286 [1] : vector<8x8xf32> to vector<8xf32>
    %505 = vector.shape_cast %504 : vector<8xf32> to vector<8x1xf32>
    %506 = tpu.reciprocal %505 {approx = true} : vector<8x1xf32> -> vector<8x1xf32>
    %507 = vector.broadcast %506 : vector<8x1xf32> to vector<8x8xf32>
    %508 = arith.mulf %503, %507 : vector<8x8xf32>
    %cst_287 = arith.constant dense<0.000000e+00> : vector<8x8xf32>
    %509 = tpu.matmul %508, %495, %cst_287 {dimension_numbers = #tpu.dot_dimension_numbers<[1], [0], [0], [1], [0, 0, 1, 1], [], []>} : vector<8x8xf32>, vector<8x8xf32>, vector<8x8xf32> -> vector<8x8xf32>
    %c0_288 = arith.constant 0 : index
    %c24_289 = arith.constant 24 : index
    %510 = vector.load %arg45[%c0_288, %c24_289] : memref<16x32xf32, #tpu.memory_space<vmem>>, vector<8x8xf32>
    tpu.vector_store %arg45[%c0_288, %c24_289], %509 {strides = array<i32>} : memref<16x32xf32, #tpu.memory_space<vmem>>, vector<8x8xf32>,
    %511 = vector.extract_strided_slice %438 {offsets = [8, 0], sizes = [8, 8], strides = [1, 1]} : vector<16x96xf32> to vector<8x8xf32>
    %512 = vector.extract_strided_slice %438 {offsets = [8, 32], sizes = [8, 8], strides = [1, 1]} : vector<16x96xf32> to vector<8x8xf32>
    %513 = vector.extract_strided_slice %438 {offsets = [8, 64], sizes = [8, 8], strides = [1, 1]} : vector<16x96xf32> to vector<8x8xf32>
    %cst_290 = arith.constant dense<0.000000e+00> : vector<8x8xf32>
    %514 = tpu.matmul %511, %512, %cst_290 {dimension_numbers = #tpu.dot_dimension_numbers<[1], [1], [0], [0], [0, 0, 1, 0], [], []>} : vector<8x8xf32>, vector<8x8xf32>, vector<8x8xf32> -> vector<8x8xf32>
    %cst_291 = arith.constant 0.353553385 : f32
    %515 = vector.broadcast %cst_291 : f32 to vector<8x8xf32>
    %516 = arith.mulf %514, %515 : vector<8x8xf32>
    %cst_292 = arith.constant dense<0xFF800000> : vector<8xf32>
    %517 = vector.multi_reduction <maximumf>, %516, %cst_292 [1] : vector<8x8xf32> to vector<8xf32>
    %518 = vector.shape_cast %517 : vector<8xf32> to vector<8x1xf32>
    %519 = vector.broadcast %518 : vector<8x1xf32> to vector<8x8xf32>
    %520 = arith.subf %516, %519 : vector<8x8xf32>
    %521 = math.exp %520 : vector<8x8xf32>
    %cst_293 = arith.constant dense<0.000000e+00> : vector<8xf32>
    %522 = vector.multi_reduction <add>, %521, %cst_293 [1] : vector<8x8xf32> to vector<8xf32>
    %523 = vector.shape_cast %522 : vector<8xf32> to vector<8x1xf32>
    %524 = tpu.reciprocal %523 {approx = true} : vector<8x1xf32> -> vector<8x1xf32>
    %525 = vector.broadcast %524 : vector<8x1xf32> to vector<8x8xf32>
    %526 = arith.mulf %521, %525 : vector<8x8xf32>
    %cst_294 = arith.constant dense<0.000000e+00> : vector<8x8xf32>
    %527 = tpu.matmul %526, %513, %cst_294 {dimension_numbers = #tpu.dot_dimension_numbers<[1], [0], [0], [1], [0, 0, 1, 1], [], []>} : vector<8x8xf32>, vector<8x8xf32>, vector<8x8xf32> -> vector<8x8xf32>
    %c8_295 = arith.constant 8 : index
    %c0_296 = arith.constant 0 : index
    %528 = vector.load %arg45[%c8_295, %c0_296] : memref<16x32xf32, #tpu.memory_space<vmem>>, vector<8x8xf32>
    tpu.vector_store %arg45[%c8_295, %c0_296], %527 {strides = array<i32>} : memref<16x32xf32, #tpu.memory_space<vmem>>, vector<8x8xf32>,
    %529 = vector.extract_strided_slice %438 {offsets = [8, 8], sizes = [8, 8], strides = [1, 1]} : vector<16x96xf32> to vector<8x8xf32>
    %530 = vector.extract_strided_slice %438 {offsets = [8, 40], sizes = [8, 8], strides = [1, 1]} : vector<16x96xf32> to vector<8x8xf32>
    %531 = vector.extract_strided_slice %438 {offsets = [8, 72], sizes = [8, 8], strides = [1, 1]} : vector<16x96xf32> to vector<8x8xf32>
    %cst_297 = arith.constant dense<0.000000e+00> : vector<8x8xf32>
    %532 = tpu.matmul %529, %530, %cst_297 {dimension_numbers = #tpu.dot_dimension_numbers<[1], [1], [0], [0], [0, 0, 1, 0], [], []>} : vector<8x8xf32>, vector<8x8xf32>, vector<8x8xf32> -> vector<8x8xf32>
    %cst_298 = arith.constant 0.353553385 : f32
    %533 = vector.broadcast %cst_298 : f32 to vector<8x8xf32>
    %534 = arith.mulf %532, %533 : vector<8x8xf32>
    %cst_299 = arith.constant dense<0xFF800000> : vector<8xf32>
    %535 = vector.multi_reduction <maximumf>, %534, %cst_299 [1] : vector<8x8xf32> to vector<8xf32>
    %536 = vector.shape_cast %535 : vector<8xf32> to vector<8x1xf32>
    %537 = vector.broadcast %536 : vector<8x1xf32> to vector<8x8xf32>
    %538 = arith.subf %534, %537 : vector<8x8xf32>
    %539 = math.exp %538 : vector<8x8xf32>
    %cst_300 = arith.constant dense<0.000000e+00> : vector<8xf32>
    %540 = vector.multi_reduction <add>, %539, %cst_300 [1] : vector<8x8xf32> to vector<8xf32>
    %541 = vector.shape_cast %540 : vector<8xf32> to vector<8x1xf32>
    %542 = tpu.reciprocal %541 {approx = true} : vector<8x1xf32> -> vector<8x1xf32>
    %543 = vector.broadcast %542 : vector<8x1xf32> to vector<8x8xf32>
    %544 = arith.mulf %539, %543 : vector<8x8xf32>
    %cst_301 = arith.constant dense<0.000000e+00> : vector<8x8xf32>
    %545 = tpu.matmul %544, %531, %cst_301 {dimension_numbers = #tpu.dot_dimension_numbers<[1], [0], [0], [1], [0, 0, 1, 1], [], []>} : vector<8x8xf32>, vector<8x8xf32>, vector<8x8xf32> -> vector<8x8xf32>
    %c8_302 = arith.constant 8 : index
    %c8_303 = arith.constant 8 : index
    %546 = vector.load %arg45[%c8_302, %c8_303] : memref<16x32xf32, #tpu.memory_space<vmem>>, vector<8x8xf32>
    tpu.vector_store %arg45[%c8_302, %c8_303], %545 {strides = array<i32>} : memref<16x32xf32, #tpu.memory_space<vmem>>, vector<8x8xf32>,
    %547 = vector.extract_strided_slice %438 {offsets = [8, 16], sizes = [8, 8], strides = [1, 1]} : vector<16x96xf32> to vector<8x8xf32>
    %548 = vector.extract_strided_slice %438 {offsets = [8, 48], sizes = [8, 8], strides = [1, 1]} : vector<16x96xf32> to vector<8x8xf32>
    %549 = vector.extract_strided_slice %438 {offsets = [8, 80], sizes = [8, 8], strides = [1, 1]} : vector<16x96xf32> to vector<8x8xf32>
    %cst_304 = arith.constant dense<0.000000e+00> : vector<8x8xf32>
    %550 = tpu.matmul %547, %548, %cst_304 {dimension_numbers = #tpu.dot_dimension_numbers<[1], [1], [0], [0], [0, 0, 1, 0], [], []>} : vector<8x8xf32>, vector<8x8xf32>, vector<8x8xf32> -> vector<8x8xf32>
    %cst_305 = arith.constant 0.353553385 : f32
    %551 = vector.broadcast %cst_305 : f32 to vector<8x8xf32>
    %552 = arith.mulf %550, %551 : vector<8x8xf32>
    %cst_306 = arith.constant dense<0xFF800000> : vector<8xf32>
    %553 = vector.multi_reduction <maximumf>, %552, %cst_306 [1] : vector<8x8xf32> to vector<8xf32>
    %554 = vector.shape_cast %553 : vector<8xf32> to vector<8x1xf32>
    %555 = vector.broadcast %554 : vector<8x1xf32> to vector<8x8xf32>
    %556 = arith.subf %552, %555 : vector<8x8xf32>
    %557 = math.exp %556 : vector<8x8xf32>
    %cst_307 = arith.constant dense<0.000000e+00> : vector<8xf32>
    %558 = vector.multi_reduction <add>, %557, %cst_307 [1] : vector<8x8xf32> to vector<8xf32>
    %559 = vector.shape_cast %558 : vector<8xf32> to vector<8x1xf32>
    %560 = tpu.reciprocal %559 {approx = true} : vector<8x1xf32> -> vector<8x1xf32>
    %561 = vector.broadcast %560 : vector<8x1xf32> to vector<8x8xf32>
    %562 = arith.mulf %557, %561 : vector<8x8xf32>
    %cst_308 = arith.constant dense<0.000000e+00> : vector<8x8xf32>
    %563 = tpu.matmul %562, %549, %cst_308 {dimension_numbers = #tpu.dot_dimension_numbers<[1], [0], [0], [1], [0, 0, 1, 1], [], []>} : vector<8x8xf32>, vector<8x8xf32>, vector<8x8xf32> -> vector<8x8xf32>
    %c8_309 = arith.constant 8 : index
    %c16_310 = arith.constant 16 : index
    %564 = vector.load %arg45[%c8_309, %c16_310] : memref<16x32xf32, #tpu.memory_space<vmem>>, vector<8x8xf32>
    tpu.vector_store %arg45[%c8_309, %c16_310], %563 {strides = array<i32>} : memref<16x32xf32, #tpu.memory_space<vmem>>, vector<8x8xf32>,
    %565 = vector.extract_strided_slice %438 {offsets = [8, 24], sizes = [8, 8], strides = [1, 1]} : vector<16x96xf32> to vector<8x8xf32>
    %566 = vector.extract_strided_slice %438 {offsets = [8, 56], sizes = [8, 8], strides = [1, 1]} : vector<16x96xf32> to vector<8x8xf32>
    %567 = vector.extract_strided_slice %438 {offsets = [8, 88], sizes = [8, 8], strides = [1, 1]} : vector<16x96xf32> to vector<8x8xf32>
    %cst_311 = arith.constant dense<0.000000e+00> : vector<8x8xf32>
    %568 = tpu.matmul %565, %566, %cst_311 {dimension_numbers = #tpu.dot_dimension_numbers<[1], [1], [0], [0], [0, 0, 1, 0], [], []>} : vector<8x8xf32>, vector<8x8xf32>, vector<8x8xf32> -> vector<8x8xf32>
    %cst_312 = arith.constant 0.353553385 : f32
    %569 = vector.broadcast %cst_312 : f32 to vector<8x8xf32>
    %570 = arith.mulf %568, %569 : vector<8x8xf32>
    %cst_313 = arith.constant dense<0xFF800000> : vector<8xf32>
    %571 = vector.multi_reduction <maximumf>, %570, %cst_313 [1] : vector<8x8xf32> to vector<8xf32>
    %572 = vector.shape_cast %571 : vector<8xf32> to vector<8x1xf32>
    %573 = vector.broadcast %572 : vector<8x1xf32> to vector<8x8xf32>
    %574 = arith.subf %570, %573 : vector<8x8xf32>
    %575 = math.exp %574 : vector<8x8xf32>
    %cst_314 = arith.constant dense<0.000000e+00> : vector<8xf32>
    %576 = vector.multi_reduction <add>, %575, %cst_314 [1] : vector<8x8xf32> to vector<8xf32>
    %577 = vector.shape_cast %576 : vector<8xf32> to vector<8x1xf32>
    %578 = tpu.reciprocal %577 {approx = true} : vector<8x1xf32> -> vector<8x1xf32>
    %579 = vector.broadcast %578 : vector<8x1xf32> to vector<8x8xf32>
    %580 = arith.mulf %575, %579 : vector<8x8xf32>
    %cst_315 = arith.constant dense<0.000000e+00> : vector<8x8xf32>
    %581 = tpu.matmul %580, %567, %cst_315 {dimension_numbers = #tpu.dot_dimension_numbers<[1], [0], [0], [1], [0, 0, 1, 1], [], []>} : vector<8x8xf32>, vector<8x8xf32>, vector<8x8xf32> -> vector<8x8xf32>
    %c8_316 = arith.constant 8 : index
    %c24_317 = arith.constant 24 : index
    %582 = vector.load %arg45[%c8_316, %c24_317] : memref<16x32xf32, #tpu.memory_space<vmem>>, vector<8x8xf32>
    tpu.vector_store %arg45[%c8_316, %c24_317], %581 {strides = array<i32>} : memref<16x32xf32, #tpu.memory_space<vmem>>, vector<8x8xf32>,
    %c0_318 = arith.constant 0 : index
    %c0_319 = arith.constant 0 : index
    %583 = vector.load %arg45[%c0_318, %c0_319] : memref<16x32xf32, #tpu.memory_space<vmem>>, vector<16x32xf32>
    %c0_320 = arith.constant 0 : index
    %c0_321 = arith.constant 0 : index
    %584 = vector.load %arg36[%c0_320, %c0_321] : memref<32x32xf32, #tpu.memory_space<vmem>>, vector<32x32xf32>
    %cst_322 = arith.constant dense<0.000000e+00> : vector<16x32xf32>
    %585 = tpu.matmul %583, %584, %cst_322 {dimension_numbers = #tpu.dot_dimension_numbers<[1], [0], [0], [1], [0, 0, 1, 1], [], []>} : vector<16x32xf32>, vector<32x32xf32>, vector<16x32xf32> -> vector<16x32xf32>
    %c0_323 = arith.constant 0 : index
    %c0_324 = arith.constant 0 : index
    %586 = vector.load %arg28[%c0_323, %c0_324] : memref<1x32xf32, #tpu.memory_space<vmem>>, vector<1x32xf32>
    %587 = vector.broadcast %586 : vector<1x32xf32> to vector<16x32xf32>
    %588 = arith.addf %585, %587 : vector<16x32xf32>
    %589 = arith.addf %409, %588 : vector<16x32xf32>
    %c0_325 = arith.constant 0 : index
    %c0_326 = arith.constant 0 : index
    %590 = vector.load %arg33[%c0_325, %c0_326] : memref<1x32xf32, #tpu.memory_space<vmem>>, vector<1x32xf32>
    %c0_327 = arith.constant 0 : index
    %c0_328 = arith.constant 0 : index
    %591 = vector.load %arg32[%c0_327, %c0_328] : memref<1x32xf32, #tpu.memory_space<vmem>>, vector<1x32xf32>
    %cst_329 = arith.constant dense<0.000000e+00> : vector<16xf32>
    %592 = vector.multi_reduction <add>, %589, %cst_329 [1] : vector<16x32xf32> to vector<16xf32>
    %593 = vector.shape_cast %592 : vector<16xf32> to vector<16x1xf32>
    %cst_330 = arith.constant 3.200000e+01 : f32
    %594 = vector.broadcast %cst_330 : f32 to vector<16x1xf32>
    %595 = arith.divf %593, %594 : vector<16x1xf32>
    %596 = vector.broadcast %595 : vector<16x1xf32> to vector<16x32xf32>
    %597 = arith.subf %589, %596 : vector<16x32xf32>
    %598 = arith.mulf %597, %597 : vector<16x32xf32>
    %cst_331 = arith.constant dense<0.000000e+00> : vector<16xf32>
    %599 = vector.multi_reduction <add>, %598, %cst_331 [1] : vector<16x32xf32> to vector<16xf32>
    %600 = vector.shape_cast %599 : vector<16xf32> to vector<16x1xf32>
    %cst_332 = arith.constant 3.200000e+01 : f32
    %601 = vector.broadcast %cst_332 : f32 to vector<16x1xf32>
    %602 = arith.divf %600, %601 : vector<16x1xf32>
    %603 = vector.broadcast %595 : vector<16x1xf32> to vector<16x32xf32>
    %604 = arith.subf %589, %603 : vector<16x32xf32>
    %cst_333 = arith.constant 9.99999974E-6 : f32
    %605 = vector.broadcast %cst_333 : f32 to vector<16x1xf32>
    %606 = arith.addf %602, %605 : vector<16x1xf32>
    %607 = math.rsqrt %606 : vector<16x1xf32>
    %608 = vector.broadcast %607 : vector<16x1xf32> to vector<16x32xf32>
    %609 = arith.mulf %604, %608 : vector<16x32xf32>
    %610 = vector.broadcast %590 : vector<1x32xf32> to vector<16x32xf32>
    %611 = arith.mulf %609, %610 : vector<16x32xf32>
    %612 = vector.broadcast %591 : vector<1x32xf32> to vector<16x32xf32>
    %613 = arith.addf %611, %612 : vector<16x32xf32>
    %c0_334 = arith.constant 0 : index
    %c0_335 = arith.constant 0 : index
    %614 = vector.load %arg34[%c0_334, %c0_335] : memref<32x64xf32, #tpu.memory_space<vmem>>, vector<32x64xf32>
    %cst_336 = arith.constant dense<0.000000e+00> : vector<16x64xf32>
    %615 = tpu.matmul %613, %614, %cst_336 {dimension_numbers = #tpu.dot_dimension_numbers<[1], [0], [0], [1], [0, 0, 1, 1], [], []>} : vector<16x32xf32>, vector<32x64xf32>, vector<16x64xf32> -> vector<16x64xf32>
    %c0_337 = arith.constant 0 : index
    %c0_338 = arith.constant 0 : index
    %616 = vector.load %arg26[%c0_337, %c0_338] : memref<1x64xf32, #tpu.memory_space<vmem>>, vector<1x64xf32>
    %617 = vector.broadcast %616 : vector<1x64xf32> to vector<16x64xf32>
    %618 = arith.addf %615, %617 : vector<16x64xf32>
    %cst_339 = arith.constant 0.000000e+00 : f32
    %619 = vector.broadcast %cst_339 : f32 to vector<16x64xf32>
    %620 = arith.maximumf %618, %619 : vector<16x64xf32>
    %c0_340 = arith.constant 0 : index
    %c0_341 = arith.constant 0 : index
    %621 = vector.load %arg35[%c0_340, %c0_341] : memref<64x32xf32, #tpu.memory_space<vmem>>, vector<64x32xf32>
    %cst_342 = arith.constant dense<0.000000e+00> : vector<16x32xf32>
    %622 = tpu.matmul %620, %621, %cst_342 {dimension_numbers = #tpu.dot_dimension_numbers<[1], [0], [0], [1], [0, 0, 1, 1], [], []>} : vector<16x64xf32>, vector<64x32xf32>, vector<16x32xf32> -> vector<16x32xf32>
    %c0_343 = arith.constant 0 : index
    %c0_344 = arith.constant 0 : index
    %623 = vector.load %arg27[%c0_343, %c0_344] : memref<1x32xf32, #tpu.memory_space<vmem>>, vector<1x32xf32>
    %624 = vector.broadcast %623 : vector<1x32xf32> to vector<16x32xf32>
    %625 = arith.addf %622, %624 : vector<16x32xf32>
    %626 = arith.addf %589, %625 : vector<16x32xf32>
    %627 = vector.extract_strided_slice %626 {offsets = [0, 0], sizes = [8, 32], strides = [1, 1]} : vector<16x32xf32> to vector<8x32xf32>
    %c0_345 = arith.constant 0 : index
    %c0_346 = arith.constant 0 : index
    %628 = vector.load %arg41[%c0_345, %c0_346] : memref<12x8xf32, #tpu.memory_space<vmem>>, vector<12x8xf32>
    %cst_347 = arith.constant dense<0.000000e+00> : vector<12x32xf32>
    %629 = tpu.matmul %628, %627, %cst_347 {dimension_numbers = #tpu.dot_dimension_numbers<[1], [0], [0], [1], [0, 0, 1, 1], [], []>} : vector<12x8xf32>, vector<8x32xf32>, vector<12x32xf32> -> vector<12x32xf32>
    %c0_348 = arith.constant 0 : index
    %c0_349 = arith.constant 0 : index
    %630 = vector.load %arg2[%c0_348, %c0_349] : memref<1x16xf32, #tpu.memory_space<vmem>>, vector<1x16xf32>
    %cst_350 = arith.constant 0.000000e+00 : f32
    %631 = vector.broadcast %cst_350 : f32 to vector<8x16xf32>
    %632 = vector.extract_strided_slice %629 {offsets = [0, 0], sizes = [8, 32], strides = [1, 1]} : vector<12x32xf32> to vector<8x32xf32>
    %c0_351 = arith.constant 0 : index
    %c0_352 = arith.constant 0 : index
    %c0_353 = arith.constant 0 : index
    %633 = vector.load %arg3[%c0_351, %c0_352, %c0_353] : memref<5x32x16xf32, #tpu.memory_space<vmem>>, vector<1x32x16xf32>
    %634 = vector.shape_cast %633 : vector<1x32x16xf32> to vector<32x16xf32>
    %cst_354 = arith.constant dense<0.000000e+00> : vector<8x16xf32>
    %635 = tpu.matmul %632, %634, %cst_354 {dimension_numbers = #tpu.dot_dimension_numbers<[1], [0], [0], [1], [0, 0, 1, 1], [], []>} : vector<8x32xf32>, vector<32x16xf32>, vector<8x16xf32> -> vector<8x16xf32>
    %636 = arith.addf %631, %635 : vector<8x16xf32>
    %637 = vector.extract_strided_slice %629 {offsets = [1, 0], sizes = [8, 32], strides = [1, 1]} : vector<12x32xf32> to vector<8x32xf32>
    %c1_355 = arith.constant 1 : index
    %c0_356 = arith.constant 0 : index
    %c0_357 = arith.constant 0 : index
    %638 = vector.load %arg3[%c1_355, %c0_356, %c0_357] : memref<5x32x16xf32, #tpu.memory_space<vmem>>, vector<1x32x16xf32>
    %639 = vector.shape_cast %638 : vector<1x32x16xf32> to vector<32x16xf32>
    %cst_358 = arith.constant dense<0.000000e+00> : vector<8x16xf32>
    %640 = tpu.matmul %637, %639, %cst_358 {dimension_numbers = #tpu.dot_dimension_numbers<[1], [0], [0], [1], [0, 0, 1, 1], [], []>} : vector<8x32xf32>, vector<32x16xf32>, vector<8x16xf32> -> vector<8x16xf32>
    %641 = arith.addf %636, %640 : vector<8x16xf32>
    %642 = vector.extract_strided_slice %629 {offsets = [2, 0], sizes = [8, 32], strides = [1, 1]} : vector<12x32xf32> to vector<8x32xf32>
    %c2_359 = arith.constant 2 : index
    %c0_360 = arith.constant 0 : index
    %c0_361 = arith.constant 0 : index
    %643 = vector.load %arg3[%c2_359, %c0_360, %c0_361] : memref<5x32x16xf32, #tpu.memory_space<vmem>>, vector<1x32x16xf32>
    %644 = vector.shape_cast %643 : vector<1x32x16xf32> to vector<32x16xf32>
    %cst_362 = arith.constant dense<0.000000e+00> : vector<8x16xf32>
    %645 = tpu.matmul %642, %644, %cst_362 {dimension_numbers = #tpu.dot_dimension_numbers<[1], [0], [0], [1], [0, 0, 1, 1], [], []>} : vector<8x32xf32>, vector<32x16xf32>, vector<8x16xf32> -> vector<8x16xf32>
    %646 = arith.addf %641, %645 : vector<8x16xf32>
    %647 = vector.extract_strided_slice %629 {offsets = [3, 0], sizes = [8, 32], strides = [1, 1]} : vector<12x32xf32> to vector<8x32xf32>
    %c3_363 = arith.constant 3 : index
    %c0_364 = arith.constant 0 : index
    %c0_365 = arith.constant 0 : index
    %648 = vector.load %arg3[%c3_363, %c0_364, %c0_365] : memref<5x32x16xf32, #tpu.memory_space<vmem>>, vector<1x32x16xf32>
    %649 = vector.shape_cast %648 : vector<1x32x16xf32> to vector<32x16xf32>
    %cst_366 = arith.constant dense<0.000000e+00> : vector<8x16xf32>
    %650 = tpu.matmul %647, %649, %cst_366 {dimension_numbers = #tpu.dot_dimension_numbers<[1], [0], [0], [1], [0, 0, 1, 1], [], []>} : vector<8x32xf32>, vector<32x16xf32>, vector<8x16xf32> -> vector<8x16xf32>
    %651 = arith.addf %646, %650 : vector<8x16xf32>
    %652 = vector.extract_strided_slice %629 {offsets = [4, 0], sizes = [8, 32], strides = [1, 1]} : vector<12x32xf32> to vector<8x32xf32>
    %c4_367 = arith.constant 4 : index
    %c0_368 = arith.constant 0 : index
    %c0_369 = arith.constant 0 : index
    %653 = vector.load %arg3[%c4_367, %c0_368, %c0_369] : memref<5x32x16xf32, #tpu.memory_space<vmem>>, vector<1x32x16xf32>
    %654 = vector.shape_cast %653 : vector<1x32x16xf32> to vector<32x16xf32>
    %cst_370 = arith.constant dense<0.000000e+00> : vector<8x16xf32>
    %655 = tpu.matmul %652, %654, %cst_370 {dimension_numbers = #tpu.dot_dimension_numbers<[1], [0], [0], [1], [0, 0, 1, 1], [], []>} : vector<8x32xf32>, vector<32x16xf32>, vector<8x16xf32> -> vector<8x16xf32>
    %656 = arith.addf %651, %655 : vector<8x16xf32>
    %657 = vector.broadcast %630 : vector<1x16xf32> to vector<8x16xf32>
    %658 = arith.addf %656, %657 : vector<8x16xf32>
    %c0_371 = arith.constant 0 : index
    %c0_372 = arith.constant 0 : index
    %c0_373 = arith.constant 0 : index
    %659 = vector.load %arg43[%c0_371, %c0_372, %c0_373] : memref<2x8x16xf32, #tpu.memory_space<vmem>>, vector<1x8x16xf32>
    %660 = vector.shape_cast %659 : vector<1x8x16xf32> to vector<8x16xf32>
    %661 = vector.shape_cast %658 : vector<8x16xf32> to vector<1x8x16xf32>
    tpu.vector_store %arg43[%c0_371, %c0_372, %c0_373], %661 {strides = array<i32>} : memref<2x8x16xf32, #tpu.memory_space<vmem>>, vector<1x8x16xf32>,
    %662 = vector.extract_strided_slice %626 {offsets = [8, 0], sizes = [8, 32], strides = [1, 1]} : vector<16x32xf32> to vector<8x32xf32>
    %c0_374 = arith.constant 0 : index
    %c0_375 = arith.constant 0 : index
    %663 = vector.load %arg41[%c0_374, %c0_375] : memref<12x8xf32, #tpu.memory_space<vmem>>, vector<12x8xf32>
    %cst_376 = arith.constant dense<0.000000e+00> : vector<12x32xf32>
    %664 = tpu.matmul %663, %662, %cst_376 {dimension_numbers = #tpu.dot_dimension_numbers<[1], [0], [0], [1], [0, 0, 1, 1], [], []>} : vector<12x8xf32>, vector<8x32xf32>, vector<12x32xf32> -> vector<12x32xf32>
    %c0_377 = arith.constant 0 : index
    %c0_378 = arith.constant 0 : index
    %665 = vector.load %arg2[%c0_377, %c0_378] : memref<1x16xf32, #tpu.memory_space<vmem>>, vector<1x16xf32>
    %cst_379 = arith.constant 0.000000e+00 : f32
    %666 = vector.broadcast %cst_379 : f32 to vector<8x16xf32>
    %667 = vector.extract_strided_slice %664 {offsets = [0, 0], sizes = [8, 32], strides = [1, 1]} : vector<12x32xf32> to vector<8x32xf32>
    %c0_380 = arith.constant 0 : index
    %c0_381 = arith.constant 0 : index
    %c0_382 = arith.constant 0 : index
    %668 = vector.load %arg3[%c0_380, %c0_381, %c0_382] : memref<5x32x16xf32, #tpu.memory_space<vmem>>, vector<1x32x16xf32>
    %669 = vector.shape_cast %668 : vector<1x32x16xf32> to vector<32x16xf32>
    %cst_383 = arith.constant dense<0.000000e+00> : vector<8x16xf32>
    %670 = tpu.matmul %667, %669, %cst_383 {dimension_numbers = #tpu.dot_dimension_numbers<[1], [0], [0], [1], [0, 0, 1, 1], [], []>} : vector<8x32xf32>, vector<32x16xf32>, vector<8x16xf32> -> vector<8x16xf32>
    %671 = arith.addf %666, %670 : vector<8x16xf32>
    %672 = vector.extract_strided_slice %664 {offsets = [1, 0], sizes = [8, 32], strides = [1, 1]} : vector<12x32xf32> to vector<8x32xf32>
    %c1_384 = arith.constant 1 : index
    %c0_385 = arith.constant 0 : index
    %c0_386 = arith.constant 0 : index
    %673 = vector.load %arg3[%c1_384, %c0_385, %c0_386] : memref<5x32x16xf32, #tpu.memory_space<vmem>>, vector<1x32x16xf32>
    %674 = vector.shape_cast %673 : vector<1x32x16xf32> to vector<32x16xf32>
    %cst_387 = arith.constant dense<0.000000e+00> : vector<8x16xf32>
    %675 = tpu.matmul %672, %674, %cst_387 {dimension_numbers = #tpu.dot_dimension_numbers<[1], [0], [0], [1], [0, 0, 1, 1], [], []>} : vector<8x32xf32>, vector<32x16xf32>, vector<8x16xf32> -> vector<8x16xf32>
    %676 = arith.addf %671, %675 : vector<8x16xf32>
    %677 = vector.extract_strided_slice %664 {offsets = [2, 0], sizes = [8, 32], strides = [1, 1]} : vector<12x32xf32> to vector<8x32xf32>
    %c2_388 = arith.constant 2 : index
    %c0_389 = arith.constant 0 : index
    %c0_390 = arith.constant 0 : index
    %678 = vector.load %arg3[%c2_388, %c0_389, %c0_390] : memref<5x32x16xf32, #tpu.memory_space<vmem>>, vector<1x32x16xf32>
    %679 = vector.shape_cast %678 : vector<1x32x16xf32> to vector<32x16xf32>
    %cst_391 = arith.constant dense<0.000000e+00> : vector<8x16xf32>
    %680 = tpu.matmul %677, %679, %cst_391 {dimension_numbers = #tpu.dot_dimension_numbers<[1], [0], [0], [1], [0, 0, 1, 1], [], []>} : vector<8x32xf32>, vector<32x16xf32>, vector<8x16xf32> -> vector<8x16xf32>
    %681 = arith.addf %676, %680 : vector<8x16xf32>
    %682 = vector.extract_strided_slice %664 {offsets = [3, 0], sizes = [8, 32], strides = [1, 1]} : vector<12x32xf32> to vector<8x32xf32>
    %c3_392 = arith.constant 3 : index
    %c0_393 = arith.constant 0 : index
    %c0_394 = arith.constant 0 : index
    %683 = vector.load %arg3[%c3_392, %c0_393, %c0_394] : memref<5x32x16xf32, #tpu.memory_space<vmem>>, vector<1x32x16xf32>
    %684 = vector.shape_cast %683 : vector<1x32x16xf32> to vector<32x16xf32>
    %cst_395 = arith.constant dense<0.000000e+00> : vector<8x16xf32>
    %685 = tpu.matmul %682, %684, %cst_395 {dimension_numbers = #tpu.dot_dimension_numbers<[1], [0], [0], [1], [0, 0, 1, 1], [], []>} : vector<8x32xf32>, vector<32x16xf32>, vector<8x16xf32> -> vector<8x16xf32>
    %686 = arith.addf %681, %685 : vector<8x16xf32>
    %687 = vector.extract_strided_slice %664 {offsets = [4, 0], sizes = [8, 32], strides = [1, 1]} : vector<12x32xf32> to vector<8x32xf32>
    %c4_396 = arith.constant 4 : index
    %c0_397 = arith.constant 0 : index
    %c0_398 = arith.constant 0 : index
    %688 = vector.load %arg3[%c4_396, %c0_397, %c0_398] : memref<5x32x16xf32, #tpu.memory_space<vmem>>, vector<1x32x16xf32>
    %689 = vector.shape_cast %688 : vector<1x32x16xf32> to vector<32x16xf32>
    %cst_399 = arith.constant dense<0.000000e+00> : vector<8x16xf32>
    %690 = tpu.matmul %687, %689, %cst_399 {dimension_numbers = #tpu.dot_dimension_numbers<[1], [0], [0], [1], [0, 0, 1, 1], [], []>} : vector<8x32xf32>, vector<32x16xf32>, vector<8x16xf32> -> vector<8x16xf32>
    %691 = arith.addf %686, %690 : vector<8x16xf32>
    %692 = vector.broadcast %665 : vector<1x16xf32> to vector<8x16xf32>
    %693 = arith.addf %691, %692 : vector<8x16xf32>
    %c1_400 = arith.constant 1 : index
    %c0_401 = arith.constant 0 : index
    %c0_402 = arith.constant 0 : index
    %694 = vector.load %arg43[%c1_400, %c0_401, %c0_402] : memref<2x8x16xf32, #tpu.memory_space<vmem>>, vector<1x8x16xf32>
    %695 = vector.shape_cast %694 : vector<1x8x16xf32> to vector<8x16xf32>
    %696 = vector.shape_cast %693 : vector<8x16xf32> to vector<1x8x16xf32>
    tpu.vector_store %arg43[%c1_400, %c0_401, %c0_402], %696 {strides = array<i32>} : memref<2x8x16xf32, #tpu.memory_space<vmem>>, vector<1x8x16xf32>,
    return
  }
  func.func @transform_0(%arg0: i32) -> (i32, i32, i32) {
    %c0_i32 = arith.constant 0 : i32
    %c0_i32_0 = arith.constant 0 : i32
    %c0_i32_1 = arith.constant 0 : i32
    %c0_i32_2 = arith.constant 0 : i32
    return %c0_i32, %c0_i32_0, %c0_i32_1 : i32, i32, i32
  }
  func.func @transform_1(%arg0: i32) -> (i32, i32) {
    %c0_i32 = arith.constant 0 : i32
    %c0_i32_0 = arith.constant 0 : i32
    %c0_i32_1 = arith.constant 0 : i32
    return %c0_i32, %c0_i32_0 : i32, i32
  }
  func.func @transform_2(%arg0: i32) -> (i32, i32, i32) {
    %c0_i32 = arith.constant 0 : i32
    %c0_i32_0 = arith.constant 0 : i32
    %c0_i32_1 = arith.constant 0 : i32
    %c0_i32_2 = arith.constant 0 : i32
    return %c0_i32, %c0_i32_0, %c0_i32_1 : i32, i32, i32
  }
  func.func @transform_3(%arg0: i32) -> (i32, i32) {
    %c0_i32 = arith.constant 0 : i32
    %c0_i32_0 = arith.constant 0 : i32
    %c0_i32_1 = arith.constant 0 : i32
    return %c0_i32, %c0_i32_0 : i32, i32
  }
  func.func @transform_4(%arg0: i32) -> (i32, i32) {
    %c0_i32 = arith.constant 0 : i32
    %c0_i32_0 = arith.constant 0 : i32
    %c0_i32_1 = arith.constant 0 : i32
    return %c0_i32, %c0_i32_0 : i32, i32
  }
  func.func @transform_5(%arg0: i32) -> (i32, i32) {
    %c0_i32 = arith.constant 0 : i32
    %c0_i32_0 = arith.constant 0 : i32
    %c0_i32_1 = arith.constant 0 : i32
    return %c0_i32, %c0_i32_0 : i32, i32
  }
  func.func @transform_6(%arg0: i32) -> (i32, i32) {
    %c0_i32 = arith.constant 0 : i32
    %c0_i32_0 = arith.constant 0 : i32
    %c0_i32_1 = arith.constant 0 : i32
    return %c0_i32, %c0_i32_0 : i32, i32
  }
  func.func @transform_7(%arg0: i32) -> (i32, i32) {
    %c0_i32 = arith.constant 0 : i32
    %c0_i32_0 = arith.constant 0 : i32
    %c0_i32_1 = arith.constant 0 : i32
    return %c0_i32, %c0_i32_0 : i32, i32
  }
  func.func @transform_8(%arg0: i32) -> (i32, i32, i32) {
    %c0_i32 = arith.constant 0 : i32
    %c0_i32_0 = arith.constant 0 : i32
    %c0_i32_1 = arith.constant 0 : i32
    %c0_i32_2 = arith.constant 0 : i32
    return %c0_i32, %c0_i32_0, %c0_i32_1 : i32, i32, i32
  }
  func.func @transform_9(%arg0: i32) -> (i32, i32) {
    %c0_i32 = arith.constant 0 : i32
    %c0_i32_0 = arith.constant 0 : i32
    %c0_i32_1 = arith.constant 0 : i32
    return %c0_i32, %c0_i32_0 : i32, i32
  }
  func.func @transform_10(%arg0: i32) -> (i32, i32) {
    %c0_i32 = arith.constant 0 : i32
    %c0_i32_0 = arith.constant 0 : i32
    %c0_i32_1 = arith.constant 0 : i32
    return %c0_i32, %c0_i32_0 : i32, i32
  }
  func.func @transform_11(%arg0: i32) -> (i32, i32) {
    %c0_i32 = arith.constant 0 : i32
    %c0_i32_0 = arith.constant 0 : i32
    %c0_i32_1 = arith.constant 0 : i32
    return %c0_i32, %c0_i32_0 : i32, i32
  }
  func.func @transform_12(%arg0: i32) -> (i32, i32, i32) {
    %c0_i32 = arith.constant 0 : i32
    %c0_i32_0 = arith.constant 0 : i32
    %c0_i32_1 = arith.constant 0 : i32
    %c0_i32_2 = arith.constant 0 : i32
    return %c0_i32, %c0_i32_0, %c0_i32_1 : i32, i32, i32
  }
  func.func @transform_13(%arg0: i32) -> (i32, i32) {
    %c0_i32 = arith.constant 0 : i32
    %c0_i32_0 = arith.constant 0 : i32
    %c0_i32_1 = arith.constant 0 : i32
    return %c0_i32, %c0_i32_0 : i32, i32
  }
  func.func @transform_14(%arg0: i32) -> (i32, i32) {
    %c0_i32 = arith.constant 0 : i32
    %c0_i32_0 = arith.constant 0 : i32
    %c0_i32_1 = arith.constant 0 : i32
    return %c0_i32, %c0_i32_0 : i32, i32
  }
  func.func @transform_15(%arg0: i32) -> (i32, i32) {
    %c0_i32 = arith.constant 0 : i32
    %c0_i32_0 = arith.constant 0 : i32
    %c0_i32_1 = arith.constant 0 : i32
    return %c0_i32, %c0_i32_0 : i32, i32
  }
  func.func @transform_16(%arg0: i32) -> (i32, i32) {
    %c0_i32 = arith.constant 0 : i32
    %c0_i32_0 = arith.constant 0 : i32
    %c0_i32_1 = arith.constant 0 : i32
    return %c0_i32, %c0_i32_0 : i32, i32
  }
  func.func @transform_17(%arg0: i32) -> (i32, i32) {
    %c0_i32 = arith.constant 0 : i32
    %c0_i32_0 = arith.constant 0 : i32
    %c0_i32_1 = arith.constant 0 : i32
    return %c0_i32, %c0_i32_0 : i32, i32
  }
  func.func @transform_18(%arg0: i32) -> (i32, i32) {
    %c0_i32 = arith.constant 0 : i32
    %c0_i32_0 = arith.constant 0 : i32
    %c0_i32_1 = arith.constant 0 : i32
    return %c0_i32, %c0_i32_0 : i32, i32
  }
  func.func @transform_19(%arg0: i32) -> (i32, i32) {
    %c0_i32 = arith.constant 0 : i32
    %c0_i32_0 = arith.constant 0 : i32
    %c0_i32_1 = arith.constant 0 : i32
    return %c0_i32, %c0_i32_0 : i32, i32
  }
  func.func @transform_20(%arg0: i32) -> (i32, i32) {
    %c0_i32 = arith.constant 0 : i32
    %c0_i32_0 = arith.constant 0 : i32
    %c0_i32_1 = arith.constant 0 : i32
    return %c0_i32, %c0_i32_0 : i32, i32
  }
  func.func @transform_21(%arg0: i32) -> (i32, i32) {
    %c0_i32 = arith.constant 0 : i32
    %c0_i32_0 = arith.constant 0 : i32
    %c0_i32_1 = arith.constant 0 : i32
    return %c0_i32, %c0_i32_0 : i32, i32
  }
  func.func @transform_22(%arg0: i32) -> (i32, i32) {
    %c0_i32 = arith.constant 0 : i32
    %c0_i32_0 = arith.constant 0 : i32
    %c0_i32_1 = arith.constant 0 : i32
    return %c0_i32, %c0_i32_0 : i32, i32
  }
  func.func @transform_23(%arg0: i32) -> (i32, i32) {
    %c0_i32 = arith.constant 0 : i32
    %c0_i32_0 = arith.constant 0 : i32
    %c0_i32_1 = arith.constant 0 : i32
    return %c0_i32, %c0_i32_0 : i32, i32
  }
  func.func @transform_24(%arg0: i32) -> (i32, i32) {
    %c0_i32 = arith.constant 0 : i32
    %c0_i32_0 = arith.constant 0 : i32
    %c0_i32_1 = arith.constant 0 : i32
    return %c0_i32, %c0_i32_0 : i32, i32
  }
  func.func @transform_25(%arg0: i32) -> (i32, i32) {
    %c0_i32 = arith.constant 0 : i32
    %c0_i32_0 = arith.constant 0 : i32
    %c0_i32_1 = arith.constant 0 : i32
    return %c0_i32, %c0_i32_0 : i32, i32
  }
  func.func @transform_26(%arg0: i32) -> (i32, i32) {
    %c0_i32 = arith.constant 0 : i32
    %c0_i32_0 = arith.constant 0 : i32
    %c0_i32_1 = arith.constant 0 : i32
    return %c0_i32, %c0_i32_0 : i32, i32
  }
  func.func @transform_27(%arg0: i32) -> (i32, i32) {
    %c0_i32 = arith.constant 0 : i32
    %c0_i32_0 = arith.constant 0 : i32
    %c0_i32_1 = arith.constant 0 : i32
    return %c0_i32, %c0_i32_0 : i32, i32
  }
  func.func @transform_28(%arg0: i32) -> (i32, i32) {
    %c0_i32 = arith.constant 0 : i32
    %c0_i32_0 = arith.constant 0 : i32
    %c0_i32_1 = arith.constant 0 : i32
    return %c0_i32, %c0_i32_0 : i32, i32
  }
  func.func @transform_29(%arg0: i32) -> (i32, i32) {
    %c0_i32 = arith.constant 0 : i32
    %c0_i32_0 = arith.constant 0 : i32
    %c0_i32_1 = arith.constant 0 : i32
    return %c0_i32, %c0_i32_0 : i32, i32
  }
  func.func @transform_30(%arg0: i32) -> (i32, i32) {
    %c0_i32 = arith.constant 0 : i32
    %c0_i32_0 = arith.constant 0 : i32
    %c0_i32_1 = arith.constant 0 : i32
    return %c0_i32, %c0_i32_0 : i32, i32
  }
  func.func @transform_31(%arg0: i32) -> (i32, i32) {
    %c0_i32 = arith.constant 0 : i32
    %c0_i32_0 = arith.constant 0 : i32
    %c0_i32_1 = arith.constant 0 : i32
    return %c0_i32, %c0_i32_0 : i32, i32
  }
  func.func @transform_32(%arg0: i32) -> (i32, i32) {
    %c0_i32 = arith.constant 0 : i32
    %c0_i32_0 = arith.constant 0 : i32
    %c0_i32_1 = arith.constant 0 : i32
    return %c0_i32, %c0_i32_0 : i32, i32
  }
  func.func @transform_33(%arg0: i32) -> (i32, i32) {
    %c0_i32 = arith.constant 0 : i32
    %c0_i32_0 = arith.constant 0 : i32
    %c0_i32_1 = arith.constant 0 : i32
    return %c0_i32, %c0_i32_0 : i32, i32
  }
  func.func @transform_34(%arg0: i32) -> (i32, i32) {
    %c0_i32 = arith.constant 0 : i32
    %c0_i32_0 = arith.constant 0 : i32
    %c0_i32_1 = arith.constant 0 : i32
    return %c0_i32, %c0_i32_0 : i32, i32
  }
  func.func @transform_35(%arg0: i32) -> (i32, i32) {
    %c0_i32 = arith.constant 0 : i32
    %c0_i32_0 = arith.constant 0 : i32
    %c0_i32_1 = arith.constant 0 : i32
    return %c0_i32, %c0_i32_0 : i32, i32
  }
  func.func @transform_36(%arg0: i32) -> (i32, i32) {
    %c0_i32 = arith.constant 0 : i32
    %c0_i32_0 = arith.constant 0 : i32
    %c0_i32_1 = arith.constant 0 : i32
    return %c0_i32, %c0_i32_0 : i32, i32
  }
  func.func @transform_37(%arg0: i32) -> (i32, i32) {
    %c0_i32 = arith.constant 0 : i32
    %c0_i32_0 = arith.constant 0 : i32
    %c0_i32_1 = arith.constant 0 : i32
    return %c0_i32, %c0_i32_0 : i32, i32
  }
  func.func @transform_38(%arg0: i32) -> (i32, i32) {
    %c0_i32 = arith.constant 0 : i32
    %c0_i32_0 = arith.constant 0 : i32
    %c0_i32_1 = arith.constant 0 : i32
    return %c0_i32, %c0_i32_0 : i32, i32
  }
  func.func @transform_39(%arg0: i32) -> (i32, i32) {
    %c0_i32 = arith.constant 0 : i32
    %c0_i32_0 = arith.constant 0 : i32
    %c0_i32_1 = arith.constant 0 : i32
    return %c0_i32, %c0_i32_0 : i32, i32
  }
  func.func @transform_40(%arg0: i32) -> (i32, i32) {
    %c0_i32 = arith.constant 0 : i32
    %c0_i32_0 = arith.constant 0 : i32
    %c0_i32_1 = arith.constant 0 : i32
    return %c0_i32, %c0_i32_0 : i32, i32
  }
  func.func @transform_41(%arg0: i32) -> (i32, i32) {
    %c0_i32 = arith.constant 0 : i32
    %c0_i32_0 = arith.constant 0 : i32
    %c0_i32_1 = arith.constant 0 : i32
    return %c0_i32, %c0_i32_0 : i32, i32
  }
  func.func @transform_42(%arg0: i32) -> (i32, i32, i32) {
    %c0_i32 = arith.constant 0 : i32
    %c0_i32_0 = arith.constant 0 : i32
    %c0_i32_1 = arith.constant 0 : i32
    %c0_i32_2 = arith.constant 0 : i32
    return %c0_i32, %c0_i32_0, %c0_i32_1 : i32, i32, i32
  }
}

</mosaic_0001>

<llo_original>
// kernel: transformer_decoder_forward.1
$region0: #{transformer_decoder_forward.1}
  #allocation0 [shape = 'u32[]', space=smem, size = 0x4, offset = 0x4, fixed_abs, tag = 'smem constant byte address 0x4 - core index']
  #allocation1 [shape = 'u32[144,128]{1,0:T(1,128)}', space=vmem, size = 0x12000, scoped, tag = 'internal scratch']
  #allocation2 [shape = 'f32[16,32]{1,0:T(8,128)}', space=vmem, size = 0x2000, scoped, tag = 'scratch operand']
  #allocation3 [shape = 'f32[16,32]{1,0:T(8,128)}', space=vmem, size = 0x2000, scoped, tag = 'scratch operand']
  %s0 = inlined_call_operand.smem [shape: u32[43], index: -1, kind: input, shape index: {}]
  %s1 = sld [smem:[%s0]]
  %s2 = scalar_lea.smem %s0, 1
  %s3 = sld [smem:[%s2]]
  %s4 = scalar_lea.smem %s0, 2
  %s5 = sld [smem:[%s4]]
  %s6 = scalar_lea.smem %s0, 3
  %s7 = sld [smem:[%s6]]
  %s8 = scalar_lea.smem %s0, 4
  %s9 = sld [smem:[%s8]]
  %s10 = scalar_lea.smem %s0, 5
  %s11 = sld [smem:[%s10]]
  %s12 = scalar_lea.smem %s0, 6
  %s13 = sld [smem:[%s12]]
  %s14 = scalar_lea.smem %s0, 7
  %s15 = sld [smem:[%s14]]
  %s16 = scalar_lea.smem %s0, 8
  %s17 = sld [smem:[%s16]]
  %s18 = scalar_lea.smem %s0, 9
  %s19 = sld [smem:[%s18]]
  %s20 = scalar_lea.smem %s0, 10
  %s21 = sld [smem:[%s20]]
  %s22 = scalar_lea.smem %s0, 11
  %s23 = sld [smem:[%s22]]
  %s24 = scalar_lea.smem %s0, 12
  %s25 = sld [smem:[%s24]]
  %s26 = scalar_lea.smem %s0, 13
  %s27 = sld [smem:[%s26]]
  %s28 = scalar_lea.smem %s0, 14
  %s29 = sld [smem:[%s28]]
  %s30 = scalar_lea.smem %s0, 15
  %s31 = sld [smem:[%s30]]
  %s32 = scalar_lea.smem %s0, 16
  %s33 = sld [smem:[%s32]]
  %s34 = scalar_lea.smem %s0, 17
  %s35 = sld [smem:[%s34]]
  %s36 = scalar_lea.smem %s0, 18
  %s37 = sld [smem:[%s36]]
  %s38 = scalar_lea.smem %s0, 19
  %s39 = sld [smem:[%s38]]
  %s40 = scalar_lea.smem %s0, 20
  %s41 = sld [smem:[%s40]]
  %s42 = scalar_lea.smem %s0, 21
  %s43 = sld [smem:[%s42]]
  %s44 = scalar_lea.smem %s0, 22
  %s45 = sld [smem:[%s44]]
  %s46 = scalar_lea.smem %s0, 23
  %s47 = sld [smem:[%s46]]
  %s48 = scalar_lea.smem %s0, 24
  %s49 = sld [smem:[%s48]]
  %s50 = scalar_lea.smem %s0, 25
  %s51 = sld [smem:[%s50]]
  %s52 = scalar_lea.smem %s0, 26
  %s53 = sld [smem:[%s52]]
  %s54 = scalar_lea.smem %s0, 27
  %s55 = sld [smem:[%s54]]
  %s56 = scalar_lea.smem %s0, 28
  %s57 = sld [smem:[%s56]]
  %s58 = scalar_lea.smem %s0, 29
  %s59 = sld [smem:[%s58]]
  %s60 = scalar_lea.smem %s0, 30
  %s61 = sld [smem:[%s60]]
  %s62 = scalar_lea.smem %s0, 31
  %s63 = sld [smem:[%s62]]
  %s64 = scalar_lea.smem %s0, 32
  %s65 = sld [smem:[%s64]]
  %s66 = scalar_lea.smem %s0, 33
  %s67 = sld [smem:[%s66]]
  %s68 = scalar_lea.smem %s0, 34
  %s69 = sld [smem:[%s68]]
  %s70 = scalar_lea.smem %s0, 35
  %s71 = sld [smem:[%s70]]
  %s72 = scalar_lea.smem %s0, 36
  %s73 = sld [smem:[%s72]]
  %s74 = scalar_lea.smem %s0, 37
  %s75 = sld [smem:[%s74]]
  %s76 = scalar_lea.smem %s0, 38
  %s77 = sld [smem:[%s76]]
  %s78 = scalar_lea.smem %s0, 39
  %s79 = sld [smem:[%s78]]
  %s80 = scalar_lea.smem %s0, 40
  %s81 = sld [smem:[%s80]]
  %s82 = scalar_lea.smem %s0, 41
  %s83 = sld [smem:[%s82]]
  %s84 = scalar_lea.smem %s0, 42
  %s85 = sld [smem:[%s84]]
  %s86 = sld [smem:[#allocation0]]
  $region282: #{transformer_decoder_forward.1} parent=0
    _
  %s88 = ssub.s32 1, %s86
  %s89 = scalar_select 0, %s88, %s86
  $region1: #{transformer_decoder_forward.1} parent=0
    #allocation4 [shape = 'u8[512]{0}', space=vmem, size = 0x400, scoped, tag = 'input window, operand 3, single buffered']
    #allocation5 [shape = 's32[1]{0}', space=sflag, size = 0x4, scoped, tag = 'scoped memory for transformer_decoder_forward.1']
    #allocation6 [shape = 's32[1]{0}', space=sflag, size = 0x4, scoped, tag = 'scoped memory for transformer_decoder_forward.1']
    #allocation7 [shape = 'u8[512]{0}', space=vmem, size = 0x400, scoped, tag = 'input window, operand 6, single buffered']
    #allocation8 [shape = 's32[1]{0}', space=sflag, size = 0x4, scoped, tag = 'scoped memory for transformer_decoder_forward.1']
    #allocation9 [shape = 'u8[512]{0}', space=vmem, size = 0x400, scoped, tag = 'input window, operand 7, single buffered']
    #allocation10 [shape = 'u8[512]{0}', space=vmem, size = 0x400, scoped, tag = 'input window, operand 9, single buffered']
    #allocation11 [shape = 's32[1]{0}', space=sflag, size = 0x4, scoped, tag = 'scoped memory for transformer_decoder_forward.1']
    #allocation12 [shape = 'u8[512]{0}', space=vmem, size = 0x400, scoped, tag = 'input window, operand 10, single buffered']
    #allocation13 [shape = 'u8[512]{0}', space=vmem, size = 0x400, scoped, tag = 'input window, operand 11, single buffered']
    #allocation14 [shape = 's32[1]{0}', space=sflag, size = 0x4, scoped, tag = 'scoped memory for transformer_decoder_forward.1']
    #allocation15 [shape = 'u8[512]{0}', space=vmem, size = 0x400, scoped, tag = 'input window, operand 13, single buffered']
    #allocation16 [shape = 'u8[512]{0}', space=vmem, size = 0x400, scoped, tag = 'input window, operand 14, single buffered']
    #allocation17 [shape = 's32[1]{0}', space=sflag, size = 0x4, scoped, tag = 'scoped memory for transformer_decoder_forward.1']
    #allocation18 [shape = 'u8[512]{0}', space=vmem, size = 0x400, scoped, tag = 'input window, operand 15, single buffered']
    #allocation19 [shape = 'u8[512]{0}', space=vmem, size = 0x400, scoped, tag = 'input window, operand 16, single buffered']
    #allocation20 [shape = 's32[1]{0}', space=sflag, size = 0x4, scoped, tag = 'scoped memory for transformer_decoder_forward.1']
    #allocation21 [shape = 'u8[512]{0}', space=vmem, size = 0x400, scoped, tag = 'input window, operand 17, single buffered']
    #allocation22 [shape = 'u8[512]{0}', space=vmem, size = 0x400, scoped, tag = 'input window, operand 18, single buffered']
    #allocation23 [shape = 's32[1]{0}', space=sflag, size = 0x4, scoped, tag = 'scoped memory for transformer_decoder_forward.1']
    #allocation24 [shape = 'u8[512]{0}', space=vmem, size = 0x400, scoped, tag = 'input window, operand 19, single buffered']
    #allocation25 [shape = 'u8[512]{0}', space=vmem, size = 0x400, scoped, tag = 'input window, operand 20, single buffered']
    #allocation26 [shape = 's32[1]{0}', space=sflag, size = 0x4, scoped, tag = 'scoped memory for transformer_decoder_forward.1']
    #allocation27 [shape = 'u8[512]{0}', space=vmem, size = 0x400, scoped, tag = 'input window, operand 25, single buffered']
    #allocation28 [shape = 'u8[512]{0}', space=vmem, size = 0x400, scoped, tag = 'input window, operand 26, single buffered']
    #allocation29 [shape = 's32[1]{0}', space=sflag, size = 0x4, scoped, tag = 'scoped memory for transformer_decoder_forward.1']
    #allocation30 [shape = 'u8[512]{0}', space=vmem, size = 0x400, scoped, tag = 'input window, operand 27, single buffered']
    #allocation31 [shape = 'u8[512]{0}', space=vmem, size = 0x400, scoped, tag = 'input window, operand 28, single buffered']
    #allocation32 [shape = 's32[1]{0}', space=sflag, size = 0x4, scoped, tag = 'scoped memory for transformer_decoder_forward.1']
    #allocation33 [shape = 'u8[512]{0}', space=vmem, size = 0x400, scoped, tag = 'input window, operand 29, single buffered']
    #allocation34 [shape = 'u8[512]{0}', space=vmem, size = 0x400, scoped, tag = 'input window, operand 30, single buffered']
    #allocation35 [shape = 's32[1]{0}', space=sflag, size = 0x4, scoped, tag = 'scoped memory for transformer_decoder_forward.1']
    #allocation36 [shape = 'u8[512]{0}', space=vmem, size = 0x400, scoped, tag = 'input window, operand 31, single buffered']
    #allocation37 [shape = 'u8[512]{0}', space=vmem, size = 0x400, scoped, tag = 'input window, operand 32, single buffered']
    #allocation38 [shape = 's32[1]{0}', space=sflag, size = 0x4, scoped, tag = 'scoped memory for transformer_decoder_forward.1']
    #allocation39 [shape = 'u8[16384]{0}', space=vmem, size = 0x4000, scoped, tag = 'input window, operand 35, single buffered']
    #allocation40 [shape = 'u8[16384]{0}', space=vmem, size = 0x4000, scoped, tag = 'input window, operand 36, single buffered']
    #allocation41 [shape = 's32[1]{0}', space=sflag, size = 0x4, scoped, tag = 'scoped memory for transformer_decoder_forward.1']
    #allocation42 [shape = 'u8[512]{0}', space=vmem, size = 0x400, scoped, tag = 'input window, operand 37, single buffered']
    #allocation43 [shape = 'u8[4096]{0}', space=vmem, size = 0x1000, scoped, tag = 'input window, operand 39, single buffered']
    #allocation44 [shape = 's32[1]{0}', space=sflag, size = 0x4, scoped, tag = 'scoped memory for transformer_decoder_forward.1']
    #allocation45 [shape = 'u8[8192]{0}', space=vmem, size = 0x2000, scoped, tag = 'output window, operand 0, single buffered']
    %90 = vsyncpa [#allocation5], 0
    %91 = vsyncpa [#allocation8], 0
    %92 = vsyncpa [#allocation11], 0
    %93 = vsyncpa [#allocation14], 0
    %94 = vsyncpa [#allocation17], 0
    %95 = vsyncpa [#allocation20], 0
    %96 = vsyncpa [#allocation23], 0
    %97 = vsyncpa [#allocation26], 0
    %98 = vsyncpa [#allocation29], 0
    %99 = vsyncpa [#allocation32], 0
    %100 = vsyncpa [#allocation35], 0
    %101 = vsyncpa [#allocation38], 0
    %102 = vsyncpa [#allocation41], 0
    %103 = vsyncpa [#allocation44], 0
    %104 = vsyncpa [#allocation6], 0
    // Predicated region
    $region2: #{transformer_decoder_forward.1} parent=1 // pred_check
      _
    $region3: #{transformer_decoder_forward.1} parent=1 // pred_check_branch
      %106 = sbr.rel (0) target = $region5
    $region4: #{transformer_decoder_forward.1} parent=1 // pred_region
      _
    $region5: #{transformer_decoder_forward.1} parent=1 // pred_fallthru
      _
    // Predicated region
    $region6: #{transformer_decoder_forward.1} parent=1 // pred_check
      _
    $region7: #{transformer_decoder_forward.1} parent=1 // pred_check_branch
      %108 = sbr.rel (0) target = $region9
    $region8: #{transformer_decoder_forward.1} parent=1 // pred_region
      _
    $region9: #{transformer_decoder_forward.1} parent=1 // pred_fallthru
      _
    // Predicated region
    $region10: #{transformer_decoder_forward.1} parent=1 // pred_check
      _
    $region11: #{transformer_decoder_forward.1} parent=1 // pred_check_branch
      %110 = sbr.rel (0) target = $region13
    $region12: #{transformer_decoder_forward.1} parent=1 // pred_region
      _
    $region13: #{transformer_decoder_forward.1} parent=1 // pred_fallthru
      _
    // Predicated region
    $region14: #{transformer_decoder_forward.1} parent=1 // pred_check
      _
    $region15: #{transformer_decoder_forward.1} parent=1 // pred_check_branch
      %112 = sbr.rel (0) target = $region17
    $region16: #{transformer_decoder_forward.1} parent=1 // pred_region
      %s114 = ssub.s32 16, 16
      %115 = vsyncadd [#allocation5], %s114
      %s117 = sshll.u32 [#allocation4], 4
      %s118 = int_to_ptr.vmem [resolvable:$true] %s117
      %120 = dma.hbm_to_vmem [thread:$0]  %s7, 16, %s118, [#allocation5]
    $region17: #{transformer_decoder_forward.1} parent=1 // pred_fallthru
      _
    // Predicated region
    $region18: #{transformer_decoder_forward.1} parent=1 // pred_check
      _
    $region19: #{transformer_decoder_forward.1} parent=1 // pred_check_branch
      %122 = sbr.rel (0) target = $region21
    $region20: #{transformer_decoder_forward.1} parent=1 // pred_region
      _
    $region21: #{transformer_decoder_forward.1} parent=1 // pred_fallthru
      _
    // Predicated region
    $region22: #{transformer_decoder_forward.1} parent=1 // pred_check
      _
    $region23: #{transformer_decoder_forward.1} parent=1 // pred_check_branch
      %124 = sbr.rel (0) target = $region25
    $region24: #{transformer_decoder_forward.1} parent=1 // pred_region
      _
    $region25: #{transformer_decoder_forward.1} parent=1 // pred_fallthru
      _
    // Predicated region
    $region26: #{transformer_decoder_forward.1} parent=1 // pred_check
      _
    $region27: #{transformer_decoder_forward.1} parent=1 // pred_check_branch
      %126 = sbr.rel (0) target = $region29
    $region28: #{transformer_decoder_forward.1} parent=1 // pred_region
      %s128 = ssub.s32 16, 16
      %129 = vsyncadd [#allocation8], %s128
      %s131 = sshll.u32 [#allocation7], 4
      %s132 = int_to_ptr.vmem [resolvable:$true] %s131
      %134 = dma.hbm_to_vmem [thread:$0]  %s13, 16, %s132, [#allocation8]
    $region29: #{transformer_decoder_forward.1} parent=1 // pred_fallthru
      _
    // Predicated region
    $region30: #{transformer_decoder_forward.1} parent=1 // pred_check
      _
    $region31: #{transformer_decoder_forward.1} parent=1 // pred_check_branch
      %136 = sbr.rel (0) target = $region33
    $region32: #{transformer_decoder_forward.1} parent=1 // pred_region
      %s138 = ssub.s32 16, 16
      %139 = vsyncadd [#allocation8], %s138
      %s141 = sshll.u32 [#allocation9], 4
      %s142 = int_to_ptr.vmem [resolvable:$true] %s141
      %144 = dma.hbm_to_vmem [thread:$0]  %s15, 16, %s142, [#allocation8]
    $region33: #{transformer_decoder_forward.1} parent=1 // pred_fallthru
      _
    // Predicated region
    $region34: #{transformer_decoder_forward.1} parent=1 // pred_check
      _
    $region35: #{transformer_decoder_forward.1} parent=1 // pred_check_branch
      %146 = sbr.rel (0) target = $region37
    $region36: #{transformer_decoder_forward.1} parent=1 // pred_region
      _
    $region37: #{transformer_decoder_forward.1} parent=1 // pred_fallthru
      _
    // Predicated region
    $region38: #{transformer_decoder_forward.1} parent=1 // pred_check
      _
    $region39: #{transformer_decoder_forward.1} parent=1 // pred_check_branch
      %148 = sbr.rel (0) target = $region41
    $region40: #{transformer_decoder_forward.1} parent=1 // pred_region
      %s150 = ssub.s32 16, 16
      %151 = vsyncadd [#allocation11], %s150
      %s153 = sshll.u32 [#allocation10], 4
      %s154 = int_to_ptr.vmem [resolvable:$true] %s153
      %156 = dma.hbm_to_vmem [thread:$0]  %s19, 16, %s154, [#allocation11]
    $region41: #{transformer_decoder_forward.1} parent=1 // pred_fallthru
      _
    // Predicated region
    $region42: #{transformer_decoder_forward.1} parent=1 // pred_check
      _
    $region43: #{transformer_decoder_forward.1} parent=1 // pred_check_branch
      %158 = sbr.rel (0) target = $region45
    $region44: #{transformer_decoder_forward.1} parent=1 // pred_region
      %s160 = ssub.s32 16, 16
      %161 = vsyncadd [#allocation11], %s160
      %s163 = sshll.u32 [#allocation12], 4
      %s164 = int_to_ptr.vmem [resolvable:$true] %s163
      %166 = dma.hbm_to_vmem [thread:$0]  %s21, 16, %s164, [#allocation11]
    $region45: #{transformer_decoder_forward.1} parent=1 // pred_fallthru
      _
    // Predicated region
    $region46: #{transformer_decoder_forward.1} parent=1 // pred_check
      _
    $region47: #{transformer_decoder_forward.1} parent=1 // pred_check_branch
      %168 = sbr.rel (0) target = $region49
    $region48: #{transformer_decoder_forward.1} parent=1 // pred_region
      %s170 = ssub.s32 16, 16
      %171 = vsyncadd [#allocation14], %s170
      %s173 = sshll.u32 [#allocation13], 4
      %s174 = int_to_ptr.vmem [resolvable:$true] %s173
      %176 = dma.hbm_to_vmem [thread:$0]  %s23, 16, %s174, [#allocation14]
    $region49: #{transformer_decoder_forward.1} parent=1 // pred_fallthru
      _
    // Predicated region
    $region50: #{transformer_decoder_forward.1} parent=1 // pred_check
      _
    $region51: #{transformer_decoder_forward.1} parent=1 // pred_check_branch
      %178 = sbr.rel (0) target = $region53
    $region52: #{transformer_decoder_forward.1} parent=1 // pred_region
      _
    $region53: #{transformer_decoder_forward.1} parent=1 // pred_fallthru
      _
    // Predicated region
    $region54: #{transformer_decoder_forward.1} parent=1 // pred_check
      _
    $region55: #{transformer_decoder_forward.1} parent=1 // pred_check_branch
      %180 = sbr.rel (0) target = $region57
    $region56: #{transformer_decoder_forward.1} parent=1 // pred_region
      %s182 = ssub.s32 16, 16
      %183 = vsyncadd [#allocation14], %s182
      %s185 = sshll.u32 [#allocation15], 4
      %s186 = int_to_ptr.vmem [resolvable:$true] %s185
      %188 = dma.hbm_to_vmem [thread:$0]  %s27, 16, %s186, [#allocation14]
    $region57: #{transformer_decoder_forward.1} parent=1 // pred_fallthru
      _
    // Predicated region
    $region58: #{transformer_decoder_forward.1} parent=1 // pred_check
      _
    $region59: #{transformer_decoder_forward.1} parent=1 // pred_check_branch
      %190 = sbr.rel (0) target = $region61
    $region60: #{transformer_decoder_forward.1} parent=1 // pred_region
      %s192 = ssub.s32 16, 16
      %193 = vsyncadd [#allocation17], %s192
      %s195 = sshll.u32 [#allocation16], 4
      %s196 = int_to_ptr.vmem [resolvable:$true] %s195
      %198 = dma.hbm_to_vmem [thread:$0]  %s29, 16, %s196, [#allocation17]
    $region61: #{transformer_decoder_forward.1} parent=1 // pred_fallthru
      _
    // Predicated region
    $region62: #{transformer_decoder_forward.1} parent=1 // pred_check
      _
    $region63: #{transformer_decoder_forward.1} parent=1 // pred_check_branch
      %200 = sbr.rel (0) target = $region65
    $region64: #{transformer_decoder_forward.1} parent=1 // pred_region
      %s202 = ssub.s32 16, 16
      %203 = vsyncadd [#allocation17], %s202
      %s205 = sshll.u32 [#allocation18], 4
      %s206 = int_to_ptr.vmem [resolvable:$true] %s205
      %208 = dma.hbm_to_vmem [thread:$0]  %s31, 16, %s206, [#allocation17]
    $region65: #{transformer_decoder_forward.1} parent=1 // pred_fallthru
      _
    // Predicated region
    $region66: #{transformer_decoder_forward.1} parent=1 // pred_check
      _
    $region67: #{transformer_decoder_forward.1} parent=1 // pred_check_branch
      %210 = sbr.rel (0) target = $region69
    $region68: #{transformer_decoder_forward.1} parent=1 // pred_region
      %s212 = ssub.s32 16, 16
      %213 = vsyncadd [#allocation20], %s212
      %s215 = sshll.u32 [#allocation19], 4
      %s216 = int_to_ptr.vmem [resolvable:$true] %s215
      %218 = dma.hbm_to_vmem [thread:$0]  %s33, 16, %s216, [#allocation20]
    $region69: #{transformer_decoder_forward.1} parent=1 // pred_fallthru
      _
    // Predicated region
    $region70: #{transformer_decoder_forward.1} parent=1 // pred_check
      _
    $region71: #{transformer_decoder_forward.1} parent=1 // pred_check_branch
      %220 = sbr.rel (0) target = $region73
    $region72: #{transformer_decoder_forward.1} parent=1 // pred_region
      %s222 = ssub.s32 16, 16
      %223 = vsyncadd [#allocation20], %s222
      %s225 = sshll.u32 [#allocation21], 4
      %s226 = int_to_ptr.vmem [resolvable:$true] %s225
      %228 = dma.hbm_to_vmem [thread:$0]  %s35, 16, %s226, [#allocation20]
    $region73: #{transformer_decoder_forward.1} parent=1 // pred_fallthru
      _
    // Predicated region
    $region74: #{transformer_decoder_forward.1} parent=1 // pred_check
      _
    $region75: #{transformer_decoder_forward.1} parent=1 // pred_check_branch
      %230 = sbr.rel (0) target = $region77
    $region76: #{transformer_decoder_forward.1} parent=1 // pred_region
      %s232 = ssub.s32 16, 16
      %233 = vsyncadd [#allocation23], %s232
      %s235 = sshll.u32 [#allocation22], 4
      %s236 = int_to_ptr.vmem [resolvable:$true] %s235
      %238 = dma.hbm_to_vmem [thread:$0]  %s37, 16, %s236, [#allocation23]
    $region77: #{transformer_decoder_forward.1} parent=1 // pred_fallthru
      _
    // Predicated region
    $region78: #{transformer_decoder_forward.1} parent=1 // pred_check
      _
    $region79: #{transformer_decoder_forward.1} parent=1 // pred_check_branch
      %240 = sbr.rel (0) target = $region81
    $region80: #{transformer_decoder_forward.1} parent=1 // pred_region
      %s242 = ssub.s32 16, 16
      %243 = vsyncadd [#allocation23], %s242
      %s245 = sshll.u32 [#allocation24], 4
      %s246 = int_to_ptr.vmem [resolvable:$true] %s245
      %248 = dma.hbm_to_vmem [thread:$0]  %s39, 16, %s246, [#allocation23]
    $region81: #{transformer_decoder_forward.1} parent=1 // pred_fallthru
      _
    // Predicated region
    $region82: #{transformer_decoder_forward.1} parent=1 // pred_check
      _
    $region83: #{transformer_decoder_forward.1} parent=1 // pred_check_branch
      %250 = sbr.rel (0) target = $region85
    $region84: #{transformer_decoder_forward.1} parent=1 // pred_region
      %s252 = ssub.s32 16, 16
      %253 = vsyncadd [#allocation26], %s252
      %s255 = sshll.u32 [#allocation25], 4
      %s256 = int_to_ptr.vmem [resolvable:$true] %s255
      %258 = dma.hbm_to_vmem [thread:$0]  %s41, 16, %s256, [#allocation26]
    $region85: #{transformer_decoder_forward.1} parent=1 // pred_fallthru
      _
    // Predicated region
    $region86: #{transformer_decoder_forward.1} parent=1 // pred_check
      _
    $region87: #{transformer_decoder_forward.1} parent=1 // pred_check_branch
      %260 = sbr.rel (0) target = $region89
    $region88: #{transformer_decoder_forward.1} parent=1 // pred_region
      _
    $region89: #{transformer_decoder_forward.1} parent=1 // pred_fallthru
      _
    // Predicated region
    $region90: #{transformer_decoder_forward.1} parent=1 // pred_check
      _
    $region91: #{transformer_decoder_forward.1} parent=1 // pred_check_branch
      %262 = sbr.rel (0) target = $region93
    $region92: #{transformer_decoder_forward.1} parent=1 // pred_region
      _
    $region93: #{transformer_decoder_forward.1} parent=1 // pred_fallthru
      _
    // Predicated region
    $region94: #{transformer_decoder_forward.1} parent=1 // pred_check
      _
    $region95: #{transformer_decoder_forward.1} parent=1 // pred_check_branch
      %264 = sbr.rel (0) target = $region97
    $region96: #{transformer_decoder_forward.1} parent=1 // pred_region
      _
    $region97: #{transformer_decoder_forward.1} parent=1 // pred_fallthru
      _
    // Predicated region
    $region98: #{transformer_decoder_forward.1} parent=1 // pred_check
      _
    $region99: #{transformer_decoder_forward.1} parent=1 // pred_check_branch
      %266 = sbr.rel (0) target = $region101
    $region100: #{transformer_decoder_forward.1} parent=1 // pred_region
      _
    $region101: #{transformer_decoder_forward.1} parent=1 // pred_fallthru
      _
    // Predicated region
    $region102: #{transformer_decoder_forward.1} parent=1 // pred_check
      _
    $region103: #{transformer_decoder_forward.1} parent=1 // pred_check_branch
      %268 = sbr.rel (0) target = $region105
    $region104: #{transformer_decoder_forward.1} parent=1 // pred_region
      %s270 = ssub.s32 16, 16
      %271 = vsyncadd [#allocation26], %s270
      %s273 = sshll.u32 [#allocation27], 4
      %s274 = int_to_ptr.vmem [resolvable:$true] %s273
      %276 = dma.hbm_to_vmem [thread:$0]  %s51, 16, %s274, [#allocation26]
    $region105: #{transformer_decoder_forward.1} parent=1 // pred_fallthru
      _
    // Predicated region
    $region106: #{transformer_decoder_forward.1} parent=1 // pred_check
      _
    $region107: #{transformer_decoder_forward.1} parent=1 // pred_check_branch
      %278 = sbr.rel (0) target = $region109
    $region108: #{transformer_decoder_forward.1} parent=1 // pred_region
      %s280 = ssub.s32 16, 16
      %281 = vsyncadd [#allocation29], %s280
      %s283 = sshll.u32 [#allocation28], 4
      %s284 = int_to_ptr.vmem [resolvable:$true] %s283
      %286 = dma.hbm_to_vmem [thread:$0]  %s53, 16, %s284, [#allocation29]
    $region109: #{transformer_decoder_forward.1} parent=1 // pred_fallthru
      _
    // Predicated region
    $region110: #{transformer_decoder_forward.1} parent=1 // pred_check
      _
    $region111: #{transformer_decoder_forward.1} parent=1 // pred_check_branch
      %288 = sbr.rel (0) target = $region113
    $region112: #{transformer_decoder_forward.1} parent=1 // pred_region
      %s290 = ssub.s32 16, 16
      %291 = vsyncadd [#allocation29], %s290
      %s293 = sshll.u32 [#allocation30], 4
      %s294 = int_to_ptr.vmem [resolvable:$true] %s293
      %296 = dma.hbm_to_vmem [thread:$0]  %s55, 16, %s294, [#allocation29]
    $region113: #{transformer_decoder_forward.1} parent=1 // pred_fallthru
      _
    // Predicated region
    $region114: #{transformer_decoder_forward.1} parent=1 // pred_check
      _
    $region115: #{transformer_decoder_forward.1} parent=1 // pred_check_branch
      %298 = sbr.rel (0) target = $region117
    $region116: #{transformer_decoder_forward.1} parent=1 // pred_region
      %s300 = ssub.s32 16, 16
      %301 = vsyncadd [#allocation32], %s300
      %s303 = sshll.u32 [#allocation31], 4
      %s304 = int_to_ptr.vmem [resolvable:$true] %s303
      %306 = dma.hbm_to_vmem [thread:$0]  %s57, 16, %s304, [#allocation32]
    $region117: #{transformer_decoder_forward.1} parent=1 // pred_fallthru
      _
    // Predicated region
    $region118: #{transformer_decoder_forward.1} parent=1 // pred_check
      _
    $region119: #{transformer_decoder_forward.1} parent=1 // pred_check_branch
      %308 = sbr.rel (0) target = $region121
    $region120: #{transformer_decoder_forward.1} parent=1 // pred_region
      %s310 = ssub.s32 16, 16
      %311 = vsyncadd [#allocation32], %s310
      %s313 = sshll.u32 [#allocation33], 4
      %s314 = int_to_ptr.vmem [resolvable:$true] %s313
      %316 = dma.hbm_to_vmem [thread:$0]  %s59, 16, %s314, [#allocation32]
    $region121: #{transformer_decoder_forward.1} parent=1 // pred_fallthru
      _
    // Predicated region
    $region122: #{transformer_decoder_forward.1} parent=1 // pred_check
      _
    $region123: #{transformer_decoder_forward.1} parent=1 // pred_check_branch
      %318 = sbr.rel (0) target = $region125
    $region124: #{transformer_decoder_forward.1} parent=1 // pred_region
      %s320 = ssub.s32 16, 16
      %321 = vsyncadd [#allocation35], %s320
      %s323 = sshll.u32 [#allocation34], 4
      %s324 = int_to_ptr.vmem [resolvable:$true] %s323
      %326 = dma.hbm_to_vmem [thread:$0]  %s61, 16, %s324, [#allocation35]
    $region125: #{transformer_decoder_forward.1} parent=1 // pred_fallthru
      _
    // Predicated region
    $region126: #{transformer_decoder_forward.1} parent=1 // pred_check
      _
    $region127: #{transformer_decoder_forward.1} parent=1 // pred_check_branch
      %328 = sbr.rel (0) target = $region129
    $region128: #{transformer_decoder_forward.1} parent=1 // pred_region
      %s330 = ssub.s32 16, 16
      %331 = vsyncadd [#allocation35], %s330
      %s333 = sshll.u32 [#allocation36], 4
      %s334 = int_to_ptr.vmem [resolvable:$true] %s333
      %336 = dma.hbm_to_vmem [thread:$0]  %s63, 16, %s334, [#allocation35]
    $region129: #{transformer_decoder_forward.1} parent=1 // pred_fallthru
      _
    // Predicated region
    $region130: #{transformer_decoder_forward.1} parent=1 // pred_check
      _
    $region131: #{transformer_decoder_forward.1} parent=1 // pred_check_branch
      %338 = sbr.rel (0) target = $region133
    $region132: #{transformer_decoder_forward.1} parent=1 // pred_region
      %s340 = ssub.s32 16, 16
      %341 = vsyncadd [#allocation38], %s340
      %s343 = sshll.u32 [#allocation37], 4
      %s344 = int_to_ptr.vmem [resolvable:$true] %s343
      %346 = dma.hbm_to_vmem [thread:$0]  %s65, 16, %s344, [#allocation38]
    $region133: #{transformer_decoder_forward.1} parent=1 // pred_fallthru
      _
    // Predicated region
    $region134: #{transformer_decoder_forward.1} parent=1 // pred_check
      _
    $region135: #{transformer_decoder_forward.1} parent=1 // pred_check_branch
      %348 = sbr.rel (0) target = $region137
    $region136: #{transformer_decoder_forward.1} parent=1 // pred_region
      _
    $region137: #{transformer_decoder_forward.1} parent=1 // pred_fallthru
      _
    // Predicated region
    $region138: #{transformer_decoder_forward.1} parent=1 // pred_check
      _
    $region139: #{transformer_decoder_forward.1} parent=1 // pred_check_branch
      %350 = sbr.rel (0) target = $region141
    $region140: #{transformer_decoder_forward.1} parent=1 // pred_region
      _
    $region141: #{transformer_decoder_forward.1} parent=1 // pred_fallthru
      _
    // Predicated region
    $region142: #{transformer_decoder_forward.1} parent=1 // pred_check
      _
    $region143: #{transformer_decoder_forward.1} parent=1 // pred_check_branch
      %352 = sbr.rel (0) target = $region145
    $region144: #{transformer_decoder_forward.1} parent=1 // pred_region
      %s354 = ssub.s32 512, 512
      %355 = vsyncadd [#allocation38], %s354
      %s356 = sshll.u32 [#allocation39], 4
      %s357 = int_to_ptr.vmem [resolvable:$true] %s356
      %362 = dma.hbm_to_vmem [thread:$0]  %s71, 512, %s357, [#allocation38], 128, 128, 8
    $region145: #{transformer_decoder_forward.1} parent=1 // pred_fallthru
      _
    // Predicated region
    $region146: #{transformer_decoder_forward.1} parent=1 // pred_check
      _
    $region147: #{transformer_decoder_forward.1} parent=1 // pred_check_branch
      %364 = sbr.rel (0) target = $region149
    $region148: #{transformer_decoder_forward.1} parent=1 // pred_region
      %s366 = ssub.s32 512, 512
      %367 = vsyncadd [#allocation41], %s366
      %s368 = sshll.u32 [#allocation40], 4
      %s369 = int_to_ptr.vmem [resolvable:$true] %s368
      %374 = dma.hbm_to_vmem [thread:$0]  %s73, 512, %s369, [#allocation41], 128, 128, 8
    $region149: #{transformer_decoder_forward.1} parent=1 // pred_fallthru
      _
    // Predicated region
    $region150: #{transformer_decoder_forward.1} parent=1 // pred_check
      _
    $region151: #{transformer_decoder_forward.1} parent=1 // pred_check_branch
      %376 = sbr.rel (0) target = $region153
    $region152: #{transformer_decoder_forward.1} parent=1 // pred_region
      %s378 = ssub.s32 16, 16
      %379 = vsyncadd [#allocation41], %s378
      %s381 = sshll.u32 [#allocation42], 4
      %s382 = int_to_ptr.vmem [resolvable:$true] %s381
      %384 = dma.hbm_to_vmem [thread:$0]  %s75, 16, %s382, [#allocation41]
    $region153: #{transformer_decoder_forward.1} parent=1 // pred_fallthru
      _
    // Predicated region
    $region154: #{transformer_decoder_forward.1} parent=1 // pred_check
      _
    $region155: #{transformer_decoder_forward.1} parent=1 // pred_check_branch
      %386 = sbr.rel (0) target = $region157
    $region156: #{transformer_decoder_forward.1} parent=1 // pred_region
      _
    $region157: #{transformer_decoder_forward.1} parent=1 // pred_fallthru
      _
    // Predicated region
    $region158: #{transformer_decoder_forward.1} parent=1 // pred_check
      _
    $region159: #{transformer_decoder_forward.1} parent=1 // pred_check_branch
      %388 = sbr.rel (0) target = $region161
    $region160: #{transformer_decoder_forward.1} parent=1 // pred_region
      %s390 = ssub.s32 128, 128
      %391 = vsyncadd [#allocation44], %s390
      %s393 = sshll.u32 [#allocation43], 4
      %s394 = int_to_ptr.vmem [resolvable:$true] %s393
      %396 = dma.hbm_to_vmem [thread:$0]  %s79, 128, %s394, [#allocation44]
    $region161: #{transformer_decoder_forward.1} parent=1 // pred_fallthru
      _
    // Predicated region
    $region162: #{transformer_decoder_forward.1} parent=1 // pred_check
      _
    $region163: #{transformer_decoder_forward.1} parent=1 // pred_check_branch
      %398 = sbr.rel (0) target = $region165
    $region164: #{transformer_decoder_forward.1} parent=1 // pred_region
      _
    $region165: #{transformer_decoder_forward.1} parent=1 // pred_fallthru
      _
    // Predicated region
    $region166: #{transformer_decoder_forward.1} parent=1 // pred_check
      _
    $region167: #{transformer_decoder_forward.1} parent=1 // pred_check_branch
      %400 = sbr.rel (0) target = $region169
    $region168: #{transformer_decoder_forward.1} parent=1 // pred_region
      _
    $region169: #{transformer_decoder_forward.1} parent=1 // pred_fallthru
      _
    // Predicated region
    $region170: #{transformer_decoder_forward.1} parent=1 // pred_check
      _
    $region171: #{transformer_decoder_forward.1} parent=1 // pred_check_branch
      %402 = sbr.rel (0) target = $region173
    $region172: #{transformer_decoder_forward.1} parent=1 // pred_region
      %403 = dma.done [#allocation5], 16
    $region173: #{transformer_decoder_forward.1} parent=1 // pred_fallthru
      _
    // Predicated region
    $region174: #{transformer_decoder_forward.1} parent=1 // pred_check
      _
    $region175: #{transformer_decoder_forward.1} parent=1 // pred_check_branch
      %405 = sbr.rel (0) target = $region177
    $region176: #{transformer_decoder_forward.1} parent=1 // pred_region
      %406 = dma.done [#allocation8], 16
    $region177: #{transformer_decoder_forward.1} parent=1 // pred_fallthru
      _
    // Predicated region
    $region178: #{transformer_decoder_forward.1} parent=1 // pred_check
      _
    $region179: #{transformer_decoder_forward.1} parent=1 // pred_check_branch
      %408 = sbr.rel (0) target = $region181
    $region180: #{transformer_decoder_forward.1} parent=1 // pred_region
      %409 = dma.done [#allocation8], 16
    $region181: #{transformer_decoder_forward.1} parent=1 // pred_fallthru
      _
    // Predicated region
    $region182: #{transformer_decoder_forward.1} parent=1 // pred_check
      _
    $region183: #{transformer_decoder_forward.1} parent=1 // pred_check_branch
      %411 = sbr.rel (0) target = $region185
    $region184: #{transformer_decoder_forward.1} parent=1 // pred_region
      %412 = dma.done [#allocation11], 16
    $region185: #{transformer_decoder_forward.1} parent=1 // pred_fallthru
      _
    // Predicated region
    $region186: #{transformer_decoder_forward.1} parent=1 // pred_check
      _
    $region187: #{transformer_decoder_forward.1} parent=1 // pred_check_branch
      %414 = sbr.rel (0) target = $region189
    $region188: #{transformer_decoder_forward.1} parent=1 // pred_region
      %415 = dma.done [#allocation11], 16
    $region189: #{transformer_decoder_forward.1} parent=1 // pred_fallthru
      _
    // Predicated region
    $region190: #{transformer_decoder_forward.1} parent=1 // pred_check
      _
    $region191: #{transformer_decoder_forward.1} parent=1 // pred_check_branch
      %417 = sbr.rel (0) target = $region193
    $region192: #{transformer_decoder_forward.1} parent=1 // pred_region
      %418 = dma.done [#allocation14], 16
    $region193: #{transformer_decoder_forward.1} parent=1 // pred_fallthru
      _
    // Predicated region
    $region194: #{transformer_decoder_forward.1} parent=1 // pred_check
      _
    $region195: #{transformer_decoder_forward.1} parent=1 // pred_check_branch
      %420 = sbr.rel (0) target = $region197
    $region196: #{transformer_decoder_forward.1} parent=1 // pred_region
      %421 = dma.done [#allocation14], 16
    $region197: #{transformer_decoder_forward.1} parent=1 // pred_fallthru
      _
    // Predicated region
    $region198: #{transformer_decoder_forward.1} parent=1 // pred_check
      _
    $region199: #{transformer_decoder_forward.1} parent=1 // pred_check_branch
      %423 = sbr.rel (0) target = $region201
    $region200: #{transformer_decoder_forward.1} parent=1 // pred_region
      %424 = dma.done [#allocation17], 16
    $region201: #{transformer_decoder_forward.1} parent=1 // pred_fallthru
      _
    // Predicated region
    $region202: #{transformer_decoder_forward.1} parent=1 // pred_check
      _
    $region203: #{transformer_decoder_forward.1} parent=1 // pred_check_branch
      %426 = sbr.rel (0) target = $region205
    $region204: #{transformer_decoder_forward.1} parent=1 // pred_region
      %427 = dma.done [#allocation17], 16
    $region205: #{transformer_decoder_forward.1} parent=1 // pred_fallthru
      _
    // Predicated region
    $region206: #{transformer_decoder_forward.1} parent=1 // pred_check
      _
    $region207: #{transformer_decoder_forward.1} parent=1 // pred_check_branch
      %429 = sbr.rel (0) target = $region209
    $region208: #{transformer_decoder_forward.1} parent=1 // pred_region
      %430 = dma.done [#allocation20], 16
    $region209: #{transformer_decoder_forward.1} parent=1 // pred_fallthru
      _
    // Predicated region
    $region210: #{transformer_decoder_forward.1} parent=1 // pred_check
      _
    $region211: #{transformer_decoder_forward.1} parent=1 // pred_check_branch
      %432 = sbr.rel (0) target = $region213
    $region212: #{transformer_decoder_forward.1} parent=1 // pred_region
      %433 = dma.done [#allocation20], 16
    $region213: #{transformer_decoder_forward.1} parent=1 // pred_fallthru
      _
    // Predicated region
    $region214: #{transformer_decoder_forward.1} parent=1 // pred_check
      _
    $region215: #{transformer_decoder_forward.1} parent=1 // pred_check_branch
      %435 = sbr.rel (0) target = $region217
    $region216: #{transformer_decoder_forward.1} parent=1 // pred_region
      %436 = dma.done [#allocation23], 16
    $region217: #{transformer_decoder_forward.1} parent=1 // pred_fallthru
      _
    // Predicated region
    $region218: #{transformer_decoder_forward.1} parent=1 // pred_check
      _
    $region219: #{transformer_decoder_forward.1} parent=1 // pred_check_branch
      %438 = sbr.rel (0) target = $region221
    $region220: #{transformer_decoder_forward.1} parent=1 // pred_region
      %439 = dma.done [#allocation23], 16
    $region221: #{transformer_decoder_forward.1} parent=1 // pred_fallthru
      _
    // Predicated region
    $region222: #{transformer_decoder_forward.1} parent=1 // pred_check
      _
    $region223: #{transformer_decoder_forward.1} parent=1 // pred_check_branch
      %441 = sbr.rel (0) target = $region225
    $region224: #{transformer_decoder_forward.1} parent=1 // pred_region
      %442 = dma.done [#allocation26], 16
    $region225: #{transformer_decoder_forward.1} parent=1 // pred_fallthru
      _
    // Predicated region
    $region226: #{transformer_decoder_forward.1} parent=1 // pred_check
      _
    $region227: #{transformer_decoder_forward.1} parent=1 // pred_check_branch
      %444 = sbr.rel (0) target = $region229
    $region228: #{transformer_decoder_forward.1} parent=1 // pred_region
      %445 = dma.done [#allocation26], 16
    $region229: #{transformer_decoder_forward.1} parent=1 // pred_fallthru
      _
    // Predicated region
    $region230: #{transformer_decoder_forward.1} parent=1 // pred_check
      _
    $region231: #{transformer_decoder_forward.1} parent=1 // pred_check_branch
      %447 = sbr.rel (0) target = $region233
    $region232: #{transformer_decoder_forward.1} parent=1 // pred_region
      %448 = dma.done [#allocation29], 16
    $region233: #{transformer_decoder_forward.1} parent=1 // pred_fallthru
      _
    // Predicated region
    $region234: #{transformer_decoder_forward.1} parent=1 // pred_check
      _
    $region235: #{transformer_decoder_forward.1} parent=1 // pred_check_branch
      %450 = sbr.rel (0) target = $region237
    $region236: #{transformer_decoder_forward.1} parent=1 // pred_region
      %451 = dma.done [#allocation29], 16
    $region237: #{transformer_decoder_forward.1} parent=1 // pred_fallthru
      _
    // Predicated region
    $region238: #{transformer_decoder_forward.1} parent=1 // pred_check
      _
    $region239: #{transformer_decoder_forward.1} parent=1 // pred_check_branch
      %453 = sbr.rel (0) target = $region241
    $region240: #{transformer_decoder_forward.1} parent=1 // pred_region
      %454 = dma.done [#allocation32], 16
    $region241: #{transformer_decoder_forward.1} parent=1 // pred_fallthru
      _
    // Predicated region
    $region242: #{transformer_decoder_forward.1} parent=1 // pred_check
      _
    $region243: #{transformer_decoder_forward.1} parent=1 // pred_check_branch
      %456 = sbr.rel (0) target = $region245
    $region244: #{transformer_decoder_forward.1} parent=1 // pred_region
      %457 = dma.done [#allocation32], 16
    $region245: #{transformer_decoder_forward.1} parent=1 // pred_fallthru
      _
    // Predicated region
    $region246: #{transformer_decoder_forward.1} parent=1 // pred_check
      _
    $region247: #{transformer_decoder_forward.1} parent=1 // pred_check_branch
      %459 = sbr.rel (0) target = $region249
    $region248: #{transformer_decoder_forward.1} parent=1 // pred_region
      %460 = dma.done [#allocation35], 16
    $region249: #{transformer_decoder_forward.1} parent=1 // pred_fallthru
      _
    // Predicated region
    $region250: #{transformer_decoder_forward.1} parent=1 // pred_check
      _
    $region251: #{transformer_decoder_forward.1} parent=1 // pred_check_branch
      %462 = sbr.rel (0) target = $region253
    $region252: #{transformer_decoder_forward.1} parent=1 // pred_region
      %463 = dma.done [#allocation35], 16
    $region253: #{transformer_decoder_forward.1} parent=1 // pred_fallthru
      _
    // Predicated region
    $region254: #{transformer_decoder_forward.1} parent=1 // pred_check
      _
    $region255: #{transformer_decoder_forward.1} parent=1 // pred_check_branch
      %465 = sbr.rel (0) target = $region257
    $region256: #{transformer_decoder_forward.1} parent=1 // pred_region
      %466 = dma.done [#allocation38], 16
    $region257: #{transformer_decoder_forward.1} parent=1 // pred_fallthru
      _
    // Predicated region
    $region258: #{transformer_decoder_forward.1} parent=1 // pred_check
      _
    $region259: #{transformer_decoder_forward.1} parent=1 // pred_check_branch
      %468 = sbr.rel (0) target = $region261
    $region260: #{transformer_decoder_forward.1} parent=1 // pred_region
      %469 = dma.done [#allocation38], 512
    $region261: #{transformer_decoder_forward.1} parent=1 // pred_fallthru
      _
    // Predicated region
    $region262: #{transformer_decoder_forward.1} parent=1 // pred_check
      _
    $region263: #{transformer_decoder_forward.1} parent=1 // pred_check_branch
      %471 = sbr.rel (0) target = $region265
    $region264: #{transformer_decoder_forward.1} parent=1 // pred_region
      %472 = dma.done [#allocation41], 512
    $region265: #{transformer_decoder_forward.1} parent=1 // pred_fallthru
      _
    // Predicated region
    $region266: #{transformer_decoder_forward.1} parent=1 // pred_check
      _
    $region267: #{transformer_decoder_forward.1} parent=1 // pred_check_branch
      %474 = sbr.rel (0) target = $region269
    $region268: #{transformer_decoder_forward.1} parent=1 // pred_region
      %475 = dma.done [#allocation41], 16
    $region269: #{transformer_decoder_forward.1} parent=1 // pred_fallthru
      _
    // Predicated region
    $region270: #{transformer_decoder_forward.1} parent=1 // pred_check
      _
    $region271: #{transformer_decoder_forward.1} parent=1 // pred_check_branch
      %477 = sbr.rel (0) target = $region273
    $region272: #{transformer_decoder_forward.1} parent=1 // pred_region
      %478 = dma.done [#allocation44], 128
    $region273: #{transformer_decoder_forward.1} parent=1 // pred_fallthru
      _
    %v479 = vld [vmem:[%s1] sm:$0x3]
    %v480 = vld [vmem:[%s83] sm:$0xff]
    %vm481 = vcmask 15360
    %v483 = vsel %vm481, %v480, 0
    %vm485 = vcmask 1041408
    %v487 = vsel %vm485, %v479, 0
    %489 = vmatprep.subr.mxu0 0.0
    %490 = vmatpush1.msra.mxu0 %v487
    %491 = vmatprep.subr.mxu0 0.0
    %492 = vmatpush1.msra.mxu0 0.0
    %493 = vmatprep.subr.mxu0 0.0
    %494 = vmatpush1.msra.mxu0 0.0
    %495 = vmatprep.subr.mxu0 0.0
    %496 = vmatpush1.msra.mxu0 0.0
    %497 = vmatprep.subr.mxu0 0.0
    %498 = vmatpush1.msra.mxu0 0.0
    %499 = vmatprep.subr.mxu0 0.0
    %500 = vmatpush1.msra.mxu0 0.0
    %501 = vmatprep.subr.mxu0 0.0
    %502 = vmatpush1.msra.mxu0 0.0
    %503 = vmatprep.subr.mxu0 0.0
    %504 = vmatpush1.msra.mxu0 0.0
    %505 = vmatprep.subr.mxu0 0.0
    %506 = vmatpush1.msra.mxu0 0.0
    %507 = vmatprep.subr.mxu0 0.0
    %508 = vmatpush1.msra.mxu0 0.0
    %509 = vmatprep.subr.mxu0 0.0
    %510 = vmatpush1.msra.mxu0 0.0
    %511 = vmatprep.subr.mxu0 0.0
    %512 = vmatpush1.msra.mxu0 0.0
    %513 = vmatprep.subr.mxu0 0.0
    %514 = vmatpush1.msra.mxu0 0.0
    %515 = vmatprep.subr.mxu0 0.0
    %516 = vmatpush1.msra.mxu0 0.0
    %517 = vmatprep.subr.mxu0 0.0
    %518 = vmatpush1.msra.mxu0 0.0
    %519 = vmatprep.subr.mxu0 0.0
    %520 = vmatpush1.msra.mxu0 0.0
    %521 = vmatprep.subr.mxu0 0.0
    %522 = vmatpush1.msra.mxu0 0.0
    %523 = vmatprep.subr.mxu0 0.0
    %524 = vmatpush1.msra.mxu0 0.0
    %525 = vmatprep.subr.mxu0 0.0
    %526 = vmatpush1.msra.mxu0 0.0
    %527 = vmatprep.subr.mxu0 0.0
    %528 = vmatpush1.msra.mxu0 0.0
    %529 = vmatprep.subr.mxu0 0.0
    %530 = vmatpush1.msra.mxu0 0.0
    %531 = vmatprep.subr.mxu0 0.0
    %532 = vmatpush1.msra.mxu0 0.0
    %533 = vmatprep.subr.mxu0 0.0
    %534 = vmatpush1.msra.mxu0 0.0
    %535 = vmatprep.subr.mxu0 0.0
    %536 = vmatpush1.msra.mxu0 0.0
    %537 = vmatprep.subr.mxu0 0.0
    %538 = vmatpush1.msra.mxu0 0.0
    %539 = vmatprep.subr.mxu0 0.0
    %540 = vmatpush1.msra.mxu0 0.0
    %541 = vmatprep.subr.mxu0 0.0
    %542 = vmatpush1.msra.mxu0 0.0
    %543 = vmatprep.subr.mxu0 0.0
    %544 = vmatpush1.msra.mxu0 0.0
    %545 = vmatprep.subr.mxu0 0.0
    %546 = vmatpush1.msra.mxu0 0.0
    %547 = vmatprep.subr.mxu0 0.0
    %548 = vmatpush1.msra.mxu0 0.0
    %549 = vmatprep.subr.mxu0 0.0
    %550 = vmatpush1.msra.mxu0 0.0
    %551 = vmatprep.subr.mxu0 0.0
    %552 = vmatpush1.msra.mxu0 0.0
    %553 = vmatprep.mubr.f32.mxu0 0.0
    %554 = vmatmul.mubr.f32.gmra.mrb[0].mxu0 %v483
    %v555 = vpop.f32.mrb[0].mxu0
    %v556 = vadd.f32 0.0, %v555
    %v557 = vpop.f32.mrb[0].mxu0
    %558 = vdwg.mxu0
    %v559 = vld [vmem:[#allocation10] sm:$0x1]
    %v560 = vld [vmem:[%s25] sm:$0xff]
    %v561 = vld [vmem:[%s25 + $0x8] sm:$0xff]
    %v562 = vld [vmem:[%s25 + $0x10] sm:$0xff]
    %v563 = vld [vmem:[%s25 + $0x18] sm:$0xff]
    %s564 = scalar_lea.vmem %s25, 32
    %v565 = vld [vmem:[%s564] sm:$0xff]
    %v566 = vld [vmem:[%s564 + $0x8] sm:$0xff]
    %v567 = vld [vmem:[%s564 + $0x10] sm:$0xff]
    %v568 = vld [vmem:[%s564 + $0x18] sm:$0xff]
    %v570 = vrot.slane %v556, 1
    %vm571 = vcmask 261120
    %v572 = vsel %vm571, %v570, 0
    %574 = vmatprep.subr.mxu0 0.0
    %575 = vmatpush1.msra.mxu0 %v565
    %576 = vmatprep.subr.mxu0 0.0
    %577 = vmatpush1.msra.mxu0 %v566
    %578 = vmatprep.subr.mxu0 0.0
    %579 = vmatpush1.msra.mxu0 %v567
    %580 = vmatprep.subr.mxu0 0.0
    %581 = vmatpush1.msra.mxu0 %v568
    %582 = vmatprep.subr.mxu0 0.0
    %583 = vmatpush1.msra.mxu0 0.0
    %584 = vmatprep.subr.mxu0 0.0
    %585 = vmatpush1.msra.mxu0 0.0
    %586 = vmatprep.subr.mxu0 0.0
    %587 = vmatpush1.msra.mxu0 0.0
    %588 = vmatprep.subr.mxu0 0.0
    %589 = vmatpush1.msra.mxu0 0.0
    %590 = vmatprep.subr.mxu0 0.0
    %591 = vmatpush1.msra.mxu0 0.0
    %592 = vmatprep.subr.mxu0 0.0
    %593 = vmatpush1.msra.mxu0 0.0
    %594 = vmatprep.subr.mxu0 0.0
    %595 = vmatpush1.msra.mxu0 0.0
    %596 = vmatprep.subr.mxu0 0.0
    %597 = vmatpush1.msra.mxu0 0.0
    %598 = vmatprep.subr.mxu0 0.0
    %599 = vmatpush1.msra.mxu0 0.0
    %600 = vmatprep.subr.mxu0 0.0
    %601 = vmatpush1.msra.mxu0 0.0
    %602 = vmatprep.subr.mxu0 0.0
    %603 = vmatpush1.msra.mxu0 0.0
    %604 = vmatprep.subr.mxu0 0.0
    %605 = vmatpush1.msra.mxu0 0.0
    %606 = vmatprep.subr.mxu0 0.0
    %607 = vmatpush1.msra.mxu0 0.0
    %608 = vmatprep.subr.mxu0 0.0
    %609 = vmatpush1.msra.mxu0 0.0
    %610 = vmatprep.subr.mxu0 0.0
    %611 = vmatpush1.msra.mxu0 0.0
    %612 = vmatprep.subr.mxu0 0.0
    %613 = vmatpush1.msra.mxu0 0.0
    %614 = vmatprep.subr.mxu0 0.0
    %615 = vmatpush1.msra.mxu0 0.0
    %616 = vmatprep.subr.mxu0 0.0
    %617 = vmatpush1.msra.mxu0 0.0
    %618 = vmatprep.subr.mxu0 0.0
    %619 = vmatpush1.msra.mxu0 0.0
    %620 = vmatprep.subr.mxu0 0.0
    %621 = vmatpush1.msra.mxu0 0.0
    %622 = vmatprep.subr.mxu0 0.0
    %623 = vmatpush1.msra.mxu0 0.0
    %624 = vmatprep.subr.mxu0 0.0
    %625 = vmatpush1.msra.mxu0 0.0
    %626 = vmatprep.subr.mxu0 0.0
    %627 = vmatpush1.msra.mxu0 0.0
    %628 = vmatprep.subr.mxu0 0.0
    %629 = vmatpush1.msra.mxu0 0.0
    %630 = vmatprep.subr.mxu0 0.0
    %631 = vmatpush1.msra.mxu0 0.0
    %632 = vmatprep.subr.mxu0 0.0
    %633 = vmatpush1.msra.mxu0 0.0
    %634 = vmatprep.subr.mxu0 0.0
    %635 = vmatpush1.msra.mxu0 0.0
    %636 = vmatprep.subr.mxu0 0.0
    %637 = vmatpush1.msra.mxu0 0.0
    %638 = vmatprep.mubr.f32.mxu0 0.0
    %639 = vmatmul.mubr.f32.gmra.mrb[0].mxu0 %v572
    %v640 = vpop.f32.mrb[0].mxu0
    %v641 = vadd.f32 0.0, %v640
    %v642 = vpop.f32.mrb[0].mxu0
    %643 = vdwg.mxu0
    %v644 = vsel %vm571, %v556, 0
    %646 = vmatprep.subr.mxu0 0.0
    %647 = vmatpush1.msra.mxu0 %v560
    %648 = vmatprep.subr.mxu0 0.0
    %649 = vmatpush1.msra.mxu0 %v561
    %650 = vmatprep.subr.mxu0 0.0
    %651 = vmatpush1.msra.mxu0 %v562
    %652 = vmatprep.subr.mxu0 0.0
    %653 = vmatpush1.msra.mxu0 %v563
    %654 = vmatprep.subr.mxu0 0.0
    %655 = vmatpush1.msra.mxu0 0.0
    %656 = vmatprep.subr.mxu0 0.0
    %657 = vmatpush1.msra.mxu0 0.0
    %658 = vmatprep.subr.mxu0 0.0
    %659 = vmatpush1.msra.mxu0 0.0
    %660 = vmatprep.subr.mxu0 0.0
    %661 = vmatpush1.msra.mxu0 0.0
    %662 = vmatprep.subr.mxu0 0.0
    %663 = vmatpush1.msra.mxu0 0.0
    %664 = vmatprep.subr.mxu0 0.0
    %665 = vmatpush1.msra.mxu0 0.0
    %666 = vmatprep.subr.mxu0 0.0
    %667 = vmatpush1.msra.mxu0 0.0
    %668 = vmatprep.subr.mxu0 0.0
    %669 = vmatpush1.msra.mxu0 0.0
    %670 = vmatprep.subr.mxu0 0.0
    %671 = vmatpush1.msra.mxu0 0.0
    %672 = vmatprep.subr.mxu0 0.0
    %673 = vmatpush1.msra.mxu0 0.0
    %674 = vmatprep.subr.mxu0 0.0
    %675 = vmatpush1.msra.mxu0 0.0
    %676 = vmatprep.subr.mxu0 0.0
    %677 = vmatpush1.msra.mxu0 0.0
    %678 = vmatprep.subr.mxu0 0.0
    %679 = vmatpush1.msra.mxu0 0.0
    %680 = vmatprep.subr.mxu0 0.0
    %681 = vmatpush1.msra.mxu0 0.0
    %682 = vmatprep.subr.mxu0 0.0
    %683 = vmatpush1.msra.mxu0 0.0
    %684 = vmatprep.subr.mxu0 0.0
    %685 = vmatpush1.msra.mxu0 0.0
    %686 = vmatprep.subr.mxu0 0.0
    %687 = vmatpush1.msra.mxu0 0.0
    %688 = vmatprep.subr.mxu0 0.0
    %689 = vmatpush1.msra.mxu0 0.0
    %690 = vmatprep.subr.mxu0 0.0
    %691 = vmatpush1.msra.mxu0 0.0
    %692 = vmatprep.subr.mxu0 0.0
    %693 = vmatpush1.msra.mxu0 0.0
    %694 = vmatprep.subr.mxu0 0.0
    %695 = vmatpush1.msra.mxu0 0.0
    %696 = vmatprep.subr.mxu0 0.0
    %697 = vmatpush1.msra.mxu0 0.0
    %698 = vmatprep.subr.mxu0 0.0
    %699 = vmatpush1.msra.mxu0 0.0
    %700 = vmatprep.subr.mxu0 0.0
    %701 = vmatpush1.msra.mxu0 0.0
    %702 = vmatprep.subr.mxu0 0.0
    %703 = vmatpush1.msra.mxu0 0.0
    %704 = vmatprep.subr.mxu0 0.0
    %705 = vmatpush1.msra.mxu0 0.0
    %706 = vmatprep.subr.mxu0 0.0
    %707 = vmatpush1.msra.mxu0 0.0
    %708 = vmatprep.subr.mxu0 0.0
    %709 = vmatpush1.msra.mxu0 0.0
    %710 = vmatprep.mubr.f32.mxu0 0.0
    %711 = vmatmul.mubr.f32.gmra.mrb[0].mxu0 %v644
    %v712 = vpop.f32.mrb[0].mxu0
    %v713 = vadd.f32 %v641, %v712
    %v714 = vpop.f32.mrb[0].mxu0
    %715 = vdwg.mxu0
    %s716 = scalar_lea.vmem %s25, 64
    %v717 = vld [vmem:[%s716] sm:$0xff]
    %v718 = vld [vmem:[%s716 + $0x8] sm:$0xff]
    %v719 = vld [vmem:[%s716 + $0x10] sm:$0xff]
    %v720 = vld [vmem:[%s716 + $0x18] sm:$0xff]
    %v721 = vrot.slane %v556, 2
    %v722 = vsel %vm571, %v721, 0
    %724 = vmatprep.subr.mxu0 0.0
    %725 = vmatpush1.msra.mxu0 %v717
    %726 = vmatprep.subr.mxu0 0.0
    %727 = vmatpush1.msra.mxu0 %v718
    %728 = vmatprep.subr.mxu0 0.0
    %729 = vmatpush1.msra.mxu0 %v719
    %730 = vmatprep.subr.mxu0 0.0
    %731 = vmatpush1.msra.mxu0 %v720
    %732 = vmatprep.subr.mxu0 0.0
    %733 = vmatpush1.msra.mxu0 0.0
    %734 = vmatprep.subr.mxu0 0.0
    %735 = vmatpush1.msra.mxu0 0.0
    %736 = vmatprep.subr.mxu0 0.0
    %737 = vmatpush1.msra.mxu0 0.0
    %738 = vmatprep.subr.mxu0 0.0
    %739 = vmatpush1.msra.mxu0 0.0
    %740 = vmatprep.subr.mxu0 0.0
    %741 = vmatpush1.msra.mxu0 0.0
    %742 = vmatprep.subr.mxu0 0.0
    %743 = vmatpush1.msra.mxu0 0.0
    %744 = vmatprep.subr.mxu0 0.0
    %745 = vmatpush1.msra.mxu0 0.0
    %746 = vmatprep.subr.mxu0 0.0
    %747 = vmatpush1.msra.mxu0 0.0
    %748 = vmatprep.subr.mxu0 0.0
    %749 = vmatpush1.msra.mxu0 0.0
    %750 = vmatprep.subr.mxu0 0.0
    %751 = vmatpush1.msra.mxu0 0.0
    %752 = vmatprep.subr.mxu0 0.0
    %753 = vmatpush1.msra.mxu0 0.0
    %754 = vmatprep.subr.mxu0 0.0
    %755 = vmatpush1.msra.mxu0 0.0
    %756 = vmatprep.subr.mxu0 0.0
    %757 = vmatpush1.msra.mxu0 0.0
    %758 = vmatprep.subr.mxu0 0.0
    %759 = vmatpush1.msra.mxu0 0.0
    %760 = vmatprep.subr.mxu0 0.0
    %761 = vmatpush1.msra.mxu0 0.0
    %762 = vmatprep.subr.mxu0 0.0
    %763 = vmatpush1.msra.mxu0 0.0
    %764 = vmatprep.subr.mxu0 0.0
    %765 = vmatpush1.msra.mxu0 0.0
    %766 = vmatprep.subr.mxu0 0.0
    %767 = vmatpush1.msra.mxu0 0.0
    %768 = vmatprep.subr.mxu0 0.0
    %769 = vmatpush1.msra.mxu0 0.0
    %770 = vmatprep.subr.mxu0 0.0
    %771 = vmatpush1.msra.mxu0 0.0
    %772 = vmatprep.subr.mxu0 0.0
    %773 = vmatpush1.msra.mxu0 0.0
    %774 = vmatprep.subr.mxu0 0.0
    %775 = vmatpush1.msra.mxu0 0.0
    %776 = vmatprep.subr.mxu0 0.0
    %777 = vmatpush1.msra.mxu0 0.0
    %778 = vmatprep.subr.mxu0 0.0
    %779 = vmatpush1.msra.mxu0 0.0
    %780 = vmatprep.subr.mxu0 0.0
    %781 = vmatpush1.msra.mxu0 0.0
    %782 = vmatprep.subr.mxu0 0.0
    %783 = vmatpush1.msra.mxu0 0.0
    %784 = vmatprep.subr.mxu0 0.0
    %785 = vmatpush1.msra.mxu0 0.0
    %786 = vmatprep.subr.mxu0 0.0
    %787 = vmatpush1.msra.mxu0 0.0
    %788 = vmatprep.mubr.f32.mxu0 0.0
    %789 = vmatmul.mubr.f32.gmra.mrb[0].mxu0 %v722
    %v790 = vpop.f32.mrb[0].mxu0
    %v791 = vadd.f32 0.0, %v790
    %v792 = vpop.f32.mrb[0].mxu0
    %793 = vdwg.mxu0
    %v794 = vadd.f32 %v713, %v791
    %s795 = scalar_lea.vmem %s25, 96
    %v796 = vld [vmem:[%s795] sm:$0xff]
    %v797 = vld [vmem:[%s795 + $0x8] sm:$0xff]
    %v798 = vld [vmem:[%s795 + $0x10] sm:$0xff]
    %v799 = vld [vmem:[%s795 + $0x18] sm:$0xff]
    %v800 = vrot.slane %v556, 3
    %v801 = vsel %vm571, %v800, 0
    %803 = vmatprep.subr.mxu0 0.0
    %804 = vmatpush1.msra.mxu0 %v796
    %805 = vmatprep.subr.mxu0 0.0
    %806 = vmatpush1.msra.mxu0 %v797
    %807 = vmatprep.subr.mxu0 0.0
    %808 = vmatpush1.msra.mxu0 %v798
    %809 = vmatprep.subr.mxu0 0.0
    %810 = vmatpush1.msra.mxu0 %v799
    %811 = vmatprep.subr.mxu0 0.0
    %812 = vmatpush1.msra.mxu0 0.0
    %813 = vmatprep.subr.mxu0 0.0
    %814 = vmatpush1.msra.mxu0 0.0
    %815 = vmatprep.subr.mxu0 0.0
    %816 = vmatpush1.msra.mxu0 0.0
    %817 = vmatprep.subr.mxu0 0.0
    %818 = vmatpush1.msra.mxu0 0.0
    %819 = vmatprep.subr.mxu0 0.0
    %820 = vmatpush1.msra.mxu0 0.0
    %821 = vmatprep.subr.mxu0 0.0
    %822 = vmatpush1.msra.mxu0 0.0
    %823 = vmatprep.subr.mxu0 0.0
    %824 = vmatpush1.msra.mxu0 0.0
    %825 = vmatprep.subr.mxu0 0.0
    %826 = vmatpush1.msra.mxu0 0.0
    %827 = vmatprep.subr.mxu0 0.0
    %828 = vmatpush1.msra.mxu0 0.0
    %829 = vmatprep.subr.mxu0 0.0
    %830 = vmatpush1.msra.mxu0 0.0
    %831 = vmatprep.subr.mxu0 0.0
    %832 = vmatpush1.msra.mxu0 0.0
    %833 = vmatprep.subr.mxu0 0.0
    %834 = vmatpush1.msra.mxu0 0.0
    %835 = vmatprep.subr.mxu0 0.0
    %836 = vmatpush1.msra.mxu0 0.0
    %837 = vmatprep.subr.mxu0 0.0
    %838 = vmatpush1.msra.mxu0 0.0
    %839 = vmatprep.subr.mxu0 0.0
    %840 = vmatpush1.msra.mxu0 0.0
    %841 = vmatprep.subr.mxu0 0.0
    %842 = vmatpush1.msra.mxu0 0.0
    %843 = vmatprep.subr.mxu0 0.0
    %844 = vmatpush1.msra.mxu0 0.0
    %845 = vmatprep.subr.mxu0 0.0
    %846 = vmatpush1.msra.mxu0 0.0
    %847 = vmatprep.subr.mxu0 0.0
    %848 = vmatpush1.msra.mxu0 0.0
    %849 = vmatprep.subr.mxu0 0.0
    %850 = vmatpush1.msra.mxu0 0.0
    %851 = vmatprep.subr.mxu0 0.0
    %852 = vmatpush1.msra.mxu0 0.0
    %853 = vmatprep.subr.mxu0 0.0
    %854 = vmatpush1.msra.mxu0 0.0
    %855 = vmatprep.subr.mxu0 0.0
    %856 = vmatpush1.msra.mxu0 0.0
    %857 = vmatprep.subr.mxu0 0.0
    %858 = vmatpush1.msra.mxu0 0.0
    %859 = vmatprep.subr.mxu0 0.0
    %860 = vmatpush1.msra.mxu0 0.0
    %861 = vmatprep.subr.mxu0 0.0
    %862 = vmatpush1.msra.mxu0 0.0
    %863 = vmatprep.subr.mxu0 0.0
    %864 = vmatpush1.msra.mxu0 0.0
    %865 = vmatprep.subr.mxu0 0.0
    %866 = vmatpush1.msra.mxu0 0.0
    %867 = vmatprep.mubr.f32.mxu0 0.0
    %868 = vmatmul.mubr.f32.gmra.mrb[0].mxu0 %v801
    %v869 = vpop.f32.mrb[0].mxu0
    %v870 = vadd.f32 0.0, %v869
    %v871 = vpop.f32.mrb[0].mxu0
    %872 = vdwg.mxu0
    %v873 = vadd.f32 %v794, %v870
    %s874 = scalar_lea.vmem %s25, 128
    %v875 = vld [vmem:[%s874] sm:$0xff]
    %v876 = vld [vmem:[%s874 + $0x8] sm:$0xff]
    %v877 = vld [vmem:[%s874 + $0x10] sm:$0xff]
    %v878 = vld [vmem:[%s874 + $0x18] sm:$0xff]
    %v879 = vrot.slane %v556, 4
    %v880 = vsel %vm571, %v879, 0
    %882 = vmatprep.subr.mxu0 0.0
    %883 = vmatpush1.msra.mxu0 %v875
    %884 = vmatprep.subr.mxu0 0.0
    %885 = vmatpush1.msra.mxu0 %v876
    %886 = vmatprep.subr.mxu0 0.0
    %887 = vmatpush1.msra.mxu0 %v877
    %888 = vmatprep.subr.mxu0 0.0
    %889 = vmatpush1.msra.mxu0 %v878
    %890 = vmatprep.subr.mxu0 0.0
    %891 = vmatpush1.msra.mxu0 0.0
    %892 = vmatprep.subr.mxu0 0.0
    %893 = vmatpush1.msra.mxu0 0.0
    %894 = vmatprep.subr.mxu0 0.0
    %895 = vmatpush1.msra.mxu0 0.0
    %896 = vmatprep.subr.mxu0 0.0
    %897 = vmatpush1.msra.mxu0 0.0
    %898 = vmatprep.subr.mxu0 0.0
    %899 = vmatpush1.msra.mxu0 0.0
    %900 = vmatprep.subr.mxu0 0.0
    %901 = vmatpush1.msra.mxu0 0.0
    %902 = vmatprep.subr.mxu0 0.0
    %903 = vmatpush1.msra.mxu0 0.0
    %904 = vmatprep.subr.mxu0 0.0
    %905 = vmatpush1.msra.mxu0 0.0
    %906 = vmatprep.subr.mxu0 0.0
    %907 = vmatpush1.msra.mxu0 0.0
    %908 = vmatprep.subr.mxu0 0.0
    %909 = vmatpush1.msra.mxu0 0.0
    %910 = vmatprep.subr.mxu0 0.0
    %911 = vmatpush1.msra.mxu0 0.0
    %912 = vmatprep.subr.mxu0 0.0
    %913 = vmatpush1.msra.mxu0 0.0
    %914 = vmatprep.subr.mxu0 0.0
    %915 = vmatpush1.msra.mxu0 0.0
    %916 = vmatprep.subr.mxu0 0.0
    %917 = vmatpush1.msra.mxu0 0.0
    %918 = vmatprep.subr.mxu0 0.0
    %919 = vmatpush1.msra.mxu0 0.0
    %920 = vmatprep.subr.mxu0 0.0
    %921 = vmatpush1.msra.mxu0 0.0
    %922 = vmatprep.subr.mxu0 0.0
    %923 = vmatpush1.msra.mxu0 0.0
    %924 = vmatprep.subr.mxu0 0.0
    %925 = vmatpush1.msra.mxu0 0.0
    %926 = vmatprep.subr.mxu0 0.0
    %927 = vmatpush1.msra.mxu0 0.0
    %928 = vmatprep.subr.mxu0 0.0
    %929 = vmatpush1.msra.mxu0 0.0
    %930 = vmatprep.subr.mxu0 0.0
    %931 = vmatpush1.msra.mxu0 0.0
    %932 = vmatprep.subr.mxu0 0.0
    %933 = vmatpush1.msra.mxu0 0.0
    %934 = vmatprep.subr.mxu0 0.0
    %935 = vmatpush1.msra.mxu0 0.0
    %936 = vmatprep.subr.mxu0 0.0
    %937 = vmatpush1.msra.mxu0 0.0
    %938 = vmatprep.subr.mxu0 0.0
    %939 = vmatpush1.msra.mxu0 0.0
    %940 = vmatprep.subr.mxu0 0.0
    %941 = vmatpush1.msra.mxu0 0.0
    %942 = vmatprep.subr.mxu0 0.0
    %943 = vmatpush1.msra.mxu0 0.0
    %944 = vmatprep.subr.mxu0 0.0
    %945 = vmatpush1.msra.mxu0 0.0
    %946 = vmatprep.mubr.f32.mxu0 0.0
    %947 = vmatmul.mubr.f32.gmra.mrb[0].mxu0 %v880
    %v948 = vpop.f32.mrb[0].mxu0
    %v949 = vadd.f32 0.0, %v948
    %v950 = vpop.f32.mrb[0].mxu0
    %951 = vdwg.mxu0
    %v952 = vadd.f32 %v873, %v949
    %v954 = vlaneseq
    %v955 = vshrl.u32 %v954, 7
    %v956 = vsub.s32 0, %v955
    %v957 = vrot.slane %v559, %v956
    %v959 = vadd.f32 %v952, %v957
    %vm960 = vcmp.ge.f32.partialorder %v959, 0.0
    %v961 = vmul.f32 %v959, 0.2
    %v962 = vsel %vm960, %v959, %v961
    %v963 = vld [vmem:[#allocation12] sm:$0x1]
    %v965 = vlaneseq
    %v966 = vshrl.u32 %v965, 7
    %v967 = vsub.s32 0, %v966
    %v968 = vrot.slane %v963, %v967
    %v970 = vmul.f32 %v962, %v968
    %v971 = vld [vmem:[#allocation13] sm:$0x1]
    %v973 = vlaneseq
    %v974 = vshrl.u32 %v973, 7
    %v975 = vsub.s32 0, %v974
    %v976 = vrot.slane %v971, %v975
    %v978 = vadd.f32 %v970, %v976
    %v979 = vld [vmem:[%s9] sm:$0xff]
    %vm980 = vcmask 31744
    %v982 = vsel %vm980, %v979, 0
    %vm984 = vcmask 1043456
    %v986 = vsel %vm984, %v978, 0
    %988 = vmatprep.subr.mxu0 0.0
    %989 = vmatpush1.msra.mxu0 %v986
    %990 = vmatprep.subr.mxu0 0.0
    %991 = vmatpush1.msra.mxu0 0.0
    %992 = vmatprep.subr.mxu0 0.0
    %993 = vmatpush1.msra.mxu0 0.0
    %994 = vmatprep.subr.mxu0 0.0
    %995 = vmatpush1.msra.mxu0 0.0
    %996 = vmatprep.subr.mxu0 0.0
    %997 = vmatpush1.msra.mxu0 0.0
    %998 = vmatprep.subr.mxu0 0.0
    %999 = vmatpush1.msra.mxu0 0.0
    %1000 = vmatprep.subr.mxu0 0.0
    %1001 = vmatpush1.msra.mxu0 0.0
    %1002 = vmatprep.subr.mxu0 0.0
    %1003 = vmatpush1.msra.mxu0 0.0
    %1004 = vmatprep.subr.mxu0 0.0
    %1005 = vmatpush1.msra.mxu0 0.0
    %1006 = vmatprep.subr.mxu0 0.0
    %1007 = vmatpush1.msra.mxu0 0.0
    %1008 = vmatprep.subr.mxu0 0.0
    %1009 = vmatpush1.msra.mxu0 0.0
    %1010 = vmatprep.subr.mxu0 0.0
    %1011 = vmatpush1.msra.mxu0 0.0
    %1012 = vmatprep.subr.mxu0 0.0
    %1013 = vmatpush1.msra.mxu0 0.0
    %1014 = vmatprep.subr.mxu0 0.0
    %1015 = vmatpush1.msra.mxu0 0.0
    %1016 = vmatprep.subr.mxu0 0.0
    %1017 = vmatpush1.msra.mxu0 0.0
    %1018 = vmatprep.subr.mxu0 0.0
    %1019 = vmatpush1.msra.mxu0 0.0
    %1020 = vmatprep.subr.mxu0 0.0
    %1021 = vmatpush1.msra.mxu0 0.0
    %1022 = vmatprep.subr.mxu0 0.0
    %1023 = vmatpush1.msra.mxu0 0.0
    %1024 = vmatprep.subr.mxu0 0.0
    %1025 = vmatpush1.msra.mxu0 0.0
    %1026 = vmatprep.subr.mxu0 0.0
    %1027 = vmatpush1.msra.mxu0 0.0
    %1028 = vmatprep.subr.mxu0 0.0
    %1029 = vmatpush1.msra.mxu0 0.0
    %1030 = vmatprep.subr.mxu0 0.0
    %1031 = vmatpush1.msra.mxu0 0.0
    %1032 = vmatprep.subr.mxu0 0.0
    %1033 = vmatpush1.msra.mxu0 0.0
    %1034 = vmatprep.subr.mxu0 0.0
    %1035 = vmatpush1.msra.mxu0 0.0
    %1036 = vmatprep.subr.mxu0 0.0
    %1037 = vmatpush1.msra.mxu0 0.0
    %1038 = vmatprep.subr.mxu0 0.0
    %1039 = vmatpush1.msra.mxu0 0.0
    %1040 = vmatprep.subr.mxu0 0.0
    %1041 = vmatpush1.msra.mxu0 0.0
    %1042 = vmatprep.subr.mxu0 0.0
    %1043 = vmatpush1.msra.mxu0 0.0
    %1044 = vmatprep.subr.mxu0 0.0
    %1045 = vmatpush1.msra.mxu0 0.0
    %1046 = vmatprep.subr.mxu0 0.0
    %1047 = vmatpush1.msra.mxu0 0.0
    %1048 = vmatprep.subr.mxu0 0.0
    %1049 = vmatpush1.msra.mxu0 0.0
    %1050 = vmatprep.subr.mxu0 0.0
    %1051 = vmatpush1.msra.mxu0 0.0
    %1052 = vmatprep.mubr.f32.mxu0 0.0
    %1053 = vmatmul.mubr.f32.gmra.mrb[0].mxu0 %v982
    %v1054 = vpop.f32.mrb[0].mxu0
    %v1055 = vadd.f32 0.0, %v1054
    %v1056 = vpop.f32.mrb[0].mxu0
    %1057 = vdwg.mxu0
    %v1058 = vld [vmem:[#allocation4] sm:$0x1]
    %v1059 = vld [vmem:[%s17] sm:$0xff]
    %v1060 = vld [vmem:[%s17 + $0x8] sm:$0xff]
    %v1061 = vld [vmem:[%s17 + $0x10] sm:$0xff]
    %v1062 = vld [vmem:[%s17 + $0x18] sm:$0xff]
    %s1063 = scalar_lea.vmem %s17, 32
    %v1064 = vld [vmem:[%s1063] sm:$0xff]
    %v1065 = vld [vmem:[%s1063 + $0x8] sm:$0xff]
    %v1066 = vld [vmem:[%s1063 + $0x10] sm:$0xff]
    %v1067 = vld [vmem:[%s1063 + $0x18] sm:$0xff]
    %v1069 = vrot.slane %v1055, 1
    %v1070 = vsel %vm571, %v1069, 0
    %1072 = vmatprep.subr.mxu0 0.0
    %1073 = vmatpush1.msra.mxu0 %v1064
    %1074 = vmatprep.subr.mxu0 0.0
    %1075 = vmatpush1.msra.mxu0 %v1065
    %1076 = vmatprep.subr.mxu0 0.0
    %1077 = vmatpush1.msra.mxu0 %v1066
    %1078 = vmatprep.subr.mxu0 0.0
    %1079 = vmatpush1.msra.mxu0 %v1067
    %1080 = vmatprep.subr.mxu0 0.0
    %1081 = vmatpush1.msra.mxu0 0.0
    %1082 = vmatprep.subr.mxu0 0.0
    %1083 = vmatpush1.msra.mxu0 0.0
    %1084 = vmatprep.subr.mxu0 0.0
    %1085 = vmatpush1.msra.mxu0 0.0
    %1086 = vmatprep.subr.mxu0 0.0
    %1087 = vmatpush1.msra.mxu0 0.0
    %1088 = vmatprep.subr.mxu0 0.0
    %1089 = vmatpush1.msra.mxu0 0.0
    %1090 = vmatprep.subr.mxu0 0.0
    %1091 = vmatpush1.msra.mxu0 0.0
    %1092 = vmatprep.subr.mxu0 0.0
    %1093 = vmatpush1.msra.mxu0 0.0
    %1094 = vmatprep.subr.mxu0 0.0
    %1095 = vmatpush1.msra.mxu0 0.0
    %1096 = vmatprep.subr.mxu0 0.0
    %1097 = vmatpush1.msra.mxu0 0.0
    %1098 = vmatprep.subr.mxu0 0.0
    %1099 = vmatpush1.msra.mxu0 0.0
    %1100 = vmatprep.subr.mxu0 0.0
    %1101 = vmatpush1.msra.mxu0 0.0
    %1102 = vmatprep.subr.mxu0 0.0
    %1103 = vmatpush1.msra.mxu0 0.0
    %1104 = vmatprep.subr.mxu0 0.0
    %1105 = vmatpush1.msra.mxu0 0.0
    %1106 = vmatprep.subr.mxu0 0.0
    %1107 = vmatpush1.msra.mxu0 0.0
    %1108 = vmatprep.subr.mxu0 0.0
    %1109 = vmatpush1.msra.mxu0 0.0
    %1110 = vmatprep.subr.mxu0 0.0
    %1111 = vmatpush1.msra.mxu0 0.0
    %1112 = vmatprep.subr.mxu0 0.0
    %1113 = vmatpush1.msra.mxu0 0.0
    %1114 = vmatprep.subr.mxu0 0.0
    %1115 = vmatpush1.msra.mxu0 0.0
    %1116 = vmatprep.subr.mxu0 0.0
    %1117 = vmatpush1.msra.mxu0 0.0
    %1118 = vmatprep.subr.mxu0 0.0
    %1119 = vmatpush1.msra.mxu0 0.0
    %1120 = vmatprep.subr.mxu0 0.0
    %1121 = vmatpush1.msra.mxu0 0.0
    %1122 = vmatprep.subr.mxu0 0.0
    %1123 = vmatpush1.msra.mxu0 0.0
    %1124 = vmatprep.subr.mxu0 0.0
    %1125 = vmatpush1.msra.mxu0 0.0
    %1126 = vmatprep.subr.mxu0 0.0
    %1127 = vmatpush1.msra.mxu0 0.0
    %1128 = vmatprep.subr.mxu0 0.0
    %1129 = vmatpush1.msra.mxu0 0.0
    %1130 = vmatprep.subr.mxu0 0.0
    %1131 = vmatpush1.msra.mxu0 0.0
    %1132 = vmatprep.subr.mxu0 0.0
    %1133 = vmatpush1.msra.mxu0 0.0
    %1134 = vmatprep.subr.mxu0 0.0
    %1135 = vmatpush1.msra.mxu0 0.0
    %1136 = vmatprep.mubr.f32.mxu0 0.0
    %1137 = vmatmul.mubr.f32.gmra.mrb[0].mxu0 %v1070
    %v1138 = vpop.f32.mrb[0].mxu0
    %v1139 = vadd.f32 0.0, %v1138
    %v1140 = vpop.f32.mrb[0].mxu0
    %1141 = vdwg.mxu0
    %v1142 = vsel %vm571, %v1055, 0
    %1144 = vmatprep.subr.mxu0 0.0
    %1145 = vmatpush1.msra.mxu0 %v1059
    %1146 = vmatprep.subr.mxu0 0.0
    %1147 = vmatpush1.msra.mxu0 %v1060
    %1148 = vmatprep.subr.mxu0 0.0
    %1149 = vmatpush1.msra.mxu0 %v1061
    %1150 = vmatprep.subr.mxu0 0.0
    %1151 = vmatpush1.msra.mxu0 %v1062
    %1152 = vmatprep.subr.mxu0 0.0
    %1153 = vmatpush1.msra.mxu0 0.0
    %1154 = vmatprep.subr.mxu0 0.0
    %1155 = vmatpush1.msra.mxu0 0.0
    %1156 = vmatprep.subr.mxu0 0.0
    %1157 = vmatpush1.msra.mxu0 0.0
    %1158 = vmatprep.subr.mxu0 0.0
    %1159 = vmatpush1.msra.mxu0 0.0
    %1160 = vmatprep.subr.mxu0 0.0
    %1161 = vmatpush1.msra.mxu0 0.0
    %1162 = vmatprep.subr.mxu0 0.0
    %1163 = vmatpush1.msra.mxu0 0.0
    %1164 = vmatprep.subr.mxu0 0.0
    %1165 = vmatpush1.msra.mxu0 0.0
    %1166 = vmatprep.subr.mxu0 0.0
    %1167 = vmatpush1.msra.mxu0 0.0
    %1168 = vmatprep.subr.mxu0 0.0
    %1169 = vmatpush1.msra.mxu0 0.0
    %1170 = vmatprep.subr.mxu0 0.0
    %1171 = vmatpush1.msra.mxu0 0.0
    %1172 = vmatprep.subr.mxu0 0.0
    %1173 = vmatpush1.msra.mxu0 0.0
    %1174 = vmatprep.subr.mxu0 0.0
    %1175 = vmatpush1.msra.mxu0 0.0
    %1176 = vmatprep.subr.mxu0 0.0
    %1177 = vmatpush1.msra.mxu0 0.0
    %1178 = vmatprep.subr.mxu0 0.0
    %1179 = vmatpush1.msra.mxu0 0.0
    %1180 = vmatprep.subr.mxu0 0.0
    %1181 = vmatpush1.msra.mxu0 0.0
    %1182 = vmatprep.subr.mxu0 0.0
    %1183 = vmatpush1.msra.mxu0 0.0
    %1184 = vmatprep.subr.mxu0 0.0
    %1185 = vmatpush1.msra.mxu0 0.0
    %1186 = vmatprep.subr.mxu0 0.0
    %1187 = vmatpush1.msra.mxu0 0.0
    %1188 = vmatprep.subr.mxu0 0.0
    %1189 = vmatpush1.msra.mxu0 0.0
    %1190 = vmatprep.subr.mxu0 0.0
    %1191 = vmatpush1.msra.mxu0 0.0
    %1192 = vmatprep.subr.mxu0 0.0
    %1193 = vmatpush1.msra.mxu0 0.0
    %1194 = vmatprep.subr.mxu0 0.0
    %1195 = vmatpush1.msra.mxu0 0.0
    %1196 = vmatprep.subr.mxu0 0.0
    %1197 = vmatpush1.msra.mxu0 0.0
    %1198 = vmatprep.subr.mxu0 0.0
    %1199 = vmatpush1.msra.mxu0 0.0
    %1200 = vmatprep.subr.mxu0 0.0
    %1201 = vmatpush1.msra.mxu0 0.0
    %1202 = vmatprep.subr.mxu0 0.0
    %1203 = vmatpush1.msra.mxu0 0.0
    %1204 = vmatprep.subr.mxu0 0.0
    %1205 = vmatpush1.msra.mxu0 0.0
    %1206 = vmatprep.subr.mxu0 0.0
    %1207 = vmatpush1.msra.mxu0 0.0
    %1208 = vmatprep.mubr.f32.mxu0 0.0
    %1209 = vmatmul.mubr.f32.gmra.mrb[0].mxu0 %v1142
    %v1210 = vpop.f32.mrb[0].mxu0
    %v1211 = vadd.f32 %v1139, %v1210
    %v1212 = vpop.f32.mrb[0].mxu0
    %1213 = vdwg.mxu0
    %s1214 = scalar_lea.vmem %s17, 64
    %v1215 = vld [vmem:[%s1214] sm:$0xff]
    %v1216 = vld [vmem:[%s1214 + $0x8] sm:$0xff]
    %v1217 = vld [vmem:[%s1214 + $0x10] sm:$0xff]
    %v1218 = vld [vmem:[%s1214 + $0x18] sm:$0xff]
    %v1219 = vrot.slane %v1055, 2
    %v1220 = vsel %vm571, %v1219, 0
    %1222 = vmatprep.subr.mxu0 0.0
    %1223 = vmatpush1.msra.mxu0 %v1215
    %1224 = vmatprep.subr.mxu0 0.0
    %1225 = vmatpush1.msra.mxu0 %v1216
    %1226 = vmatprep.subr.mxu0 0.0
    %1227 = vmatpush1.msra.mxu0 %v1217
    %1228 = vmatprep.subr.mxu0 0.0
    %1229 = vmatpush1.msra.mxu0 %v1218
    %1230 = vmatprep.subr.mxu0 0.0
    %1231 = vmatpush1.msra.mxu0 0.0
    %1232 = vmatprep.subr.mxu0 0.0
    %1233 = vmatpush1.msra.mxu0 0.0
    %1234 = vmatprep.subr.mxu0 0.0
    %1235 = vmatpush1.msra.mxu0 0.0
    %1236 = vmatprep.subr.mxu0 0.0
    %1237 = vmatpush1.msra.mxu0 0.0
    %1238 = vmatprep.subr.mxu0 0.0
    %1239 = vmatpush1.msra.mxu0 0.0
    %1240 = vmatprep.subr.mxu0 0.0
    %1241 = vmatpush1.msra.mxu0 0.0
    %1242 = vmatprep.subr.mxu0 0.0
    %1243 = vmatpush1.msra.mxu0 0.0
    %1244 = vmatprep.subr.mxu0 0.0
    %1245 = vmatpush1.msra.mxu0 0.0
    %1246 = vmatprep.subr.mxu0 0.0
    %1247 = vmatpush1.msra.mxu0 0.0
    %1248 = vmatprep.subr.mxu0 0.0
    %1249 = vmatpush1.msra.mxu0 0.0
    %1250 = vmatprep.subr.mxu0 0.0
    %1251 = vmatpush1.msra.mxu0 0.0
    %1252 = vmatprep.subr.mxu0 0.0
    %1253 = vmatpush1.msra.mxu0 0.0
    %1254 = vmatprep.subr.mxu0 0.0
    %1255 = vmatpush1.msra.mxu0 0.0
    %1256 = vmatprep.subr.mxu0 0.0
    %1257 = vmatpush1.msra.mxu0 0.0
    %1258 = vmatprep.subr.mxu0 0.0
    %1259 = vmatpush1.msra.mxu0 0.0
    %1260 = vmatprep.subr.mxu0 0.0
    %1261 = vmatpush1.msra.mxu0 0.0
    %1262 = vmatprep.subr.mxu0 0.0
    %1263 = vmatpush1.msra.mxu0 0.0
    %1264 = vmatprep.subr.mxu0 0.0
    %1265 = vmatpush1.msra.mxu0 0.0
    %1266 = vmatprep.subr.mxu0 0.0
    %1267 = vmatpush1.msra.mxu0 0.0
    %1268 = vmatprep.subr.mxu0 0.0
    %1269 = vmatpush1.msra.mxu0 0.0
    %1270 = vmatprep.subr.mxu0 0.0
    %1271 = vmatpush1.msra.mxu0 0.0
    %1272 = vmatprep.subr.mxu0 0.0
    %1273 = vmatpush1.msra.mxu0 0.0
    %1274 = vmatprep.subr.mxu0 0.0
    %1275 = vmatpush1.msra.mxu0 0.0
    %1276 = vmatprep.subr.mxu0 0.0
    %1277 = vmatpush1.msra.mxu0 0.0
    %1278 = vmatprep.subr.mxu0 0.0
    %1279 = vmatpush1.msra.mxu0 0.0
    %1280 = vmatprep.subr.mxu0 0.0
    %1281 = vmatpush1.msra.mxu0 0.0
    %1282 = vmatprep.subr.mxu0 0.0
    %1283 = vmatpush1.msra.mxu0 0.0
    %1284 = vmatprep.subr.mxu0 0.0
    %1285 = vmatpush1.msra.mxu0 0.0
    %1286 = vmatprep.mubr.f32.mxu0 0.0
    %1287 = vmatmul.mubr.f32.gmra.mrb[0].mxu0 %v1220
    %v1288 = vpop.f32.mrb[0].mxu0
    %v1289 = vadd.f32 0.0, %v1288
    %v1290 = vpop.f32.mrb[0].mxu0
    %1291 = vdwg.mxu0
    %v1292 = vadd.f32 %v1211, %v1289
    %s1293 = scalar_lea.vmem %s17, 96
    %v1294 = vld [vmem:[%s1293] sm:$0xff]
    %v1295 = vld [vmem:[%s1293 + $0x8] sm:$0xff]
    %v1296 = vld [vmem:[%s1293 + $0x10] sm:$0xff]
    %v1297 = vld [vmem:[%s1293 + $0x18] sm:$0xff]
    %v1298 = vrot.slane %v1055, 3
    %v1299 = vsel %vm571, %v1298, 0
    %1301 = vmatprep.subr.mxu0 0.0
    %1302 = vmatpush1.msra.mxu0 %v1294
    %1303 = vmatprep.subr.mxu0 0.0
    %1304 = vmatpush1.msra.mxu0 %v1295
    %1305 = vmatprep.subr.mxu0 0.0
    %1306 = vmatpush1.msra.mxu0 %v1296
    %1307 = vmatprep.subr.mxu0 0.0
    %1308 = vmatpush1.msra.mxu0 %v1297
    %1309 = vmatprep.subr.mxu0 0.0
    %1310 = vmatpush1.msra.mxu0 0.0
    %1311 = vmatprep.subr.mxu0 0.0
    %1312 = vmatpush1.msra.mxu0 0.0
    %1313 = vmatprep.subr.mxu0 0.0
    %1314 = vmatpush1.msra.mxu0 0.0
    %1315 = vmatprep.subr.mxu0 0.0
    %1316 = vmatpush1.msra.mxu0 0.0
    %1317 = vmatprep.subr.mxu0 0.0
    %1318 = vmatpush1.msra.mxu0 0.0
    %1319 = vmatprep.subr.mxu0 0.0
    %1320 = vmatpush1.msra.mxu0 0.0
    %1321 = vmatprep.subr.mxu0 0.0
    %1322 = vmatpush1.msra.mxu0 0.0
    %1323 = vmatprep.subr.mxu0 0.0
    %1324 = vmatpush1.msra.mxu0 0.0
    %1325 = vmatprep.subr.mxu0 0.0
    %1326 = vmatpush1.msra.mxu0 0.0
    %1327 = vmatprep.subr.mxu0 0.0
    %1328 = vmatpush1.msra.mxu0 0.0
    %1329 = vmatprep.subr.mxu0 0.0
    %1330 = vmatpush1.msra.mxu0 0.0
    %1331 = vmatprep.subr.mxu0 0.0
    %1332 = vmatpush1.msra.mxu0 0.0
    %1333 = vmatprep.subr.mxu0 0.0
    %1334 = vmatpush1.msra.mxu0 0.0
    %1335 = vmatprep.subr.mxu0 0.0
    %1336 = vmatpush1.msra.mxu0 0.0
    %1337 = vmatprep.subr.mxu0 0.0
    %1338 = vmatpush1.msra.mxu0 0.0
    %1339 = vmatprep.subr.mxu0 0.0
    %1340 = vmatpush1.msra.mxu0 0.0
    %1341 = vmatprep.subr.mxu0 0.0
    %1342 = vmatpush1.msra.mxu0 0.0
    %1343 = vmatprep.subr.mxu0 0.0
    %1344 = vmatpush1.msra.mxu0 0.0
    %1345 = vmatprep.subr.mxu0 0.0
    %1346 = vmatpush1.msra.mxu0 0.0
    %1347 = vmatprep.subr.mxu0 0.0
    %1348 = vmatpush1.msra.mxu0 0.0
    %1349 = vmatprep.subr.mxu0 0.0
    %1350 = vmatpush1.msra.mxu0 0.0
    %1351 = vmatprep.subr.mxu0 0.0
    %1352 = vmatpush1.msra.mxu0 0.0
    %1353 = vmatprep.subr.mxu0 0.0
    %1354 = vmatpush1.msra.mxu0 0.0
    %1355 = vmatprep.subr.mxu0 0.0
    %1356 = vmatpush1.msra.mxu0 0.0
    %1357 = vmatprep.subr.mxu0 0.0
    %1358 = vmatpush1.msra.mxu0 0.0
    %1359 = vmatprep.subr.mxu0 0.0
    %1360 = vmatpush1.msra.mxu0 0.0
    %1361 = vmatprep.subr.mxu0 0.0
    %1362 = vmatpush1.msra.mxu0 0.0
    %1363 = vmatprep.subr.mxu0 0.0
    %1364 = vmatpush1.msra.mxu0 0.0
    %1365 = vmatprep.mubr.f32.mxu0 0.0
    %1366 = vmatmul.mubr.f32.gmra.mrb[0].mxu0 %v1299
    %v1367 = vpop.f32.mrb[0].mxu0
    %v1368 = vadd.f32 0.0, %v1367
    %v1369 = vpop.f32.mrb[0].mxu0
    %1370 = vdwg.mxu0
    %v1371 = vadd.f32 %v1292, %v1368
    %s1372 = scalar_lea.vmem %s17, 128
    %v1373 = vld [vmem:[%s1372] sm:$0xff]
    %v1374 = vld [vmem:[%s1372 + $0x8] sm:$0xff]
    %v1375 = vld [vmem:[%s1372 + $0x10] sm:$0xff]
    %v1376 = vld [vmem:[%s1372 + $0x18] sm:$0xff]
    %v1377 = vrot.slane %v1055, 4
    %v1378 = vsel %vm571, %v1377, 0
    %1380 = vmatprep.subr.mxu0 0.0
    %1381 = vmatpush1.msra.mxu0 %v1373
    %1382 = vmatprep.subr.mxu0 0.0
    %1383 = vmatpush1.msra.mxu0 %v1374
    %1384 = vmatprep.subr.mxu0 0.0
    %1385 = vmatpush1.msra.mxu0 %v1375
    %1386 = vmatprep.subr.mxu0 0.0
    %1387 = vmatpush1.msra.mxu0 %v1376
    %1388 = vmatprep.subr.mxu0 0.0
    %1389 = vmatpush1.msra.mxu0 0.0
    %1390 = vmatprep.subr.mxu0 0.0
    %1391 = vmatpush1.msra.mxu0 0.0
    %1392 = vmatprep.subr.mxu0 0.0
    %1393 = vmatpush1.msra.mxu0 0.0
    %1394 = vmatprep.subr.mxu0 0.0
    %1395 = vmatpush1.msra.mxu0 0.0
    %1396 = vmatprep.subr.mxu0 0.0
    %1397 = vmatpush1.msra.mxu0 0.0
    %1398 = vmatprep.subr.mxu0 0.0
    %1399 = vmatpush1.msra.mxu0 0.0
    %1400 = vmatprep.subr.mxu0 0.0
    %1401 = vmatpush1.msra.mxu0 0.0
    %1402 = vmatprep.subr.mxu0 0.0
    %1403 = vmatpush1.msra.mxu0 0.0
    %1404 = vmatprep.subr.mxu0 0.0
    %1405 = vmatpush1.msra.mxu0 0.0
    %1406 = vmatprep.subr.mxu0 0.0
    %1407 = vmatpush1.msra.mxu0 0.0
    %1408 = vmatprep.subr.mxu0 0.0
    %1409 = vmatpush1.msra.mxu0 0.0
    %1410 = vmatprep.subr.mxu0 0.0
    %1411 = vmatpush1.msra.mxu0 0.0
    %1412 = vmatprep.subr.mxu0 0.0
    %1413 = vmatpush1.msra.mxu0 0.0
    %1414 = vmatprep.subr.mxu0 0.0
    %1415 = vmatpush1.msra.mxu0 0.0
    %1416 = vmatprep.subr.mxu0 0.0
    %1417 = vmatpush1.msra.mxu0 0.0
    %1418 = vmatprep.subr.mxu0 0.0
    %1419 = vmatpush1.msra.mxu0 0.0
    %1420 = vmatprep.subr.mxu0 0.0
    %1421 = vmatpush1.msra.mxu0 0.0
    %1422 = vmatprep.subr.mxu0 0.0
    %1423 = vmatpush1.msra.mxu0 0.0
    %1424 = vmatprep.subr.mxu0 0.0
    %1425 = vmatpush1.msra.mxu0 0.0
    %1426 = vmatprep.subr.mxu0 0.0
    %1427 = vmatpush1.msra.mxu0 0.0
    %1428 = vmatprep.subr.mxu0 0.0
    %1429 = vmatpush1.msra.mxu0 0.0
    %1430 = vmatprep.subr.mxu0 0.0
    %1431 = vmatpush1.msra.mxu0 0.0
    %1432 = vmatprep.subr.mxu0 0.0
    %1433 = vmatpush1.msra.mxu0 0.0
    %1434 = vmatprep.subr.mxu0 0.0
    %1435 = vmatpush1.msra.mxu0 0.0
    %1436 = vmatprep.subr.mxu0 0.0
    %1437 = vmatpush1.msra.mxu0 0.0
    %1438 = vmatprep.subr.mxu0 0.0
    %1439 = vmatpush1.msra.mxu0 0.0
    %1440 = vmatprep.subr.mxu0 0.0
    %1441 = vmatpush1.msra.mxu0 0.0
    %1442 = vmatprep.subr.mxu0 0.0
    %1443 = vmatpush1.msra.mxu0 0.0
    %1444 = vmatprep.mubr.f32.mxu0 0.0
    %1445 = vmatmul.mubr.f32.gmra.mrb[0].mxu0 %v1378
    %v1446 = vpop.f32.mrb[0].mxu0
    %v1447 = vadd.f32 0.0, %v1446
    %v1448 = vpop.f32.mrb[0].mxu0
    %1449 = vdwg.mxu0
    %v1450 = vadd.f32 %v1371, %v1447
    %v1452 = vlaneseq
    %v1453 = vshrl.u32 %v1452, 7
    %v1454 = vsub.s32 0, %v1453
    %v1455 = vrot.slane %v1058, %v1454
    %v1457 = vadd.f32 %v1450, %v1455
    %vm1458 = vcmp.ge.f32.partialorder %v1457, 0.0
    %v1459 = vmul.f32 %v1457, 0.2
    %v1460 = vsel %vm1458, %v1457, %v1459
    %v1461 = vld [vmem:[#allocation7] sm:$0x1]
    %v1463 = vlaneseq
    %v1464 = vshrl.u32 %v1463, 7
    %v1465 = vsub.s32 0, %v1464
    %v1466 = vrot.slane %v1461, %v1465
    %v1468 = vmul.f32 %v1460, %v1466
    %v1469 = vld [vmem:[#allocation9] sm:$0x1]
    %v1471 = vlaneseq
    %v1472 = vshrl.u32 %v1471, 7
    %v1473 = vsub.s32 0, %v1472
    %v1474 = vrot.slane %v1469, %v1473
    %v1476 = vadd.f32 %v1468, %v1474
    %v1477 = vld [vmem:[%s11] sm:$0xff]
    %v1479 = vsel %vm980, %v1477, 0
    %v1482 = vsel %vm984, %v1476, 0
    %1484 = vmatprep.subr.mxu0 0.0
    %1485 = vmatpush1.msra.mxu0 %v1482
    %1486 = vmatprep.subr.mxu0 0.0
    %1487 = vmatpush1.msra.mxu0 0.0
    %1488 = vmatprep.subr.mxu0 0.0
    %1489 = vmatpush1.msra.mxu0 0.0
    %1490 = vmatprep.subr.mxu0 0.0
    %1491 = vmatpush1.msra.mxu0 0.0
    %1492 = vmatprep.subr.mxu0 0.0
    %1493 = vmatpush1.msra.mxu0 0.0
    %1494 = vmatprep.subr.mxu0 0.0
    %1495 = vmatpush1.msra.mxu0 0.0
    %1496 = vmatprep.subr.mxu0 0.0
    %1497 = vmatpush1.msra.mxu0 0.0
    %1498 = vmatprep.subr.mxu0 0.0
    %1499 = vmatpush1.msra.mxu0 0.0
    %1500 = vmatprep.subr.mxu0 0.0
    %1501 = vmatpush1.msra.mxu0 0.0
    %1502 = vmatprep.subr.mxu0 0.0
    %1503 = vmatpush1.msra.mxu0 0.0
    %1504 = vmatprep.subr.mxu0 0.0
    %1505 = vmatpush1.msra.mxu0 0.0
    %1506 = vmatprep.subr.mxu0 0.0
    %1507 = vmatpush1.msra.mxu0 0.0
    %1508 = vmatprep.subr.mxu0 0.0
    %1509 = vmatpush1.msra.mxu0 0.0
    %1510 = vmatprep.subr.mxu0 0.0
    %1511 = vmatpush1.msra.mxu0 0.0
    %1512 = vmatprep.subr.mxu0 0.0
    %1513 = vmatpush1.msra.mxu0 0.0
    %1514 = vmatprep.subr.mxu0 0.0
    %1515 = vmatpush1.msra.mxu0 0.0
    %1516 = vmatprep.subr.mxu0 0.0
    %1517 = vmatpush1.msra.mxu0 0.0
    %1518 = vmatprep.subr.mxu0 0.0
    %1519 = vmatpush1.msra.mxu0 0.0
    %1520 = vmatprep.subr.mxu0 0.0
    %1521 = vmatpush1.msra.mxu0 0.0
    %1522 = vmatprep.subr.mxu0 0.0
    %1523 = vmatpush1.msra.mxu0 0.0
    %1524 = vmatprep.subr.mxu0 0.0
    %1525 = vmatpush1.msra.mxu0 0.0
    %1526 = vmatprep.subr.mxu0 0.0
    %1527 = vmatpush1.msra.mxu0 0.0
    %1528 = vmatprep.subr.mxu0 0.0
    %1529 = vmatpush1.msra.mxu0 0.0
    %1530 = vmatprep.subr.mxu0 0.0
    %1531 = vmatpush1.msra.mxu0 0.0
    %1532 = vmatprep.subr.mxu0 0.0
    %1533 = vmatpush1.msra.mxu0 0.0
    %1534 = vmatprep.subr.mxu0 0.0
    %1535 = vmatpush1.msra.mxu0 0.0
    %1536 = vmatprep.subr.mxu0 0.0
    %1537 = vmatpush1.msra.mxu0 0.0
    %1538 = vmatprep.subr.mxu0 0.0
    %1539 = vmatpush1.msra.mxu0 0.0
    %1540 = vmatprep.subr.mxu0 0.0
    %1541 = vmatpush1.msra.mxu0 0.0
    %1542 = vmatprep.subr.mxu0 0.0
    %1543 = vmatpush1.msra.mxu0 0.0
    %1544 = vmatprep.subr.mxu0 0.0
    %1545 = vmatpush1.msra.mxu0 0.0
    %1546 = vmatprep.subr.mxu0 0.0
    %1547 = vmatpush1.msra.mxu0 0.0
    %1548 = vmatprep.mubr.f32.mxu0 0.0
    %1549 = vmatmul.mubr.f32.gmra.mrb[0].mxu0 %v1479
    %v1550 = vpop.f32.mrb[0].mxu0
    %v1551 = vadd.f32 0.0, %v1550
    %v1552 = vpop.f32.mrb[0].mxu0
    %1553 = vdwg.mxu0
    %v1554 = vld [vmem:[%s77] sm:$0xff]
    %v1555 = vld [vmem:[%s77 + $0x8] sm:$0xff]
    %v1556 = vld [vmem:[%s77 + $0x10] sm:$0xff]
    %v1557 = vld [vmem:[%s77 + $0x18] sm:$0xff]
    %v1558 = vld [vmem:[#allocation42] sm:$0x1]
    %v1560 = vlaneseq
    %v1561 = vshrl.u32 %v1560, 7
    %v1562 = vsub.s32 0, %v1561
    %v1563 = vrot.slane %v1558, %v1562
    %v1566 = vsel %vm571, %v1551, 0
    %1568 = vmatprep.subr.mxu0 0.0
    %1569 = vmatpush1.msra.mxu0 %v1554
    %1570 = vmatprep.subr.mxu0 0.0
    %1571 = vmatpush1.msra.mxu0 %v1555
    %1572 = vmatprep.subr.mxu0 0.0
    %1573 = vmatpush1.msra.mxu0 %v1556
    %1574 = vmatprep.subr.mxu0 0.0
    %1575 = vmatpush1.msra.mxu0 %v1557
    %1576 = vmatprep.subr.mxu0 0.0
    %1577 = vmatpush1.msra.mxu0 0.0
    %1578 = vmatprep.subr.mxu0 0.0
    %1579 = vmatpush1.msra.mxu0 0.0
    %1580 = vmatprep.subr.mxu0 0.0
    %1581 = vmatpush1.msra.mxu0 0.0
    %1582 = vmatprep.subr.mxu0 0.0
    %1583 = vmatpush1.msra.mxu0 0.0
    %1584 = vmatprep.subr.mxu0 0.0
    %1585 = vmatpush1.msra.mxu0 0.0
    %1586 = vmatprep.subr.mxu0 0.0
    %1587 = vmatpush1.msra.mxu0 0.0
    %1588 = vmatprep.subr.mxu0 0.0
    %1589 = vmatpush1.msra.mxu0 0.0
    %1590 = vmatprep.subr.mxu0 0.0
    %1591 = vmatpush1.msra.mxu0 0.0
    %1592 = vmatprep.subr.mxu0 0.0
    %1593 = vmatpush1.msra.mxu0 0.0
    %1594 = vmatprep.subr.mxu0 0.0
    %1595 = vmatpush1.msra.mxu0 0.0
    %1596 = vmatprep.subr.mxu0 0.0
    %1597 = vmatpush1.msra.mxu0 0.0
    %1598 = vmatprep.subr.mxu0 0.0
    %1599 = vmatpush1.msra.mxu0 0.0
    %1600 = vmatprep.subr.mxu0 0.0
    %1601 = vmatpush1.msra.mxu0 0.0
    %1602 = vmatprep.subr.mxu0 0.0
    %1603 = vmatpush1.msra.mxu0 0.0
    %1604 = vmatprep.subr.mxu0 0.0
    %1605 = vmatpush1.msra.mxu0 0.0
    %1606 = vmatprep.subr.mxu0 0.0
    %1607 = vmatpush1.msra.mxu0 0.0
    %1608 = vmatprep.subr.mxu0 0.0
    %1609 = vmatpush1.msra.mxu0 0.0
    %1610 = vmatprep.subr.mxu0 0.0
    %1611 = vmatpush1.msra.mxu0 0.0
    %1612 = vmatprep.subr.mxu0 0.0
    %1613 = vmatpush1.msra.mxu0 0.0
    %1614 = vmatprep.subr.mxu0 0.0
    %1615 = vmatpush1.msra.mxu0 0.0
    %1616 = vmatprep.subr.mxu0 0.0
    %1617 = vmatpush1.msra.mxu0 0.0
    %1618 = vmatprep.subr.mxu0 0.0
    %1619 = vmatpush1.msra.mxu0 0.0
    %1620 = vmatprep.subr.mxu0 0.0
    %1621 = vmatpush1.msra.mxu0 0.0
    %1622 = vmatprep.subr.mxu0 0.0
    %1623 = vmatpush1.msra.mxu0 0.0
    %1624 = vmatprep.subr.mxu0 0.0
    %1625 = vmatpush1.msra.mxu0 0.0
    %1626 = vmatprep.subr.mxu0 0.0
    %1627 = vmatpush1.msra.mxu0 0.0
    %1628 = vmatprep.subr.mxu0 0.0
    %1629 = vmatpush1.msra.mxu0 0.0
    %1630 = vmatprep.subr.mxu0 0.0
    %1631 = vmatpush1.msra.mxu0 0.0
    %1632 = vmatprep.mubr.f32.mxu0 0.0
    %1633 = vmatmul.mubr.f32.gmra.mrb[0].mxu0 %v1566
    %v1634 = vpop.f32.mrb[0].mxu0
    %v1635 = vadd.f32 %v1563, %v1634
    %v1636 = vpop.f32.mrb[0].mxu0
    %1637 = vdwg.mxu0
    %v1638 = vld [vmem:[#allocation43] sm:$0xff]
    %v1639 = vadd.f32 %v1635, %v1638
    %1640 = vst.msk [vmem:[#allocation2] sm:$0xff] %vm571, %v1639
    %s1641 = scalar_lea.vmem %s1, 2
    %v1642 = vld [vmem:[%s1641] sm:$0x3]
    %v1643 = vld [vmem:[%s83] sm:$0xff]
    %v1645 = vsel %vm481, %v1643, 0
    %v1648 = vsel %vm485, %v1642, 0
    %1650 = vmatprep.subr.mxu0 0.0
    %1651 = vmatpush1.msra.mxu0 %v1648
    %1652 = vmatprep.subr.mxu0 0.0
    %1653 = vmatpush1.msra.mxu0 0.0
    %1654 = vmatprep.subr.mxu0 0.0
    %1655 = vmatpush1.msra.mxu0 0.0
    %1656 = vmatprep.subr.mxu0 0.0
    %1657 = vmatpush1.msra.mxu0 0.0
    %1658 = vmatprep.subr.mxu0 0.0
    %1659 = vmatpush1.msra.mxu0 0.0
    %1660 = vmatprep.subr.mxu0 0.0
    %1661 = vmatpush1.msra.mxu0 0.0
    %1662 = vmatprep.subr.mxu0 0.0
    %1663 = vmatpush1.msra.mxu0 0.0
    %1664 = vmatprep.subr.mxu0 0.0
    %1665 = vmatpush1.msra.mxu0 0.0
    %1666 = vmatprep.subr.mxu0 0.0
    %1667 = vmatpush1.msra.mxu0 0.0
    %1668 = vmatprep.subr.mxu0 0.0
    %1669 = vmatpush1.msra.mxu0 0.0
    %1670 = vmatprep.subr.mxu0 0.0
    %1671 = vmatpush1.msra.mxu0 0.0
    %1672 = vmatprep.subr.mxu0 0.0
    %1673 = vmatpush1.msra.mxu0 0.0
    %1674 = vmatprep.subr.mxu0 0.0
    %1675 = vmatpush1.msra.mxu0 0.0
    %1676 = vmatprep.subr.mxu0 0.0
    %1677 = vmatpush1.msra.mxu0 0.0
    %1678 = vmatprep.subr.mxu0 0.0
    %1679 = vmatpush1.msra.mxu0 0.0
    %1680 = vmatprep.subr.mxu0 0.0
    %1681 = vmatpush1.msra.mxu0 0.0
    %1682 = vmatprep.subr.mxu0 0.0
    %1683 = vmatpush1.msra.mxu0 0.0
    %1684 = vmatprep.subr.mxu0 0.0
    %1685 = vmatpush1.msra.mxu0 0.0
    %1686 = vmatprep.subr.mxu0 0.0
    %1687 = vmatpush1.msra.mxu0 0.0
    %1688 = vmatprep.subr.mxu0 0.0
    %1689 = vmatpush1.msra.mxu0 0.0
    %1690 = vmatprep.subr.mxu0 0.0
    %1691 = vmatpush1.msra.mxu0 0.0
    %1692 = vmatprep.subr.mxu0 0.0
    %1693 = vmatpush1.msra.mxu0 0.0
    %1694 = vmatprep.subr.mxu0 0.0
    %1695 = vmatpush1.msra.mxu0 0.0
    %1696 = vmatprep.subr.mxu0 0.0
    %1697 = vmatpush1.msra.mxu0 0.0
    %1698 = vmatprep.subr.mxu0 0.0
    %1699 = vmatpush1.msra.mxu0 0.0
    %1700 = vmatprep.subr.mxu0 0.0
    %1701 = vmatpush1.msra.mxu0 0.0
    %1702 = vmatprep.subr.mxu0 0.0
    %1703 = vmatpush1.msra.mxu0 0.0
    %1704 = vmatprep.subr.mxu0 0.0
    %1705 = vmatpush1.msra.mxu0 0.0
    %1706 = vmatprep.subr.mxu0 0.0
    %1707 = vmatpush1.msra.mxu0 0.0
    %1708 = vmatprep.subr.mxu0 0.0
    %1709 = vmatpush1.msra.mxu0 0.0
    %1710 = vmatprep.subr.mxu0 0.0
    %1711 = vmatpush1.msra.mxu0 0.0
    %1712 = vmatprep.subr.mxu0 0.0
    %1713 = vmatpush1.msra.mxu0 0.0
    %1714 = vmatprep.mubr.f32.mxu0 0.0
    %1715 = vmatmul.mubr.f32.gmra.mrb[0].mxu0 %v1645
    %v1716 = vpop.f32.mrb[0].mxu0
    %v1717 = vadd.f32 0.0, %v1716
    %v1718 = vpop.f32.mrb[0].mxu0
    %1719 = vdwg.mxu0
    %v1720 = vld [vmem:[#allocation10] sm:$0x1]
    %v1721 = vld [vmem:[%s25] sm:$0xff]
    %v1722 = vld [vmem:[%s25 + $0x8] sm:$0xff]
    %v1723 = vld [vmem:[%s25 + $0x10] sm:$0xff]
    %v1724 = vld [vmem:[%s25 + $0x18] sm:$0xff]
    %v1725 = vld [vmem:[%s564] sm:$0xff]
    %v1726 = vld [vmem:[%s564 + $0x8] sm:$0xff]
    %v1727 = vld [vmem:[%s564 + $0x10] sm:$0xff]
    %v1728 = vld [vmem:[%s564 + $0x18] sm:$0xff]
    %v1730 = vrot.slane %v1717, 1
    %v1731 = vsel %vm571, %v1730, 0
    %1733 = vmatprep.subr.mxu0 0.0
    %1734 = vmatpush1.msra.mxu0 %v1725
    %1735 = vmatprep.subr.mxu0 0.0
    %1736 = vmatpush1.msra.mxu0 %v1726
    %1737 = vmatprep.subr.mxu0 0.0
    %1738 = vmatpush1.msra.mxu0 %v1727
    %1739 = vmatprep.subr.mxu0 0.0
    %1740 = vmatpush1.msra.mxu0 %v1728
    %1741 = vmatprep.subr.mxu0 0.0
    %1742 = vmatpush1.msra.mxu0 0.0
    %1743 = vmatprep.subr.mxu0 0.0
    %1744 = vmatpush1.msra.mxu0 0.0
    %1745 = vmatprep.subr.mxu0 0.0
    %1746 = vmatpush1.msra.mxu0 0.0
    %1747 = vmatprep.subr.mxu0 0.0
    %1748 = vmatpush1.msra.mxu0 0.0
    %1749 = vmatprep.subr.mxu0 0.0
    %1750 = vmatpush1.msra.mxu0 0.0
    %1751 = vmatprep.subr.mxu0 0.0
    %1752 = vmatpush1.msra.mxu0 0.0
    %1753 = vmatprep.subr.mxu0 0.0
    %1754 = vmatpush1.msra.mxu0 0.0
    %1755 = vmatprep.subr.mxu0 0.0
    %1756 = vmatpush1.msra.mxu0 0.0
    %1757 = vmatprep.subr.mxu0 0.0
    %1758 = vmatpush1.msra.mxu0 0.0
    %1759 = vmatprep.subr.mxu0 0.0
    %1760 = vmatpush1.msra.mxu0 0.0
    %1761 = vmatprep.subr.mxu0 0.0
    %1762 = vmatpush1.msra.mxu0 0.0
    %1763 = vmatprep.subr.mxu0 0.0
    %1764 = vmatpush1.msra.mxu0 0.0
    %1765 = vmatprep.subr.mxu0 0.0
    %1766 = vmatpush1.msra.mxu0 0.0
    %1767 = vmatprep.subr.mxu0 0.0
    %1768 = vmatpush1.msra.mxu0 0.0
    %1769 = vmatprep.subr.mxu0 0.0
    %1770 = vmatpush1.msra.mxu0 0.0
    %1771 = vmatprep.subr.mxu0 0.0
    %1772 = vmatpush1.msra.mxu0 0.0
    %1773 = vmatprep.subr.mxu0 0.0
    %1774 = vmatpush1.msra.mxu0 0.0
    %1775 = vmatprep.subr.mxu0 0.0
    %1776 = vmatpush1.msra.mxu0 0.0
    %1777 = vmatprep.subr.mxu0 0.0
    %1778 = vmatpush1.msra.mxu0 0.0
    %1779 = vmatprep.subr.mxu0 0.0
    %1780 = vmatpush1.msra.mxu0 0.0
    %1781 = vmatprep.subr.mxu0 0.0
    %1782 = vmatpush1.msra.mxu0 0.0
    %1783 = vmatprep.subr.mxu0 0.0
    %1784 = vmatpush1.msra.mxu0 0.0
    %1785 = vmatprep.subr.mxu0 0.0
    %1786 = vmatpush1.msra.mxu0 0.0
    %1787 = vmatprep.subr.mxu0 0.0
    %1788 = vmatpush1.msra.mxu0 0.0
    %1789 = vmatprep.subr.mxu0 0.0
    %1790 = vmatpush1.msra.mxu0 0.0
    %1791 = vmatprep.subr.mxu0 0.0
    %1792 = vmatpush1.msra.mxu0 0.0
    %1793 = vmatprep.subr.mxu0 0.0
    %1794 = vmatpush1.msra.mxu0 0.0
    %1795 = vmatprep.subr.mxu0 0.0
    %1796 = vmatpush1.msra.mxu0 0.0
    %1797 = vmatprep.mubr.f32.mxu0 0.0
    %1798 = vmatmul.mubr.f32.gmra.mrb[0].mxu0 %v1731
    %v1799 = vpop.f32.mrb[0].mxu0
    %v1800 = vadd.f32 0.0, %v1799
    %v1801 = vpop.f32.mrb[0].mxu0
    %1802 = vdwg.mxu0
    %v1803 = vsel %vm571, %v1717, 0
    %1805 = vmatprep.subr.mxu0 0.0
    %1806 = vmatpush1.msra.mxu0 %v1721
    %1807 = vmatprep.subr.mxu0 0.0
    %1808 = vmatpush1.msra.mxu0 %v1722
    %1809 = vmatprep.subr.mxu0 0.0
    %1810 = vmatpush1.msra.mxu0 %v1723
    %1811 = vmatprep.subr.mxu0 0.0
    %1812 = vmatpush1.msra.mxu0 %v1724
    %1813 = vmatprep.subr.mxu0 0.0
    %1814 = vmatpush1.msra.mxu0 0.0
    %1815 = vmatprep.subr.mxu0 0.0
    %1816 = vmatpush1.msra.mxu0 0.0
    %1817 = vmatprep.subr.mxu0 0.0
    %1818 = vmatpush1.msra.mxu0 0.0
    %1819 = vmatprep.subr.mxu0 0.0
    %1820 = vmatpush1.msra.mxu0 0.0
    %1821 = vmatprep.subr.mxu0 0.0
    %1822 = vmatpush1.msra.mxu0 0.0
    %1823 = vmatprep.subr.mxu0 0.0
    %1824 = vmatpush1.msra.mxu0 0.0
    %1825 = vmatprep.subr.mxu0 0.0
    %1826 = vmatpush1.msra.mxu0 0.0
    %1827 = vmatprep.subr.mxu0 0.0
    %1828 = vmatpush1.msra.mxu0 0.0
    %1829 = vmatprep.subr.mxu0 0.0
    %1830 = vmatpush1.msra.mxu0 0.0
    %1831 = vmatprep.subr.mxu0 0.0
    %1832 = vmatpush1.msra.mxu0 0.0
    %1833 = vmatprep.subr.mxu0 0.0
    %1834 = vmatpush1.msra.mxu0 0.0
    %1835 = vmatprep.subr.mxu0 0.0
    %1836 = vmatpush1.msra.mxu0 0.0
    %1837 = vmatprep.subr.mxu0 0.0
    %1838 = vmatpush1.msra.mxu0 0.0
    %1839 = vmatprep.subr.mxu0 0.0
    %1840 = vmatpush1.msra.mxu0 0.0
    %1841 = vmatprep.subr.mxu0 0.0
    %1842 = vmatpush1.msra.mxu0 0.0
    %1843 = vmatprep.subr.mxu0 0.0
    %1844 = vmatpush1.msra.mxu0 0.0
    %1845 = vmatprep.subr.mxu0 0.0
    %1846 = vmatpush1.msra.mxu0 0.0
    %1847 = vmatprep.subr.mxu0 0.0
    %1848 = vmatpush1.msra.mxu0 0.0
    %1849 = vmatprep.subr.mxu0 0.0
    %1850 = vmatpush1.msra.mxu0 0.0
    %1851 = vmatprep.subr.mxu0 0.0
    %1852 = vmatpush1.msra.mxu0 0.0
    %1853 = vmatprep.subr.mxu0 0.0
    %1854 = vmatpush1.msra.mxu0 0.0
    %1855 = vmatprep.subr.mxu0 0.0
    %1856 = vmatpush1.msra.mxu0 0.0
    %1857 = vmatprep.subr.mxu0 0.0
    %1858 = vmatpush1.msra.mxu0 0.0
    %1859 = vmatprep.subr.mxu0 0.0
    %1860 = vmatpush1.msra.mxu0 0.0
    %1861 = vmatprep.subr.mxu0 0.0
    %1862 = vmatpush1.msra.mxu0 0.0
    %1863 = vmatprep.subr.mxu0 0.0
    %1864 = vmatpush1.msra.mxu0 0.0
    %1865 = vmatprep.subr.mxu0 0.0
    %1866 = vmatpush1.msra.mxu0 0.0
    %1867 = vmatprep.subr.mxu0 0.0
    %1868 = vmatpush1.msra.mxu0 0.0
    %1869 = vmatprep.mubr.f32.mxu0 0.0
    %1870 = vmatmul.mubr.f32.gmra.mrb[0].mxu0 %v1803
    %v1871 = vpop.f32.mrb[0].mxu0
    %v1872 = vadd.f32 %v1800, %v1871
    %v1873 = vpop.f32.mrb[0].mxu0
    %1874 = vdwg.mxu0
    %v1875 = vld [vmem:[%s716] sm:$0xff]
    %v1876 = vld [vmem:[%s716 + $0x8] sm:$0xff]
    %v1877 = vld [vmem:[%s716 + $0x10] sm:$0xff]
    %v1878 = vld [vmem:[%s716 + $0x18] sm:$0xff]
    %v1879 = vrot.slane %v1717, 2
    %v1880 = vsel %vm571, %v1879, 0
    %1882 = vmatprep.subr.mxu0 0.0
    %1883 = vmatpush1.msra.mxu0 %v1875
    %1884 = vmatprep.subr.mxu0 0.0
    %1885 = vmatpush1.msra.mxu0 %v1876
    %1886 = vmatprep.subr.mxu0 0.0
    %1887 = vmatpush1.msra.mxu0 %v1877
    %1888 = vmatprep.subr.mxu0 0.0
    %1889 = vmatpush1.msra.mxu0 %v1878
    %1890 = vmatprep.subr.mxu0 0.0
    %1891 = vmatpush1.msra.mxu0 0.0
    %1892 = vmatprep.subr.mxu0 0.0
    %1893 = vmatpush1.msra.mxu0 0.0
    %1894 = vmatprep.subr.mxu0 0.0
    %1895 = vmatpush1.msra.mxu0 0.0
    %1896 = vmatprep.subr.mxu0 0.0
    %1897 = vmatpush1.msra.mxu0 0.0
    %1898 = vmatprep.subr.mxu0 0.0
    %1899 = vmatpush1.msra.mxu0 0.0
    %1900 = vmatprep.subr.mxu0 0.0
    %1901 = vmatpush1.msra.mxu0 0.0
    %1902 = vmatprep.subr.mxu0 0.0
    %1903 = vmatpush1.msra.mxu0 0.0
    %1904 = vmatprep.subr.mxu0 0.0
    %1905 = vmatpush1.msra.mxu0 0.0
    %1906 = vmatprep.subr.mxu0 0.0
    %1907 = vmatpush1.msra.mxu0 0.0
    %1908 = vmatprep.subr.mxu0 0.0
    %1909 = vmatpush1.msra.mxu0 0.0
    %1910 = vmatprep.subr.mxu0 0.0
    %1911 = vmatpush1.msra.mxu0 0.0
    %1912 = vmatprep.subr.mxu0 0.0
    %1913 = vmatpush1.msra.mxu0 0.0
    %1914 = vmatprep.subr.mxu0 0.0
    %1915 = vmatpush1.msra.mxu0 0.0
    %1916 = vmatprep.subr.mxu0 0.0
    %1917 = vmatpush1.msra.mxu0 0.0
    %1918 = vmatprep.subr.mxu0 0.0
    %1919 = vmatpush1.msra.mxu0 0.0
    %1920 = vmatprep.subr.mxu0 0.0
    %1921 = vmatpush1.msra.mxu0 0.0
    %1922 = vmatprep.subr.mxu0 0.0
    %1923 = vmatpush1.msra.mxu0 0.0
    %1924 = vmatprep.subr.mxu0 0.0
    %1925 = vmatpush1.msra.mxu0 0.0
    %1926 = vmatprep.subr.mxu0 0.0
    %1927 = vmatpush1.msra.mxu0 0.0
    %1928 = vmatprep.subr.mxu0 0.0
    %1929 = vmatpush1.msra.mxu0 0.0
    %1930 = vmatprep.subr.mxu0 0.0
    %1931 = vmatpush1.msra.mxu0 0.0
    %1932 = vmatprep.subr.mxu0 0.0
    %1933 = vmatpush1.msra.mxu0 0.0
    %1934 = vmatprep.subr.mxu0 0.0
    %1935 = vmatpush1.msra.mxu0 0.0
    %1936 = vmatprep.subr.mxu0 0.0
    %1937 = vmatpush1.msra.mxu0 0.0
    %1938 = vmatprep.subr.mxu0 0.0
    %1939 = vmatpush1.msra.mxu0 0.0
    %1940 = vmatprep.subr.mxu0 0.0
    %1941 = vmatpush1.msra.mxu0 0.0
    %1942 = vmatprep.subr.mxu0 0.0
    %1943 = vmatpush1.msra.mxu0 0.0
    %1944 = vmatprep.subr.mxu0 0.0
    %1945 = vmatpush1.msra.mxu0 0.0
    %1946 = vmatprep.mubr.f32.mxu0 0.0
    %1947 = vmatmul.mubr.f32.gmra.mrb[0].mxu0 %v1880
    %v1948 = vpop.f32.mrb[0].mxu0
    %v1949 = vadd.f32 0.0, %v1948
    %v1950 = vpop.f32.mrb[0].mxu0
    %1951 = vdwg.mxu0
    %v1952 = vadd.f32 %v1872, %v1949
    %v1953 = vld [vmem:[%s795] sm:$0xff]
    %v1954 = vld [vmem:[%s795 + $0x8] sm:$0xff]
    %v1955 = vld [vmem:[%s795 + $0x10] sm:$0xff]
    %v1956 = vld [vmem:[%s795 + $0x18] sm:$0xff]
    %v1957 = vrot.slane %v1717, 3
    %v1958 = vsel %vm571, %v1957, 0
    %1960 = vmatprep.subr.mxu0 0.0
    %1961 = vmatpush1.msra.mxu0 %v1953
    %1962 = vmatprep.subr.mxu0 0.0
    %1963 = vmatpush1.msra.mxu0 %v1954
    %1964 = vmatprep.subr.mxu0 0.0
    %1965 = vmatpush1.msra.mxu0 %v1955
    %1966 = vmatprep.subr.mxu0 0.0
    %1967 = vmatpush1.msra.mxu0 %v1956
    %1968 = vmatprep.subr.mxu0 0.0
    %1969 = vmatpush1.msra.mxu0 0.0
    %1970 = vmatprep.subr.mxu0 0.0
    %1971 = vmatpush1.msra.mxu0 0.0
    %1972 = vmatprep.subr.mxu0 0.0
    %1973 = vmatpush1.msra.mxu0 0.0
    %1974 = vmatprep.subr.mxu0 0.0
    %1975 = vmatpush1.msra.mxu0 0.0
    %1976 = vmatprep.subr.mxu0 0.0
    %1977 = vmatpush1.msra.mxu0 0.0
    %1978 = vmatprep.subr.mxu0 0.0
    %1979 = vmatpush1.msra.mxu0 0.0
    %1980 = vmatprep.subr.mxu0 0.0
    %1981 = vmatpush1.msra.mxu0 0.0
    %1982 = vmatprep.subr.mxu0 0.0
    %1983 = vmatpush1.msra.mxu0 0.0
    %1984 = vmatprep.subr.mxu0 0.0
    %1985 = vmatpush1.msra.mxu0 0.0
    %1986 = vmatprep.subr.mxu0 0.0
    %1987 = vmatpush1.msra.mxu0 0.0
    %1988 = vmatprep.subr.mxu0 0.0
    %1989 = vmatpush1.msra.mxu0 0.0
    %1990 = vmatprep.subr.mxu0 0.0
    %1991 = vmatpush1.msra.mxu0 0.0
    %1992 = vmatprep.subr.mxu0 0.0
    %1993 = vmatpush1.msra.mxu0 0.0
    %1994 = vmatprep.subr.mxu0 0.0
    %1995 = vmatpush1.msra.mxu0 0.0
    %1996 = vmatprep.subr.mxu0 0.0
    %1997 = vmatpush1.msra.mxu0 0.0
    %1998 = vmatprep.subr.mxu0 0.0
    %1999 = vmatpush1.msra.mxu0 0.0
    %2000 = vmatprep.subr.mxu0 0.0
    %2001 = vmatpush1.msra.mxu0 0.0
    %2002 = vmatprep.subr.mxu0 0.0
    %2003 = vmatpush1.msra.mxu0 0.0
    %2004 = vmatprep.subr.mxu0 0.0
    %2005 = vmatpush1.msra.mxu0 0.0
    %2006 = vmatprep.subr.mxu0 0.0
    %2007 = vmatpush1.msra.mxu0 0.0
    %2008 = vmatprep.subr.mxu0 0.0
    %2009 = vmatpush1.msra.mxu0 0.0
    %2010 = vmatprep.subr.mxu0 0.0
    %2011 = vmatpush1.msra.mxu0 0.0
    %2012 = vmatprep.subr.mxu0 0.0
    %2013 = vmatpush1.msra.mxu0 0.0
    %2014 = vmatprep.subr.mxu0 0.0
    %2015 = vmatpush1.msra.mxu0 0.0
    %2016 = vmatprep.subr.mxu0 0.0
    %2017 = vmatpush1.msra.mxu0 0.0
    %2018 = vmatprep.subr.mxu0 0.0
    %2019 = vmatpush1.msra.mxu0 0.0
    %2020 = vmatprep.subr.mxu0 0.0
    %2021 = vmatpush1.msra.mxu0 0.0
    %2022 = vmatprep.subr.mxu0 0.0
    %2023 = vmatpush1.msra.mxu0 0.0
    %2024 = vmatprep.mubr.f32.mxu0 0.0
    %2025 = vmatmul.mubr.f32.gmra.mrb[0].mxu0 %v1958
    %v2026 = vpop.f32.mrb[0].mxu0
    %v2027 = vadd.f32 0.0, %v2026
    %v2028 = vpop.f32.mrb[0].mxu0
    %2029 = vdwg.mxu0
    %v2030 = vadd.f32 %v1952, %v2027
    %v2031 = vld [vmem:[%s874] sm:$0xff]
    %v2032 = vld [vmem:[%s874 + $0x8] sm:$0xff]
    %v2033 = vld [vmem:[%s874 + $0x10] sm:$0xff]
    %v2034 = vld [vmem:[%s874 + $0x18] sm:$0xff]
    %v2035 = vrot.slane %v1717, 4
    %v2036 = vsel %vm571, %v2035, 0
    %2038 = vmatprep.subr.mxu0 0.0
    %2039 = vmatpush1.msra.mxu0 %v2031
    %2040 = vmatprep.subr.mxu0 0.0
    %2041 = vmatpush1.msra.mxu0 %v2032
    %2042 = vmatprep.subr.mxu0 0.0
    %2043 = vmatpush1.msra.mxu0 %v2033
    %2044 = vmatprep.subr.mxu0 0.0
    %2045 = vmatpush1.msra.mxu0 %v2034
    %2046 = vmatprep.subr.mxu0 0.0
    %2047 = vmatpush1.msra.mxu0 0.0
    %2048 = vmatprep.subr.mxu0 0.0
    %2049 = vmatpush1.msra.mxu0 0.0
    %2050 = vmatprep.subr.mxu0 0.0
    %2051 = vmatpush1.msra.mxu0 0.0
    %2052 = vmatprep.subr.mxu0 0.0
    %2053 = vmatpush1.msra.mxu0 0.0
    %2054 = vmatprep.subr.mxu0 0.0
    %2055 = vmatpush1.msra.mxu0 0.0
    %2056 = vmatprep.subr.mxu0 0.0
    %2057 = vmatpush1.msra.mxu0 0.0
    %2058 = vmatprep.subr.mxu0 0.0
    %2059 = vmatpush1.msra.mxu0 0.0
    %2060 = vmatprep.subr.mxu0 0.0
    %2061 = vmatpush1.msra.mxu0 0.0
    %2062 = vmatprep.subr.mxu0 0.0
    %2063 = vmatpush1.msra.mxu0 0.0
    %2064 = vmatprep.subr.mxu0 0.0
    %2065 = vmatpush1.msra.mxu0 0.0
    %2066 = vmatprep.subr.mxu0 0.0
    %2067 = vmatpush1.msra.mxu0 0.0
    %2068 = vmatprep.subr.mxu0 0.0
    %2069 = vmatpush1.msra.mxu0 0.0
    %2070 = vmatprep.subr.mxu0 0.0
    %2071 = vmatpush1.msra.mxu0 0.0
    %2072 = vmatprep.subr.mxu0 0.0
    %2073 = vmatpush1.msra.mxu0 0.0
    %2074 = vmatprep.subr.mxu0 0.0
    %2075 = vmatpush1.msra.mxu0 0.0
    %2076 = vmatprep.subr.mxu0 0.0
    %2077 = vmatpush1.msra.mxu0 0.0
    %2078 = vmatprep.subr.mxu0 0.0
    %2079 = vmatpush1.msra.mxu0 0.0
    %2080 = vmatprep.subr.mxu0 0.0
    %2081 = vmatpush1.msra.mxu0 0.0
    %2082 = vmatprep.subr.mxu0 0.0
    %2083 = vmatpush1.msra.mxu0 0.0
    %2084 = vmatprep.subr.mxu0 0.0
    %2085 = vmatpush1.msra.mxu0 0.0
    %2086 = vmatprep.subr.mxu0 0.0
    %2087 = vmatpush1.msra.mxu0 0.0
    %2088 = vmatprep.subr.mxu0 0.0
    %2089 = vmatpush1.msra.mxu0 0.0
    %2090 = vmatprep.subr.mxu0 0.0
    %2091 = vmatpush1.msra.mxu0 0.0
    %2092 = vmatprep.subr.mxu0 0.0
    %2093 = vmatpush1.msra.mxu0 0.0
    %2094 = vmatprep.subr.mxu0 0.0
    %2095 = vmatpush1.msra.mxu0 0.0
    %2096 = vmatprep.subr.mxu0 0.0
    %2097 = vmatpush1.msra.mxu0 0.0
    %2098 = vmatprep.subr.mxu0 0.0
    %2099 = vmatpush1.msra.mxu0 0.0
    %2100 = vmatprep.subr.mxu0 0.0
    %2101 = vmatpush1.msra.mxu0 0.0
    %2102 = vmatprep.mubr.f32.mxu0 0.0
    %2103 = vmatmul.mubr.f32.gmra.mrb[0].mxu0 %v2036
    %v2104 = vpop.f32.mrb[0].mxu0
    %v2105 = vadd.f32 0.0, %v2104
    %v2106 = vpop.f32.mrb[0].mxu0
    %2107 = vdwg.mxu0
    %v2108 = vadd.f32 %v2030, %v2105
    %v2110 = vlaneseq
    %v2111 = vshrl.u32 %v2110, 7
    %v2112 = vsub.s32 0, %v2111
    %v2113 = vrot.slane %v1720, %v2112
    %v2115 = vadd.f32 %v2108, %v2113
    %vm2116 = vcmp.ge.f32.partialorder %v2115, 0.0
    %v2117 = vmul.f32 %v2115, 0.2
    %v2118 = vsel %vm2116, %v2115, %v2117
    %v2119 = vld [vmem:[#allocation12] sm:$0x1]
    %v2121 = vlaneseq
    %v2122 = vshrl.u32 %v2121, 7
    %v2123 = vsub.s32 0, %v2122
    %v2124 = vrot.slane %v2119, %v2123
    %v2126 = vmul.f32 %v2118, %v2124
    %v2127 = vld [vmem:[#allocation13] sm:$0x1]
    %v2129 = vlaneseq
    %v2130 = vshrl.u32 %v2129, 7
    %v2131 = vsub.s32 0, %v2130
    %v2132 = vrot.slane %v2127, %v2131
    %v2134 = vadd.f32 %v2126, %v2132
    %v2135 = vld [vmem:[%s9] sm:$0xff]
    %v2137 = vsel %vm980, %v2135, 0
    %v2140 = vsel %vm984, %v2134, 0
    %2142 = vmatprep.subr.mxu0 0.0
    %2143 = vmatpush1.msra.mxu0 %v2140
    %2144 = vmatprep.subr.mxu0 0.0
    %2145 = vmatpush1.msra.mxu0 0.0
    %2146 = vmatprep.subr.mxu0 0.0
    %2147 = vmatpush1.msra.mxu0 0.0
    %2148 = vmatprep.subr.mxu0 0.0
    %2149 = vmatpush1.msra.mxu0 0.0
    %2150 = vmatprep.subr.mxu0 0.0
    %2151 = vmatpush1.msra.mxu0 0.0
    %2152 = vmatprep.subr.mxu0 0.0
    %2153 = vmatpush1.msra.mxu0 0.0
    %2154 = vmatprep.subr.mxu0 0.0
    %2155 = vmatpush1.msra.mxu0 0.0
    %2156 = vmatprep.subr.mxu0 0.0
    %2157 = vmatpush1.msra.mxu0 0.0
    %2158 = vmatprep.subr.mxu0 0.0
    %2159 = vmatpush1.msra.mxu0 0.0
    %2160 = vmatprep.subr.mxu0 0.0
    %2161 = vmatpush1.msra.mxu0 0.0
    %2162 = vmatprep.subr.mxu0 0.0
    %2163 = vmatpush1.msra.mxu0 0.0
    %2164 = vmatprep.subr.mxu0 0.0
    %2165 = vmatpush1.msra.mxu0 0.0
    %2166 = vmatprep.subr.mxu0 0.0
    %2167 = vmatpush1.msra.mxu0 0.0
    %2168 = vmatprep.subr.mxu0 0.0
    %2169 = vmatpush1.msra.mxu0 0.0
    %2170 = vmatprep.subr.mxu0 0.0
    %2171 = vmatpush1.msra.mxu0 0.0
    %2172 = vmatprep.subr.mxu0 0.0
    %2173 = vmatpush1.msra.mxu0 0.0
    %2174 = vmatprep.subr.mxu0 0.0
    %2175 = vmatpush1.msra.mxu0 0.0
    %2176 = vmatprep.subr.mxu0 0.0
    %2177 = vmatpush1.msra.mxu0 0.0
    %2178 = vmatprep.subr.mxu0 0.0
    %2179 = vmatpush1.msra.mxu0 0.0
    %2180 = vmatprep.subr.mxu0 0.0
    %2181 = vmatpush1.msra.mxu0 0.0
    %2182 = vmatprep.subr.mxu0 0.0
    %2183 = vmatpush1.msra.mxu0 0.0
    %2184 = vmatprep.subr.mxu0 0.0
    %2185 = vmatpush1.msra.mxu0 0.0
    %2186 = vmatprep.subr.mxu0 0.0
    %2187 = vmatpush1.msra.mxu0 0.0
    %2188 = vmatprep.subr.mxu0 0.0
    %2189 = vmatpush1.msra.mxu0 0.0
    %2190 = vmatprep.subr.mxu0 0.0
    %2191 = vmatpush1.msra.mxu0 0.0
    %2192 = vmatprep.subr.mxu0 0.0
    %2193 = vmatpush1.msra.mxu0 0.0
    %2194 = vmatprep.subr.mxu0 0.0
    %2195 = vmatpush1.msra.mxu0 0.0
    %2196 = vmatprep.subr.mxu0 0.0
    %2197 = vmatpush1.msra.mxu0 0.0
    %2198 = vmatprep.subr.mxu0 0.0
    %2199 = vmatpush1.msra.mxu0 0.0
    %2200 = vmatprep.subr.mxu0 0.0
    %2201 = vmatpush1.msra.mxu0 0.0
    %2202 = vmatprep.subr.mxu0 0.0
    %2203 = vmatpush1.msra.mxu0 0.0
    %2204 = vmatprep.subr.mxu0 0.0
    %2205 = vmatpush1.msra.mxu0 0.0
    %2206 = vmatprep.mubr.f32.mxu0 0.0
    %2207 = vmatmul.mubr.f32.gmra.mrb[0].mxu0 %v2137
    %v2208 = vpop.f32.mrb[0].mxu0
    %v2209 = vadd.f32 0.0, %v2208
    %v2210 = vpop.f32.mrb[0].mxu0
    %2211 = vdwg.mxu0
    %v2212 = vld [vmem:[#allocation4] sm:$0x1]
    %v2213 = vld [vmem:[%s17] sm:$0xff]
    %v2214 = vld [vmem:[%s17 + $0x8] sm:$0xff]
    %v2215 = vld [vmem:[%s17 + $0x10] sm:$0xff]
    %v2216 = vld [vmem:[%s17 + $0x18] sm:$0xff]
    %v2217 = vld [vmem:[%s1063] sm:$0xff]
    %v2218 = vld [vmem:[%s1063 + $0x8] sm:$0xff]
    %v2219 = vld [vmem:[%s1063 + $0x10] sm:$0xff]
    %v2220 = vld [vmem:[%s1063 + $0x18] sm:$0xff]
    %v2222 = vrot.slane %v2209, 1
    %v2223 = vsel %vm571, %v2222, 0
    %2225 = vmatprep.subr.mxu0 0.0
    %2226 = vmatpush1.msra.mxu0 %v2217
    %2227 = vmatprep.subr.mxu0 0.0
    %2228 = vmatpush1.msra.mxu0 %v2218
    %2229 = vmatprep.subr.mxu0 0.0
    %2230 = vmatpush1.msra.mxu0 %v2219
    %2231 = vmatprep.subr.mxu0 0.0
    %2232 = vmatpush1.msra.mxu0 %v2220
    %2233 = vmatprep.subr.mxu0 0.0
    %2234 = vmatpush1.msra.mxu0 0.0
    %2235 = vmatprep.subr.mxu0 0.0
    %2236 = vmatpush1.msra.mxu0 0.0
    %2237 = vmatprep.subr.mxu0 0.0
    %2238 = vmatpush1.msra.mxu0 0.0
    %2239 = vmatprep.subr.mxu0 0.0
    %2240 = vmatpush1.msra.mxu0 0.0
    %2241 = vmatprep.subr.mxu0 0.0
    %2242 = vmatpush1.msra.mxu0 0.0
    %2243 = vmatprep.subr.mxu0 0.0
    %2244 = vmatpush1.msra.mxu0 0.0
    %2245 = vmatprep.subr.mxu0 0.0
    %2246 = vmatpush1.msra.mxu0 0.0
    %2247 = vmatprep.subr.mxu0 0.0
    %2248 = vmatpush1.msra.mxu0 0.0
    %2249 = vmatprep.subr.mxu0 0.0
    %2250 = vmatpush1.msra.mxu0 0.0
    %2251 = vmatprep.subr.mxu0 0.0
    %2252 = vmatpush1.msra.mxu0 0.0
    %2253 = vmatprep.subr.mxu0 0.0
    %2254 = vmatpush1.msra.mxu0 0.0
    %2255 = vmatprep.subr.mxu0 0.0
    %2256 = vmatpush1.msra.mxu0 0.0
    %2257 = vmatprep.subr.mxu0 0.0
    %2258 = vmatpush1.msra.mxu0 0.0
    %2259 = vmatprep.subr.mxu0 0.0
    %2260 = vmatpush1.msra.mxu0 0.0
    %2261 = vmatprep.subr.mxu0 0.0
    %2262 = vmatpush1.msra.mxu0 0.0
    %2263 = vmatprep.subr.mxu0 0.0
    %2264 = vmatpush1.msra.mxu0 0.0
    %2265 = vmatprep.subr.mxu0 0.0
    %2266 = vmatpush1.msra.mxu0 0.0
    %2267 = vmatprep.subr.mxu0 0.0
    %2268 = vmatpush1.msra.mxu0 0.0
    %2269 = vmatprep.subr.mxu0 0.0
    %2270 = vmatpush1.msra.mxu0 0.0
    %2271 = vmatprep.subr.mxu0 0.0
    %2272 = vmatpush1.msra.mxu0 0.0
    %2273 = vmatprep.subr.mxu0 0.0
    %2274 = vmatpush1.msra.mxu0 0.0
    %2275 = vmatprep.subr.mxu0 0.0
    %2276 = vmatpush1.msra.mxu0 0.0
    %2277 = vmatprep.subr.mxu0 0.0
    %2278 = vmatpush1.msra.mxu0 0.0
    %2279 = vmatprep.subr.mxu0 0.0
    %2280 = vmatpush1.msra.mxu0 0.0
    %2281 = vmatprep.subr.mxu0 0.0
    %2282 = vmatpush1.msra.mxu0 0.0
    %2283 = vmatprep.subr.mxu0 0.0
    %2284 = vmatpush1.msra.mxu0 0.0
    %2285 = vmatprep.subr.mxu0 0.0
    %2286 = vmatpush1.msra.mxu0 0.0
    %2287 = vmatprep.subr.mxu0 0.0
    %2288 = vmatpush1.msra.mxu0 0.0
    %2289 = vmatprep.mubr.f32.mxu0 0.0
    %2290 = vmatmul.mubr.f32.gmra.mrb[0].mxu0 %v2223
    %v2291 = vpop.f32.mrb[0].mxu0
    %v2292 = vadd.f32 0.0, %v2291
    %v2293 = vpop.f32.mrb[0].mxu0
    %2294 = vdwg.mxu0
    %v2295 = vsel %vm571, %v2209, 0
    %2297 = vmatprep.subr.mxu0 0.0
    %2298 = vmatpush1.msra.mxu0 %v2213
    %2299 = vmatprep.subr.mxu0 0.0
    %2300 = vmatpush1.msra.mxu0 %v2214
    %2301 = vmatprep.subr.mxu0 0.0
    %2302 = vmatpush1.msra.mxu0 %v2215
    %2303 = vmatprep.subr.mxu0 0.0
    %2304 = vmatpush1.msra.mxu0 %v2216
    %2305 = vmatprep.subr.mxu0 0.0
    %2306 = vmatpush1.msra.mxu0 0.0
    %2307 = vmatprep.subr.mxu0 0.0
    %2308 = vmatpush1.msra.mxu0 0.0
    %2309 = vmatprep.subr.mxu0 0.0
    %2310 = vmatpush1.msra.mxu0 0.0
    %2311 = vmatprep.subr.mxu0 0.0
    %2312 = vmatpush1.msra.mxu0 0.0
    %2313 = vmatprep.subr.mxu0 0.0
    %2314 = vmatpush1.msra.mxu0 0.0
    %2315 = vmatprep.subr.mxu0 0.0
    %2316 = vmatpush1.msra.mxu0 0.0
    %2317 = vmatprep.subr.mxu0 0.0
    %2318 = vmatpush1.msra.mxu0 0.0
    %2319 = vmatprep.subr.mxu0 0.0
    %2320 = vmatpush1.msra.mxu0 0.0
    %2321 = vmatprep.subr.mxu0 0.0
    %2322 = vmatpush1.msra.mxu0 0.0
    %2323 = vmatprep.subr.mxu0 0.0
    %2324 = vmatpush1.msra.mxu0 0.0
    %2325 = vmatprep.subr.mxu0 0.0
    %2326 = vmatpush1.msra.mxu0 0.0
    %2327 = vmatprep.subr.mxu0 0.0
    %2328 = vmatpush1.msra.mxu0 0.0
    %2329 = vmatprep.subr.mxu0 0.0
    %2330 = vmatpush1.msra.mxu0 0.0
    %2331 = vmatprep.subr.mxu0 0.0
    %2332 = vmatpush1.msra.mxu0 0.0
    %2333 = vmatprep.subr.mxu0 0.0
    %2334 = vmatpush1.msra.mxu0 0.0
    %2335 = vmatprep.subr.mxu0 0.0
    %2336 = vmatpush1.msra.mxu0 0.0
    %2337 = vmatprep.subr.mxu0 0.0
    %2338 = vmatpush1.msra.mxu0 0.0
    %2339 = vmatprep.subr.mxu0 0.0
    %2340 = vmatpush1.msra.mxu0 0.0
    %2341 = vmatprep.subr.mxu0 0.0
    %2342 = vmatpush1.msra.mxu0 0.0
    %2343 = vmatprep.subr.mxu0 0.0
    %2344 = vmatpush1.msra.mxu0 0.0
    %2345 = vmatprep.subr.mxu0 0.0
    %2346 = vmatpush1.msra.mxu0 0.0
    %2347 = vmatprep.subr.mxu0 0.0
    %2348 = vmatpush1.msra.mxu0 0.0
    %2349 = vmatprep.subr.mxu0 0.0
    %2350 = vmatpush1.msra.mxu0 0.0
    %2351 = vmatprep.subr.mxu0 0.0
    %2352 = vmatpush1.msra.mxu0 0.0
    %2353 = vmatprep.subr.mxu0 0.0
    %2354 = vmatpush1.msra.mxu0 0.0
    %2355 = vmatprep.subr.mxu0 0.0
    %2356 = vmatpush1.msra.mxu0 0.0
    %2357 = vmatprep.subr.mxu0 0.0
    %2358 = vmatpush1.msra.mxu0 0.0
    %2359 = vmatprep.subr.mxu0 0.0
    %2360 = vmatpush1.msra.mxu0 0.0
    %2361 = vmatprep.mubr.f32.mxu0 0.0
    %2362 = vmatmul.mubr.f32.gmra.mrb[0].mxu0 %v2295
    %v2363 = vpop.f32.mrb[0].mxu0
    %v2364 = vadd.f32 %v2292, %v2363
    %v2365 = vpop.f32.mrb[0].mxu0
    %2366 = vdwg.mxu0
    %v2367 = vld [vmem:[%s1214] sm:$0xff]
    %v2368 = vld [vmem:[%s1214 + $0x8] sm:$0xff]
    %v2369 = vld [vmem:[%s1214 + $0x10] sm:$0xff]
    %v2370 = vld [vmem:[%s1214 + $0x18] sm:$0xff]
    %v2371 = vrot.slane %v2209, 2
    %v2372 = vsel %vm571, %v2371, 0
    %2374 = vmatprep.subr.mxu0 0.0
    %2375 = vmatpush1.msra.mxu0 %v2367
    %2376 = vmatprep.subr.mxu0 0.0
    %2377 = vmatpush1.msra.mxu0 %v2368
    %2378 = vmatprep.subr.mxu0 0.0
    %2379 = vmatpush1.msra.mxu0 %v2369
    %2380 = vmatprep.subr.mxu0 0.0
    %2381 = vmatpush1.msra.mxu0 %v2370
    %2382 = vmatprep.subr.mxu0 0.0
    %2383 = vmatpush1.msra.mxu0 0.0
    %2384 = vmatprep.subr.mxu0 0.0
    %2385 = vmatpush1.msra.mxu0 0.0
    %2386 = vmatprep.subr.mxu0 0.0
    %2387 = vmatpush1.msra.mxu0 0.0
    %2388 = vmatprep.subr.mxu0 0.0
    %2389 = vmatpush1.msra.mxu0 0.0
    %2390 = vmatprep.subr.mxu0 0.0
    %2391 = vmatpush1.msra.mxu0 0.0
    %2392 = vmatprep.subr.mxu0 0.0
    %2393 = vmatpush1.msra.mxu0 0.0
    %2394 = vmatprep.subr.mxu0 0.0
    %2395 = vmatpush1.msra.mxu0 0.0
    %2396 = vmatprep.subr.mxu0 0.0
    %2397 = vmatpush1.msra.mxu0 0.0
    %2398 = vmatprep.subr.mxu0 0.0
    %2399 = vmatpush1.msra.mxu0 0.0
    %2400 = vmatprep.subr.mxu0 0.0
    %2401 = vmatpush1.msra.mxu0 0.0
    %2402 = vmatprep.subr.mxu0 0.0
    %2403 = vmatpush1.msra.mxu0 0.0
    %2404 = vmatprep.subr.mxu0 0.0
    %2405 = vmatpush1.msra.mxu0 0.0
    %2406 = vmatprep.subr.mxu0 0.0
    %2407 = vmatpush1.msra.mxu0 0.0
    %2408 = vmatprep.subr.mxu0 0.0
    %2409 = vmatpush1.msra.mxu0 0.0
    %2410 = vmatprep.subr.mxu0 0.0
    %2411 = vmatpush1.msra.mxu0 0.0
    %2412 = vmatprep.subr.mxu0 0.0
    %2413 = vmatpush1.msra.mxu0 0.0
    %2414 = vmatprep.subr.mxu0 0.0
    %2415 = vmatpush1.msra.mxu0 0.0
    %2416 = vmatprep.subr.mxu0 0.0
    %2417 = vmatpush1.msra.mxu0 0.0
    %2418 = vmatprep.subr.mxu0 0.0
    %2419 = vmatpush1.msra.mxu0 0.0
    %2420 = vmatprep.subr.mxu0 0.0
    %2421 = vmatpush1.msra.mxu0 0.0
    %2422 = vmatprep.subr.mxu0 0.0
    %2423 = vmatpush1.msra.mxu0 0.0
    %2424 = vmatprep.subr.mxu0 0.0
    %2425 = vmatpush1.msra.mxu0 0.0
    %2426 = vmatprep.subr.mxu0 0.0
    %2427 = vmatpush1.msra.mxu0 0.0
    %2428 = vmatprep.subr.mxu0 0.0
    %2429 = vmatpush1.msra.mxu0 0.0
    %2430 = vmatprep.subr.mxu0 0.0
    %2431 = vmatpush1.msra.mxu0 0.0
    %2432 = vmatprep.subr.mxu0 0.0
    %2433 = vmatpush1.msra.mxu0 0.0
    %2434 = vmatprep.subr.mxu0 0.0
    %2435 = vmatpush1.msra.mxu0 0.0
    %2436 = vmatprep.subr.mxu0 0.0
    %2437 = vmatpush1.msra.mxu0 0.0
    %2438 = vmatprep.mubr.f32.mxu0 0.0
    %2439 = vmatmul.mubr.f32.gmra.mrb[0].mxu0 %v2372
    %v2440 = vpop.f32.mrb[0].mxu0
    %v2441 = vadd.f32 0.0, %v2440
    %v2442 = vpop.f32.mrb[0].mxu0
    %2443 = vdwg.mxu0
    %v2444 = vadd.f32 %v2364, %v2441
    %v2445 = vld [vmem:[%s1293] sm:$0xff]
    %v2446 = vld [vmem:[%s1293 + $0x8] sm:$0xff]
    %v2447 = vld [vmem:[%s1293 + $0x10] sm:$0xff]
    %v2448 = vld [vmem:[%s1293 + $0x18] sm:$0xff]
    %v2449 = vrot.slane %v2209, 3
    %v2450 = vsel %vm571, %v2449, 0
    %2452 = vmatprep.subr.mxu0 0.0
    %2453 = vmatpush1.msra.mxu0 %v2445
    %2454 = vmatprep.subr.mxu0 0.0
    %2455 = vmatpush1.msra.mxu0 %v2446
    %2456 = vmatprep.subr.mxu0 0.0
    %2457 = vmatpush1.msra.mxu0 %v2447
    %2458 = vmatprep.subr.mxu0 0.0
    %2459 = vmatpush1.msra.mxu0 %v2448
    %2460 = vmatprep.subr.mxu0 0.0
    %2461 = vmatpush1.msra.mxu0 0.0
    %2462 = vmatprep.subr.mxu0 0.0
    %2463 = vmatpush1.msra.mxu0 0.0
    %2464 = vmatprep.subr.mxu0 0.0
    %2465 = vmatpush1.msra.mxu0 0.0
    %2466 = vmatprep.subr.mxu0 0.0
    %2467 = vmatpush1.msra.mxu0 0.0
    %2468 = vmatprep.subr.mxu0 0.0
    %2469 = vmatpush1.msra.mxu0 0.0
    %2470 = vmatprep.subr.mxu0 0.0
    %2471 = vmatpush1.msra.mxu0 0.0
    %2472 = vmatprep.subr.mxu0 0.0
    %2473 = vmatpush1.msra.mxu0 0.0
    %2474 = vmatprep.subr.mxu0 0.0
    %2475 = vmatpush1.msra.mxu0 0.0
    %2476 = vmatprep.subr.mxu0 0.0
    %2477 = vmatpush1.msra.mxu0 0.0
    %2478 = vmatprep.subr.mxu0 0.0
    %2479 = vmatpush1.msra.mxu0 0.0
    %2480 = vmatprep.subr.mxu0 0.0
    %2481 = vmatpush1.msra.mxu0 0.0
    %2482 = vmatprep.subr.mxu0 0.0
    %2483 = vmatpush1.msra.mxu0 0.0
    %2484 = vmatprep.subr.mxu0 0.0
    %2485 = vmatpush1.msra.mxu0 0.0
    %2486 = vmatprep.subr.mxu0 0.0
    %2487 = vmatpush1.msra.mxu0 0.0
    %2488 = vmatprep.subr.mxu0 0.0
    %2489 = vmatpush1.msra.mxu0 0.0
    %2490 = vmatprep.subr.mxu0 0.0
    %2491 = vmatpush1.msra.mxu0 0.0
    %2492 = vmatprep.subr.mxu0 0.0
    %2493 = vmatpush1.msra.mxu0 0.0
    %2494 = vmatprep.subr.mxu0 0.0
    %2495 = vmatpush1.msra.mxu0 0.0
    %2496 = vmatprep.subr.mxu0 0.0
    %2497 = vmatpush1.msra.mxu0 0.0
    %2498 = vmatprep.subr.mxu0 0.0
    %2499 = vmatpush1.msra.mxu0 0.0
    %2500 = vmatprep.subr.mxu0 0.0
    %2501 = vmatpush1.msra.mxu0 0.0
    %2502 = vmatprep.subr.mxu0 0.0
    %2503 = vmatpush1.msra.mxu0 0.0
    %2504 = vmatprep.subr.mxu0 0.0
    %2505 = vmatpush1.msra.mxu0 0.0
    %2506 = vmatprep.subr.mxu0 0.0
    %2507 = vmatpush1.msra.mxu0 0.0
    %2508 = vmatprep.subr.mxu0 0.0
    %2509 = vmatpush1.msra.mxu0 0.0
    %2510 = vmatprep.subr.mxu0 0.0
    %2511 = vmatpush1.msra.mxu0 0.0
    %2512 = vmatprep.subr.mxu0 0.0
    %2513 = vmatpush1.msra.mxu0 0.0
    %2514 = vmatprep.subr.mxu0 0.0
    %2515 = vmatpush1.msra.mxu0 0.0
    %2516 = vmatprep.mubr.f32.mxu0 0.0
    %2517 = vmatmul.mubr.f32.gmra.mrb[0].mxu0 %v2450
    %v2518 = vpop.f32.mrb[0].mxu0
    %v2519 = vadd.f32 0.0, %v2518
    %v2520 = vpop.f32.mrb[0].mxu0
    %2521 = vdwg.mxu0
    %v2522 = vadd.f32 %v2444, %v2519
    %v2523 = vld [vmem:[%s1372] sm:$0xff]
    %v2524 = vld [vmem:[%s1372 + $0x8] sm:$0xff]
    %v2525 = vld [vmem:[%s1372 + $0x10] sm:$0xff]
    %v2526 = vld [vmem:[%s1372 + $0x18] sm:$0xff]
    %v2527 = vrot.slane %v2209, 4
    %v2528 = vsel %vm571, %v2527, 0
    %2530 = vmatprep.subr.mxu0 0.0
    %2531 = vmatpush1.msra.mxu0 %v2523
    %2532 = vmatprep.subr.mxu0 0.0
    %2533 = vmatpush1.msra.mxu0 %v2524
    %2534 = vmatprep.subr.mxu0 0.0
    %2535 = vmatpush1.msra.mxu0 %v2525
    %2536 = vmatprep.subr.mxu0 0.0
    %2537 = vmatpush1.msra.mxu0 %v2526
    %2538 = vmatprep.subr.mxu0 0.0
    %2539 = vmatpush1.msra.mxu0 0.0
    %2540 = vmatprep.subr.mxu0 0.0
    %2541 = vmatpush1.msra.mxu0 0.0
    %2542 = vmatprep.subr.mxu0 0.0
    %2543 = vmatpush1.msra.mxu0 0.0
    %2544 = vmatprep.subr.mxu0 0.0
    %2545 = vmatpush1.msra.mxu0 0.0
    %2546 = vmatprep.subr.mxu0 0.0
    %2547 = vmatpush1.msra.mxu0 0.0
    %2548 = vmatprep.subr.mxu0 0.0
    %2549 = vmatpush1.msra.mxu0 0.0
    %2550 = vmatprep.subr.mxu0 0.0
    %2551 = vmatpush1.msra.mxu0 0.0
    %2552 = vmatprep.subr.mxu0 0.0
    %2553 = vmatpush1.msra.mxu0 0.0
    %2554 = vmatprep.subr.mxu0 0.0
    %2555 = vmatpush1.msra.mxu0 0.0
    %2556 = vmatprep.subr.mxu0 0.0
    %2557 = vmatpush1.msra.mxu0 0.0
    %2558 = vmatprep.subr.mxu0 0.0
    %2559 = vmatpush1.msra.mxu0 0.0
    %2560 = vmatprep.subr.mxu0 0.0
    %2561 = vmatpush1.msra.mxu0 0.0
    %2562 = vmatprep.subr.mxu0 0.0
    %2563 = vmatpush1.msra.mxu0 0.0
    %2564 = vmatprep.subr.mxu0 0.0
    %2565 = vmatpush1.msra.mxu0 0.0
    %2566 = vmatprep.subr.mxu0 0.0
    %2567 = vmatpush1.msra.mxu0 0.0
    %2568 = vmatprep.subr.mxu0 0.0
    %2569 = vmatpush1.msra.mxu0 0.0
    %2570 = vmatprep.subr.mxu0 0.0
    %2571 = vmatpush1.msra.mxu0 0.0
    %2572 = vmatprep.subr.mxu0 0.0
    %2573 = vmatpush1.msra.mxu0 0.0
    %2574 = vmatprep.subr.mxu0 0.0
    %2575 = vmatpush1.msra.mxu0 0.0
    %2576 = vmatprep.subr.mxu0 0.0
    %2577 = vmatpush1.msra.mxu0 0.0
    %2578 = vmatprep.subr.mxu0 0.0
    %2579 = vmatpush1.msra.mxu0 0.0
    %2580 = vmatprep.subr.mxu0 0.0
    %2581 = vmatpush1.msra.mxu0 0.0
    %2582 = vmatprep.subr.mxu0 0.0
    %2583 = vmatpush1.msra.mxu0 0.0
    %2584 = vmatprep.subr.mxu0 0.0
    %2585 = vmatpush1.msra.mxu0 0.0
    %2586 = vmatprep.subr.mxu0 0.0
    %2587 = vmatpush1.msra.mxu0 0.0
    %2588 = vmatprep.subr.mxu0 0.0
    %2589 = vmatpush1.msra.mxu0 0.0
    %2590 = vmatprep.subr.mxu0 0.0
    %2591 = vmatpush1.msra.mxu0 0.0
    %2592 = vmatprep.subr.mxu0 0.0
    %2593 = vmatpush1.msra.mxu0 0.0
    %2594 = vmatprep.mubr.f32.mxu0 0.0
    %2595 = vmatmul.mubr.f32.gmra.mrb[0].mxu0 %v2528
    %v2596 = vpop.f32.mrb[0].mxu0
    %v2597 = vadd.f32 0.0, %v2596
    %v2598 = vpop.f32.mrb[0].mxu0
    %2599 = vdwg.mxu0
    %v2600 = vadd.f32 %v2522, %v2597
    %v2602 = vlaneseq
    %v2603 = vshrl.u32 %v2602, 7
    %v2604 = vsub.s32 0, %v2603
    %v2605 = vrot.slane %v2212, %v2604
    %v2607 = vadd.f32 %v2600, %v2605
    %vm2608 = vcmp.ge.f32.partialorder %v2607, 0.0
    %v2609 = vmul.f32 %v2607, 0.2
    %v2610 = vsel %vm2608, %v2607, %v2609
    %v2611 = vld [vmem:[#allocation7] sm:$0x1]
    %v2613 = vlaneseq
    %v2614 = vshrl.u32 %v2613, 7
    %v2615 = vsub.s32 0, %v2614
    %v2616 = vrot.slane %v2611, %v2615
    %v2618 = vmul.f32 %v2610, %v2616
    %v2619 = vld [vmem:[#allocation9] sm:$0x1]
    %v2621 = vlaneseq
    %v2622 = vshrl.u32 %v2621, 7
    %v2623 = vsub.s32 0, %v2622
    %v2624 = vrot.slane %v2619, %v2623
    %v2626 = vadd.f32 %v2618, %v2624
    %v2627 = vld [vmem:[%s11] sm:$0xff]
    %v2629 = vsel %vm980, %v2627, 0
    %v2632 = vsel %vm984, %v2626, 0
    %2634 = vmatprep.subr.mxu0 0.0
    %2635 = vmatpush1.msra.mxu0 %v2632
    %2636 = vmatprep.subr.mxu0 0.0
    %2637 = vmatpush1.msra.mxu0 0.0
    %2638 = vmatprep.subr.mxu0 0.0
    %2639 = vmatpush1.msra.mxu0 0.0
    %2640 = vmatprep.subr.mxu0 0.0
    %2641 = vmatpush1.msra.mxu0 0.0
    %2642 = vmatprep.subr.mxu0 0.0
    %2643 = vmatpush1.msra.mxu0 0.0
    %2644 = vmatprep.subr.mxu0 0.0
    %2645 = vmatpush1.msra.mxu0 0.0
    %2646 = vmatprep.subr.mxu0 0.0
    %2647 = vmatpush1.msra.mxu0 0.0
    %2648 = vmatprep.subr.mxu0 0.0
    %2649 = vmatpush1.msra.mxu0 0.0
    %2650 = vmatprep.subr.mxu0 0.0
    %2651 = vmatpush1.msra.mxu0 0.0
    %2652 = vmatprep.subr.mxu0 0.0
    %2653 = vmatpush1.msra.mxu0 0.0
    %2654 = vmatprep.subr.mxu0 0.0
    %2655 = vmatpush1.msra.mxu0 0.0
    %2656 = vmatprep.subr.mxu0 0.0
    %2657 = vmatpush1.msra.mxu0 0.0
    %2658 = vmatprep.subr.mxu0 0.0
    %2659 = vmatpush1.msra.mxu0 0.0
    %2660 = vmatprep.subr.mxu0 0.0
    %2661 = vmatpush1.msra.mxu0 0.0
    %2662 = vmatprep.subr.mxu0 0.0
    %2663 = vmatpush1.msra.mxu0 0.0
    %2664 = vmatprep.subr.mxu0 0.0
    %2665 = vmatpush1.msra.mxu0 0.0
    %2666 = vmatprep.subr.mxu0 0.0
    %2667 = vmatpush1.msra.mxu0 0.0
    %2668 = vmatprep.subr.mxu0 0.0
    %2669 = vmatpush1.msra.mxu0 0.0
    %2670 = vmatprep.subr.mxu0 0.0
    %2671 = vmatpush1.msra.mxu0 0.0
    %2672 = vmatprep.subr.mxu0 0.0
    %2673 = vmatpush1.msra.mxu0 0.0
    %2674 = vmatprep.subr.mxu0 0.0
    %2675 = vmatpush1.msra.mxu0 0.0
    %2676 = vmatprep.subr.mxu0 0.0
    %2677 = vmatpush1.msra.mxu0 0.0
    %2678 = vmatprep.subr.mxu0 0.0
    %2679 = vmatpush1.msra.mxu0 0.0
    %2680 = vmatprep.subr.mxu0 0.0
    %2681 = vmatpush1.msra.mxu0 0.0
    %2682 = vmatprep.subr.mxu0 0.0
    %2683 = vmatpush1.msra.mxu0 0.0
    %2684 = vmatprep.subr.mxu0 0.0
    %2685 = vmatpush1.msra.mxu0 0.0
    %2686 = vmatprep.subr.mxu0 0.0
    %2687 = vmatpush1.msra.mxu0 0.0
    %2688 = vmatprep.subr.mxu0 0.0
    %2689 = vmatpush1.msra.mxu0 0.0
    %2690 = vmatprep.subr.mxu0 0.0
    %2691 = vmatpush1.msra.mxu0 0.0
    %2692 = vmatprep.subr.mxu0 0.0
    %2693 = vmatpush1.msra.mxu0 0.0
    %2694 = vmatprep.subr.mxu0 0.0
    %2695 = vmatpush1.msra.mxu0 0.0
    %2696 = vmatprep.subr.mxu0 0.0
    %2697 = vmatpush1.msra.mxu0 0.0
    %2698 = vmatprep.mubr.f32.mxu0 0.0
    %2699 = vmatmul.mubr.f32.gmra.mrb[0].mxu0 %v2629
    %v2700 = vpop.f32.mrb[0].mxu0
    %v2701 = vadd.f32 0.0, %v2700
    %v2702 = vpop.f32.mrb[0].mxu0
    %2703 = vdwg.mxu0
    %v2704 = vld [vmem:[%s77] sm:$0xff]
    %v2705 = vld [vmem:[%s77 + $0x8] sm:$0xff]
    %v2706 = vld [vmem:[%s77 + $0x10] sm:$0xff]
    %v2707 = vld [vmem:[%s77 + $0x18] sm:$0xff]
    %v2708 = vld [vmem:[#allocation42] sm:$0x1]
    %v2710 = vlaneseq
    %v2711 = vshrl.u32 %v2710, 7
    %v2712 = vsub.s32 0, %v2711
    %v2713 = vrot.slane %v2708, %v2712
    %v2716 = vsel %vm571, %v2701, 0
    %2718 = vmatprep.subr.mxu0 0.0
    %2719 = vmatpush1.msra.mxu0 %v2704
    %2720 = vmatprep.subr.mxu0 0.0
    %2721 = vmatpush1.msra.mxu0 %v2705
    %2722 = vmatprep.subr.mxu0 0.0
    %2723 = vmatpush1.msra.mxu0 %v2706
    %2724 = vmatprep.subr.mxu0 0.0
    %2725 = vmatpush1.msra.mxu0 %v2707
    %2726 = vmatprep.subr.mxu0 0.0
    %2727 = vmatpush1.msra.mxu0 0.0
    %2728 = vmatprep.subr.mxu0 0.0
    %2729 = vmatpush1.msra.mxu0 0.0
    %2730 = vmatprep.subr.mxu0 0.0
    %2731 = vmatpush1.msra.mxu0 0.0
    %2732 = vmatprep.subr.mxu0 0.0
    %2733 = vmatpush1.msra.mxu0 0.0
    %2734 = vmatprep.subr.mxu0 0.0
    %2735 = vmatpush1.msra.mxu0 0.0
    %2736 = vmatprep.subr.mxu0 0.0
    %2737 = vmatpush1.msra.mxu0 0.0
    %2738 = vmatprep.subr.mxu0 0.0
    %2739 = vmatpush1.msra.mxu0 0.0
    %2740 = vmatprep.subr.mxu0 0.0
    %2741 = vmatpush1.msra.mxu0 0.0
    %2742 = vmatprep.subr.mxu0 0.0
    %2743 = vmatpush1.msra.mxu0 0.0
    %2744 = vmatprep.subr.mxu0 0.0
    %2745 = vmatpush1.msra.mxu0 0.0
    %2746 = vmatprep.subr.mxu0 0.0
    %2747 = vmatpush1.msra.mxu0 0.0
    %2748 = vmatprep.subr.mxu0 0.0
    %2749 = vmatpush1.msra.mxu0 0.0
    %2750 = vmatprep.subr.mxu0 0.0
    %2751 = vmatpush1.msra.mxu0 0.0
    %2752 = vmatprep.subr.mxu0 0.0
    %2753 = vmatpush1.msra.mxu0 0.0
    %2754 = vmatprep.subr.mxu0 0.0
    %2755 = vmatpush1.msra.mxu0 0.0
    %2756 = vmatprep.subr.mxu0 0.0
    %2757 = vmatpush1.msra.mxu0 0.0
    %2758 = vmatprep.subr.mxu0 0.0
    %2759 = vmatpush1.msra.mxu0 0.0
    %2760 = vmatprep.subr.mxu0 0.0
    %2761 = vmatpush1.msra.mxu0 0.0
    %2762 = vmatprep.subr.mxu0 0.0
    %2763 = vmatpush1.msra.mxu0 0.0
    %2764 = vmatprep.subr.mxu0 0.0
    %2765 = vmatpush1.msra.mxu0 0.0
    %2766 = vmatprep.subr.mxu0 0.0
    %2767 = vmatpush1.msra.mxu0 0.0
    %2768 = vmatprep.subr.mxu0 0.0
    %2769 = vmatpush1.msra.mxu0 0.0
    %2770 = vmatprep.subr.mxu0 0.0
    %2771 = vmatpush1.msra.mxu0 0.0
    %2772 = vmatprep.subr.mxu0 0.0
    %2773 = vmatpush1.msra.mxu0 0.0
    %2774 = vmatprep.subr.mxu0 0.0
    %2775 = vmatpush1.msra.mxu0 0.0
    %2776 = vmatprep.subr.mxu0 0.0
    %2777 = vmatpush1.msra.mxu0 0.0
    %2778 = vmatprep.subr.mxu0 0.0
    %2779 = vmatpush1.msra.mxu0 0.0
    %2780 = vmatprep.subr.mxu0 0.0
    %2781 = vmatpush1.msra.mxu0 0.0
    %2782 = vmatprep.mubr.f32.mxu0 0.0
    %2783 = vmatmul.mubr.f32.gmra.mrb[0].mxu0 %v2716
    %v2784 = vpop.f32.mrb[0].mxu0
    %v2785 = vadd.f32 %v2713, %v2784
    %v2786 = vpop.f32.mrb[0].mxu0
    %2787 = vdwg.mxu0
    %v2788 = vld [vmem:[#allocation43] sm:$0xff]
    %v2789 = vadd.f32 %v2785, %v2788
    %2790 = vst.msk [vmem:[#allocation2 + $0x8] sm:$0xff] %vm571, %v2789
    %v2791 = vld [vmem:[#allocation2] sm:$0xff]
    %v2792 = vld [vmem:[#allocation2 + $0x8] sm:$0xff]
    %v2793 = vld [vmem:[#allocation22] sm:$0x1]
    %v2794 = vld [vmem:[#allocation21] sm:$0x1]
    %v2795 = vsel %vm571, %v2791, 0.0
    %2796 = vadd.xlane.f32.xlu0 %v2795
    %v2797 = vpop.xlane.xlu0 %2796
    %v2798 = vsel %vm571, %v2792, 0.0
    %2799 = vadd.xlane.f32.xlu0 %v2798
    %v2800 = vpop.xlane.xlu0 %2799
    %v2801 = vrcp.pop 32.0
    %v2802 = vmul.f32 %v2797, %v2801
    %v2803 = vmul.f32 %v2800, %v2801
    %v2804 = vsub.f32 %v2791, %v2802
    %v2805 = vsub.f32 %v2792, %v2803
    %v2806 = vmul.f32 %v2804, %v2804
    %v2807 = vmul.f32 %v2805, %v2805
    %v2808 = vsel %vm571, %v2806, 0.0
    %2809 = vadd.xlane.f32.xlu0 %v2808
    %v2810 = vpop.xlane.xlu0 %2809
    %v2811 = vsel %vm571, %v2807, 0.0
    %2812 = vadd.xlane.f32.xlu0 %v2811
    %v2813 = vpop.xlane.xlu0 %2812
    %v2814 = vmul.f32 %v2810, %v2801
    %v2815 = vmul.f32 %v2813, %v2801
    %v2816 = vadd.f32 %v2814, 1e-05
    %v2817 = vadd.f32 %v2815, 1e-05
    %v2818 = vrsqrt.pop %v2816
    %v2819 = vrsqrt.pop %v2817
    %v2820 = vmul.f32 %v2804, %v2818
    %v2821 = vmul.f32 %v2805, %v2819
    %v2823 = vlaneseq
    %v2824 = vshrl.u32 %v2823, 7
    %v2825 = vsub.s32 0, %v2824
    %v2826 = vrot.slane %v2793, %v2825
    %v2828 = vmul.f32 %v2820, %v2826
    %v2829 = vmul.f32 %v2821, %v2826
    %v2831 = vlaneseq
    %v2832 = vshrl.u32 %v2831, 7
    %v2833 = vsub.s32 0, %v2832
    %v2834 = vrot.slane %v2794, %v2833
    %v2836 = vadd.f32 %v2828, %v2834
    %v2837 = vadd.f32 %v2829, %v2834
    %v2838 = vld [vmem:[%s49] sm:$0xff]
    %v2839 = vld [vmem:[%s49 + $0x8] sm:$0xff]
    %v2840 = vld [vmem:[%s49 + $0x10] sm:$0xff]
    %v2841 = vld [vmem:[%s49 + $0x18] sm:$0xff]
    %v2842 = vld [vmem:[#allocation19] sm:$0x1]
    %v2844 = vlaneseq
    %v2845 = vshrl.u32 %v2844, 7
    %v2846 = vsub.s32 0, %v2845
    %v2847 = vrot.slane %v2842, %v2846
    %v2850 = vsel %vm571, %v2836, 0
    %v2853 = vsel %vm571, %v2837, 0
    %2855 = vmatprep.subr.mxu0 0.0
    %2856 = vmatpush1.msra.mxu0 %v2838
    %2857 = vmatprep.subr.mxu0 0.0
    %2858 = vmatpush1.msra.mxu0 %v2839
    %2859 = vmatprep.subr.mxu0 0.0
    %2860 = vmatpush1.msra.mxu0 %v2840
    %2861 = vmatprep.subr.mxu0 0.0
    %2862 = vmatpush1.msra.mxu0 %v2841
    %2863 = vmatprep.subr.mxu0 0.0
    %2864 = vmatpush1.msra.mxu0 0.0
    %2865 = vmatprep.subr.mxu0 0.0
    %2866 = vmatpush1.msra.mxu0 0.0
    %2867 = vmatprep.subr.mxu0 0.0
    %2868 = vmatpush1.msra.mxu0 0.0
    %2869 = vmatprep.subr.mxu0 0.0
    %2870 = vmatpush1.msra.mxu0 0.0
    %2871 = vmatprep.subr.mxu0 0.0
    %2872 = vmatpush1.msra.mxu0 0.0
    %2873 = vmatprep.subr.mxu0 0.0
    %2874 = vmatpush1.msra.mxu0 0.0
    %2875 = vmatprep.subr.mxu0 0.0
    %2876 = vmatpush1.msra.mxu0 0.0
    %2877 = vmatprep.subr.mxu0 0.0
    %2878 = vmatpush1.msra.mxu0 0.0
    %2879 = vmatprep.subr.mxu0 0.0
    %2880 = vmatpush1.msra.mxu0 0.0
    %2881 = vmatprep.subr.mxu0 0.0
    %2882 = vmatpush1.msra.mxu0 0.0
    %2883 = vmatprep.subr.mxu0 0.0
    %2884 = vmatpush1.msra.mxu0 0.0
    %2885 = vmatprep.subr.mxu0 0.0
    %2886 = vmatpush1.msra.mxu0 0.0
    %2887 = vmatprep.subr.mxu0 0.0
    %2888 = vmatpush1.msra.mxu0 0.0
    %2889 = vmatprep.subr.mxu0 0.0
    %2890 = vmatpush1.msra.mxu0 0.0
    %2891 = vmatprep.subr.mxu0 0.0
    %2892 = vmatpush1.msra.mxu0 0.0
    %2893 = vmatprep.subr.mxu0 0.0
    %2894 = vmatpush1.msra.mxu0 0.0
    %2895 = vmatprep.subr.mxu0 0.0
    %2896 = vmatpush1.msra.mxu0 0.0
    %2897 = vmatprep.subr.mxu0 0.0
    %2898 = vmatpush1.msra.mxu0 0.0
    %2899 = vmatprep.subr.mxu0 0.0
    %2900 = vmatpush1.msra.mxu0 0.0
    %2901 = vmatprep.subr.mxu0 0.0
    %2902 = vmatpush1.msra.mxu0 0.0
    %2903 = vmatprep.subr.mxu0 0.0
    %2904 = vmatpush1.msra.mxu0 0.0
    %2905 = vmatprep.subr.mxu0 0.0
    %2906 = vmatpush1.msra.mxu0 0.0
    %2907 = vmatprep.subr.mxu0 0.0
    %2908 = vmatpush1.msra.mxu0 0.0
    %2909 = vmatprep.subr.mxu0 0.0
    %2910 = vmatpush1.msra.mxu0 0.0
    %2911 = vmatprep.subr.mxu0 0.0
    %2912 = vmatpush1.msra.mxu0 0.0
    %2913 = vmatprep.subr.mxu0 0.0
    %2914 = vmatpush1.msra.mxu0 0.0
    %2915 = vmatprep.subr.mxu0 0.0
    %2916 = vmatpush1.msra.mxu0 0.0
    %2917 = vmatprep.subr.mxu0 0.0
    %2918 = vmatpush1.msra.mxu0 0.0
    %2919 = vmatprep.mubr.f32.mxu0 0.0
    %2920 = vmatmul.mubr.f32.gmra.mrb[0].mxu0 %v2850
    %v2921 = vpop.f32.mrb[0].mxu0
    %v2922 = vadd.f32 %v2847, %v2921
    %v2923 = vpop.f32.mrb[0].mxu0
    %2924 = vmatprep.mubr.f32.mxu0 0.0
    %2925 = vmatmul.mubr.f32.gmra.mrb[0].mxu0 %v2853
    %v2926 = vpop.f32.mrb[0].mxu0
    %v2927 = vadd.f32 %v2847, %v2926
    %v2928 = vpop.f32.mrb[0].mxu0
    %2929 = vdwg.mxu0
    %2931 = vrot.lane.b32.xlu0 %v2922, 96
    %v2932 = vpop.permute.xlu0 %2931
    %vm2933 = vcmask 64512
    %v2934 = vsel %vm2933, %v2922, 0
    %v2936 = vsel %vm2933, %v2932, 0
    %2938 = vmatprep.subr.mxu0 0.0
    %2939 = vmatpush1.xpose.msra.mxu0 %v2936
    %2940 = vmatprep.subr.mxu0 0.0
    %2941 = vmatpush1.xpose.msra.mxu0 0.0
    %2942 = vmatprep.subr.mxu0 0.0
    %2943 = vmatpush1.xpose.msra.mxu0 0.0
    %2944 = vmatprep.subr.mxu0 0.0
    %2945 = vmatpush1.xpose.msra.mxu0 0.0
    %2946 = vmatprep.subr.mxu0 0.0
    %2947 = vmatpush1.xpose.msra.mxu0 0.0
    %2948 = vmatprep.subr.mxu0 0.0
    %2949 = vmatpush1.xpose.msra.mxu0 0.0
    %2950 = vmatprep.subr.mxu0 0.0
    %2951 = vmatpush1.xpose.msra.mxu0 0.0
    %2952 = vmatprep.subr.mxu0 0.0
    %2953 = vmatpush1.xpose.msra.mxu0 0.0
    %2954 = vmatprep.subr.mxu0 0.0
    %2955 = vmatpush1.xpose.msra.mxu0 0.0
    %2956 = vmatprep.subr.mxu0 0.0
    %2957 = vmatpush1.xpose.msra.mxu0 0.0
    %2958 = vmatprep.subr.mxu0 0.0
    %2959 = vmatpush1.xpose.msra.mxu0 0.0
    %2960 = vmatprep.subr.mxu0 0.0
    %2961 = vmatpush1.xpose.msra.mxu0 0.0
    %2962 = vmatprep.subr.mxu0 0.0
    %2963 = vmatpush1.xpose.msra.mxu0 0.0
    %2964 = vmatprep.subr.mxu0 0.0
    %2965 = vmatpush1.xpose.msra.mxu0 0.0
    %2966 = vmatprep.subr.mxu0 0.0
    %2967 = vmatpush1.xpose.msra.mxu0 0.0
    %2968 = vmatprep.subr.mxu0 0.0
    %2969 = vmatpush1.xpose.msra.mxu0 0.0
    %2970 = vmatprep.subr.mxu0 0.0
    %2971 = vmatpush1.xpose.msra.mxu0 0.0
    %2972 = vmatprep.subr.mxu0 0.0
    %2973 = vmatpush1.xpose.msra.mxu0 0.0
    %2974 = vmatprep.subr.mxu0 0.0
    %2975 = vmatpush1.xpose.msra.mxu0 0.0
    %2976 = vmatprep.subr.mxu0 0.0
    %2977 = vmatpush1.xpose.msra.mxu0 0.0
    %2978 = vmatprep.subr.mxu0 0.0
    %2979 = vmatpush1.xpose.msra.mxu0 0.0
    %2980 = vmatprep.subr.mxu0 0.0
    %2981 = vmatpush1.xpose.msra.mxu0 0.0
    %2982 = vmatprep.subr.mxu0 0.0
    %2983 = vmatpush1.xpose.msra.mxu0 0.0
    %2984 = vmatprep.subr.mxu0 0.0
    %2985 = vmatpush1.xpose.msra.mxu0 0.0
    %2986 = vmatprep.subr.mxu0 0.0
    %2987 = vmatpush1.xpose.msra.mxu0 0.0
    %2988 = vmatprep.subr.mxu0 0.0
    %2989 = vmatpush1.xpose.msra.mxu0 0.0
    %2990 = vmatprep.subr.mxu0 0.0
    %2991 = vmatpush1.xpose.msra.mxu0 0.0
    %2992 = vmatprep.subr.mxu0 0.0
    %2993 = vmatpush1.xpose.msra.mxu0 0.0
    %2994 = vmatprep.subr.mxu0 0.0
    %2995 = vmatpush1.xpose.msra.mxu0 0.0
    %2996 = vmatprep.subr.mxu0 0.0
    %2997 = vmatpush1.xpose.msra.mxu0 0.0
    %2998 = vmatprep.subr.mxu0 0.0
    %2999 = vmatpush1.xpose.msra.mxu0 0.0
    %3000 = vmatprep.subr.mxu0 0.0
    %3001 = vmatpush1.xpose.msra.mxu0 0.0
    %3002 = vmatprep.mubr.f32.mxu0 0.0
    %3003 = vmatmul.mubr.f32.gmra.mrb[0].mxu0 %v2934
    %v3004 = vpop.f32.mrb[0].mxu0
    %v3005 = vadd.f32 0.0, %v3004
    %v3006 = vpop.f32.mrb[0].mxu0
    %3007 = vdwg.mxu0
    %v3008 = vmul.f32 %v3005, 0.35355338
    %v3009 = vsel %vm2933, %v3008, -inf
    %3010 = vmax.xlane.f32.xlu0 %v3009
    %v3011 = vpop.xlane.xlu0 %3010
    %v3012 = vsub.f32 %v3008, %v3011
    %v3013 = vmul.f32 %v3012, 1.442695
    %v3014 = vpow.pop %v3013
    %v3015 = vsel %vm2933, %v3014, 0.0
    %3016 = vadd.xlane.f32.xlu0 %v3015
    %v3017 = vpop.xlane.xlu0 %3016
    %v3018 = vrcp.pop %v3017
    %v3019 = vmul.f32 %v3014, %v3018
    %3020 = vrot.lane.b32.xlu0 %v2922, 64
    %v3021 = vpop.permute.xlu0 %3020
    %v3024 = vsel %vm2933, %v3019, 0
    %3026 = vmatprep.subr.mxu0 0.0
    %3027 = vmatpush1.msra.mxu0 %v3021
    %3028 = vmatprep.subr.mxu0 0.0
    %3029 = vmatpush1.msra.mxu0 0.0
    %3030 = vmatprep.subr.mxu0 0.0
    %3031 = vmatpush1.msra.mxu0 0.0
    %3032 = vmatprep.subr.mxu0 0.0
    %3033 = vmatpush1.msra.mxu0 0.0
    %3034 = vmatprep.subr.mxu0 0.0
    %3035 = vmatpush1.msra.mxu0 0.0
    %3036 = vmatprep.subr.mxu0 0.0
    %3037 = vmatpush1.msra.mxu0 0.0
    %3038 = vmatprep.subr.mxu0 0.0
    %3039 = vmatpush1.msra.mxu0 0.0
    %3040 = vmatprep.subr.mxu0 0.0
    %3041 = vmatpush1.msra.mxu0 0.0
    %3042 = vmatprep.subr.mxu0 0.0
    %3043 = vmatpush1.msra.mxu0 0.0
    %3044 = vmatprep.subr.mxu0 0.0
    %3045 = vmatpush1.msra.mxu0 0.0
    %3046 = vmatprep.subr.mxu0 0.0
    %3047 = vmatpush1.msra.mxu0 0.0
    %3048 = vmatprep.subr.mxu0 0.0
    %3049 = vmatpush1.msra.mxu0 0.0
    %3050 = vmatprep.subr.mxu0 0.0
    %3051 = vmatpush1.msra.mxu0 0.0
    %3052 = vmatprep.subr.mxu0 0.0
    %3053 = vmatpush1.msra.mxu0 0.0
    %3054 = vmatprep.subr.mxu0 0.0
    %3055 = vmatpush1.msra.mxu0 0.0
    %3056 = vmatprep.subr.mxu0 0.0
    %3057 = vmatpush1.msra.mxu0 0.0
    %3058 = vmatprep.subr.mxu0 0.0
    %3059 = vmatpush1.msra.mxu0 0.0
    %3060 = vmatprep.subr.mxu0 0.0
    %3061 = vmatpush1.msra.mxu0 0.0
    %3062 = vmatprep.subr.mxu0 0.0
    %3063 = vmatpush1.msra.mxu0 0.0
    %3064 = vmatprep.subr.mxu0 0.0
    %3065 = vmatpush1.msra.mxu0 0.0
    %3066 = vmatprep.subr.mxu0 0.0
    %3067 = vmatpush1.msra.mxu0 0.0
    %3068 = vmatprep.subr.mxu0 0.0
    %3069 = vmatpush1.msra.mxu0 0.0
    %3070 = vmatprep.subr.mxu0 0.0
    %3071 = vmatpush1.msra.mxu0 0.0
    %3072 = vmatprep.subr.mxu0 0.0
    %3073 = vmatpush1.msra.mxu0 0.0
    %3074 = vmatprep.subr.mxu0 0.0
    %3075 = vmatpush1.msra.mxu0 0.0
    %3076 = vmatprep.subr.mxu0 0.0
    %3077 = vmatpush1.msra.mxu0 0.0
    %3078 = vmatprep.subr.mxu0 0.0
    %3079 = vmatpush1.msra.mxu0 0.0
    %3080 = vmatprep.subr.mxu0 0.0
    %3081 = vmatpush1.msra.mxu0 0.0
    %3082 = vmatprep.subr.mxu0 0.0
    %3083 = vmatpush1.msra.mxu0 0.0
    %3084 = vmatprep.subr.mxu0 0.0
    %3085 = vmatpush1.msra.mxu0 0.0
    %3086 = vmatprep.subr.mxu0 0.0
    %3087 = vmatpush1.msra.mxu0 0.0
    %3088 = vmatprep.subr.mxu0 0.0
    %3089 = vmatpush1.msra.mxu0 0.0
    %3090 = vmatprep.mubr.f32.mxu0 0.0
    %3091 = vmatmul.mubr.f32.gmra.mrb[0].mxu0 %v3024
    %v3092 = vpop.f32.mrb[0].mxu0
    %v3093 = vadd.f32 0.0, %v3092
    %v3094 = vpop.f32.mrb[0].mxu0
    %3095 = vdwg.mxu0
    %3096 = vst.msk [vmem:[#allocation3] sm:$0xff] %vm2933, %v3093
    %3097 = vrot.lane.b32.xlu0 %v2922, 120
    %v3098 = vpop.permute.xlu0 %3097
    %3099 = vrot.lane.b32.xlu0 %v2922, 88
    %v3100 = vpop.permute.xlu0 %3099
    %v3101 = vsel %vm2933, %v3098, 0
    %v3103 = vsel %vm2933, %v3100, 0
    %3105 = vmatprep.subr.mxu0 0.0
    %3106 = vmatpush1.xpose.msra.mxu0 %v3103
    %3107 = vmatprep.subr.mxu0 0.0
    %3108 = vmatpush1.xpose.msra.mxu0 0.0
    %3109 = vmatprep.subr.mxu0 0.0
    %3110 = vmatpush1.xpose.msra.mxu0 0.0
    %3111 = vmatprep.subr.mxu0 0.0
    %3112 = vmatpush1.xpose.msra.mxu0 0.0
    %3113 = vmatprep.subr.mxu0 0.0
    %3114 = vmatpush1.xpose.msra.mxu0 0.0
    %3115 = vmatprep.subr.mxu0 0.0
    %3116 = vmatpush1.xpose.msra.mxu0 0.0
    %3117 = vmatprep.subr.mxu0 0.0
    %3118 = vmatpush1.xpose.msra.mxu0 0.0
    %3119 = vmatprep.subr.mxu0 0.0
    %3120 = vmatpush1.xpose.msra.mxu0 0.0
    %3121 = vmatprep.subr.mxu0 0.0
    %3122 = vmatpush1.xpose.msra.mxu0 0.0
    %3123 = vmatprep.subr.mxu0 0.0
    %3124 = vmatpush1.xpose.msra.mxu0 0.0
    %3125 = vmatprep.subr.mxu0 0.0
    %3126 = vmatpush1.xpose.msra.mxu0 0.0
    %3127 = vmatprep.subr.mxu0 0.0
    %3128 = vmatpush1.xpose.msra.mxu0 0.0
    %3129 = vmatprep.subr.mxu0 0.0
    %3130 = vmatpush1.xpose.msra.mxu0 0.0
    %3131 = vmatprep.subr.mxu0 0.0
    %3132 = vmatpush1.xpose.msra.mxu0 0.0
    %3133 = vmatprep.subr.mxu0 0.0
    %3134 = vmatpush1.xpose.msra.mxu0 0.0
    %3135 = vmatprep.subr.mxu0 0.0
    %3136 = vmatpush1.xpose.msra.mxu0 0.0
    %3137 = vmatprep.subr.mxu0 0.0
    %3138 = vmatpush1.xpose.msra.mxu0 0.0
    %3139 = vmatprep.subr.mxu0 0.0
    %3140 = vmatpush1.xpose.msra.mxu0 0.0
    %3141 = vmatprep.subr.mxu0 0.0
    %3142 = vmatpush1.xpose.msra.mxu0 0.0
    %3143 = vmatprep.subr.mxu0 0.0
    %3144 = vmatpush1.xpose.msra.mxu0 0.0
    %3145 = vmatprep.subr.mxu0 0.0
    %3146 = vmatpush1.xpose.msra.mxu0 0.0
    %3147 = vmatprep.subr.mxu0 0.0
    %3148 = vmatpush1.xpose.msra.mxu0 0.0
    %3149 = vmatprep.subr.mxu0 0.0
    %3150 = vmatpush1.xpose.msra.mxu0 0.0
    %3151 = vmatprep.subr.mxu0 0.0
    %3152 = vmatpush1.xpose.msra.mxu0 0.0
    %3153 = vmatprep.subr.mxu0 0.0
    %3154 = vmatpush1.xpose.msra.mxu0 0.0
    %3155 = vmatprep.subr.mxu0 0.0
    %3156 = vmatpush1.xpose.msra.mxu0 0.0
    %3157 = vmatprep.subr.mxu0 0.0
    %3158 = vmatpush1.xpose.msra.mxu0 0.0
    %3159 = vmatprep.subr.mxu0 0.0
    %3160 = vmatpush1.xpose.msra.mxu0 0.0
    %3161 = vmatprep.subr.mxu0 0.0
    %3162 = vmatpush1.xpose.msra.mxu0 0.0
    %3163 = vmatprep.subr.mxu0 0.0
    %3164 = vmatpush1.xpose.msra.mxu0 0.0
    %3165 = vmatprep.subr.mxu0 0.0
    %3166 = vmatpush1.xpose.msra.mxu0 0.0
    %3167 = vmatprep.subr.mxu0 0.0
    %3168 = vmatpush1.xpose.msra.mxu0 0.0
    %3169 = vmatprep.mubr.f32.mxu0 0.0
    %3170 = vmatmul.mubr.f32.gmra.mrb[0].mxu0 %v3101
    %v3171 = vpop.f32.mrb[0].mxu0
    %v3172 = vadd.f32 0.0, %v3171
    %v3173 = vpop.f32.mrb[0].mxu0
    %3174 = vdwg.mxu0
    %v3175 = vmul.f32 %v3172, 0.35355338
    %v3176 = vsel %vm2933, %v3175, -inf
    %3177 = vmax.xlane.f32.xlu0 %v3176
    %v3178 = vpop.xlane.xlu0 %3177
    %v3179 = vsub.f32 %v3175, %v3178
    %v3180 = vmul.f32 %v3179, 1.442695
    %v3181 = vpow.pop %v3180
    %v3182 = vsel %vm2933, %v3181, 0.0
    %3183 = vadd.xlane.f32.xlu0 %v3182
    %v3184 = vpop.xlane.xlu0 %3183
    %v3185 = vrcp.pop %v3184
    %v3186 = vmul.f32 %v3181, %v3185
    %3187 = vrot.lane.b32.xlu0 %v2922, 56
    %v3188 = vpop.permute.xlu0 %3187
    %v3191 = vsel %vm2933, %v3186, 0
    %3193 = vmatprep.subr.mxu0 0.0
    %3194 = vmatpush1.msra.mxu0 %v3188
    %3195 = vmatprep.subr.mxu0 0.0
    %3196 = vmatpush1.msra.mxu0 0.0
    %3197 = vmatprep.subr.mxu0 0.0
    %3198 = vmatpush1.msra.mxu0 0.0
    %3199 = vmatprep.subr.mxu0 0.0
    %3200 = vmatpush1.msra.mxu0 0.0
    %3201 = vmatprep.subr.mxu0 0.0
    %3202 = vmatpush1.msra.mxu0 0.0
    %3203 = vmatprep.subr.mxu0 0.0
    %3204 = vmatpush1.msra.mxu0 0.0
    %3205 = vmatprep.subr.mxu0 0.0
    %3206 = vmatpush1.msra.mxu0 0.0
    %3207 = vmatprep.subr.mxu0 0.0
    %3208 = vmatpush1.msra.mxu0 0.0
    %3209 = vmatprep.subr.mxu0 0.0
    %3210 = vmatpush1.msra.mxu0 0.0
    %3211 = vmatprep.subr.mxu0 0.0
    %3212 = vmatpush1.msra.mxu0 0.0
    %3213 = vmatprep.subr.mxu0 0.0
    %3214 = vmatpush1.msra.mxu0 0.0
    %3215 = vmatprep.subr.mxu0 0.0
    %3216 = vmatpush1.msra.mxu0 0.0
    %3217 = vmatprep.subr.mxu0 0.0
    %3218 = vmatpush1.msra.mxu0 0.0
    %3219 = vmatprep.subr.mxu0 0.0
    %3220 = vmatpush1.msra.mxu0 0.0
    %3221 = vmatprep.subr.mxu0 0.0
    %3222 = vmatpush1.msra.mxu0 0.0
    %3223 = vmatprep.subr.mxu0 0.0
    %3224 = vmatpush1.msra.mxu0 0.0
    %3225 = vmatprep.subr.mxu0 0.0
    %3226 = vmatpush1.msra.mxu0 0.0
    %3227 = vmatprep.subr.mxu0 0.0
    %3228 = vmatpush1.msra.mxu0 0.0
    %3229 = vmatprep.subr.mxu0 0.0
    %3230 = vmatpush1.msra.mxu0 0.0
    %3231 = vmatprep.subr.mxu0 0.0
    %3232 = vmatpush1.msra.mxu0 0.0
    %3233 = vmatprep.subr.mxu0 0.0
    %3234 = vmatpush1.msra.mxu0 0.0
    %3235 = vmatprep.subr.mxu0 0.0
    %3236 = vmatpush1.msra.mxu0 0.0
    %3237 = vmatprep.subr.mxu0 0.0
    %3238 = vmatpush1.msra.mxu0 0.0
    %3239 = vmatprep.subr.mxu0 0.0
    %3240 = vmatpush1.msra.mxu0 0.0
    %3241 = vmatprep.subr.mxu0 0.0
    %3242 = vmatpush1.msra.mxu0 0.0
    %3243 = vmatprep.subr.mxu0 0.0
    %3244 = vmatpush1.msra.mxu0 0.0
    %3245 = vmatprep.subr.mxu0 0.0
    %3246 = vmatpush1.msra.mxu0 0.0
    %3247 = vmatprep.subr.mxu0 0.0
    %3248 = vmatpush1.msra.mxu0 0.0
    %3249 = vmatprep.subr.mxu0 0.0
    %3250 = vmatpush1.msra.mxu0 0.0
    %3251 = vmatprep.subr.mxu0 0.0
    %3252 = vmatpush1.msra.mxu0 0.0
    %3253 = vmatprep.subr.mxu0 0.0
    %3254 = vmatpush1.msra.mxu0 0.0
    %3255 = vmatprep.subr.mxu0 0.0
    %3256 = vmatpush1.msra.mxu0 0.0
    %3257 = vmatprep.mubr.f32.mxu0 0.0
    %3258 = vmatmul.mubr.f32.gmra.mrb[0].mxu0 %v3191
    %v3259 = vpop.f32.mrb[0].mxu0
    %v3260 = vadd.f32 0.0, %v3259
    %v3261 = vpop.f32.mrb[0].mxu0
    %3262 = vdwg.mxu0
    %3264 = vrot.lane.b32.xlu0 %v3260, 8
    %v3265 = vpop.permute.xlu0 %3264
    %vm3267 = vcmask 130112
    %3268 = vst.msk [vmem:[#allocation3] sm:$0xff] %vm3267, %v3265
    %3269 = vrot.lane.b32.xlu0 %v2922, 112
    %v3270 = vpop.permute.xlu0 %3269
    %3271 = vrot.lane.b32.xlu0 %v2922, 80
    %v3272 = vpop.permute.xlu0 %3271
    %v3273 = vsel %vm2933, %v3270, 0
    %v3275 = vsel %vm2933, %v3272, 0
    %3277 = vmatprep.subr.mxu0 0.0
    %3278 = vmatpush1.xpose.msra.mxu0 %v3275
    %3279 = vmatprep.subr.mxu0 0.0
    %3280 = vmatpush1.xpose.msra.mxu0 0.0
    %3281 = vmatprep.subr.mxu0 0.0
    %3282 = vmatpush1.xpose.msra.mxu0 0.0
    %3283 = vmatprep.subr.mxu0 0.0
    %3284 = vmatpush1.xpose.msra.mxu0 0.0
    %3285 = vmatprep.subr.mxu0 0.0
    %3286 = vmatpush1.xpose.msra.mxu0 0.0
    %3287 = vmatprep.subr.mxu0 0.0
    %3288 = vmatpush1.xpose.msra.mxu0 0.0
    %3289 = vmatprep.subr.mxu0 0.0
    %3290 = vmatpush1.xpose.msra.mxu0 0.0
    %3291 = vmatprep.subr.mxu0 0.0
    %3292 = vmatpush1.xpose.msra.mxu0 0.0
    %3293 = vmatprep.subr.mxu0 0.0
    %3294 = vmatpush1.xpose.msra.mxu0 0.0
    %3295 = vmatprep.subr.mxu0 0.0
    %3296 = vmatpush1.xpose.msra.mxu0 0.0
    %3297 = vmatprep.subr.mxu0 0.0
    %3298 = vmatpush1.xpose.msra.mxu0 0.0
    %3299 = vmatprep.subr.mxu0 0.0
    %3300 = vmatpush1.xpose.msra.mxu0 0.0
    %3301 = vmatprep.subr.mxu0 0.0
    %3302 = vmatpush1.xpose.msra.mxu0 0.0
    %3303 = vmatprep.subr.mxu0 0.0
    %3304 = vmatpush1.xpose.msra.mxu0 0.0
    %3305 = vmatprep.subr.mxu0 0.0
    %3306 = vmatpush1.xpose.msra.mxu0 0.0
    %3307 = vmatprep.subr.mxu0 0.0
    %3308 = vmatpush1.xpose.msra.mxu0 0.0
    %3309 = vmatprep.subr.mxu0 0.0
    %3310 = vmatpush1.xpose.msra.mxu0 0.0
    %3311 = vmatprep.subr.mxu0 0.0
    %3312 = vmatpush1.xpose.msra.mxu0 0.0
    %3313 = vmatprep.subr.mxu0 0.0
    %3314 = vmatpush1.xpose.msra.mxu0 0.0
    %3315 = vmatprep.subr.mxu0 0.0
    %3316 = vmatpush1.xpose.msra.mxu0 0.0
    %3317 = vmatprep.subr.mxu0 0.0
    %3318 = vmatpush1.xpose.msra.mxu0 0.0
    %3319 = vmatprep.subr.mxu0 0.0
    %3320 = vmatpush1.xpose.msra.mxu0 0.0
    %3321 = vmatprep.subr.mxu0 0.0
    %3322 = vmatpush1.xpose.msra.mxu0 0.0
    %3323 = vmatprep.subr.mxu0 0.0
    %3324 = vmatpush1.xpose.msra.mxu0 0.0
    %3325 = vmatprep.subr.mxu0 0.0
    %3326 = vmatpush1.xpose.msra.mxu0 0.0
    %3327 = vmatprep.subr.mxu0 0.0
    %3328 = vmatpush1.xpose.msra.mxu0 0.0
    %3329 = vmatprep.subr.mxu0 0.0
    %3330 = vmatpush1.xpose.msra.mxu0 0.0
    %3331 = vmatprep.subr.mxu0 0.0
    %3332 = vmatpush1.xpose.msra.mxu0 0.0
    %3333 = vmatprep.subr.mxu0 0.0
    %3334 = vmatpush1.xpose.msra.mxu0 0.0
    %3335 = vmatprep.subr.mxu0 0.0
    %3336 = vmatpush1.xpose.msra.mxu0 0.0
    %3337 = vmatprep.subr.mxu0 0.0
    %3338 = vmatpush1.xpose.msra.mxu0 0.0
    %3339 = vmatprep.subr.mxu0 0.0
    %3340 = vmatpush1.xpose.msra.mxu0 0.0
    %3341 = vmatprep.mubr.f32.mxu0 0.0
    %3342 = vmatmul.mubr.f32.gmra.mrb[0].mxu0 %v3273
    %v3343 = vpop.f32.mrb[0].mxu0
    %v3344 = vadd.f32 0.0, %v3343
    %v3345 = vpop.f32.mrb[0].mxu0
    %3346 = vdwg.mxu0
    %v3347 = vmul.f32 %v3344, 0.35355338
    %v3348 = vsel %vm2933, %v3347, -inf
    %3349 = vmax.xlane.f32.xlu0 %v3348
    %v3350 = vpop.xlane.xlu0 %3349
    %v3351 = vsub.f32 %v3347, %v3350
    %v3352 = vmul.f32 %v3351, 1.442695
    %v3353 = vpow.pop %v3352
    %v3354 = vsel %vm2933, %v3353, 0.0
    %3355 = vadd.xlane.f32.xlu0 %v3354
    %v3356 = vpop.xlane.xlu0 %3355
    %v3357 = vrcp.pop %v3356
    %v3358 = vmul.f32 %v3353, %v3357
    %3359 = vrot.lane.b32.xlu0 %v2922, 48
    %v3360 = vpop.permute.xlu0 %3359
    %v3363 = vsel %vm2933, %v3358, 0
    %3365 = vmatprep.subr.mxu0 0.0
    %3366 = vmatpush1.msra.mxu0 %v3360
    %3367 = vmatprep.subr.mxu0 0.0
    %3368 = vmatpush1.msra.mxu0 0.0
    %3369 = vmatprep.subr.mxu0 0.0
    %3370 = vmatpush1.msra.mxu0 0.0
    %3371 = vmatprep.subr.mxu0 0.0
    %3372 = vmatpush1.msra.mxu0 0.0
    %3373 = vmatprep.subr.mxu0 0.0
    %3374 = vmatpush1.msra.mxu0 0.0
    %3375 = vmatprep.subr.mxu0 0.0
    %3376 = vmatpush1.msra.mxu0 0.0
    %3377 = vmatprep.subr.mxu0 0.0
    %3378 = vmatpush1.msra.mxu0 0.0
    %3379 = vmatprep.subr.mxu0 0.0
    %3380 = vmatpush1.msra.mxu0 0.0
    %3381 = vmatprep.subr.mxu0 0.0
    %3382 = vmatpush1.msra.mxu0 0.0
    %3383 = vmatprep.subr.mxu0 0.0
    %3384 = vmatpush1.msra.mxu0 0.0
    %3385 = vmatprep.subr.mxu0 0.0
    %3386 = vmatpush1.msra.mxu0 0.0
    %3387 = vmatprep.subr.mxu0 0.0
    %3388 = vmatpush1.msra.mxu0 0.0
    %3389 = vmatprep.subr.mxu0 0.0
    %3390 = vmatpush1.msra.mxu0 0.0
    %3391 = vmatprep.subr.mxu0 0.0
    %3392 = vmatpush1.msra.mxu0 0.0
    %3393 = vmatprep.subr.mxu0 0.0
    %3394 = vmatpush1.msra.mxu0 0.0
    %3395 = vmatprep.subr.mxu0 0.0
    %3396 = vmatpush1.msra.mxu0 0.0
    %3397 = vmatprep.subr.mxu0 0.0
    %3398 = vmatpush1.msra.mxu0 0.0
    %3399 = vmatprep.subr.mxu0 0.0
    %3400 = vmatpush1.msra.mxu0 0.0
    %3401 = vmatprep.subr.mxu0 0.0
    %3402 = vmatpush1.msra.mxu0 0.0
    %3403 = vmatprep.subr.mxu0 0.0
    %3404 = vmatpush1.msra.mxu0 0.0
    %3405 = vmatprep.subr.mxu0 0.0
    %3406 = vmatpush1.msra.mxu0 0.0
    %3407 = vmatprep.subr.mxu0 0.0
    %3408 = vmatpush1.msra.mxu0 0.0
    %3409 = vmatprep.subr.mxu0 0.0
    %3410 = vmatpush1.msra.mxu0 0.0
    %3411 = vmatprep.subr.mxu0 0.0
    %3412 = vmatpush1.msra.mxu0 0.0
    %3413 = vmatprep.subr.mxu0 0.0
    %3414 = vmatpush1.msra.mxu0 0.0
    %3415 = vmatprep.subr.mxu0 0.0
    %3416 = vmatpush1.msra.mxu0 0.0
    %3417 = vmatprep.subr.mxu0 0.0
    %3418 = vmatpush1.msra.mxu0 0.0
    %3419 = vmatprep.subr.mxu0 0.0
    %3420 = vmatpush1.msra.mxu0 0.0
    %3421 = vmatprep.subr.mxu0 0.0
    %3422 = vmatpush1.msra.mxu0 0.0
    %3423 = vmatprep.subr.mxu0 0.0
    %3424 = vmatpush1.msra.mxu0 0.0
    %3425 = vmatprep.subr.mxu0 0.0
    %3426 = vmatpush1.msra.mxu0 0.0
    %3427 = vmatprep.subr.mxu0 0.0
    %3428 = vmatpush1.msra.mxu0 0.0
    %3429 = vmatprep.mubr.f32.mxu0 0.0
    %3430 = vmatmul.mubr.f32.gmra.mrb[0].mxu0 %v3363
    %v3431 = vpop.f32.mrb[0].mxu0
    %v3432 = vadd.f32 0.0, %v3431
    %v3433 = vpop.f32.mrb[0].mxu0
    %3434 = vdwg.mxu0
    %3436 = vrot.lane.b32.xlu0 %v3432, 16
    %v3437 = vpop.permute.xlu0 %3436
    %vm3439 = vcmask 195712
    %3440 = vst.msk [vmem:[#allocation3] sm:$0xff] %vm3439, %v3437
    %3441 = vrot.lane.b32.xlu0 %v2922, 104
    %v3442 = vpop.permute.xlu0 %3441
    %3443 = vrot.lane.b32.xlu0 %v2922, 72
    %v3444 = vpop.permute.xlu0 %3443
    %v3445 = vsel %vm2933, %v3442, 0
    %v3447 = vsel %vm2933, %v3444, 0
    %3449 = vmatprep.subr.mxu0 0.0
    %3450 = vmatpush1.xpose.msra.mxu0 %v3447
    %3451 = vmatprep.subr.mxu0 0.0
    %3452 = vmatpush1.xpose.msra.mxu0 0.0
    %3453 = vmatprep.subr.mxu0 0.0
    %3454 = vmatpush1.xpose.msra.mxu0 0.0
    %3455 = vmatprep.subr.mxu0 0.0
    %3456 = vmatpush1.xpose.msra.mxu0 0.0
    %3457 = vmatprep.subr.mxu0 0.0
    %3458 = vmatpush1.xpose.msra.mxu0 0.0
    %3459 = vmatprep.subr.mxu0 0.0
    %3460 = vmatpush1.xpose.msra.mxu0 0.0
    %3461 = vmatprep.subr.mxu0 0.0
    %3462 = vmatpush1.xpose.msra.mxu0 0.0
    %3463 = vmatprep.subr.mxu0 0.0
    %3464 = vmatpush1.xpose.msra.mxu0 0.0
    %3465 = vmatprep.subr.mxu0 0.0
    %3466 = vmatpush1.xpose.msra.mxu0 0.0
    %3467 = vmatprep.subr.mxu0 0.0
    %3468 = vmatpush1.xpose.msra.mxu0 0.0
    %3469 = vmatprep.subr.mxu0 0.0
    %3470 = vmatpush1.xpose.msra.mxu0 0.0
    %3471 = vmatprep.subr.mxu0 0.0
    %3472 = vmatpush1.xpose.msra.mxu0 0.0
    %3473 = vmatprep.subr.mxu0 0.0
    %3474 = vmatpush1.xpose.msra.mxu0 0.0
    %3475 = vmatprep.subr.mxu0 0.0
    %3476 = vmatpush1.xpose.msra.mxu0 0.0
    %3477 = vmatprep.subr.mxu0 0.0
    %3478 = vmatpush1.xpose.msra.mxu0 0.0
    %3479 = vmatprep.subr.mxu0 0.0
    %3480 = vmatpush1.xpose.msra.mxu0 0.0
    %3481 = vmatprep.subr.mxu0 0.0
    %3482 = vmatpush1.xpose.msra.mxu0 0.0
    %3483 = vmatprep.subr.mxu0 0.0
    %3484 = vmatpush1.xpose.msra.mxu0 0.0
    %3485 = vmatprep.subr.mxu0 0.0
    %3486 = vmatpush1.xpose.msra.mxu0 0.0
    %3487 = vmatprep.subr.mxu0 0.0
    %3488 = vmatpush1.xpose.msra.mxu0 0.0
    %3489 = vmatprep.subr.mxu0 0.0
    %3490 = vmatpush1.xpose.msra.mxu0 0.0
    %3491 = vmatprep.subr.mxu0 0.0
    %3492 = vmatpush1.xpose.msra.mxu0 0.0
    %3493 = vmatprep.subr.mxu0 0.0
    %3494 = vmatpush1.xpose.msra.mxu0 0.0
    %3495 = vmatprep.subr.mxu0 0.0
    %3496 = vmatpush1.xpose.msra.mxu0 0.0
    %3497 = vmatprep.subr.mxu0 0.0
    %3498 = vmatpush1.xpose.msra.mxu0 0.0
    %3499 = vmatprep.subr.mxu0 0.0
    %3500 = vmatpush1.xpose.msra.mxu0 0.0
    %3501 = vmatprep.subr.mxu0 0.0
    %3502 = vmatpush1.xpose.msra.mxu0 0.0
    %3503 = vmatprep.subr.mxu0 0.0
    %3504 = vmatpush1.xpose.msra.mxu0 0.0
    %3505 = vmatprep.subr.mxu0 0.0
    %3506 = vmatpush1.xpose.msra.mxu0 0.0
    %3507 = vmatprep.subr.mxu0 0.0
    %3508 = vmatpush1.xpose.msra.mxu0 0.0
    %3509 = vmatprep.subr.mxu0 0.0
    %3510 = vmatpush1.xpose.msra.mxu0 0.0
    %3511 = vmatprep.subr.mxu0 0.0
    %3512 = vmatpush1.xpose.msra.mxu0 0.0
    %3513 = vmatprep.mubr.f32.mxu0 0.0
    %3514 = vmatmul.mubr.f32.gmra.mrb[0].mxu0 %v3445
    %v3515 = vpop.f32.mrb[0].mxu0
    %v3516 = vadd.f32 0.0, %v3515
    %v3517 = vpop.f32.mrb[0].mxu0
    %3518 = vdwg.mxu0
    %v3519 = vmul.f32 %v3516, 0.35355338
    %v3520 = vsel %vm2933, %v3519, -inf
    %3521 = vmax.xlane.f32.xlu0 %v3520
    %v3522 = vpop.xlane.xlu0 %3521
    %v3523 = vsub.f32 %v3519, %v3522
    %v3524 = vmul.f32 %v3523, 1.442695
    %v3525 = vpow.pop %v3524
    %v3526 = vsel %vm2933, %v3525, 0.0
    %3527 = vadd.xlane.f32.xlu0 %v3526
    %v3528 = vpop.xlane.xlu0 %3527
    %v3529 = vrcp.pop %v3528
    %v3530 = vmul.f32 %v3525, %v3529
    %3531 = vrot.lane.b32.xlu0 %v2922, 40
    %v3532 = vpop.permute.xlu0 %3531
    %v3535 = vsel %vm2933, %v3530, 0
    %3537 = vmatprep.subr.mxu0 0.0
    %3538 = vmatpush1.msra.mxu0 %v3532
    %3539 = vmatprep.subr.mxu0 0.0
    %3540 = vmatpush1.msra.mxu0 0.0
    %3541 = vmatprep.subr.mxu0 0.0
    %3542 = vmatpush1.msra.mxu0 0.0
    %3543 = vmatprep.subr.mxu0 0.0
    %3544 = vmatpush1.msra.mxu0 0.0
    %3545 = vmatprep.subr.mxu0 0.0
    %3546 = vmatpush1.msra.mxu0 0.0
    %3547 = vmatprep.subr.mxu0 0.0
    %3548 = vmatpush1.msra.mxu0 0.0
    %3549 = vmatprep.subr.mxu0 0.0
    %3550 = vmatpush1.msra.mxu0 0.0
    %3551 = vmatprep.subr.mxu0 0.0
    %3552 = vmatpush1.msra.mxu0 0.0
    %3553 = vmatprep.subr.mxu0 0.0
    %3554 = vmatpush1.msra.mxu0 0.0
    %3555 = vmatprep.subr.mxu0 0.0
    %3556 = vmatpush1.msra.mxu0 0.0
    %3557 = vmatprep.subr.mxu0 0.0
    %3558 = vmatpush1.msra.mxu0 0.0
    %3559 = vmatprep.subr.mxu0 0.0
    %3560 = vmatpush1.msra.mxu0 0.0
    %3561 = vmatprep.subr.mxu0 0.0
    %3562 = vmatpush1.msra.mxu0 0.0
    %3563 = vmatprep.subr.mxu0 0.0
    %3564 = vmatpush1.msra.mxu0 0.0
    %3565 = vmatprep.subr.mxu0 0.0
    %3566 = vmatpush1.msra.mxu0 0.0
    %3567 = vmatprep.subr.mxu0 0.0
    %3568 = vmatpush1.msra.mxu0 0.0
    %3569 = vmatprep.subr.mxu0 0.0
    %3570 = vmatpush1.msra.mxu0 0.0
    %3571 = vmatprep.subr.mxu0 0.0
    %3572 = vmatpush1.msra.mxu0 0.0
    %3573 = vmatprep.subr.mxu0 0.0
    %3574 = vmatpush1.msra.mxu0 0.0
    %3575 = vmatprep.subr.mxu0 0.0
    %3576 = vmatpush1.msra.mxu0 0.0
    %3577 = vmatprep.subr.mxu0 0.0
    %3578 = vmatpush1.msra.mxu0 0.0
    %3579 = vmatprep.subr.mxu0 0.0
    %3580 = vmatpush1.msra.mxu0 0.0
    %3581 = vmatprep.subr.mxu0 0.0
    %3582 = vmatpush1.msra.mxu0 0.0
    %3583 = vmatprep.subr.mxu0 0.0
    %3584 = vmatpush1.msra.mxu0 0.0
    %3585 = vmatprep.subr.mxu0 0.0
    %3586 = vmatpush1.msra.mxu0 0.0
    %3587 = vmatprep.subr.mxu0 0.0
    %3588 = vmatpush1.msra.mxu0 0.0
    %3589 = vmatprep.subr.mxu0 0.0
    %3590 = vmatpush1.msra.mxu0 0.0
    %3591 = vmatprep.subr.mxu0 0.0
    %3592 = vmatpush1.msra.mxu0 0.0
    %3593 = vmatprep.subr.mxu0 0.0
    %3594 = vmatpush1.msra.mxu0 0.0
    %3595 = vmatprep.subr.mxu0 0.0
    %3596 = vmatpush1.msra.mxu0 0.0
    %3597 = vmatprep.subr.mxu0 0.0
    %3598 = vmatpush1.msra.mxu0 0.0
    %3599 = vmatprep.subr.mxu0 0.0
    %3600 = vmatpush1.msra.mxu0 0.0
    %3601 = vmatprep.mubr.f32.mxu0 0.0
    %3602 = vmatmul.mubr.f32.gmra.mrb[0].mxu0 %v3535
    %v3603 = vpop.f32.mrb[0].mxu0
    %v3604 = vadd.f32 0.0, %v3603
    %v3605 = vpop.f32.mrb[0].mxu0
    %3606 = vdwg.mxu0
    %3608 = vrot.lane.b32.xlu0 %v3604, 24
    %v3609 = vpop.permute.xlu0 %3608
    %vm3611 = vcmask 261312
    %3612 = vst.msk [vmem:[#allocation3] sm:$0xff] %vm3611, %v3609
    %3614 = vrot.lane.b32.xlu0 %v2927, 96
    %v3615 = vpop.permute.xlu0 %3614
    %v3616 = vsel %vm2933, %v2927, 0
    %v3618 = vsel %vm2933, %v3615, 0
    %3620 = vmatprep.subr.mxu0 0.0
    %3621 = vmatpush1.xpose.msra.mxu0 %v3618
    %3622 = vmatprep.subr.mxu0 0.0
    %3623 = vmatpush1.xpose.msra.mxu0 0.0
    %3624 = vmatprep.subr.mxu0 0.0
    %3625 = vmatpush1.xpose.msra.mxu0 0.0
    %3626 = vmatprep.subr.mxu0 0.0
    %3627 = vmatpush1.xpose.msra.mxu0 0.0
    %3628 = vmatprep.subr.mxu0 0.0
    %3629 = vmatpush1.xpose.msra.mxu0 0.0
    %3630 = vmatprep.subr.mxu0 0.0
    %3631 = vmatpush1.xpose.msra.mxu0 0.0
    %3632 = vmatprep.subr.mxu0 0.0
    %3633 = vmatpush1.xpose.msra.mxu0 0.0
    %3634 = vmatprep.subr.mxu0 0.0
    %3635 = vmatpush1.xpose.msra.mxu0 0.0
    %3636 = vmatprep.subr.mxu0 0.0
    %3637 = vmatpush1.xpose.msra.mxu0 0.0
    %3638 = vmatprep.subr.mxu0 0.0
    %3639 = vmatpush1.xpose.msra.mxu0 0.0
    %3640 = vmatprep.subr.mxu0 0.0
    %3641 = vmatpush1.xpose.msra.mxu0 0.0
    %3642 = vmatprep.subr.mxu0 0.0
    %3643 = vmatpush1.xpose.msra.mxu0 0.0
    %3644 = vmatprep.subr.mxu0 0.0
    %3645 = vmatpush1.xpose.msra.mxu0 0.0
    %3646 = vmatprep.subr.mxu0 0.0
    %3647 = vmatpush1.xpose.msra.mxu0 0.0
    %3648 = vmatprep.subr.mxu0 0.0
    %3649 = vmatpush1.xpose.msra.mxu0 0.0
    %3650 = vmatprep.subr.mxu0 0.0
    %3651 = vmatpush1.xpose.msra.mxu0 0.0
    %3652 = vmatprep.subr.mxu0 0.0
    %3653 = vmatpush1.xpose.msra.mxu0 0.0
    %3654 = vmatprep.subr.mxu0 0.0
    %3655 = vmatpush1.xpose.msra.mxu0 0.0
    %3656 = vmatprep.subr.mxu0 0.0
    %3657 = vmatpush1.xpose.msra.mxu0 0.0
    %3658 = vmatprep.subr.mxu0 0.0
    %3659 = vmatpush1.xpose.msra.mxu0 0.0
    %3660 = vmatprep.subr.mxu0 0.0
    %3661 = vmatpush1.xpose.msra.mxu0 0.0
    %3662 = vmatprep.subr.mxu0 0.0
    %3663 = vmatpush1.xpose.msra.mxu0 0.0
    %3664 = vmatprep.subr.mxu0 0.0
    %3665 = vmatpush1.xpose.msra.mxu0 0.0
    %3666 = vmatprep.subr.mxu0 0.0
    %3667 = vmatpush1.xpose.msra.mxu0 0.0
    %3668 = vmatprep.subr.mxu0 0.0
    %3669 = vmatpush1.xpose.msra.mxu0 0.0
    %3670 = vmatprep.subr.mxu0 0.0
    %3671 = vmatpush1.xpose.msra.mxu0 0.0
    %3672 = vmatprep.subr.mxu0 0.0
    %3673 = vmatpush1.xpose.msra.mxu0 0.0
    %3674 = vmatprep.subr.mxu0 0.0
    %3675 = vmatpush1.xpose.msra.mxu0 0.0
    %3676 = vmatprep.subr.mxu0 0.0
    %3677 = vmatpush1.xpose.msra.mxu0 0.0
    %3678 = vmatprep.subr.mxu0 0.0
    %3679 = vmatpush1.xpose.msra.mxu0 0.0
    %3680 = vmatprep.subr.mxu0 0.0
    %3681 = vmatpush1.xpose.msra.mxu0 0.0
    %3682 = vmatprep.subr.mxu0 0.0
    %3683 = vmatpush1.xpose.msra.mxu0 0.0
    %3684 = vmatprep.mubr.f32.mxu0 0.0
    %3685 = vmatmul.mubr.f32.gmra.mrb[0].mxu0 %v3616
    %v3686 = vpop.f32.mrb[0].mxu0
    %v3687 = vadd.f32 0.0, %v3686
    %v3688 = vpop.f32.mrb[0].mxu0
    %3689 = vdwg.mxu0
    %v3690 = vmul.f32 %v3687, 0.35355338
    %v3691 = vsel %vm2933, %v3690, -inf
    %3692 = vmax.xlane.f32.xlu0 %v3691
    %v3693 = vpop.xlane.xlu0 %3692
    %v3694 = vsub.f32 %v3690, %v3693
    %v3695 = vmul.f32 %v3694, 1.442695
    %v3696 = vpow.pop %v3695
    %v3697 = vsel %vm2933, %v3696, 0.0
    %3698 = vadd.xlane.f32.xlu0 %v3697
    %v3699 = vpop.xlane.xlu0 %3698
    %v3700 = vrcp.pop %v3699
    %v3701 = vmul.f32 %v3696, %v3700
    %3702 = vrot.lane.b32.xlu0 %v2927, 64
    %v3703 = vpop.permute.xlu0 %3702
    %v3706 = vsel %vm2933, %v3701, 0
    %3708 = vmatprep.subr.mxu0 0.0
    %3709 = vmatpush1.msra.mxu0 %v3703
    %3710 = vmatprep.subr.mxu0 0.0
    %3711 = vmatpush1.msra.mxu0 0.0
    %3712 = vmatprep.subr.mxu0 0.0
    %3713 = vmatpush1.msra.mxu0 0.0
    %3714 = vmatprep.subr.mxu0 0.0
    %3715 = vmatpush1.msra.mxu0 0.0
    %3716 = vmatprep.subr.mxu0 0.0
    %3717 = vmatpush1.msra.mxu0 0.0
    %3718 = vmatprep.subr.mxu0 0.0
    %3719 = vmatpush1.msra.mxu0 0.0
    %3720 = vmatprep.subr.mxu0 0.0
    %3721 = vmatpush1.msra.mxu0 0.0
    %3722 = vmatprep.subr.mxu0 0.0
    %3723 = vmatpush1.msra.mxu0 0.0
    %3724 = vmatprep.subr.mxu0 0.0
    %3725 = vmatpush1.msra.mxu0 0.0
    %3726 = vmatprep.subr.mxu0 0.0
    %3727 = vmatpush1.msra.mxu0 0.0
    %3728 = vmatprep.subr.mxu0 0.0
    %3729 = vmatpush1.msra.mxu0 0.0
    %3730 = vmatprep.subr.mxu0 0.0
    %3731 = vmatpush1.msra.mxu0 0.0
    %3732 = vmatprep.subr.mxu0 0.0
    %3733 = vmatpush1.msra.mxu0 0.0
    %3734 = vmatprep.subr.mxu0 0.0
    %3735 = vmatpush1.msra.mxu0 0.0
    %3736 = vmatprep.subr.mxu0 0.0
    %3737 = vmatpush1.msra.mxu0 0.0
    %3738 = vmatprep.subr.mxu0 0.0
    %3739 = vmatpush1.msra.mxu0 0.0
    %3740 = vmatprep.subr.mxu0 0.0
    %3741 = vmatpush1.msra.mxu0 0.0
    %3742 = vmatprep.subr.mxu0 0.0
    %3743 = vmatpush1.msra.mxu0 0.0
    %3744 = vmatprep.subr.mxu0 0.0
    %3745 = vmatpush1.msra.mxu0 0.0
    %3746 = vmatprep.subr.mxu0 0.0
    %3747 = vmatpush1.msra.mxu0 0.0
    %3748 = vmatprep.subr.mxu0 0.0
    %3749 = vmatpush1.msra.mxu0 0.0
    %3750 = vmatprep.subr.mxu0 0.0
    %3751 = vmatpush1.msra.mxu0 0.0
    %3752 = vmatprep.subr.mxu0 0.0
    %3753 = vmatpush1.msra.mxu0 0.0
    %3754 = vmatprep.subr.mxu0 0.0
    %3755 = vmatpush1.msra.mxu0 0.0
    %3756 = vmatprep.subr.mxu0 0.0
    %3757 = vmatpush1.msra.mxu0 0.0
    %3758 = vmatprep.subr.mxu0 0.0
    %3759 = vmatpush1.msra.mxu0 0.0
    %3760 = vmatprep.subr.mxu0 0.0
    %3761 = vmatpush1.msra.mxu0 0.0
    %3762 = vmatprep.subr.mxu0 0.0
    %3763 = vmatpush1.msra.mxu0 0.0
    %3764 = vmatprep.subr.mxu0 0.0
    %3765 = vmatpush1.msra.mxu0 0.0
    %3766 = vmatprep.subr.mxu0 0.0
    %3767 = vmatpush1.msra.mxu0 0.0
    %3768 = vmatprep.subr.mxu0 0.0
    %3769 = vmatpush1.msra.mxu0 0.0
    %3770 = vmatprep.subr.mxu0 0.0
    %3771 = vmatpush1.msra.mxu0 0.0
    %3772 = vmatprep.mubr.f32.mxu0 0.0
    %3773 = vmatmul.mubr.f32.gmra.mrb[0].mxu0 %v3706
    %v3774 = vpop.f32.mrb[0].mxu0
    %v3775 = vadd.f32 0.0, %v3774
    %v3776 = vpop.f32.mrb[0].mxu0
    %3777 = vdwg.mxu0
    %3778 = vst.msk [vmem:[#allocation3 + $0x8] sm:$0xff] %vm2933, %v3775
    %3779 = vrot.lane.b32.xlu0 %v2927, 120
    %v3780 = vpop.permute.xlu0 %3779
    %3781 = vrot.lane.b32.xlu0 %v2927, 88
    %v3782 = vpop.permute.xlu0 %3781
    %v3783 = vsel %vm2933, %v3780, 0
    %v3785 = vsel %vm2933, %v3782, 0
    %3787 = vmatprep.subr.mxu0 0.0
    %3788 = vmatpush1.xpose.msra.mxu0 %v3785
    %3789 = vmatprep.subr.mxu0 0.0
    %3790 = vmatpush1.xpose.msra.mxu0 0.0
    %3791 = vmatprep.subr.mxu0 0.0
    %3792 = vmatpush1.xpose.msra.mxu0 0.0
    %3793 = vmatprep.subr.mxu0 0.0
    %3794 = vmatpush1.xpose.msra.mxu0 0.0
    %3795 = vmatprep.subr.mxu0 0.0
    %3796 = vmatpush1.xpose.msra.mxu0 0.0
    %3797 = vmatprep.subr.mxu0 0.0
    %3798 = vmatpush1.xpose.msra.mxu0 0.0
    %3799 = vmatprep.subr.mxu0 0.0
    %3800 = vmatpush1.xpose.msra.mxu0 0.0
    %3801 = vmatprep.subr.mxu0 0.0
    %3802 = vmatpush1.xpose.msra.mxu0 0.0
    %3803 = vmatprep.subr.mxu0 0.0
    %3804 = vmatpush1.xpose.msra.mxu0 0.0
    %3805 = vmatprep.subr.mxu0 0.0
    %3806 = vmatpush1.xpose.msra.mxu0 0.0
    %3807 = vmatprep.subr.mxu0 0.0
    %3808 = vmatpush1.xpose.msra.mxu0 0.0
    %3809 = vmatprep.subr.mxu0 0.0
    %3810 = vmatpush1.xpose.msra.mxu0 0.0
    %3811 = vmatprep.subr.mxu0 0.0
    %3812 = vmatpush1.xpose.msra.mxu0 0.0
    %3813 = vmatprep.subr.mxu0 0.0
    %3814 = vmatpush1.xpose.msra.mxu0 0.0
    %3815 = vmatprep.subr.mxu0 0.0
    %3816 = vmatpush1.xpose.msra.mxu0 0.0
    %3817 = vmatprep.subr.mxu0 0.0
    %3818 = vmatpush1.xpose.msra.mxu0 0.0
    %3819 = vmatprep.subr.mxu0 0.0
    %3820 = vmatpush1.xpose.msra.mxu0 0.0
    %3821 = vmatprep.subr.mxu0 0.0
    %3822 = vmatpush1.xpose.msra.mxu0 0.0
    %3823 = vmatprep.subr.mxu0 0.0
    %3824 = vmatpush1.xpose.msra.mxu0 0.0
    %3825 = vmatprep.subr.mxu0 0.0
    %3826 = vmatpush1.xpose.msra.mxu0 0.0
    %3827 = vmatprep.subr.mxu0 0.0
    %3828 = vmatpush1.xpose.msra.mxu0 0.0
    %3829 = vmatprep.subr.mxu0 0.0
    %3830 = vmatpush1.xpose.msra.mxu0 0.0
    %3831 = vmatprep.subr.mxu0 0.0
    %3832 = vmatpush1.xpose.msra.mxu0 0.0
    %3833 = vmatprep.subr.mxu0 0.0
    %3834 = vmatpush1.xpose.msra.mxu0 0.0
    %3835 = vmatprep.subr.mxu0 0.0
    %3836 = vmatpush1.xpose.msra.mxu0 0.0
    %3837 = vmatprep.subr.mxu0 0.0
    %3838 = vmatpush1.xpose.msra.mxu0 0.0
    %3839 = vmatprep.subr.mxu0 0.0
    %3840 = vmatpush1.xpose.msra.mxu0 0.0
    %3841 = vmatprep.subr.mxu0 0.0
    %3842 = vmatpush1.xpose.msra.mxu0 0.0
    %3843 = vmatprep.subr.mxu0 0.0
    %3844 = vmatpush1.xpose.msra.mxu0 0.0
    %3845 = vmatprep.subr.mxu0 0.0
    %3846 = vmatpush1.xpose.msra.mxu0 0.0
    %3847 = vmatprep.subr.mxu0 0.0
    %3848 = vmatpush1.xpose.msra.mxu0 0.0
    %3849 = vmatprep.subr.mxu0 0.0
    %3850 = vmatpush1.xpose.msra.mxu0 0.0
    %3851 = vmatprep.mubr.f32.mxu0 0.0
    %3852 = vmatmul.mubr.f32.gmra.mrb[0].mxu0 %v3783
    %v3853 = vpop.f32.mrb[0].mxu0
    %v3854 = vadd.f32 0.0, %v3853
    %v3855 = vpop.f32.mrb[0].mxu0
    %3856 = vdwg.mxu0
    %v3857 = vmul.f32 %v3854, 0.35355338
    %v3858 = vsel %vm2933, %v3857, -inf
    %3859 = vmax.xlane.f32.xlu0 %v3858
    %v3860 = vpop.xlane.xlu0 %3859
    %v3861 = vsub.f32 %v3857, %v3860
    %v3862 = vmul.f32 %v3861, 1.442695
    %v3863 = vpow.pop %v3862
    %v3864 = vsel %vm2933, %v3863, 0.0
    %3865 = vadd.xlane.f32.xlu0 %v3864
    %v3866 = vpop.xlane.xlu0 %3865
    %v3867 = vrcp.pop %v3866
    %v3868 = vmul.f32 %v3863, %v3867
    %3869 = vrot.lane.b32.xlu0 %v2927, 56
    %v3870 = vpop.permute.xlu0 %3869
    %v3873 = vsel %vm2933, %v3868, 0
    %3875 = vmatprep.subr.mxu0 0.0
    %3876 = vmatpush1.msra.mxu0 %v3870
    %3877 = vmatprep.subr.mxu0 0.0
    %3878 = vmatpush1.msra.mxu0 0.0
    %3879 = vmatprep.subr.mxu0 0.0
    %3880 = vmatpush1.msra.mxu0 0.0
    %3881 = vmatprep.subr.mxu0 0.0
    %3882 = vmatpush1.msra.mxu0 0.0
    %3883 = vmatprep.subr.mxu0 0.0
    %3884 = vmatpush1.msra.mxu0 0.0
    %3885 = vmatprep.subr.mxu0 0.0
    %3886 = vmatpush1.msra.mxu0 0.0
    %3887 = vmatprep.subr.mxu0 0.0
    %3888 = vmatpush1.msra.mxu0 0.0
    %3889 = vmatprep.subr.mxu0 0.0
    %3890 = vmatpush1.msra.mxu0 0.0
    %3891 = vmatprep.subr.mxu0 0.0
    %3892 = vmatpush1.msra.mxu0 0.0
    %3893 = vmatprep.subr.mxu0 0.0
    %3894 = vmatpush1.msra.mxu0 0.0
    %3895 = vmatprep.subr.mxu0 0.0
    %3896 = vmatpush1.msra.mxu0 0.0
    %3897 = vmatprep.subr.mxu0 0.0
    %3898 = vmatpush1.msra.mxu0 0.0
    %3899 = vmatprep.subr.mxu0 0.0
    %3900 = vmatpush1.msra.mxu0 0.0
    %3901 = vmatprep.subr.mxu0 0.0
    %3902 = vmatpush1.msra.mxu0 0.0
    %3903 = vmatprep.subr.mxu0 0.0
    %3904 = vmatpush1.msra.mxu0 0.0
    %3905 = vmatprep.subr.mxu0 0.0
    %3906 = vmatpush1.msra.mxu0 0.0
    %3907 = vmatprep.subr.mxu0 0.0
    %3908 = vmatpush1.msra.mxu0 0.0
    %3909 = vmatprep.subr.mxu0 0.0
    %3910 = vmatpush1.msra.mxu0 0.0
    %3911 = vmatprep.subr.mxu0 0.0
    %3912 = vmatpush1.msra.mxu0 0.0
    %3913 = vmatprep.subr.mxu0 0.0
    %3914 = vmatpush1.msra.mxu0 0.0
    %3915 = vmatprep.subr.mxu0 0.0
    %3916 = vmatpush1.msra.mxu0 0.0
    %3917 = vmatprep.subr.mxu0 0.0
    %3918 = vmatpush1.msra.mxu0 0.0
    %3919 = vmatprep.subr.mxu0 0.0
    %3920 = vmatpush1.msra.mxu0 0.0
    %3921 = vmatprep.subr.mxu0 0.0
    %3922 = vmatpush1.msra.mxu0 0.0
    %3923 = vmatprep.subr.mxu0 0.0
    %3924 = vmatpush1.msra.mxu0 0.0
    %3925 = vmatprep.subr.mxu0 0.0
    %3926 = vmatpush1.msra.mxu0 0.0
    %3927 = vmatprep.subr.mxu0 0.0
    %3928 = vmatpush1.msra.mxu0 0.0
    %3929 = vmatprep.subr.mxu0 0.0
    %3930 = vmatpush1.msra.mxu0 0.0
    %3931 = vmatprep.subr.mxu0 0.0
    %3932 = vmatpush1.msra.mxu0 0.0
    %3933 = vmatprep.subr.mxu0 0.0
    %3934 = vmatpush1.msra.mxu0 0.0
    %3935 = vmatprep.subr.mxu0 0.0
    %3936 = vmatpush1.msra.mxu0 0.0
    %3937 = vmatprep.subr.mxu0 0.0
    %3938 = vmatpush1.msra.mxu0 0.0
    %3939 = vmatprep.mubr.f32.mxu0 0.0
    %3940 = vmatmul.mubr.f32.gmra.mrb[0].mxu0 %v3873
    %v3941 = vpop.f32.mrb[0].mxu0
    %v3942 = vadd.f32 0.0, %v3941
    %v3943 = vpop.f32.mrb[0].mxu0
    %3944 = vdwg.mxu0
    %3946 = vrot.lane.b32.xlu0 %v3942, 8
    %v3947 = vpop.permute.xlu0 %3946
    %3949 = vst.msk [vmem:[#allocation3 + $0x8] sm:$0xff] %vm3267, %v3947
    %3950 = vrot.lane.b32.xlu0 %v2927, 112
    %v3951 = vpop.permute.xlu0 %3950
    %3952 = vrot.lane.b32.xlu0 %v2927, 80
    %v3953 = vpop.permute.xlu0 %3952
    %v3954 = vsel %vm2933, %v3951, 0
    %v3956 = vsel %vm2933, %v3953, 0
    %3958 = vmatprep.subr.mxu0 0.0
    %3959 = vmatpush1.xpose.msra.mxu0 %v3956
    %3960 = vmatprep.subr.mxu0 0.0
    %3961 = vmatpush1.xpose.msra.mxu0 0.0
    %3962 = vmatprep.subr.mxu0 0.0
    %3963 = vmatpush1.xpose.msra.mxu0 0.0
    %3964 = vmatprep.subr.mxu0 0.0
    %3965 = vmatpush1.xpose.msra.mxu0 0.0
    %3966 = vmatprep.subr.mxu0 0.0
    %3967 = vmatpush1.xpose.msra.mxu0 0.0
    %3968 = vmatprep.subr.mxu0 0.0
    %3969 = vmatpush1.xpose.msra.mxu0 0.0
    %3970 = vmatprep.subr.mxu0 0.0
    %3971 = vmatpush1.xpose.msra.mxu0 0.0
    %3972 = vmatprep.subr.mxu0 0.0
    %3973 = vmatpush1.xpose.msra.mxu0 0.0
    %3974 = vmatprep.subr.mxu0 0.0
    %3975 = vmatpush1.xpose.msra.mxu0 0.0
    %3976 = vmatprep.subr.mxu0 0.0
    %3977 = vmatpush1.xpose.msra.mxu0 0.0
    %3978 = vmatprep.subr.mxu0 0.0
    %3979 = vmatpush1.xpose.msra.mxu0 0.0
    %3980 = vmatprep.subr.mxu0 0.0
    %3981 = vmatpush1.xpose.msra.mxu0 0.0
    %3982 = vmatprep.subr.mxu0 0.0
    %3983 = vmatpush1.xpose.msra.mxu0 0.0
    %3984 = vmatprep.subr.mxu0 0.0
    %3985 = vmatpush1.xpose.msra.mxu0 0.0
    %3986 = vmatprep.subr.mxu0 0.0
    %3987 = vmatpush1.xpose.msra.mxu0 0.0
    %3988 = vmatprep.subr.mxu0 0.0
    %3989 = vmatpush1.xpose.msra.mxu0 0.0
    %3990 = vmatprep.subr.mxu0 0.0
    %3991 = vmatpush1.xpose.msra.mxu0 0.0
    %3992 = vmatprep.subr.mxu0 0.0
    %3993 = vmatpush1.xpose.msra.mxu0 0.0
    %3994 = vmatprep.subr.mxu0 0.0
    %3995 = vmatpush1.xpose.msra.mxu0 0.0
    %3996 = vmatprep.subr.mxu0 0.0
    %3997 = vmatpush1.xpose.msra.mxu0 0.0
    %3998 = vmatprep.subr.mxu0 0.0
    %3999 = vmatpush1.xpose.msra.mxu0 0.0
    %4000 = vmatprep.subr.mxu0 0.0
    %4001 = vmatpush1.xpose.msra.mxu0 0.0
    %4002 = vmatprep.subr.mxu0 0.0
    %4003 = vmatpush1.xpose.msra.mxu0 0.0
    %4004 = vmatprep.subr.mxu0 0.0
    %4005 = vmatpush1.xpose.msra.mxu0 0.0
    %4006 = vmatprep.subr.mxu0 0.0
    %4007 = vmatpush1.xpose.msra.mxu0 0.0
    %4008 = vmatprep.subr.mxu0 0.0
    %4009 = vmatpush1.xpose.msra.mxu0 0.0
    %4010 = vmatprep.subr.mxu0 0.0
    %4011 = vmatpush1.xpose.msra.mxu0 0.0
    %4012 = vmatprep.subr.mxu0 0.0
    %4013 = vmatpush1.xpose.msra.mxu0 0.0
    %4014 = vmatprep.subr.mxu0 0.0
    %4015 = vmatpush1.xpose.msra.mxu0 0.0
    %4016 = vmatprep.subr.mxu0 0.0
    %4017 = vmatpush1.xpose.msra.mxu0 0.0
    %4018 = vmatprep.subr.mxu0 0.0
    %4019 = vmatpush1.xpose.msra.mxu0 0.0
    %4020 = vmatprep.subr.mxu0 0.0
    %4021 = vmatpush1.xpose.msra.mxu0 0.0
    %4022 = vmatprep.mubr.f32.mxu0 0.0
    %4023 = vmatmul.mubr.f32.gmra.mrb[0].mxu0 %v3954
    %v4024 = vpop.f32.mrb[0].mxu0
    %v4025 = vadd.f32 0.0, %v4024
    %v4026 = vpop.f32.mrb[0].mxu0
    %4027 = vdwg.mxu0
    %v4028 = vmul.f32 %v4025, 0.35355338
    %v4029 = vsel %vm2933, %v4028, -inf
    %4030 = vmax.xlane.f32.xlu0 %v4029
    %v4031 = vpop.xlane.xlu0 %4030
    %v4032 = vsub.f32 %v4028, %v4031
    %v4033 = vmul.f32 %v4032, 1.442695
    %v4034 = vpow.pop %v4033
    %v4035 = vsel %vm2933, %v4034, 0.0
    %4036 = vadd.xlane.f32.xlu0 %v4035
    %v4037 = vpop.xlane.xlu0 %4036
    %v4038 = vrcp.pop %v4037
    %v4039 = vmul.f32 %v4034, %v4038
    %4040 = vrot.lane.b32.xlu0 %v2927, 48
    %v4041 = vpop.permute.xlu0 %4040
    %v4044 = vsel %vm2933, %v4039, 0
    %4046 = vmatprep.subr.mxu0 0.0
    %4047 = vmatpush1.msra.mxu0 %v4041
    %4048 = vmatprep.subr.mxu0 0.0
    %4049 = vmatpush1.msra.mxu0 0.0
    %4050 = vmatprep.subr.mxu0 0.0
    %4051 = vmatpush1.msra.mxu0 0.0
    %4052 = vmatprep.subr.mxu0 0.0
    %4053 = vmatpush1.msra.mxu0 0.0
    %4054 = vmatprep.subr.mxu0 0.0
    %4055 = vmatpush1.msra.mxu0 0.0
    %4056 = vmatprep.subr.mxu0 0.0
    %4057 = vmatpush1.msra.mxu0 0.0
    %4058 = vmatprep.subr.mxu0 0.0
    %4059 = vmatpush1.msra.mxu0 0.0
    %4060 = vmatprep.subr.mxu0 0.0
    %4061 = vmatpush1.msra.mxu0 0.0
    %4062 = vmatprep.subr.mxu0 0.0
    %4063 = vmatpush1.msra.mxu0 0.0
    %4064 = vmatprep.subr.mxu0 0.0
    %4065 = vmatpush1.msra.mxu0 0.0
    %4066 = vmatprep.subr.mxu0 0.0
    %4067 = vmatpush1.msra.mxu0 0.0
    %4068 = vmatprep.subr.mxu0 0.0
    %4069 = vmatpush1.msra.mxu0 0.0
    %4070 = vmatprep.subr.mxu0 0.0
    %4071 = vmatpush1.msra.mxu0 0.0
    %4072 = vmatprep.subr.mxu0 0.0
    %4073 = vmatpush1.msra.mxu0 0.0
    %4074 = vmatprep.subr.mxu0 0.0
    %4075 = vmatpush1.msra.mxu0 0.0
    %4076 = vmatprep.subr.mxu0 0.0
    %4077 = vmatpush1.msra.mxu0 0.0
    %4078 = vmatprep.subr.mxu0 0.0
    %4079 = vmatpush1.msra.mxu0 0.0
    %4080 = vmatprep.subr.mxu0 0.0
    %4081 = vmatpush1.msra.mxu0 0.0
    %4082 = vmatprep.subr.mxu0 0.0
    %4083 = vmatpush1.msra.mxu0 0.0
    %4084 = vmatprep.subr.mxu0 0.0
    %4085 = vmatpush1.msra.mxu0 0.0
    %4086 = vmatprep.subr.mxu0 0.0
    %4087 = vmatpush1.msra.mxu0 0.0
    %4088 = vmatprep.subr.mxu0 0.0
    %4089 = vmatpush1.msra.mxu0 0.0
    %4090 = vmatprep.subr.mxu0 0.0
    %4091 = vmatpush1.msra.mxu0 0.0
    %4092 = vmatprep.subr.mxu0 0.0
    %4093 = vmatpush1.msra.mxu0 0.0
    %4094 = vmatprep.subr.mxu0 0.0
    %4095 = vmatpush1.msra.mxu0 0.0
    %4096 = vmatprep.subr.mxu0 0.0
    %4097 = vmatpush1.msra.mxu0 0.0
    %4098 = vmatprep.subr.mxu0 0.0
    %4099 = vmatpush1.msra.mxu0 0.0
    %4100 = vmatprep.subr.mxu0 0.0
    %4101 = vmatpush1.msra.mxu0 0.0
    %4102 = vmatprep.subr.mxu0 0.0
    %4103 = vmatpush1.msra.mxu0 0.0
    %4104 = vmatprep.subr.mxu0 0.0
    %4105 = vmatpush1.msra.mxu0 0.0
    %4106 = vmatprep.subr.mxu0 0.0
    %4107 = vmatpush1.msra.mxu0 0.0
    %4108 = vmatprep.subr.mxu0 0.0
    %4109 = vmatpush1.msra.mxu0 0.0
    %4110 = vmatprep.mubr.f32.mxu0 0.0
    %4111 = vmatmul.mubr.f32.gmra.mrb[0].mxu0 %v4044
    %v4112 = vpop.f32.mrb[0].mxu0
    %v4113 = vadd.f32 0.0, %v4112
    %v4114 = vpop.f32.mrb[0].mxu0
    %4115 = vdwg.mxu0
    %4117 = vrot.lane.b32.xlu0 %v4113, 16
    %v4118 = vpop.permute.xlu0 %4117
    %4120 = vst.msk [vmem:[#allocation3 + $0x8] sm:$0xff] %vm3439, %v4118
    %4121 = vrot.lane.b32.xlu0 %v2927, 104
    %v4122 = vpop.permute.xlu0 %4121
    %4123 = vrot.lane.b32.xlu0 %v2927, 72
    %v4124 = vpop.permute.xlu0 %4123
    %v4125 = vsel %vm2933, %v4122, 0
    %v4127 = vsel %vm2933, %v4124, 0
    %4129 = vmatprep.subr.mxu0 0.0
    %4130 = vmatpush1.xpose.msra.mxu0 %v4127
    %4131 = vmatprep.subr.mxu0 0.0
    %4132 = vmatpush1.xpose.msra.mxu0 0.0
    %4133 = vmatprep.subr.mxu0 0.0
    %4134 = vmatpush1.xpose.msra.mxu0 0.0
    %4135 = vmatprep.subr.mxu0 0.0
    %4136 = vmatpush1.xpose.msra.mxu0 0.0
    %4137 = vmatprep.subr.mxu0 0.0
    %4138 = vmatpush1.xpose.msra.mxu0 0.0
    %4139 = vmatprep.subr.mxu0 0.0
    %4140 = vmatpush1.xpose.msra.mxu0 0.0
    %4141 = vmatprep.subr.mxu0 0.0
    %4142 = vmatpush1.xpose.msra.mxu0 0.0
    %4143 = vmatprep.subr.mxu0 0.0
    %4144 = vmatpush1.xpose.msra.mxu0 0.0
    %4145 = vmatprep.subr.mxu0 0.0
    %4146 = vmatpush1.xpose.msra.mxu0 0.0
    %4147 = vmatprep.subr.mxu0 0.0
    %4148 = vmatpush1.xpose.msra.mxu0 0.0
    %4149 = vmatprep.subr.mxu0 0.0
    %4150 = vmatpush1.xpose.msra.mxu0 0.0
    %4151 = vmatprep.subr.mxu0 0.0
    %4152 = vmatpush1.xpose.msra.mxu0 0.0
    %4153 = vmatprep.subr.mxu0 0.0
    %4154 = vmatpush1.xpose.msra.mxu0 0.0
    %4155 = vmatprep.subr.mxu0 0.0
    %4156 = vmatpush1.xpose.msra.mxu0 0.0
    %4157 = vmatprep.subr.mxu0 0.0
    %4158 = vmatpush1.xpose.msra.mxu0 0.0
    %4159 = vmatprep.subr.mxu0 0.0
    %4160 = vmatpush1.xpose.msra.mxu0 0.0
    %4161 = vmatprep.subr.mxu0 0.0
    %4162 = vmatpush1.xpose.msra.mxu0 0.0
    %4163 = vmatprep.subr.mxu0 0.0
    %4164 = vmatpush1.xpose.msra.mxu0 0.0
    %4165 = vmatprep.subr.mxu0 0.0
    %4166 = vmatpush1.xpose.msra.mxu0 0.0
    %4167 = vmatprep.subr.mxu0 0.0
    %4168 = vmatpush1.xpose.msra.mxu0 0.0
    %4169 = vmatprep.subr.mxu0 0.0
    %4170 = vmatpush1.xpose.msra.mxu0 0.0
    %4171 = vmatprep.subr.mxu0 0.0
    %4172 = vmatpush1.xpose.msra.mxu0 0.0
    %4173 = vmatprep.subr.mxu0 0.0
    %4174 = vmatpush1.xpose.msra.mxu0 0.0
    %4175 = vmatprep.subr.mxu0 0.0
    %4176 = vmatpush1.xpose.msra.mxu0 0.0
    %4177 = vmatprep.subr.mxu0 0.0
    %4178 = vmatpush1.xpose.msra.mxu0 0.0
    %4179 = vmatprep.subr.mxu0 0.0
    %4180 = vmatpush1.xpose.msra.mxu0 0.0
    %4181 = vmatprep.subr.mxu0 0.0
    %4182 = vmatpush1.xpose.msra.mxu0 0.0
    %4183 = vmatprep.subr.mxu0 0.0
    %4184 = vmatpush1.xpose.msra.mxu0 0.0
    %4185 = vmatprep.subr.mxu0 0.0
    %4186 = vmatpush1.xpose.msra.mxu0 0.0
    %4187 = vmatprep.subr.mxu0 0.0
    %4188 = vmatpush1.xpose.msra.mxu0 0.0
    %4189 = vmatprep.subr.mxu0 0.0
    %4190 = vmatpush1.xpose.msra.mxu0 0.0
    %4191 = vmatprep.subr.mxu0 0.0
    %4192 = vmatpush1.xpose.msra.mxu0 0.0
    %4193 = vmatprep.mubr.f32.mxu0 0.0
    %4194 = vmatmul.mubr.f32.gmra.mrb[0].mxu0 %v4125
    %v4195 = vpop.f32.mrb[0].mxu0
    %v4196 = vadd.f32 0.0, %v4195
    %v4197 = vpop.f32.mrb[0].mxu0
    %4198 = vdwg.mxu0
    %v4199 = vmul.f32 %v4196, 0.35355338
    %v4200 = vsel %vm2933, %v4199, -inf
    %4201 = vmax.xlane.f32.xlu0 %v4200
    %v4202 = vpop.xlane.xlu0 %4201
    %v4203 = vsub.f32 %v4199, %v4202
    %v4204 = vmul.f32 %v4203, 1.442695
    %v4205 = vpow.pop %v4204
    %v4206 = vsel %vm2933, %v4205, 0.0
    %4207 = vadd.xlane.f32.xlu0 %v4206
    %v4208 = vpop.xlane.xlu0 %4207
    %v4209 = vrcp.pop %v4208
    %v4210 = vmul.f32 %v4205, %v4209
    %4211 = vrot.lane.b32.xlu0 %v2927, 40
    %v4212 = vpop.permute.xlu0 %4211
    %v4215 = vsel %vm2933, %v4210, 0
    %4217 = vmatprep.subr.mxu0 0.0
    %4218 = vmatpush1.msra.mxu0 %v4212
    %4219 = vmatprep.subr.mxu0 0.0
    %4220 = vmatpush1.msra.mxu0 0.0
    %4221 = vmatprep.subr.mxu0 0.0
    %4222 = vmatpush1.msra.mxu0 0.0
    %4223 = vmatprep.subr.mxu0 0.0
    %4224 = vmatpush1.msra.mxu0 0.0
    %4225 = vmatprep.subr.mxu0 0.0
    %4226 = vmatpush1.msra.mxu0 0.0
    %4227 = vmatprep.subr.mxu0 0.0
    %4228 = vmatpush1.msra.mxu0 0.0
    %4229 = vmatprep.subr.mxu0 0.0
    %4230 = vmatpush1.msra.mxu0 0.0
    %4231 = vmatprep.subr.mxu0 0.0
    %4232 = vmatpush1.msra.mxu0 0.0
    %4233 = vmatprep.subr.mxu0 0.0
    %4234 = vmatpush1.msra.mxu0 0.0
    %4235 = vmatprep.subr.mxu0 0.0
    %4236 = vmatpush1.msra.mxu0 0.0
    %4237 = vmatprep.subr.mxu0 0.0
    %4238 = vmatpush1.msra.mxu0 0.0
    %4239 = vmatprep.subr.mxu0 0.0
    %4240 = vmatpush1.msra.mxu0 0.0
    %4241 = vmatprep.subr.mxu0 0.0
    %4242 = vmatpush1.msra.mxu0 0.0
    %4243 = vmatprep.subr.mxu0 0.0
    %4244 = vmatpush1.msra.mxu0 0.0
    %4245 = vmatprep.subr.mxu0 0.0
    %4246 = vmatpush1.msra.mxu0 0.0
    %4247 = vmatprep.subr.mxu0 0.0
    %4248 = vmatpush1.msra.mxu0 0.0
    %4249 = vmatprep.subr.mxu0 0.0
    %4250 = vmatpush1.msra.mxu0 0.0
    %4251 = vmatprep.subr.mxu0 0.0
    %4252 = vmatpush1.msra.mxu0 0.0
    %4253 = vmatprep.subr.mxu0 0.0
    %4254 = vmatpush1.msra.mxu0 0.0
    %4255 = vmatprep.subr.mxu0 0.0
    %4256 = vmatpush1.msra.mxu0 0.0
    %4257 = vmatprep.subr.mxu0 0.0
    %4258 = vmatpush1.msra.mxu0 0.0
    %4259 = vmatprep.subr.mxu0 0.0
    %4260 = vmatpush1.msra.mxu0 0.0
    %4261 = vmatprep.subr.mxu0 0.0
    %4262 = vmatpush1.msra.mxu0 0.0
    %4263 = vmatprep.subr.mxu0 0.0
    %4264 = vmatpush1.msra.mxu0 0.0
    %4265 = vmatprep.subr.mxu0 0.0
    %4266 = vmatpush1.msra.mxu0 0.0
    %4267 = vmatprep.subr.mxu0 0.0
    %4268 = vmatpush1.msra.mxu0 0.0
    %4269 = vmatprep.subr.mxu0 0.0
    %4270 = vmatpush1.msra.mxu0 0.0
    %4271 = vmatprep.subr.mxu0 0.0
    %4272 = vmatpush1.msra.mxu0 0.0
    %4273 = vmatprep.subr.mxu0 0.0
    %4274 = vmatpush1.msra.mxu0 0.0
    %4275 = vmatprep.subr.mxu0 0.0
    %4276 = vmatpush1.msra.mxu0 0.0
    %4277 = vmatprep.subr.mxu0 0.0
    %4278 = vmatpush1.msra.mxu0 0.0
    %4279 = vmatprep.subr.mxu0 0.0
    %4280 = vmatpush1.msra.mxu0 0.0
    %4281 = vmatprep.mubr.f32.mxu0 0.0
    %4282 = vmatmul.mubr.f32.gmra.mrb[0].mxu0 %v4215
    %v4283 = vpop.f32.mrb[0].mxu0
    %v4284 = vadd.f32 0.0, %v4283
    %v4285 = vpop.f32.mrb[0].mxu0
    %4286 = vdwg.mxu0
    %4288 = vrot.lane.b32.xlu0 %v4284, 24
    %v4289 = vpop.permute.xlu0 %4288
    %4291 = vst.msk [vmem:[#allocation3 + $0x8] sm:$0xff] %vm3611, %v4289
    %v4292 = vld [vmem:[#allocation3] sm:$0xff]
    %v4293 = vld [vmem:[#allocation3 + $0x8] sm:$0xff]
    %v4294 = vld [vmem:[%s47] sm:$0xff]
    %v4295 = vld [vmem:[%s47 + $0x8] sm:$0xff]
    %v4296 = vld [vmem:[%s47 + $0x10] sm:$0xff]
    %v4297 = vld [vmem:[%s47 + $0x18] sm:$0xff]
    %v4298 = vld [vmem:[#allocation18] sm:$0x1]
    %v4300 = vlaneseq
    %v4301 = vshrl.u32 %v4300, 7
    %v4302 = vsub.s32 0, %v4301
    %v4303 = vrot.slane %v4298, %v4302
    %v4306 = vsel %vm571, %v4292, 0
    %v4309 = vsel %vm571, %v4293, 0
    %4311 = vmatprep.subr.mxu0 0.0
    %4312 = vmatpush1.msra.mxu0 %v4294
    %4313 = vmatprep.subr.mxu0 0.0
    %4314 = vmatpush1.msra.mxu0 %v4295
    %4315 = vmatprep.subr.mxu0 0.0
    %4316 = vmatpush1.msra.mxu0 %v4296
    %4317 = vmatprep.subr.mxu0 0.0
    %4318 = vmatpush1.msra.mxu0 %v4297
    %4319 = vmatprep.subr.mxu0 0.0
    %4320 = vmatpush1.msra.mxu0 0.0
    %4321 = vmatprep.subr.mxu0 0.0
    %4322 = vmatpush1.msra.mxu0 0.0
    %4323 = vmatprep.subr.mxu0 0.0
    %4324 = vmatpush1.msra.mxu0 0.0
    %4325 = vmatprep.subr.mxu0 0.0
    %4326 = vmatpush1.msra.mxu0 0.0
    %4327 = vmatprep.subr.mxu0 0.0
    %4328 = vmatpush1.msra.mxu0 0.0
    %4329 = vmatprep.subr.mxu0 0.0
    %4330 = vmatpush1.msra.mxu0 0.0
    %4331 = vmatprep.subr.mxu0 0.0
    %4332 = vmatpush1.msra.mxu0 0.0
    %4333 = vmatprep.subr.mxu0 0.0
    %4334 = vmatpush1.msra.mxu0 0.0
    %4335 = vmatprep.subr.mxu0 0.0
    %4336 = vmatpush1.msra.mxu0 0.0
    %4337 = vmatprep.subr.mxu0 0.0
    %4338 = vmatpush1.msra.mxu0 0.0
    %4339 = vmatprep.subr.mxu0 0.0
    %4340 = vmatpush1.msra.mxu0 0.0
    %4341 = vmatprep.subr.mxu0 0.0
    %4342 = vmatpush1.msra.mxu0 0.0
    %4343 = vmatprep.subr.mxu0 0.0
    %4344 = vmatpush1.msra.mxu0 0.0
    %4345 = vmatprep.subr.mxu0 0.0
    %4346 = vmatpush1.msra.mxu0 0.0
    %4347 = vmatprep.subr.mxu0 0.0
    %4348 = vmatpush1.msra.mxu0 0.0
    %4349 = vmatprep.subr.mxu0 0.0
    %4350 = vmatpush1.msra.mxu0 0.0
    %4351 = vmatprep.subr.mxu0 0.0
    %4352 = vmatpush1.msra.mxu0 0.0
    %4353 = vmatprep.subr.mxu0 0.0
    %4354 = vmatpush1.msra.mxu0 0.0
    %4355 = vmatprep.subr.mxu0 0.0
    %4356 = vmatpush1.msra.mxu0 0.0
    %4357 = vmatprep.subr.mxu0 0.0
    %4358 = vmatpush1.msra.mxu0 0.0
    %4359 = vmatprep.subr.mxu0 0.0
    %4360 = vmatpush1.msra.mxu0 0.0
    %4361 = vmatprep.subr.mxu0 0.0
    %4362 = vmatpush1.msra.mxu0 0.0
    %4363 = vmatprep.subr.mxu0 0.0
    %4364 = vmatpush1.msra.mxu0 0.0
    %4365 = vmatprep.subr.mxu0 0.0
    %4366 = vmatpush1.msra.mxu0 0.0
    %4367 = vmatprep.subr.mxu0 0.0
    %4368 = vmatpush1.msra.mxu0 0.0
    %4369 = vmatprep.subr.mxu0 0.0
    %4370 = vmatpush1.msra.mxu0 0.0
    %4371 = vmatprep.subr.mxu0 0.0
    %4372 = vmatpush1.msra.mxu0 0.0
    %4373 = vmatprep.subr.mxu0 0.0
    %4374 = vmatpush1.msra.mxu0 0.0
    %4375 = vmatprep.mubr.f32.mxu0 0.0
    %4376 = vmatmul.mubr.f32.gmra.mrb[0].mxu0 %v4306
    %v4377 = vpop.f32.mrb[0].mxu0
    %v4378 = vadd.f32 %v4303, %v4377
    %v4379 = vpop.f32.mrb[0].mxu0
    %4380 = vmatprep.mubr.f32.mxu0 0.0
    %4381 = vmatmul.mubr.f32.gmra.mrb[0].mxu0 %v4309
    %v4382 = vpop.f32.mrb[0].mxu0
    %v4383 = vadd.f32 %v4303, %v4382
    %v4384 = vpop.f32.mrb[0].mxu0
    %4385 = vdwg.mxu0
    %v4386 = vadd.f32 %v2791, %v4378
    %v4387 = vadd.f32 %v2792, %v4383
    %v4388 = vld [vmem:[#allocation25] sm:$0x1]
    %v4389 = vld [vmem:[#allocation24] sm:$0x1]
    %v4390 = vsel %vm571, %v4386, 0.0
    %4391 = vadd.xlane.f32.xlu0 %v4390
    %v4392 = vpop.xlane.xlu0 %4391
    %v4393 = vsel %vm571, %v4387, 0.0
    %4394 = vadd.xlane.f32.xlu0 %v4393
    %v4395 = vpop.xlane.xlu0 %4394
    %v4396 = vmul.f32 %v4392, %v2801
    %v4397 = vmul.f32 %v4395, %v2801
    %v4398 = vsub.f32 %v4386, %v4396
    %v4399 = vsub.f32 %v4387, %v4397
    %v4400 = vmul.f32 %v4398, %v4398
    %v4401 = vmul.f32 %v4399, %v4399
    %v4402 = vsel %vm571, %v4400, 0.0
    %4403 = vadd.xlane.f32.xlu0 %v4402
    %v4404 = vpop.xlane.xlu0 %4403
    %v4405 = vsel %vm571, %v4401, 0.0
    %4406 = vadd.xlane.f32.xlu0 %v4405
    %v4407 = vpop.xlane.xlu0 %4406
    %v4408 = vmul.f32 %v4404, %v2801
    %v4409 = vmul.f32 %v4407, %v2801
    %v4410 = vadd.f32 %v4408, 1e-05
    %v4411 = vadd.f32 %v4409, 1e-05
    %v4412 = vrsqrt.pop %v4410
    %v4413 = vrsqrt.pop %v4411
    %v4414 = vmul.f32 %v4398, %v4412
    %v4415 = vmul.f32 %v4399, %v4413
    %v4417 = vlaneseq
    %v4418 = vshrl.u32 %v4417, 7
    %v4419 = vsub.s32 0, %v4418
    %v4420 = vrot.slane %v4388, %v4419
    %v4422 = vmul.f32 %v4414, %v4420
    %v4423 = vmul.f32 %v4415, %v4420
    %v4425 = vlaneseq
    %v4426 = vshrl.u32 %v4425, 7
    %v4427 = vsub.s32 0, %v4426
    %v4428 = vrot.slane %v4389, %v4427
    %v4430 = vadd.f32 %v4422, %v4428
    %v4431 = vadd.f32 %v4423, %v4428
    %v4432 = vld [vmem:[%s43] sm:$0xff]
    %v4433 = vld [vmem:[%s43 + $0x8] sm:$0xff]
    %v4434 = vld [vmem:[%s43 + $0x10] sm:$0xff]
    %v4435 = vld [vmem:[%s43 + $0x18] sm:$0xff]
    %v4436 = vld [vmem:[#allocation15] sm:$0x1]
    %v4438 = vlaneseq
    %v4439 = vshrl.u32 %v4438, 7
    %v4440 = vsub.s32 0, %v4439
    %v4441 = vrot.slane %v4436, %v4440
    %v4444 = vsel %vm571, %v4430, 0
    %v4447 = vsel %vm571, %v4431, 0
    %4449 = vmatprep.subr.mxu0 0.0
    %4450 = vmatpush1.msra.mxu0 %v4432
    %4451 = vmatprep.subr.mxu0 0.0
    %4452 = vmatpush1.msra.mxu0 %v4433
    %4453 = vmatprep.subr.mxu0 0.0
    %4454 = vmatpush1.msra.mxu0 %v4434
    %4455 = vmatprep.subr.mxu0 0.0
    %4456 = vmatpush1.msra.mxu0 %v4435
    %4457 = vmatprep.subr.mxu0 0.0
    %4458 = vmatpush1.msra.mxu0 0.0
    %4459 = vmatprep.subr.mxu0 0.0
    %4460 = vmatpush1.msra.mxu0 0.0
    %4461 = vmatprep.subr.mxu0 0.0
    %4462 = vmatpush1.msra.mxu0 0.0
    %4463 = vmatprep.subr.mxu0 0.0
    %4464 = vmatpush1.msra.mxu0 0.0
    %4465 = vmatprep.subr.mxu0 0.0
    %4466 = vmatpush1.msra.mxu0 0.0
    %4467 = vmatprep.subr.mxu0 0.0
    %4468 = vmatpush1.msra.mxu0 0.0
    %4469 = vmatprep.subr.mxu0 0.0
    %4470 = vmatpush1.msra.mxu0 0.0
    %4471 = vmatprep.subr.mxu0 0.0
    %4472 = vmatpush1.msra.mxu0 0.0
    %4473 = vmatprep.subr.mxu0 0.0
    %4474 = vmatpush1.msra.mxu0 0.0
    %4475 = vmatprep.subr.mxu0 0.0
    %4476 = vmatpush1.msra.mxu0 0.0
    %4477 = vmatprep.subr.mxu0 0.0
    %4478 = vmatpush1.msra.mxu0 0.0
    %4479 = vmatprep.subr.mxu0 0.0
    %4480 = vmatpush1.msra.mxu0 0.0
    %4481 = vmatprep.subr.mxu0 0.0
    %4482 = vmatpush1.msra.mxu0 0.0
    %4483 = vmatprep.subr.mxu0 0.0
    %4484 = vmatpush1.msra.mxu0 0.0
    %4485 = vmatprep.subr.mxu0 0.0
    %4486 = vmatpush1.msra.mxu0 0.0
    %4487 = vmatprep.subr.mxu0 0.0
    %4488 = vmatpush1.msra.mxu0 0.0
    %4489 = vmatprep.subr.mxu0 0.0
    %4490 = vmatpush1.msra.mxu0 0.0
    %4491 = vmatprep.subr.mxu0 0.0
    %4492 = vmatpush1.msra.mxu0 0.0
    %4493 = vmatprep.subr.mxu0 0.0
    %4494 = vmatpush1.msra.mxu0 0.0
    %4495 = vmatprep.subr.mxu0 0.0
    %4496 = vmatpush1.msra.mxu0 0.0
    %4497 = vmatprep.subr.mxu0 0.0
    %4498 = vmatpush1.msra.mxu0 0.0
    %4499 = vmatprep.subr.mxu0 0.0
    %4500 = vmatpush1.msra.mxu0 0.0
    %4501 = vmatprep.subr.mxu0 0.0
    %4502 = vmatpush1.msra.mxu0 0.0
    %4503 = vmatprep.subr.mxu0 0.0
    %4504 = vmatpush1.msra.mxu0 0.0
    %4505 = vmatprep.subr.mxu0 0.0
    %4506 = vmatpush1.msra.mxu0 0.0
    %4507 = vmatprep.subr.mxu0 0.0
    %4508 = vmatpush1.msra.mxu0 0.0
    %4509 = vmatprep.subr.mxu0 0.0
    %4510 = vmatpush1.msra.mxu0 0.0
    %4511 = vmatprep.subr.mxu0 0.0
    %4512 = vmatpush1.msra.mxu0 0.0
    %4513 = vmatprep.mubr.f32.mxu0 0.0
    %4514 = vmatmul.mubr.f32.gmra.mrb[0].mxu0 %v4444
    %v4515 = vpop.f32.mrb[0].mxu0
    %v4516 = vadd.f32 %v4441, %v4515
    %v4517 = vpop.f32.mrb[0].mxu0
    %4518 = vmatprep.mubr.f32.mxu0 0.0
    %4519 = vmatmul.mubr.f32.gmra.mrb[0].mxu0 %v4447
    %v4520 = vpop.f32.mrb[0].mxu0
    %v4521 = vadd.f32 %v4441, %v4520
    %v4522 = vpop.f32.mrb[0].mxu0
    %4523 = vdwg.mxu0
    %v4524 = vmax.f32 %v4516, 0.0
    %v4525 = vmax.f32 %v4521, 0.0
    %v4526 = vld [vmem:[%s45] sm:$0xff]
    %v4527 = vld [vmem:[%s45 + $0x8] sm:$0xff]
    %v4528 = vld [vmem:[%s45 + $0x10] sm:$0xff]
    %v4529 = vld [vmem:[%s45 + $0x18] sm:$0xff]
    %v4530 = vld [vmem:[%s45 + $0x20] sm:$0xff]
    %v4531 = vld [vmem:[%s45 + $0x28] sm:$0xff]
    %v4532 = vld [vmem:[%s45 + $0x30] sm:$0xff]
    %v4533 = vld [vmem:[%s45 + $0x38] sm:$0xff]
    %v4534 = vld [vmem:[#allocation16] sm:$0x1]
    %v4536 = vlaneseq
    %v4537 = vshrl.u32 %v4536, 7
    %v4538 = vsub.s32 0, %v4537
    %v4539 = vrot.slane %v4534, %v4538
    %vm4541 = vcmask 523264
    %v4543 = vsel %vm4541, %v4524, 0
    %v4546 = vsel %vm4541, %v4525, 0
    %4548 = vmatprep.subr.mxu0 0.0
    %4549 = vmatpush1.msra.mxu0 %v4526
    %4550 = vmatprep.subr.mxu0 0.0
    %4551 = vmatpush1.msra.mxu0 %v4527
    %4552 = vmatprep.subr.mxu0 0.0
    %4553 = vmatpush1.msra.mxu0 %v4528
    %4554 = vmatprep.subr.mxu0 0.0
    %4555 = vmatpush1.msra.mxu0 %v4529
    %4556 = vmatprep.subr.mxu0 0.0
    %4557 = vmatpush1.msra.mxu0 %v4530
    %4558 = vmatprep.subr.mxu0 0.0
    %4559 = vmatpush1.msra.mxu0 %v4531
    %4560 = vmatprep.subr.mxu0 0.0
    %4561 = vmatpush1.msra.mxu0 %v4532
    %4562 = vmatprep.subr.mxu0 0.0
    %4563 = vmatpush1.msra.mxu0 %v4533
    %4564 = vmatprep.subr.mxu0 0.0
    %4565 = vmatpush1.msra.mxu0 0.0
    %4566 = vmatprep.subr.mxu0 0.0
    %4567 = vmatpush1.msra.mxu0 0.0
    %4568 = vmatprep.subr.mxu0 0.0
    %4569 = vmatpush1.msra.mxu0 0.0
    %4570 = vmatprep.subr.mxu0 0.0
    %4571 = vmatpush1.msra.mxu0 0.0
    %4572 = vmatprep.subr.mxu0 0.0
    %4573 = vmatpush1.msra.mxu0 0.0
    %4574 = vmatprep.subr.mxu0 0.0
    %4575 = vmatpush1.msra.mxu0 0.0
    %4576 = vmatprep.subr.mxu0 0.0
    %4577 = vmatpush1.msra.mxu0 0.0
    %4578 = vmatprep.subr.mxu0 0.0
    %4579 = vmatpush1.msra.mxu0 0.0
    %4580 = vmatprep.subr.mxu0 0.0
    %4581 = vmatpush1.msra.mxu0 0.0
    %4582 = vmatprep.subr.mxu0 0.0
    %4583 = vmatpush1.msra.mxu0 0.0
    %4584 = vmatprep.subr.mxu0 0.0
    %4585 = vmatpush1.msra.mxu0 0.0
    %4586 = vmatprep.subr.mxu0 0.0
    %4587 = vmatpush1.msra.mxu0 0.0
    %4588 = vmatprep.subr.mxu0 0.0
    %4589 = vmatpush1.msra.mxu0 0.0
    %4590 = vmatprep.subr.mxu0 0.0
    %4591 = vmatpush1.msra.mxu0 0.0
    %4592 = vmatprep.subr.mxu0 0.0
    %4593 = vmatpush1.msra.mxu0 0.0
    %4594 = vmatprep.subr.mxu0 0.0
    %4595 = vmatpush1.msra.mxu0 0.0
    %4596 = vmatprep.subr.mxu0 0.0
    %4597 = vmatpush1.msra.mxu0 0.0
    %4598 = vmatprep.subr.mxu0 0.0
    %4599 = vmatpush1.msra.mxu0 0.0
    %4600 = vmatprep.subr.mxu0 0.0
    %4601 = vmatpush1.msra.mxu0 0.0
    %4602 = vmatprep.subr.mxu0 0.0
    %4603 = vmatpush1.msra.mxu0 0.0
    %4604 = vmatprep.subr.mxu0 0.0
    %4605 = vmatpush1.msra.mxu0 0.0
    %4606 = vmatprep.subr.mxu0 0.0
    %4607 = vmatpush1.msra.mxu0 0.0
    %4608 = vmatprep.subr.mxu0 0.0
    %4609 = vmatpush1.msra.mxu0 0.0
    %4610 = vmatprep.subr.mxu0 0.0
    %4611 = vmatpush1.msra.mxu0 0.0
    %4612 = vmatprep.mubr.f32.mxu0 0.0
    %4613 = vmatmul.mubr.f32.gmra.mrb[0].mxu0 %v4543
    %v4614 = vpop.f32.mrb[0].mxu0
    %v4615 = vadd.f32 %v4539, %v4614
    %v4616 = vpop.f32.mrb[0].mxu0
    %4617 = vmatprep.mubr.f32.mxu0 0.0
    %4618 = vmatmul.mubr.f32.gmra.mrb[0].mxu0 %v4546
    %v4619 = vpop.f32.mrb[0].mxu0
    %v4620 = vadd.f32 %v4539, %v4619
    %v4621 = vpop.f32.mrb[0].mxu0
    %4622 = vdwg.mxu0
    %v4623 = vadd.f32 %v4386, %v4615
    %v4624 = vadd.f32 %v4387, %v4620
    %v4625 = vld [vmem:[#allocation34] sm:$0x1]
    %v4626 = vld [vmem:[#allocation33] sm:$0x1]
    %v4627 = vsel %vm571, %v4623, 0.0
    %4628 = vadd.xlane.f32.xlu0 %v4627
    %v4629 = vpop.xlane.xlu0 %4628
    %v4630 = vsel %vm571, %v4624, 0.0
    %4631 = vadd.xlane.f32.xlu0 %v4630
    %v4632 = vpop.xlane.xlu0 %4631
    %v4633 = vmul.f32 %v4629, %v2801
    %v4634 = vmul.f32 %v4632, %v2801
    %v4635 = vsub.f32 %v4623, %v4633
    %v4636 = vsub.f32 %v4624, %v4634
    %v4637 = vmul.f32 %v4635, %v4635
    %v4638 = vmul.f32 %v4636, %v4636
    %v4639 = vsel %vm571, %v4637, 0.0
    %4640 = vadd.xlane.f32.xlu0 %v4639
    %v4641 = vpop.xlane.xlu0 %4640
    %v4642 = vsel %vm571, %v4638, 0.0
    %4643 = vadd.xlane.f32.xlu0 %v4642
    %v4644 = vpop.xlane.xlu0 %4643
    %v4645 = vmul.f32 %v4641, %v2801
    %v4646 = vmul.f32 %v4644, %v2801
    %v4647 = vadd.f32 %v4645, 1e-05
    %v4648 = vadd.f32 %v4646, 1e-05
    %v4649 = vrsqrt.pop %v4647
    %v4650 = vrsqrt.pop %v4648
    %v4651 = vmul.f32 %v4635, %v4649
    %v4652 = vmul.f32 %v4636, %v4650
    %v4654 = vlaneseq
    %v4655 = vshrl.u32 %v4654, 7
    %v4656 = vsub.s32 0, %v4655
    %v4657 = vrot.slane %v4625, %v4656
    %v4659 = vmul.f32 %v4651, %v4657
    %v4660 = vmul.f32 %v4652, %v4657
    %v4662 = vlaneseq
    %v4663 = vshrl.u32 %v4662, 7
    %v4664 = vsub.s32 0, %v4663
    %v4665 = vrot.slane %v4626, %v4664
    %v4667 = vadd.f32 %v4659, %v4665
    %v4668 = vadd.f32 %v4660, %v4665
    %v4669 = vld [vmem:[#allocation40] sm:$0xff]
    %v4670 = vld [vmem:[#allocation40 + $0x8] sm:$0xff]
    %v4671 = vld [vmem:[#allocation40 + $0x10] sm:$0xff]
    %v4672 = vld [vmem:[#allocation40 + $0x18] sm:$0xff]
    %v4673 = vld [vmem:[#allocation31] sm:$0x1]
    %v4675 = vlaneseq
    %v4676 = vshrl.u32 %v4675, 7
    %v4677 = vsub.s32 0, %v4676
    %v4678 = vrot.slane %v4673, %v4677
    %v4681 = vsel %vm571, %v4667, 0
    %v4684 = vsel %vm571, %v4668, 0
    %4686 = vmatprep.subr.mxu0 0.0
    %4687 = vmatpush1.msra.mxu0 %v4669
    %4688 = vmatprep.subr.mxu0 0.0
    %4689 = vmatpush1.msra.mxu0 %v4670
    %4690 = vmatprep.subr.mxu0 0.0
    %4691 = vmatpush1.msra.mxu0 %v4671
    %4692 = vmatprep.subr.mxu0 0.0
    %4693 = vmatpush1.msra.mxu0 %v4672
    %4694 = vmatprep.subr.mxu0 0.0
    %4695 = vmatpush1.msra.mxu0 0.0
    %4696 = vmatprep.subr.mxu0 0.0
    %4697 = vmatpush1.msra.mxu0 0.0
    %4698 = vmatprep.subr.mxu0 0.0
    %4699 = vmatpush1.msra.mxu0 0.0
    %4700 = vmatprep.subr.mxu0 0.0
    %4701 = vmatpush1.msra.mxu0 0.0
    %4702 = vmatprep.subr.mxu0 0.0
    %4703 = vmatpush1.msra.mxu0 0.0
    %4704 = vmatprep.subr.mxu0 0.0
    %4705 = vmatpush1.msra.mxu0 0.0
    %4706 = vmatprep.subr.mxu0 0.0
    %4707 = vmatpush1.msra.mxu0 0.0
    %4708 = vmatprep.subr.mxu0 0.0
    %4709 = vmatpush1.msra.mxu0 0.0
    %4710 = vmatprep.subr.mxu0 0.0
    %4711 = vmatpush1.msra.mxu0 0.0
    %4712 = vmatprep.subr.mxu0 0.0
    %4713 = vmatpush1.msra.mxu0 0.0
    %4714 = vmatprep.subr.mxu0 0.0
    %4715 = vmatpush1.msra.mxu0 0.0
    %4716 = vmatprep.subr.mxu0 0.0
    %4717 = vmatpush1.msra.mxu0 0.0
    %4718 = vmatprep.subr.mxu0 0.0
    %4719 = vmatpush1.msra.mxu0 0.0
    %4720 = vmatprep.subr.mxu0 0.0
    %4721 = vmatpush1.msra.mxu0 0.0
    %4722 = vmatprep.subr.mxu0 0.0
    %4723 = vmatpush1.msra.mxu0 0.0
    %4724 = vmatprep.subr.mxu0 0.0
    %4725 = vmatpush1.msra.mxu0 0.0
    %4726 = vmatprep.subr.mxu0 0.0
    %4727 = vmatpush1.msra.mxu0 0.0
    %4728 = vmatprep.subr.mxu0 0.0
    %4729 = vmatpush1.msra.mxu0 0.0
    %4730 = vmatprep.subr.mxu0 0.0
    %4731 = vmatpush1.msra.mxu0 0.0
    %4732 = vmatprep.subr.mxu0 0.0
    %4733 = vmatpush1.msra.mxu0 0.0
    %4734 = vmatprep.subr.mxu0 0.0
    %4735 = vmatpush1.msra.mxu0 0.0
    %4736 = vmatprep.subr.mxu0 0.0
    %4737 = vmatpush1.msra.mxu0 0.0
    %4738 = vmatprep.subr.mxu0 0.0
    %4739 = vmatpush1.msra.mxu0 0.0
    %4740 = vmatprep.subr.mxu0 0.0
    %4741 = vmatpush1.msra.mxu0 0.0
    %4742 = vmatprep.subr.mxu0 0.0
    %4743 = vmatpush1.msra.mxu0 0.0
    %4744 = vmatprep.subr.mxu0 0.0
    %4745 = vmatpush1.msra.mxu0 0.0
    %4746 = vmatprep.subr.mxu0 0.0
    %4747 = vmatpush1.msra.mxu0 0.0
    %4748 = vmatprep.subr.mxu0 0.0
    %4749 = vmatpush1.msra.mxu0 0.0
    %4750 = vmatprep.mubr.f32.mxu0 0.0
    %4751 = vmatmul.mubr.f32.gmra.mrb[0].mxu0 %v4681
    %v4752 = vpop.f32.mrb[0].mxu0
    %v4753 = vadd.f32 %v4678, %v4752
    %v4754 = vpop.f32.mrb[0].mxu0
    %4755 = vmatprep.mubr.f32.mxu0 0.0
    %4756 = vmatmul.mubr.f32.gmra.mrb[0].mxu0 %v4684
    %v4757 = vpop.f32.mrb[0].mxu0
    %v4758 = vadd.f32 %v4678, %v4757
    %v4759 = vpop.f32.mrb[0].mxu0
    %4760 = vdwg.mxu0
    %4762 = vrot.lane.b32.xlu0 %v4753, 96
    %v4763 = vpop.permute.xlu0 %4762
    %v4764 = vsel %vm2933, %v4753, 0
    %v4766 = vsel %vm2933, %v4763, 0
    %4768 = vmatprep.subr.mxu0 0.0
    %4769 = vmatpush1.xpose.msra.mxu0 %v4766
    %4770 = vmatprep.subr.mxu0 0.0
    %4771 = vmatpush1.xpose.msra.mxu0 0.0
    %4772 = vmatprep.subr.mxu0 0.0
    %4773 = vmatpush1.xpose.msra.mxu0 0.0
    %4774 = vmatprep.subr.mxu0 0.0
    %4775 = vmatpush1.xpose.msra.mxu0 0.0
    %4776 = vmatprep.subr.mxu0 0.0
    %4777 = vmatpush1.xpose.msra.mxu0 0.0
    %4778 = vmatprep.subr.mxu0 0.0
    %4779 = vmatpush1.xpose.msra.mxu0 0.0
    %4780 = vmatprep.subr.mxu0 0.0
    %4781 = vmatpush1.xpose.msra.mxu0 0.0
    %4782 = vmatprep.subr.mxu0 0.0
    %4783 = vmatpush1.xpose.msra.mxu0 0.0
    %4784 = vmatprep.subr.mxu0 0.0
    %4785 = vmatpush1.xpose.msra.mxu0 0.0
    %4786 = vmatprep.subr.mxu0 0.0
    %4787 = vmatpush1.xpose.msra.mxu0 0.0
    %4788 = vmatprep.subr.mxu0 0.0
    %4789 = vmatpush1.xpose.msra.mxu0 0.0
    %4790 = vmatprep.subr.mxu0 0.0
    %4791 = vmatpush1.xpose.msra.mxu0 0.0
    %4792 = vmatprep.subr.mxu0 0.0
    %4793 = vmatpush1.xpose.msra.mxu0 0.0
    %4794 = vmatprep.subr.mxu0 0.0
    %4795 = vmatpush1.xpose.msra.mxu0 0.0
    %4796 = vmatprep.subr.mxu0 0.0
    %4797 = vmatpush1.xpose.msra.mxu0 0.0
    %4798 = vmatprep.subr.mxu0 0.0
    %4799 = vmatpush1.xpose.msra.mxu0 0.0
    %4800 = vmatprep.subr.mxu0 0.0
    %4801 = vmatpush1.xpose.msra.mxu0 0.0
    %4802 = vmatprep.subr.mxu0 0.0
    %4803 = vmatpush1.xpose.msra.mxu0 0.0
    %4804 = vmatprep.subr.mxu0 0.0
    %4805 = vmatpush1.xpose.msra.mxu0 0.0
    %4806 = vmatprep.subr.mxu0 0.0
    %4807 = vmatpush1.xpose.msra.mxu0 0.0
    %4808 = vmatprep.subr.mxu0 0.0
    %4809 = vmatpush1.xpose.msra.mxu0 0.0
    %4810 = vmatprep.subr.mxu0 0.0
    %4811 = vmatpush1.xpose.msra.mxu0 0.0
    %4812 = vmatprep.subr.mxu0 0.0
    %4813 = vmatpush1.xpose.msra.mxu0 0.0
    %4814 = vmatprep.subr.mxu0 0.0
    %4815 = vmatpush1.xpose.msra.mxu0 0.0
    %4816 = vmatprep.subr.mxu0 0.0
    %4817 = vmatpush1.xpose.msra.mxu0 0.0
    %4818 = vmatprep.subr.mxu0 0.0
    %4819 = vmatpush1.xpose.msra.mxu0 0.0
    %4820 = vmatprep.subr.mxu0 0.0
    %4821 = vmatpush1.xpose.msra.mxu0 0.0
    %4822 = vmatprep.subr.mxu0 0.0
    %4823 = vmatpush1.xpose.msra.mxu0 0.0
    %4824 = vmatprep.subr.mxu0 0.0
    %4825 = vmatpush1.xpose.msra.mxu0 0.0
    %4826 = vmatprep.subr.mxu0 0.0
    %4827 = vmatpush1.xpose.msra.mxu0 0.0
    %4828 = vmatprep.subr.mxu0 0.0
    %4829 = vmatpush1.xpose.msra.mxu0 0.0
    %4830 = vmatprep.subr.mxu0 0.0
    %4831 = vmatpush1.xpose.msra.mxu0 0.0
    %4832 = vmatprep.mubr.f32.mxu0 0.0
    %4833 = vmatmul.mubr.f32.gmra.mrb[0].mxu0 %v4764
    %v4834 = vpop.f32.mrb[0].mxu0
    %v4835 = vadd.f32 0.0, %v4834
    %v4836 = vpop.f32.mrb[0].mxu0
    %4837 = vdwg.mxu0
    %v4838 = vmul.f32 %v4835, 0.35355338
    %v4839 = vsel %vm2933, %v4838, -inf
    %4840 = vmax.xlane.f32.xlu0 %v4839
    %v4841 = vpop.xlane.xlu0 %4840
    %v4842 = vsub.f32 %v4838, %v4841
    %v4843 = vmul.f32 %v4842, 1.442695
    %v4844 = vpow.pop %v4843
    %v4845 = vsel %vm2933, %v4844, 0.0
    %4846 = vadd.xlane.f32.xlu0 %v4845
    %v4847 = vpop.xlane.xlu0 %4846
    %v4848 = vrcp.pop %v4847
    %v4849 = vmul.f32 %v4844, %v4848
    %4850 = vrot.lane.b32.xlu0 %v4753, 64
    %v4851 = vpop.permute.xlu0 %4850
    %v4854 = vsel %vm2933, %v4849, 0
    %4856 = vmatprep.subr.mxu0 0.0
    %4857 = vmatpush1.msra.mxu0 %v4851
    %4858 = vmatprep.subr.mxu0 0.0
    %4859 = vmatpush1.msra.mxu0 0.0
    %4860 = vmatprep.subr.mxu0 0.0
    %4861 = vmatpush1.msra.mxu0 0.0
    %4862 = vmatprep.subr.mxu0 0.0
    %4863 = vmatpush1.msra.mxu0 0.0
    %4864 = vmatprep.subr.mxu0 0.0
    %4865 = vmatpush1.msra.mxu0 0.0
    %4866 = vmatprep.subr.mxu0 0.0
    %4867 = vmatpush1.msra.mxu0 0.0
    %4868 = vmatprep.subr.mxu0 0.0
    %4869 = vmatpush1.msra.mxu0 0.0
    %4870 = vmatprep.subr.mxu0 0.0
    %4871 = vmatpush1.msra.mxu0 0.0
    %4872 = vmatprep.subr.mxu0 0.0
    %4873 = vmatpush1.msra.mxu0 0.0
    %4874 = vmatprep.subr.mxu0 0.0
    %4875 = vmatpush1.msra.mxu0 0.0
    %4876 = vmatprep.subr.mxu0 0.0
    %4877 = vmatpush1.msra.mxu0 0.0
    %4878 = vmatprep.subr.mxu0 0.0
    %4879 = vmatpush1.msra.mxu0 0.0
    %4880 = vmatprep.subr.mxu0 0.0
    %4881 = vmatpush1.msra.mxu0 0.0
    %4882 = vmatprep.subr.mxu0 0.0
    %4883 = vmatpush1.msra.mxu0 0.0
    %4884 = vmatprep.subr.mxu0 0.0
    %4885 = vmatpush1.msra.mxu0 0.0
    %4886 = vmatprep.subr.mxu0 0.0
    %4887 = vmatpush1.msra.mxu0 0.0
    %4888 = vmatprep.subr.mxu0 0.0
    %4889 = vmatpush1.msra.mxu0 0.0
    %4890 = vmatprep.subr.mxu0 0.0
    %4891 = vmatpush1.msra.mxu0 0.0
    %4892 = vmatprep.subr.mxu0 0.0
    %4893 = vmatpush1.msra.mxu0 0.0
    %4894 = vmatprep.subr.mxu0 0.0
    %4895 = vmatpush1.msra.mxu0 0.0
    %4896 = vmatprep.subr.mxu0 0.0
    %4897 = vmatpush1.msra.mxu0 0.0
    %4898 = vmatprep.subr.mxu0 0.0
    %4899 = vmatpush1.msra.mxu0 0.0
    %4900 = vmatprep.subr.mxu0 0.0
    %4901 = vmatpush1.msra.mxu0 0.0
    %4902 = vmatprep.subr.mxu0 0.0
    %4903 = vmatpush1.msra.mxu0 0.0
    %4904 = vmatprep.subr.mxu0 0.0
    %4905 = vmatpush1.msra.mxu0 0.0
    %4906 = vmatprep.subr.mxu0 0.0
    %4907 = vmatpush1.msra.mxu0 0.0
    %4908 = vmatprep.subr.mxu0 0.0
    %4909 = vmatpush1.msra.mxu0 0.0
    %4910 = vmatprep.subr.mxu0 0.0
    %4911 = vmatpush1.msra.mxu0 0.0
    %4912 = vmatprep.subr.mxu0 0.0
    %4913 = vmatpush1.msra.mxu0 0.0
    %4914 = vmatprep.subr.mxu0 0.0
    %4915 = vmatpush1.msra.mxu0 0.0
    %4916 = vmatprep.subr.mxu0 0.0
    %4917 = vmatpush1.msra.mxu0 0.0
    %4918 = vmatprep.subr.mxu0 0.0
    %4919 = vmatpush1.msra.mxu0 0.0
    %4920 = vmatprep.mubr.f32.mxu0 0.0
    %4921 = vmatmul.mubr.f32.gmra.mrb[0].mxu0 %v4854
    %v4922 = vpop.f32.mrb[0].mxu0
    %v4923 = vadd.f32 0.0, %v4922
    %v4924 = vpop.f32.mrb[0].mxu0
    %4925 = vdwg.mxu0
    %4926 = vst.msk [vmem:[#allocation3] sm:$0xff] %vm2933, %v4923
    %4927 = vrot.lane.b32.xlu0 %v4753, 120
    %v4928 = vpop.permute.xlu0 %4927
    %4929 = vrot.lane.b32.xlu0 %v4753, 88
    %v4930 = vpop.permute.xlu0 %4929
    %v4931 = vsel %vm2933, %v4928, 0
    %v4933 = vsel %vm2933, %v4930, 0
    %4935 = vmatprep.subr.mxu0 0.0
    %4936 = vmatpush1.xpose.msra.mxu0 %v4933
    %4937 = vmatprep.subr.mxu0 0.0
    %4938 = vmatpush1.xpose.msra.mxu0 0.0
    %4939 = vmatprep.subr.mxu0 0.0
    %4940 = vmatpush1.xpose.msra.mxu0 0.0
    %4941 = vmatprep.subr.mxu0 0.0
    %4942 = vmatpush1.xpose.msra.mxu0 0.0
    %4943 = vmatprep.subr.mxu0 0.0
    %4944 = vmatpush1.xpose.msra.mxu0 0.0
    %4945 = vmatprep.subr.mxu0 0.0
    %4946 = vmatpush1.xpose.msra.mxu0 0.0
    %4947 = vmatprep.subr.mxu0 0.0
    %4948 = vmatpush1.xpose.msra.mxu0 0.0
    %4949 = vmatprep.subr.mxu0 0.0
    %4950 = vmatpush1.xpose.msra.mxu0 0.0
    %4951 = vmatprep.subr.mxu0 0.0
    %4952 = vmatpush1.xpose.msra.mxu0 0.0
    %4953 = vmatprep.subr.mxu0 0.0
    %4954 = vmatpush1.xpose.msra.mxu0 0.0
    %4955 = vmatprep.subr.mxu0 0.0
    %4956 = vmatpush1.xpose.msra.mxu0 0.0
    %4957 = vmatprep.subr.mxu0 0.0
    %4958 = vmatpush1.xpose.msra.mxu0 0.0
    %4959 = vmatprep.subr.mxu0 0.0
    %4960 = vmatpush1.xpose.msra.mxu0 0.0
    %4961 = vmatprep.subr.mxu0 0.0
    %4962 = vmatpush1.xpose.msra.mxu0 0.0
    %4963 = vmatprep.subr.mxu0 0.0
    %4964 = vmatpush1.xpose.msra.mxu0 0.0
    %4965 = vmatprep.subr.mxu0 0.0
    %4966 = vmatpush1.xpose.msra.mxu0 0.0
    %4967 = vmatprep.subr.mxu0 0.0
    %4968 = vmatpush1.xpose.msra.mxu0 0.0
    %4969 = vmatprep.subr.mxu0 0.0
    %4970 = vmatpush1.xpose.msra.mxu0 0.0
    %4971 = vmatprep.subr.mxu0 0.0
    %4972 = vmatpush1.xpose.msra.mxu0 0.0
    %4973 = vmatprep.subr.mxu0 0.0
    %4974 = vmatpush1.xpose.msra.mxu0 0.0
    %4975 = vmatprep.subr.mxu0 0.0
    %4976 = vmatpush1.xpose.msra.mxu0 0.0
    %4977 = vmatprep.subr.mxu0 0.0
    %4978 = vmatpush1.xpose.msra.mxu0 0.0
    %4979 = vmatprep.subr.mxu0 0.0
    %4980 = vmatpush1.xpose.msra.mxu0 0.0
    %4981 = vmatprep.subr.mxu0 0.0
    %4982 = vmatpush1.xpose.msra.mxu0 0.0
    %4983 = vmatprep.subr.mxu0 0.0
    %4984 = vmatpush1.xpose.msra.mxu0 0.0
    %4985 = vmatprep.subr.mxu0 0.0
    %4986 = vmatpush1.xpose.msra.mxu0 0.0
    %4987 = vmatprep.subr.mxu0 0.0
    %4988 = vmatpush1.xpose.msra.mxu0 0.0
    %4989 = vmatprep.subr.mxu0 0.0
    %4990 = vmatpush1.xpose.msra.mxu0 0.0
    %4991 = vmatprep.subr.mxu0 0.0
    %4992 = vmatpush1.xpose.msra.mxu0 0.0
    %4993 = vmatprep.subr.mxu0 0.0
    %4994 = vmatpush1.xpose.msra.mxu0 0.0
    %4995 = vmatprep.subr.mxu0 0.0
    %4996 = vmatpush1.xpose.msra.mxu0 0.0
    %4997 = vmatprep.subr.mxu0 0.0
    %4998 = vmatpush1.xpose.msra.mxu0 0.0
    %4999 = vmatprep.mubr.f32.mxu0 0.0
    %5000 = vmatmul.mubr.f32.gmra.mrb[0].mxu0 %v4931
    %v5001 = vpop.f32.mrb[0].mxu0
    %v5002 = vadd.f32 0.0, %v5001
    %v5003 = vpop.f32.mrb[0].mxu0
    %5004 = vdwg.mxu0
    %v5005 = vmul.f32 %v5002, 0.35355338
    %v5006 = vsel %vm2933, %v5005, -inf
    %5007 = vmax.xlane.f32.xlu0 %v5006
    %v5008 = vpop.xlane.xlu0 %5007
    %v5009 = vsub.f32 %v5005, %v5008
    %v5010 = vmul.f32 %v5009, 1.442695
    %v5011 = vpow.pop %v5010
    %v5012 = vsel %vm2933, %v5011, 0.0
    %5013 = vadd.xlane.f32.xlu0 %v5012
    %v5014 = vpop.xlane.xlu0 %5013
    %v5015 = vrcp.pop %v5014
    %v5016 = vmul.f32 %v5011, %v5015
    %5017 = vrot.lane.b32.xlu0 %v4753, 56
    %v5018 = vpop.permute.xlu0 %5017
    %v5021 = vsel %vm2933, %v5016, 0
    %5023 = vmatprep.subr.mxu0 0.0
    %5024 = vmatpush1.msra.mxu0 %v5018
    %5025 = vmatprep.subr.mxu0 0.0
    %5026 = vmatpush1.msra.mxu0 0.0
    %5027 = vmatprep.subr.mxu0 0.0
    %5028 = vmatpush1.msra.mxu0 0.0
    %5029 = vmatprep.subr.mxu0 0.0
    %5030 = vmatpush1.msra.mxu0 0.0
    %5031 = vmatprep.subr.mxu0 0.0
    %5032 = vmatpush1.msra.mxu0 0.0
    %5033 = vmatprep.subr.mxu0 0.0
    %5034 = vmatpush1.msra.mxu0 0.0
    %5035 = vmatprep.subr.mxu0 0.0
    %5036 = vmatpush1.msra.mxu0 0.0
    %5037 = vmatprep.subr.mxu0 0.0
    %5038 = vmatpush1.msra.mxu0 0.0
    %5039 = vmatprep.subr.mxu0 0.0
    %5040 = vmatpush1.msra.mxu0 0.0
    %5041 = vmatprep.subr.mxu0 0.0
    %5042 = vmatpush1.msra.mxu0 0.0
    %5043 = vmatprep.subr.mxu0 0.0
    %5044 = vmatpush1.msra.mxu0 0.0
    %5045 = vmatprep.subr.mxu0 0.0
    %5046 = vmatpush1.msra.mxu0 0.0
    %5047 = vmatprep.subr.mxu0 0.0
    %5048 = vmatpush1.msra.mxu0 0.0
    %5049 = vmatprep.subr.mxu0 0.0
    %5050 = vmatpush1.msra.mxu0 0.0
    %5051 = vmatprep.subr.mxu0 0.0
    %5052 = vmatpush1.msra.mxu0 0.0
    %5053 = vmatprep.subr.mxu0 0.0
    %5054 = vmatpush1.msra.mxu0 0.0
    %5055 = vmatprep.subr.mxu0 0.0
    %5056 = vmatpush1.msra.mxu0 0.0
    %5057 = vmatprep.subr.mxu0 0.0
    %5058 = vmatpush1.msra.mxu0 0.0
    %5059 = vmatprep.subr.mxu0 0.0
    %5060 = vmatpush1.msra.mxu0 0.0
    %5061 = vmatprep.subr.mxu0 0.0
    %5062 = vmatpush1.msra.mxu0 0.0
    %5063 = vmatprep.subr.mxu0 0.0
    %5064 = vmatpush1.msra.mxu0 0.0
    %5065 = vmatprep.subr.mxu0 0.0
    %5066 = vmatpush1.msra.mxu0 0.0
    %5067 = vmatprep.subr.mxu0 0.0
    %5068 = vmatpush1.msra.mxu0 0.0
    %5069 = vmatprep.subr.mxu0 0.0
    %5070 = vmatpush1.msra.mxu0 0.0
    %5071 = vmatprep.subr.mxu0 0.0
    %5072 = vmatpush1.msra.mxu0 0.0
    %5073 = vmatprep.subr.mxu0 0.0
    %5074 = vmatpush1.msra.mxu0 0.0
    %5075 = vmatprep.subr.mxu0 0.0
    %5076 = vmatpush1.msra.mxu0 0.0
    %5077 = vmatprep.subr.mxu0 0.0
    %5078 = vmatpush1.msra.mxu0 0.0
    %5079 = vmatprep.subr.mxu0 0.0
    %5080 = vmatpush1.msra.mxu0 0.0
    %5081 = vmatprep.subr.mxu0 0.0
    %5082 = vmatpush1.msra.mxu0 0.0
    %5083 = vmatprep.subr.mxu0 0.0
    %5084 = vmatpush1.msra.mxu0 0.0
    %5085 = vmatprep.subr.mxu0 0.0
    %5086 = vmatpush1.msra.mxu0 0.0
    %5087 = vmatprep.mubr.f32.mxu0 0.0
    %5088 = vmatmul.mubr.f32.gmra.mrb[0].mxu0 %v5021
    %v5089 = vpop.f32.mrb[0].mxu0
    %v5090 = vadd.f32 0.0, %v5089
    %v5091 = vpop.f32.mrb[0].mxu0
    %5092 = vdwg.mxu0
    %5094 = vrot.lane.b32.xlu0 %v5090, 8
    %v5095 = vpop.permute.xlu0 %5094
    %5097 = vst.msk [vmem:[#allocation3] sm:$0xff] %vm3267, %v5095
    %5098 = vrot.lane.b32.xlu0 %v4753, 112
    %v5099 = vpop.permute.xlu0 %5098
    %5100 = vrot.lane.b32.xlu0 %v4753, 80
    %v5101 = vpop.permute.xlu0 %5100
    %v5102 = vsel %vm2933, %v5099, 0
    %v5104 = vsel %vm2933, %v5101, 0
    %5106 = vmatprep.subr.mxu0 0.0
    %5107 = vmatpush1.xpose.msra.mxu0 %v5104
    %5108 = vmatprep.subr.mxu0 0.0
    %5109 = vmatpush1.xpose.msra.mxu0 0.0
    %5110 = vmatprep.subr.mxu0 0.0
    %5111 = vmatpush1.xpose.msra.mxu0 0.0
    %5112 = vmatprep.subr.mxu0 0.0
    %5113 = vmatpush1.xpose.msra.mxu0 0.0
    %5114 = vmatprep.subr.mxu0 0.0
    %5115 = vmatpush1.xpose.msra.mxu0 0.0
    %5116 = vmatprep.subr.mxu0 0.0
    %5117 = vmatpush1.xpose.msra.mxu0 0.0
    %5118 = vmatprep.subr.mxu0 0.0
    %5119 = vmatpush1.xpose.msra.mxu0 0.0
    %5120 = vmatprep.subr.mxu0 0.0
    %5121 = vmatpush1.xpose.msra.mxu0 0.0
    %5122 = vmatprep.subr.mxu0 0.0
    %5123 = vmatpush1.xpose.msra.mxu0 0.0
    %5124 = vmatprep.subr.mxu0 0.0
    %5125 = vmatpush1.xpose.msra.mxu0 0.0
    %5126 = vmatprep.subr.mxu0 0.0
    %5127 = vmatpush1.xpose.msra.mxu0 0.0
    %5128 = vmatprep.subr.mxu0 0.0
    %5129 = vmatpush1.xpose.msra.mxu0 0.0
    %5130 = vmatprep.subr.mxu0 0.0
    %5131 = vmatpush1.xpose.msra.mxu0 0.0
    %5132 = vmatprep.subr.mxu0 0.0
    %5133 = vmatpush1.xpose.msra.mxu0 0.0
    %5134 = vmatprep.subr.mxu0 0.0
    %5135 = vmatpush1.xpose.msra.mxu0 0.0
    %5136 = vmatprep.subr.mxu0 0.0
    %5137 = vmatpush1.xpose.msra.mxu0 0.0
    %5138 = vmatprep.subr.mxu0 0.0
    %5139 = vmatpush1.xpose.msra.mxu0 0.0
    %5140 = vmatprep.subr.mxu0 0.0
    %5141 = vmatpush1.xpose.msra.mxu0 0.0
    %5142 = vmatprep.subr.mxu0 0.0
    %5143 = vmatpush1.xpose.msra.mxu0 0.0
    %5144 = vmatprep.subr.mxu0 0.0
    %5145 = vmatpush1.xpose.msra.mxu0 0.0
    %5146 = vmatprep.subr.mxu0 0.0
    %5147 = vmatpush1.xpose.msra.mxu0 0.0
    %5148 = vmatprep.subr.mxu0 0.0
    %5149 = vmatpush1.xpose.msra.mxu0 0.0
    %5150 = vmatprep.subr.mxu0 0.0
    %5151 = vmatpush1.xpose.msra.mxu0 0.0
    %5152 = vmatprep.subr.mxu0 0.0
    %5153 = vmatpush1.xpose.msra.mxu0 0.0
    %5154 = vmatprep.subr.mxu0 0.0
    %5155 = vmatpush1.xpose.msra.mxu0 0.0
    %5156 = vmatprep.subr.mxu0 0.0
    %5157 = vmatpush1.xpose.msra.mxu0 0.0
    %5158 = vmatprep.subr.mxu0 0.0
    %5159 = vmatpush1.xpose.msra.mxu0 0.0
    %5160 = vmatprep.subr.mxu0 0.0
    %5161 = vmatpush1.xpose.msra.mxu0 0.0
    %5162 = vmatprep.subr.mxu0 0.0
    %5163 = vmatpush1.xpose.msra.mxu0 0.0
    %5164 = vmatprep.subr.mxu0 0.0
    %5165 = vmatpush1.xpose.msra.mxu0 0.0
    %5166 = vmatprep.subr.mxu0 0.0
    %5167 = vmatpush1.xpose.msra.mxu0 0.0
    %5168 = vmatprep.subr.mxu0 0.0
    %5169 = vmatpush1.xpose.msra.mxu0 0.0
    %5170 = vmatprep.mubr.f32.mxu0 0.0
    %5171 = vmatmul.mubr.f32.gmra.mrb[0].mxu0 %v5102
    %v5172 = vpop.f32.mrb[0].mxu0
    %v5173 = vadd.f32 0.0, %v5172
    %v5174 = vpop.f32.mrb[0].mxu0
    %5175 = vdwg.mxu0
    %v5176 = vmul.f32 %v5173, 0.35355338
    %v5177 = vsel %vm2933, %v5176, -inf
    %5178 = vmax.xlane.f32.xlu0 %v5177
    %v5179 = vpop.xlane.xlu0 %5178
    %v5180 = vsub.f32 %v5176, %v5179
    %v5181 = vmul.f32 %v5180, 1.442695
    %v5182 = vpow.pop %v5181
    %v5183 = vsel %vm2933, %v5182, 0.0
    %5184 = vadd.xlane.f32.xlu0 %v5183
    %v5185 = vpop.xlane.xlu0 %5184
    %v5186 = vrcp.pop %v5185
    %v5187 = vmul.f32 %v5182, %v5186
    %5188 = vrot.lane.b32.xlu0 %v4753, 48
    %v5189 = vpop.permute.xlu0 %5188
    %v5192 = vsel %vm2933, %v5187, 0
    %5194 = vmatprep.subr.mxu0 0.0
    %5195 = vmatpush1.msra.mxu0 %v5189
    %5196 = vmatprep.subr.mxu0 0.0
    %5197 = vmatpush1.msra.mxu0 0.0
    %5198 = vmatprep.subr.mxu0 0.0
    %5199 = vmatpush1.msra.mxu0 0.0
    %5200 = vmatprep.subr.mxu0 0.0
    %5201 = vmatpush1.msra.mxu0 0.0
    %5202 = vmatprep.subr.mxu0 0.0
    %5203 = vmatpush1.msra.mxu0 0.0
    %5204 = vmatprep.subr.mxu0 0.0
    %5205 = vmatpush1.msra.mxu0 0.0
    %5206 = vmatprep.subr.mxu0 0.0
    %5207 = vmatpush1.msra.mxu0 0.0
    %5208 = vmatprep.subr.mxu0 0.0
    %5209 = vmatpush1.msra.mxu0 0.0
    %5210 = vmatprep.subr.mxu0 0.0
    %5211 = vmatpush1.msra.mxu0 0.0
    %5212 = vmatprep.subr.mxu0 0.0
    %5213 = vmatpush1.msra.mxu0 0.0
    %5214 = vmatprep.subr.mxu0 0.0
    %5215 = vmatpush1.msra.mxu0 0.0
    %5216 = vmatprep.subr.mxu0 0.0
    %5217 = vmatpush1.msra.mxu0 0.0
    %5218 = vmatprep.subr.mxu0 0.0
    %5219 = vmatpush1.msra.mxu0 0.0
    %5220 = vmatprep.subr.mxu0 0.0
    %5221 = vmatpush1.msra.mxu0 0.0
    %5222 = vmatprep.subr.mxu0 0.0
    %5223 = vmatpush1.msra.mxu0 0.0
    %5224 = vmatprep.subr.mxu0 0.0
    %5225 = vmatpush1.msra.mxu0 0.0
    %5226 = vmatprep.subr.mxu0 0.0
    %5227 = vmatpush1.msra.mxu0 0.0
    %5228 = vmatprep.subr.mxu0 0.0
    %5229 = vmatpush1.msra.mxu0 0.0
    %5230 = vmatprep.subr.mxu0 0.0
    %5231 = vmatpush1.msra.mxu0 0.0
    %5232 = vmatprep.subr.mxu0 0.0
    %5233 = vmatpush1.msra.mxu0 0.0
    %5234 = vmatprep.subr.mxu0 0.0
    %5235 = vmatpush1.msra.mxu0 0.0
    %5236 = vmatprep.subr.mxu0 0.0
    %5237 = vmatpush1.msra.mxu0 0.0
    %5238 = vmatprep.subr.mxu0 0.0
    %5239 = vmatpush1.msra.mxu0 0.0
    %5240 = vmatprep.subr.mxu0 0.0
    %5241 = vmatpush1.msra.mxu0 0.0
    %5242 = vmatprep.subr.mxu0 0.0
    %5243 = vmatpush1.msra.mxu0 0.0
    %5244 = vmatprep.subr.mxu0 0.0
    %5245 = vmatpush1.msra.mxu0 0.0
    %5246 = vmatprep.subr.mxu0 0.0
    %5247 = vmatpush1.msra.mxu0 0.0
    %5248 = vmatprep.subr.mxu0 0.0
    %5249 = vmatpush1.msra.mxu0 0.0
    %5250 = vmatprep.subr.mxu0 0.0
    %5251 = vmatpush1.msra.mxu0 0.0
    %5252 = vmatprep.subr.mxu0 0.0
    %5253 = vmatpush1.msra.mxu0 0.0
    %5254 = vmatprep.subr.mxu0 0.0
    %5255 = vmatpush1.msra.mxu0 0.0
    %5256 = vmatprep.subr.mxu0 0.0
    %5257 = vmatpush1.msra.mxu0 0.0
    %5258 = vmatprep.mubr.f32.mxu0 0.0
    %5259 = vmatmul.mubr.f32.gmra.mrb[0].mxu0 %v5192
    %v5260 = vpop.f32.mrb[0].mxu0
    %v5261 = vadd.f32 0.0, %v5260
    %v5262 = vpop.f32.mrb[0].mxu0
    %5263 = vdwg.mxu0
    %5265 = vrot.lane.b32.xlu0 %v5261, 16
    %v5266 = vpop.permute.xlu0 %5265
    %5268 = vst.msk [vmem:[#allocation3] sm:$0xff] %vm3439, %v5266
    %5269 = vrot.lane.b32.xlu0 %v4753, 104
    %v5270 = vpop.permute.xlu0 %5269
    %5271 = vrot.lane.b32.xlu0 %v4753, 72
    %v5272 = vpop.permute.xlu0 %5271
    %v5273 = vsel %vm2933, %v5270, 0
    %v5275 = vsel %vm2933, %v5272, 0
    %5277 = vmatprep.subr.mxu0 0.0
    %5278 = vmatpush1.xpose.msra.mxu0 %v5275
    %5279 = vmatprep.subr.mxu0 0.0
    %5280 = vmatpush1.xpose.msra.mxu0 0.0
    %5281 = vmatprep.subr.mxu0 0.0
    %5282 = vmatpush1.xpose.msra.mxu0 0.0
    %5283 = vmatprep.subr.mxu0 0.0
    %5284 = vmatpush1.xpose.msra.mxu0 0.0
    %5285 = vmatprep.subr.mxu0 0.0
    %5286 = vmatpush1.xpose.msra.mxu0 0.0
    %5287 = vmatprep.subr.mxu0 0.0
    %5288 = vmatpush1.xpose.msra.mxu0 0.0
    %5289 = vmatprep.subr.mxu0 0.0
    %5290 = vmatpush1.xpose.msra.mxu0 0.0
    %5291 = vmatprep.subr.mxu0 0.0
    %5292 = vmatpush1.xpose.msra.mxu0 0.0
    %5293 = vmatprep.subr.mxu0 0.0
    %5294 = vmatpush1.xpose.msra.mxu0 0.0
    %5295 = vmatprep.subr.mxu0 0.0
    %5296 = vmatpush1.xpose.msra.mxu0 0.0
    %5297 = vmatprep.subr.mxu0 0.0
    %5298 = vmatpush1.xpose.msra.mxu0 0.0
    %5299 = vmatprep.subr.mxu0 0.0
    %5300 = vmatpush1.xpose.msra.mxu0 0.0
    %5301 = vmatprep.subr.mxu0 0.0
    %5302 = vmatpush1.xpose.msra.mxu0 0.0
    %5303 = vmatprep.subr.mxu0 0.0
    %5304 = vmatpush1.xpose.msra.mxu0 0.0
    %5305 = vmatprep.subr.mxu0 0.0
    %5306 = vmatpush1.xpose.msra.mxu0 0.0
    %5307 = vmatprep.subr.mxu0 0.0
    %5308 = vmatpush1.xpose.msra.mxu0 0.0
    %5309 = vmatprep.subr.mxu0 0.0
    %5310 = vmatpush1.xpose.msra.mxu0 0.0
    %5311 = vmatprep.subr.mxu0 0.0
    %5312 = vmatpush1.xpose.msra.mxu0 0.0
    %5313 = vmatprep.subr.mxu0 0.0
    %5314 = vmatpush1.xpose.msra.mxu0 0.0
    %5315 = vmatprep.subr.mxu0 0.0
    %5316 = vmatpush1.xpose.msra.mxu0 0.0
    %5317 = vmatprep.subr.mxu0 0.0
    %5318 = vmatpush1.xpose.msra.mxu0 0.0
    %5319 = vmatprep.subr.mxu0 0.0
    %5320 = vmatpush1.xpose.msra.mxu0 0.0
    %5321 = vmatprep.subr.mxu0 0.0
    %5322 = vmatpush1.xpose.msra.mxu0 0.0
    %5323 = vmatprep.subr.mxu0 0.0
    %5324 = vmatpush1.xpose.msra.mxu0 0.0
    %5325 = vmatprep.subr.mxu0 0.0
    %5326 = vmatpush1.xpose.msra.mxu0 0.0
    %5327 = vmatprep.subr.mxu0 0.0
    %5328 = vmatpush1.xpose.msra.mxu0 0.0
    %5329 = vmatprep.subr.mxu0 0.0
    %5330 = vmatpush1.xpose.msra.mxu0 0.0
    %5331 = vmatprep.subr.mxu0 0.0
    %5332 = vmatpush1.xpose.msra.mxu0 0.0
    %5333 = vmatprep.subr.mxu0 0.0
    %5334 = vmatpush1.xpose.msra.mxu0 0.0
    %5335 = vmatprep.subr.mxu0 0.0
    %5336 = vmatpush1.xpose.msra.mxu0 0.0
    %5337 = vmatprep.subr.mxu0 0.0
    %5338 = vmatpush1.xpose.msra.mxu0 0.0
    %5339 = vmatprep.subr.mxu0 0.0
    %5340 = vmatpush1.xpose.msra.mxu0 0.0
    %5341 = vmatprep.mubr.f32.mxu0 0.0
    %5342 = vmatmul.mubr.f32.gmra.mrb[0].mxu0 %v5273
    %v5343 = vpop.f32.mrb[0].mxu0
    %v5344 = vadd.f32 0.0, %v5343
    %v5345 = vpop.f32.mrb[0].mxu0
    %5346 = vdwg.mxu0
    %v5347 = vmul.f32 %v5344, 0.35355338
    %v5348 = vsel %vm2933, %v5347, -inf
    %5349 = vmax.xlane.f32.xlu0 %v5348
    %v5350 = vpop.xlane.xlu0 %5349
    %v5351 = vsub.f32 %v5347, %v5350
    %v5352 = vmul.f32 %v5351, 1.442695
    %v5353 = vpow.pop %v5352
    %v5354 = vsel %vm2933, %v5353, 0.0
    %5355 = vadd.xlane.f32.xlu0 %v5354
    %v5356 = vpop.xlane.xlu0 %5355
    %v5357 = vrcp.pop %v5356
    %v5358 = vmul.f32 %v5353, %v5357
    %5359 = vrot.lane.b32.xlu0 %v4753, 40
    %v5360 = vpop.permute.xlu0 %5359
    %v5363 = vsel %vm2933, %v5358, 0
    %5365 = vmatprep.subr.mxu0 0.0
    %5366 = vmatpush1.msra.mxu0 %v5360
    %5367 = vmatprep.subr.mxu0 0.0
    %5368 = vmatpush1.msra.mxu0 0.0
    %5369 = vmatprep.subr.mxu0 0.0
    %5370 = vmatpush1.msra.mxu0 0.0
    %5371 = vmatprep.subr.mxu0 0.0
    %5372 = vmatpush1.msra.mxu0 0.0
    %5373 = vmatprep.subr.mxu0 0.0
    %5374 = vmatpush1.msra.mxu0 0.0
    %5375 = vmatprep.subr.mxu0 0.0
    %5376 = vmatpush1.msra.mxu0 0.0
    %5377 = vmatprep.subr.mxu0 0.0
    %5378 = vmatpush1.msra.mxu0 0.0
    %5379 = vmatprep.subr.mxu0 0.0
    %5380 = vmatpush1.msra.mxu0 0.0
    %5381 = vmatprep.subr.mxu0 0.0
    %5382 = vmatpush1.msra.mxu0 0.0
    %5383 = vmatprep.subr.mxu0 0.0
    %5384 = vmatpush1.msra.mxu0 0.0
    %5385 = vmatprep.subr.mxu0 0.0
    %5386 = vmatpush1.msra.mxu0 0.0
    %5387 = vmatprep.subr.mxu0 0.0
    %5388 = vmatpush1.msra.mxu0 0.0
    %5389 = vmatprep.subr.mxu0 0.0
    %5390 = vmatpush1.msra.mxu0 0.0
    %5391 = vmatprep.subr.mxu0 0.0
    %5392 = vmatpush1.msra.mxu0 0.0
    %5393 = vmatprep.subr.mxu0 0.0
    %5394 = vmatpush1.msra.mxu0 0.0
    %5395 = vmatprep.subr.mxu0 0.0
    %5396 = vmatpush1.msra.mxu0 0.0
    %5397 = vmatprep.subr.mxu0 0.0
    %5398 = vmatpush1.msra.mxu0 0.0
    %5399 = vmatprep.subr.mxu0 0.0
    %5400 = vmatpush1.msra.mxu0 0.0
    %5401 = vmatprep.subr.mxu0 0.0
    %5402 = vmatpush1.msra.mxu0 0.0
    %5403 = vmatprep.subr.mxu0 0.0
    %5404 = vmatpush1.msra.mxu0 0.0
    %5405 = vmatprep.subr.mxu0 0.0
    %5406 = vmatpush1.msra.mxu0 0.0
    %5407 = vmatprep.subr.mxu0 0.0
    %5408 = vmatpush1.msra.mxu0 0.0
    %5409 = vmatprep.subr.mxu0 0.0
    %5410 = vmatpush1.msra.mxu0 0.0
    %5411 = vmatprep.subr.mxu0 0.0
    %5412 = vmatpush1.msra.mxu0 0.0
    %5413 = vmatprep.subr.mxu0 0.0
    %5414 = vmatpush1.msra.mxu0 0.0
    %5415 = vmatprep.subr.mxu0 0.0
    %5416 = vmatpush1.msra.mxu0 0.0
    %5417 = vmatprep.subr.mxu0 0.0
    %5418 = vmatpush1.msra.mxu0 0.0
    %5419 = vmatprep.subr.mxu0 0.0
    %5420 = vmatpush1.msra.mxu0 0.0
    %5421 = vmatprep.subr.mxu0 0.0
    %5422 = vmatpush1.msra.mxu0 0.0
    %5423 = vmatprep.subr.mxu0 0.0
    %5424 = vmatpush1.msra.mxu0 0.0
    %5425 = vmatprep.subr.mxu0 0.0
    %5426 = vmatpush1.msra.mxu0 0.0
    %5427 = vmatprep.subr.mxu0 0.0
    %5428 = vmatpush1.msra.mxu0 0.0
    %5429 = vmatprep.mubr.f32.mxu0 0.0
    %5430 = vmatmul.mubr.f32.gmra.mrb[0].mxu0 %v5363
    %v5431 = vpop.f32.mrb[0].mxu0
    %v5432 = vadd.f32 0.0, %v5431
    %v5433 = vpop.f32.mrb[0].mxu0
    %5434 = vdwg.mxu0
    %5436 = vrot.lane.b32.xlu0 %v5432, 24
    %v5437 = vpop.permute.xlu0 %5436
    %5439 = vst.msk [vmem:[#allocation3] sm:$0xff] %vm3611, %v5437
    %5441 = vrot.lane.b32.xlu0 %v4758, 96
    %v5442 = vpop.permute.xlu0 %5441
    %v5443 = vsel %vm2933, %v4758, 0
    %v5445 = vsel %vm2933, %v5442, 0
    %5447 = vmatprep.subr.mxu0 0.0
    %5448 = vmatpush1.xpose.msra.mxu0 %v5445
    %5449 = vmatprep.subr.mxu0 0.0
    %5450 = vmatpush1.xpose.msra.mxu0 0.0
    %5451 = vmatprep.subr.mxu0 0.0
    %5452 = vmatpush1.xpose.msra.mxu0 0.0
    %5453 = vmatprep.subr.mxu0 0.0
    %5454 = vmatpush1.xpose.msra.mxu0 0.0
    %5455 = vmatprep.subr.mxu0 0.0
    %5456 = vmatpush1.xpose.msra.mxu0 0.0
    %5457 = vmatprep.subr.mxu0 0.0
    %5458 = vmatpush1.xpose.msra.mxu0 0.0
    %5459 = vmatprep.subr.mxu0 0.0
    %5460 = vmatpush1.xpose.msra.mxu0 0.0
    %5461 = vmatprep.subr.mxu0 0.0
    %5462 = vmatpush1.xpose.msra.mxu0 0.0
    %5463 = vmatprep.subr.mxu0 0.0
    %5464 = vmatpush1.xpose.msra.mxu0 0.0
    %5465 = vmatprep.subr.mxu0 0.0
    %5466 = vmatpush1.xpose.msra.mxu0 0.0
    %5467 = vmatprep.subr.mxu0 0.0
    %5468 = vmatpush1.xpose.msra.mxu0 0.0
    %5469 = vmatprep.subr.mxu0 0.0
    %5470 = vmatpush1.xpose.msra.mxu0 0.0
    %5471 = vmatprep.subr.mxu0 0.0
    %5472 = vmatpush1.xpose.msra.mxu0 0.0
    %5473 = vmatprep.subr.mxu0 0.0
    %5474 = vmatpush1.xpose.msra.mxu0 0.0
    %5475 = vmatprep.subr.mxu0 0.0
    %5476 = vmatpush1.xpose.msra.mxu0 0.0
    %5477 = vmatprep.subr.mxu0 0.0
    %5478 = vmatpush1.xpose.msra.mxu0 0.0
    %5479 = vmatprep.subr.mxu0 0.0
    %5480 = vmatpush1.xpose.msra.mxu0 0.0
    %5481 = vmatprep.subr.mxu0 0.0
    %5482 = vmatpush1.xpose.msra.mxu0 0.0
    %5483 = vmatprep.subr.mxu0 0.0
    %5484 = vmatpush1.xpose.msra.mxu0 0.0
    %5485 = vmatprep.subr.mxu0 0.0
    %5486 = vmatpush1.xpose.msra.mxu0 0.0
    %5487 = vmatprep.subr.mxu0 0.0
    %5488 = vmatpush1.xpose.msra.mxu0 0.0
    %5489 = vmatprep.subr.mxu0 0.0
    %5490 = vmatpush1.xpose.msra.mxu0 0.0
    %5491 = vmatprep.subr.mxu0 0.0
    %5492 = vmatpush1.xpose.msra.mxu0 0.0
    %5493 = vmatprep.subr.mxu0 0.0
    %5494 = vmatpush1.xpose.msra.mxu0 0.0
    %5495 = vmatprep.subr.mxu0 0.0
    %5496 = vmatpush1.xpose.msra.mxu0 0.0
    %5497 = vmatprep.subr.mxu0 0.0
    %5498 = vmatpush1.xpose.msra.mxu0 0.0
    %5499 = vmatprep.subr.mxu0 0.0
    %5500 = vmatpush1.xpose.msra.mxu0 0.0
    %5501 = vmatprep.subr.mxu0 0.0
    %5502 = vmatpush1.xpose.msra.mxu0 0.0
    %5503 = vmatprep.subr.mxu0 0.0
    %5504 = vmatpush1.xpose.msra.mxu0 0.0
    %5505 = vmatprep.subr.mxu0 0.0
    %5506 = vmatpush1.xpose.msra.mxu0 0.0
    %5507 = vmatprep.subr.mxu0 0.0
    %5508 = vmatpush1.xpose.msra.mxu0 0.0
    %5509 = vmatprep.subr.mxu0 0.0
    %5510 = vmatpush1.xpose.msra.mxu0 0.0
    %5511 = vmatprep.mubr.f32.mxu0 0.0
    %5512 = vmatmul.mubr.f32.gmra.mrb[0].mxu0 %v5443
    %v5513 = vpop.f32.mrb[0].mxu0
    %v5514 = vadd.f32 0.0, %v5513
    %v5515 = vpop.f32.mrb[0].mxu0
    %5516 = vdwg.mxu0
    %v5517 = vmul.f32 %v5514, 0.35355338
    %v5518 = vsel %vm2933, %v5517, -inf
    %5519 = vmax.xlane.f32.xlu0 %v5518
    %v5520 = vpop.xlane.xlu0 %5519
    %v5521 = vsub.f32 %v5517, %v5520
    %v5522 = vmul.f32 %v5521, 1.442695
    %v5523 = vpow.pop %v5522
    %v5524 = vsel %vm2933, %v5523, 0.0
    %5525 = vadd.xlane.f32.xlu0 %v5524
    %v5526 = vpop.xlane.xlu0 %5525
    %v5527 = vrcp.pop %v5526
    %v5528 = vmul.f32 %v5523, %v5527
    %5529 = vrot.lane.b32.xlu0 %v4758, 64
    %v5530 = vpop.permute.xlu0 %5529
    %v5533 = vsel %vm2933, %v5528, 0
    %5535 = vmatprep.subr.mxu0 0.0
    %5536 = vmatpush1.msra.mxu0 %v5530
    %5537 = vmatprep.subr.mxu0 0.0
    %5538 = vmatpush1.msra.mxu0 0.0
    %5539 = vmatprep.subr.mxu0 0.0
    %5540 = vmatpush1.msra.mxu0 0.0
    %5541 = vmatprep.subr.mxu0 0.0
    %5542 = vmatpush1.msra.mxu0 0.0
    %5543 = vmatprep.subr.mxu0 0.0
    %5544 = vmatpush1.msra.mxu0 0.0
    %5545 = vmatprep.subr.mxu0 0.0
    %5546 = vmatpush1.msra.mxu0 0.0
    %5547 = vmatprep.subr.mxu0 0.0
    %5548 = vmatpush1.msra.mxu0 0.0
    %5549 = vmatprep.subr.mxu0 0.0
    %5550 = vmatpush1.msra.mxu0 0.0
    %5551 = vmatprep.subr.mxu0 0.0
    %5552 = vmatpush1.msra.mxu0 0.0
    %5553 = vmatprep.subr.mxu0 0.0
    %5554 = vmatpush1.msra.mxu0 0.0
    %5555 = vmatprep.subr.mxu0 0.0
    %5556 = vmatpush1.msra.mxu0 0.0
    %5557 = vmatprep.subr.mxu0 0.0
    %5558 = vmatpush1.msra.mxu0 0.0
    %5559 = vmatprep.subr.mxu0 0.0
    %5560 = vmatpush1.msra.mxu0 0.0
    %5561 = vmatprep.subr.mxu0 0.0
    %5562 = vmatpush1.msra.mxu0 0.0
    %5563 = vmatprep.subr.mxu0 0.0
    %5564 = vmatpush1.msra.mxu0 0.0
    %5565 = vmatprep.subr.mxu0 0.0
    %5566 = vmatpush1.msra.mxu0 0.0
    %5567 = vmatprep.subr.mxu0 0.0
    %5568 = vmatpush1.msra.mxu0 0.0
    %5569 = vmatprep.subr.mxu0 0.0
    %5570 = vmatpush1.msra.mxu0 0.0
    %5571 = vmatprep.subr.mxu0 0.0
    %5572 = vmatpush1.msra.mxu0 0.0
    %5573 = vmatprep.subr.mxu0 0.0
    %5574 = vmatpush1.msra.mxu0 0.0
    %5575 = vmatprep.subr.mxu0 0.0
    %5576 = vmatpush1.msra.mxu0 0.0
    %5577 = vmatprep.subr.mxu0 0.0
    %5578 = vmatpush1.msra.mxu0 0.0
    %5579 = vmatprep.subr.mxu0 0.0
    %5580 = vmatpush1.msra.mxu0 0.0
    %5581 = vmatprep.subr.mxu0 0.0
    %5582 = vmatpush1.msra.mxu0 0.0
    %5583 = vmatprep.subr.mxu0 0.0
    %5584 = vmatpush1.msra.mxu0 0.0
    %5585 = vmatprep.subr.mxu0 0.0
    %5586 = vmatpush1.msra.mxu0 0.0
    %5587 = vmatprep.subr.mxu0 0.0
    %5588 = vmatpush1.msra.mxu0 0.0
    %5589 = vmatprep.subr.mxu0 0.0
    %5590 = vmatpush1.msra.mxu0 0.0
    %5591 = vmatprep.subr.mxu0 0.0
    %5592 = vmatpush1.msra.mxu0 0.0
    %5593 = vmatprep.subr.mxu0 0.0
    %5594 = vmatpush1.msra.mxu0 0.0
    %5595 = vmatprep.subr.mxu0 0.0
    %5596 = vmatpush1.msra.mxu0 0.0
    %5597 = vmatprep.subr.mxu0 0.0
    %5598 = vmatpush1.msra.mxu0 0.0
    %5599 = vmatprep.mubr.f32.mxu0 0.0
    %5600 = vmatmul.mubr.f32.gmra.mrb[0].mxu0 %v5533
    %v5601 = vpop.f32.mrb[0].mxu0
    %v5602 = vadd.f32 0.0, %v5601
    %v5603 = vpop.f32.mrb[0].mxu0
    %5604 = vdwg.mxu0
    %5605 = vst.msk [vmem:[#allocation3 + $0x8] sm:$0xff] %vm2933, %v5602
    %5606 = vrot.lane.b32.xlu0 %v4758, 120
    %v5607 = vpop.permute.xlu0 %5606
    %5608 = vrot.lane.b32.xlu0 %v4758, 88
    %v5609 = vpop.permute.xlu0 %5608
    %v5610 = vsel %vm2933, %v5607, 0
    %v5612 = vsel %vm2933, %v5609, 0
    %5614 = vmatprep.subr.mxu0 0.0
    %5615 = vmatpush1.xpose.msra.mxu0 %v5612
    %5616 = vmatprep.subr.mxu0 0.0
    %5617 = vmatpush1.xpose.msra.mxu0 0.0
    %5618 = vmatprep.subr.mxu0 0.0
    %5619 = vmatpush1.xpose.msra.mxu0 0.0
    %5620 = vmatprep.subr.mxu0 0.0
    %5621 = vmatpush1.xpose.msra.mxu0 0.0
    %5622 = vmatprep.subr.mxu0 0.0
    %5623 = vmatpush1.xpose.msra.mxu0 0.0
    %5624 = vmatprep.subr.mxu0 0.0
    %5625 = vmatpush1.xpose.msra.mxu0 0.0
    %5626 = vmatprep.subr.mxu0 0.0
    %5627 = vmatpush1.xpose.msra.mxu0 0.0
    %5628 = vmatprep.subr.mxu0 0.0
    %5629 = vmatpush1.xpose.msra.mxu0 0.0
    %5630 = vmatprep.subr.mxu0 0.0
    %5631 = vmatpush1.xpose.msra.mxu0 0.0
    %5632 = vmatprep.subr.mxu0 0.0
    %5633 = vmatpush1.xpose.msra.mxu0 0.0
    %5634 = vmatprep.subr.mxu0 0.0
    %5635 = vmatpush1.xpose.msra.mxu0 0.0
    %5636 = vmatprep.subr.mxu0 0.0
    %5637 = vmatpush1.xpose.msra.mxu0 0.0
    %5638 = vmatprep.subr.mxu0 0.0
    %5639 = vmatpush1.xpose.msra.mxu0 0.0
    %5640 = vmatprep.subr.mxu0 0.0
    %5641 = vmatpush1.xpose.msra.mxu0 0.0
    %5642 = vmatprep.subr.mxu0 0.0
    %5643 = vmatpush1.xpose.msra.mxu0 0.0
    %5644 = vmatprep.subr.mxu0 0.0
    %5645 = vmatpush1.xpose.msra.mxu0 0.0
    %5646 = vmatprep.subr.mxu0 0.0
    %5647 = vmatpush1.xpose.msra.mxu0 0.0
    %5648 = vmatprep.subr.mxu0 0.0
    %5649 = vmatpush1.xpose.msra.mxu0 0.0
    %5650 = vmatprep.subr.mxu0 0.0
    %5651 = vmatpush1.xpose.msra.mxu0 0.0
    %5652 = vmatprep.subr.mxu0 0.0
    %5653 = vmatpush1.xpose.msra.mxu0 0.0
    %5654 = vmatprep.subr.mxu0 0.0
    %5655 = vmatpush1.xpose.msra.mxu0 0.0
    %5656 = vmatprep.subr.mxu0 0.0
    %5657 = vmatpush1.xpose.msra.mxu0 0.0
    %5658 = vmatprep.subr.mxu0 0.0
    %5659 = vmatpush1.xpose.msra.mxu0 0.0
    %5660 = vmatprep.subr.mxu0 0.0
    %5661 = vmatpush1.xpose.msra.mxu0 0.0
    %5662 = vmatprep.subr.mxu0 0.0
    %5663 = vmatpush1.xpose.msra.mxu0 0.0
    %5664 = vmatprep.subr.mxu0 0.0
    %5665 = vmatpush1.xpose.msra.mxu0 0.0
    %5666 = vmatprep.subr.mxu0 0.0
    %5667 = vmatpush1.xpose.msra.mxu0 0.0
    %5668 = vmatprep.subr.mxu0 0.0
    %5669 = vmatpush1.xpose.msra.mxu0 0.0
    %5670 = vmatprep.subr.mxu0 0.0
    %5671 = vmatpush1.xpose.msra.mxu0 0.0
    %5672 = vmatprep.subr.mxu0 0.0
    %5673 = vmatpush1.xpose.msra.mxu0 0.0
    %5674 = vmatprep.subr.mxu0 0.0
    %5675 = vmatpush1.xpose.msra.mxu0 0.0
    %5676 = vmatprep.subr.mxu0 0.0
    %5677 = vmatpush1.xpose.msra.mxu0 0.0
    %5678 = vmatprep.mubr.f32.mxu0 0.0
    %5679 = vmatmul.mubr.f32.gmra.mrb[0].mxu0 %v5610
    %v5680 = vpop.f32.mrb[0].mxu0
    %v5681 = vadd.f32 0.0, %v5680
    %v5682 = vpop.f32.mrb[0].mxu0
    %5683 = vdwg.mxu0
    %v5684 = vmul.f32 %v5681, 0.35355338
    %v5685 = vsel %vm2933, %v5684, -inf
    %5686 = vmax.xlane.f32.xlu0 %v5685
    %v5687 = vpop.xlane.xlu0 %5686
    %v5688 = vsub.f32 %v5684, %v5687
    %v5689 = vmul.f32 %v5688, 1.442695
    %v5690 = vpow.pop %v5689
    %v5691 = vsel %vm2933, %v5690, 0.0
    %5692 = vadd.xlane.f32.xlu0 %v5691
    %v5693 = vpop.xlane.xlu0 %5692
    %v5694 = vrcp.pop %v5693
    %v5695 = vmul.f32 %v5690, %v5694
    %5696 = vrot.lane.b32.xlu0 %v4758, 56
    %v5697 = vpop.permute.xlu0 %5696
    %v5700 = vsel %vm2933, %v5695, 0
    %5702 = vmatprep.subr.mxu0 0.0
    %5703 = vmatpush1.msra.mxu0 %v5697
    %5704 = vmatprep.subr.mxu0 0.0
    %5705 = vmatpush1.msra.mxu0 0.0
    %5706 = vmatprep.subr.mxu0 0.0
    %5707 = vmatpush1.msra.mxu0 0.0
    %5708 = vmatprep.subr.mxu0 0.0
    %5709 = vmatpush1.msra.mxu0 0.0
    %5710 = vmatprep.subr.mxu0 0.0
    %5711 = vmatpush1.msra.mxu0 0.0
    %5712 = vmatprep.subr.mxu0 0.0
    %5713 = vmatpush1.msra.mxu0 0.0
    %5714 = vmatprep.subr.mxu0 0.0
    %5715 = vmatpush1.msra.mxu0 0.0
    %5716 = vmatprep.subr.mxu0 0.0
    %5717 = vmatpush1.msra.mxu0 0.0
    %5718 = vmatprep.subr.mxu0 0.0
    %5719 = vmatpush1.msra.mxu0 0.0
    %5720 = vmatprep.subr.mxu0 0.0
    %5721 = vmatpush1.msra.mxu0 0.0
    %5722 = vmatprep.subr.mxu0 0.0
    %5723 = vmatpush1.msra.mxu0 0.0
    %5724 = vmatprep.subr.mxu0 0.0
    %5725 = vmatpush1.msra.mxu0 0.0
    %5726 = vmatprep.subr.mxu0 0.0
    %5727 = vmatpush1.msra.mxu0 0.0
    %5728 = vmatprep.subr.mxu0 0.0
    %5729 = vmatpush1.msra.mxu0 0.0
    %5730 = vmatprep.subr.mxu0 0.0
    %5731 = vmatpush1.msra.mxu0 0.0
    %5732 = vmatprep.subr.mxu0 0.0
    %5733 = vmatpush1.msra.mxu0 0.0
    %5734 = vmatprep.subr.mxu0 0.0
    %5735 = vmatpush1.msra.mxu0 0.0
    %5736 = vmatprep.subr.mxu0 0.0
    %5737 = vmatpush1.msra.mxu0 0.0
    %5738 = vmatprep.subr.mxu0 0.0
    %5739 = vmatpush1.msra.mxu0 0.0
    %5740 = vmatprep.subr.mxu0 0.0
    %5741 = vmatpush1.msra.mxu0 0.0
    %5742 = vmatprep.subr.mxu0 0.0
    %5743 = vmatpush1.msra.mxu0 0.0
    %5744 = vmatprep.subr.mxu0 0.0
    %5745 = vmatpush1.msra.mxu0 0.0
    %5746 = vmatprep.subr.mxu0 0.0
    %5747 = vmatpush1.msra.mxu0 0.0
    %5748 = vmatprep.subr.mxu0 0.0
    %5749 = vmatpush1.msra.mxu0 0.0
    %5750 = vmatprep.subr.mxu0 0.0
    %5751 = vmatpush1.msra.mxu0 0.0
    %5752 = vmatprep.subr.mxu0 0.0
    %5753 = vmatpush1.msra.mxu0 0.0
    %5754 = vmatprep.subr.mxu0 0.0
    %5755 = vmatpush1.msra.mxu0 0.0
    %5756 = vmatprep.subr.mxu0 0.0
    %5757 = vmatpush1.msra.mxu0 0.0
    %5758 = vmatprep.subr.mxu0 0.0
    %5759 = vmatpush1.msra.mxu0 0.0
    %5760 = vmatprep.subr.mxu0 0.0
    %5761 = vmatpush1.msra.mxu0 0.0
    %5762 = vmatprep.subr.mxu0 0.0
    %5763 = vmatpush1.msra.mxu0 0.0
    %5764 = vmatprep.subr.mxu0 0.0
    %5765 = vmatpush1.msra.mxu0 0.0
    %5766 = vmatprep.mubr.f32.mxu0 0.0
    %5767 = vmatmul.mubr.f32.gmra.mrb[0].mxu0 %v5700
    %v5768 = vpop.f32.mrb[0].mxu0
    %v5769 = vadd.f32 0.0, %v5768
    %v5770 = vpop.f32.mrb[0].mxu0
    %5771 = vdwg.mxu0
    %5773 = vrot.lane.b32.xlu0 %v5769, 8
    %v5774 = vpop.permute.xlu0 %5773
    %5776 = vst.msk [vmem:[#allocation3 + $0x8] sm:$0xff] %vm3267, %v5774
    %5777 = vrot.lane.b32.xlu0 %v4758, 112
    %v5778 = vpop.permute.xlu0 %5777
    %5779 = vrot.lane.b32.xlu0 %v4758, 80
    %v5780 = vpop.permute.xlu0 %5779
    %v5781 = vsel %vm2933, %v5778, 0
    %v5783 = vsel %vm2933, %v5780, 0
    %5785 = vmatprep.subr.mxu0 0.0
    %5786 = vmatpush1.xpose.msra.mxu0 %v5783
    %5787 = vmatprep.subr.mxu0 0.0
    %5788 = vmatpush1.xpose.msra.mxu0 0.0
    %5789 = vmatprep.subr.mxu0 0.0
    %5790 = vmatpush1.xpose.msra.mxu0 0.0
    %5791 = vmatprep.subr.mxu0 0.0
    %5792 = vmatpush1.xpose.msra.mxu0 0.0
    %5793 = vmatprep.subr.mxu0 0.0
    %5794 = vmatpush1.xpose.msra.mxu0 0.0
    %5795 = vmatprep.subr.mxu0 0.0
    %5796 = vmatpush1.xpose.msra.mxu0 0.0
    %5797 = vmatprep.subr.mxu0 0.0
    %5798 = vmatpush1.xpose.msra.mxu0 0.0
    %5799 = vmatprep.subr.mxu0 0.0
    %5800 = vmatpush1.xpose.msra.mxu0 0.0
    %5801 = vmatprep.subr.mxu0 0.0
    %5802 = vmatpush1.xpose.msra.mxu0 0.0
    %5803 = vmatprep.subr.mxu0 0.0
    %5804 = vmatpush1.xpose.msra.mxu0 0.0
    %5805 = vmatprep.subr.mxu0 0.0
    %5806 = vmatpush1.xpose.msra.mxu0 0.0
    %5807 = vmatprep.subr.mxu0 0.0
    %5808 = vmatpush1.xpose.msra.mxu0 0.0
    %5809 = vmatprep.subr.mxu0 0.0
    %5810 = vmatpush1.xpose.msra.mxu0 0.0
    %5811 = vmatprep.subr.mxu0 0.0
    %5812 = vmatpush1.xpose.msra.mxu0 0.0
    %5813 = vmatprep.subr.mxu0 0.0
    %5814 = vmatpush1.xpose.msra.mxu0 0.0
    %5815 = vmatprep.subr.mxu0 0.0
    %5816 = vmatpush1.xpose.msra.mxu0 0.0
    %5817 = vmatprep.subr.mxu0 0.0
    %5818 = vmatpush1.xpose.msra.mxu0 0.0
    %5819 = vmatprep.subr.mxu0 0.0
    %5820 = vmatpush1.xpose.msra.mxu0 0.0
    %5821 = vmatprep.subr.mxu0 0.0
    %5822 = vmatpush1.xpose.msra.mxu0 0.0
    %5823 = vmatprep.subr.mxu0 0.0
    %5824 = vmatpush1.xpose.msra.mxu0 0.0
    %5825 = vmatprep.subr.mxu0 0.0
    %5826 = vmatpush1.xpose.msra.mxu0 0.0
    %5827 = vmatprep.subr.mxu0 0.0
    %5828 = vmatpush1.xpose.msra.mxu0 0.0
    %5829 = vmatprep.subr.mxu0 0.0
    %5830 = vmatpush1.xpose.msra.mxu0 0.0
    %5831 = vmatprep.subr.mxu0 0.0
    %5832 = vmatpush1.xpose.msra.mxu0 0.0
    %5833 = vmatprep.subr.mxu0 0.0
    %5834 = vmatpush1.xpose.msra.mxu0 0.0
    %5835 = vmatprep.subr.mxu0 0.0
    %5836 = vmatpush1.xpose.msra.mxu0 0.0
    %5837 = vmatprep.subr.mxu0 0.0
    %5838 = vmatpush1.xpose.msra.mxu0 0.0
    %5839 = vmatprep.subr.mxu0 0.0
    %5840 = vmatpush1.xpose.msra.mxu0 0.0
    %5841 = vmatprep.subr.mxu0 0.0
    %5842 = vmatpush1.xpose.msra.mxu0 0.0
    %5843 = vmatprep.subr.mxu0 0.0
    %5844 = vmatpush1.xpose.msra.mxu0 0.0
    %5845 = vmatprep.subr.mxu0 0.0
    %5846 = vmatpush1.xpose.msra.mxu0 0.0
    %5847 = vmatprep.subr.mxu0 0.0
    %5848 = vmatpush1.xpose.msra.mxu0 0.0
    %5849 = vmatprep.mubr.f32.mxu0 0.0
    %5850 = vmatmul.mubr.f32.gmra.mrb[0].mxu0 %v5781
    %v5851 = vpop.f32.mrb[0].mxu0
    %v5852 = vadd.f32 0.0, %v5851
    %v5853 = vpop.f32.mrb[0].mxu0
    %5854 = vdwg.mxu0
    %v5855 = vmul.f32 %v5852, 0.35355338
    %v5856 = vsel %vm2933, %v5855, -inf
    %5857 = vmax.xlane.f32.xlu0 %v5856
    %v5858 = vpop.xlane.xlu0 %5857
    %v5859 = vsub.f32 %v5855, %v5858
    %v5860 = vmul.f32 %v5859, 1.442695
    %v5861 = vpow.pop %v5860
    %v5862 = vsel %vm2933, %v5861, 0.0
    %5863 = vadd.xlane.f32.xlu0 %v5862
    %v5864 = vpop.xlane.xlu0 %5863
    %v5865 = vrcp.pop %v5864
    %v5866 = vmul.f32 %v5861, %v5865
    %5867 = vrot.lane.b32.xlu0 %v4758, 48
    %v5868 = vpop.permute.xlu0 %5867
    %v5871 = vsel %vm2933, %v5866, 0
    %5873 = vmatprep.subr.mxu0 0.0
    %5874 = vmatpush1.msra.mxu0 %v5868
    %5875 = vmatprep.subr.mxu0 0.0
    %5876 = vmatpush1.msra.mxu0 0.0
    %5877 = vmatprep.subr.mxu0 0.0
    %5878 = vmatpush1.msra.mxu0 0.0
    %5879 = vmatprep.subr.mxu0 0.0
    %5880 = vmatpush1.msra.mxu0 0.0
    %5881 = vmatprep.subr.mxu0 0.0
    %5882 = vmatpush1.msra.mxu0 0.0
    %5883 = vmatprep.subr.mxu0 0.0
    %5884 = vmatpush1.msra.mxu0 0.0
    %5885 = vmatprep.subr.mxu0 0.0
    %5886 = vmatpush1.msra.mxu0 0.0
    %5887 = vmatprep.subr.mxu0 0.0
    %5888 = vmatpush1.msra.mxu0 0.0
    %5889 = vmatprep.subr.mxu0 0.0
    %5890 = vmatpush1.msra.mxu0 0.0
    %5891 = vmatprep.subr.mxu0 0.0
    %5892 = vmatpush1.msra.mxu0 0.0
    %5893 = vmatprep.subr.mxu0 0.0
    %5894 = vmatpush1.msra.mxu0 0.0
    %5895 = vmatprep.subr.mxu0 0.0
    %5896 = vmatpush1.msra.mxu0 0.0
    %5897 = vmatprep.subr.mxu0 0.0
    %5898 = vmatpush1.msra.mxu0 0.0
    %5899 = vmatprep.subr.mxu0 0.0
    %5900 = vmatpush1.msra.mxu0 0.0
    %5901 = vmatprep.subr.mxu0 0.0
    %5902 = vmatpush1.msra.mxu0 0.0
    %5903 = vmatprep.subr.mxu0 0.0
    %5904 = vmatpush1.msra.mxu0 0.0
    %5905 = vmatprep.subr.mxu0 0.0
    %5906 = vmatpush1.msra.mxu0 0.0
    %5907 = vmatprep.subr.mxu0 0.0
    %5908 = vmatpush1.msra.mxu0 0.0
    %5909 = vmatprep.subr.mxu0 0.0
    %5910 = vmatpush1.msra.mxu0 0.0
    %5911 = vmatprep.subr.mxu0 0.0
    %5912 = vmatpush1.msra.mxu0 0.0
    %5913 = vmatprep.subr.mxu0 0.0
    %5914 = vmatpush1.msra.mxu0 0.0
    %5915 = vmatprep.subr.mxu0 0.0
    %5916 = vmatpush1.msra.mxu0 0.0
    %5917 = vmatprep.subr.mxu0 0.0
    %5918 = vmatpush1.msra.mxu0 0.0
    %5919 = vmatprep.subr.mxu0 0.0
    %5920 = vmatpush1.msra.mxu0 0.0
    %5921 = vmatprep.subr.mxu0 0.0
    %5922 = vmatpush1.msra.mxu0 0.0
    %5923 = vmatprep.subr.mxu0 0.0
    %5924 = vmatpush1.msra.mxu0 0.0
    %5925 = vmatprep.subr.mxu0 0.0
    %5926 = vmatpush1.msra.mxu0 0.0
    %5927 = vmatprep.subr.mxu0 0.0
    %5928 = vmatpush1.msra.mxu0 0.0
    %5929 = vmatprep.subr.mxu0 0.0
    %5930 = vmatpush1.msra.mxu0 0.0
    %5931 = vmatprep.subr.mxu0 0.0
    %5932 = vmatpush1.msra.mxu0 0.0
    %5933 = vmatprep.subr.mxu0 0.0
    %5934 = vmatpush1.msra.mxu0 0.0
    %5935 = vmatprep.subr.mxu0 0.0
    %5936 = vmatpush1.msra.mxu0 0.0
    %5937 = vmatprep.mubr.f32.mxu0 0.0
    %5938 = vmatmul.mubr.f32.gmra.mrb[0].mxu0 %v5871
    %v5939 = vpop.f32.mrb[0].mxu0
    %v5940 = vadd.f32 0.0, %v5939
    %v5941 = vpop.f32.mrb[0].mxu0
    %5942 = vdwg.mxu0
    %5944 = vrot.lane.b32.xlu0 %v5940, 16
    %v5945 = vpop.permute.xlu0 %5944
    %5947 = vst.msk [vmem:[#allocation3 + $0x8] sm:$0xff] %vm3439, %v5945
    %5948 = vrot.lane.b32.xlu0 %v4758, 104
    %v5949 = vpop.permute.xlu0 %5948
    %5950 = vrot.lane.b32.xlu0 %v4758, 72
    %v5951 = vpop.permute.xlu0 %5950
    %v5952 = vsel %vm2933, %v5949, 0
    %v5954 = vsel %vm2933, %v5951, 0
    %5956 = vmatprep.subr.mxu0 0.0
    %5957 = vmatpush1.xpose.msra.mxu0 %v5954
    %5958 = vmatprep.subr.mxu0 0.0
    %5959 = vmatpush1.xpose.msra.mxu0 0.0
    %5960 = vmatprep.subr.mxu0 0.0
    %5961 = vmatpush1.xpose.msra.mxu0 0.0
    %5962 = vmatprep.subr.mxu0 0.0
    %5963 = vmatpush1.xpose.msra.mxu0 0.0
    %5964 = vmatprep.subr.mxu0 0.0
    %5965 = vmatpush1.xpose.msra.mxu0 0.0
    %5966 = vmatprep.subr.mxu0 0.0
    %5967 = vmatpush1.xpose.msra.mxu0 0.0
    %5968 = vmatprep.subr.mxu0 0.0
    %5969 = vmatpush1.xpose.msra.mxu0 0.0
    %5970 = vmatprep.subr.mxu0 0.0
    %5971 = vmatpush1.xpose.msra.mxu0 0.0
    %5972 = vmatprep.subr.mxu0 0.0
    %5973 = vmatpush1.xpose.msra.mxu0 0.0
    %5974 = vmatprep.subr.mxu0 0.0
    %5975 = vmatpush1.xpose.msra.mxu0 0.0
    %5976 = vmatprep.subr.mxu0 0.0
    %5977 = vmatpush1.xpose.msra.mxu0 0.0
    %5978 = vmatprep.subr.mxu0 0.0
    %5979 = vmatpush1.xpose.msra.mxu0 0.0
    %5980 = vmatprep.subr.mxu0 0.0
    %5981 = vmatpush1.xpose.msra.mxu0 0.0
    %5982 = vmatprep.subr.mxu0 0.0
    %5983 = vmatpush1.xpose.msra.mxu0 0.0
    %5984 = vmatprep.subr.mxu0 0.0
    %5985 = vmatpush1.xpose.msra.mxu0 0.0
    %5986 = vmatprep.subr.mxu0 0.0
    %5987 = vmatpush1.xpose.msra.mxu0 0.0
    %5988 = vmatprep.subr.mxu0 0.0
    %5989 = vmatpush1.xpose.msra.mxu0 0.0
    %5990 = vmatprep.subr.mxu0 0.0
    %5991 = vmatpush1.xpose.msra.mxu0 0.0
    %5992 = vmatprep.subr.mxu0 0.0
    %5993 = vmatpush1.xpose.msra.mxu0 0.0
    %5994 = vmatprep.subr.mxu0 0.0
    %5995 = vmatpush1.xpose.msra.mxu0 0.0
    %5996 = vmatprep.subr.mxu0 0.0
    %5997 = vmatpush1.xpose.msra.mxu0 0.0
    %5998 = vmatprep.subr.mxu0 0.0
    %5999 = vmatpush1.xpose.msra.mxu0 0.0
    %6000 = vmatprep.subr.mxu0 0.0
    %6001 = vmatpush1.xpose.msra.mxu0 0.0
    %6002 = vmatprep.subr.mxu0 0.0
    %6003 = vmatpush1.xpose.msra.mxu0 0.0
    %6004 = vmatprep.subr.mxu0 0.0
    %6005 = vmatpush1.xpose.msra.mxu0 0.0
    %6006 = vmatprep.subr.mxu0 0.0
    %6007 = vmatpush1.xpose.msra.mxu0 0.0
    %6008 = vmatprep.subr.mxu0 0.0
    %6009 = vmatpush1.xpose.msra.mxu0 0.0
    %6010 = vmatprep.subr.mxu0 0.0
    %6011 = vmatpush1.xpose.msra.mxu0 0.0
    %6012 = vmatprep.subr.mxu0 0.0
    %6013 = vmatpush1.xpose.msra.mxu0 0.0
    %6014 = vmatprep.subr.mxu0 0.0
    %6015 = vmatpush1.xpose.msra.mxu0 0.0
    %6016 = vmatprep.subr.mxu0 0.0
    %6017 = vmatpush1.xpose.msra.mxu0 0.0
    %6018 = vmatprep.subr.mxu0 0.0
    %6019 = vmatpush1.xpose.msra.mxu0 0.0
    %6020 = vmatprep.mubr.f32.mxu0 0.0
    %6021 = vmatmul.mubr.f32.gmra.mrb[0].mxu0 %v5952
    %v6022 = vpop.f32.mrb[0].mxu0
    %v6023 = vadd.f32 0.0, %v6022
    %v6024 = vpop.f32.mrb[0].mxu0
    %6025 = vdwg.mxu0
    %v6026 = vmul.f32 %v6023, 0.35355338
    %v6027 = vsel %vm2933, %v6026, -inf
    %6028 = vmax.xlane.f32.xlu0 %v6027
    %v6029 = vpop.xlane.xlu0 %6028
    %v6030 = vsub.f32 %v6026, %v6029
    %v6031 = vmul.f32 %v6030, 1.442695
    %v6032 = vpow.pop %v6031
    %v6033 = vsel %vm2933, %v6032, 0.0
    %6034 = vadd.xlane.f32.xlu0 %v6033
    %v6035 = vpop.xlane.xlu0 %6034
    %v6036 = vrcp.pop %v6035
    %v6037 = vmul.f32 %v6032, %v6036
    %6038 = vrot.lane.b32.xlu0 %v4758, 40
    %v6039 = vpop.permute.xlu0 %6038
    %v6042 = vsel %vm2933, %v6037, 0
    %6044 = vmatprep.subr.mxu0 0.0
    %6045 = vmatpush1.msra.mxu0 %v6039
    %6046 = vmatprep.subr.mxu0 0.0
    %6047 = vmatpush1.msra.mxu0 0.0
    %6048 = vmatprep.subr.mxu0 0.0
    %6049 = vmatpush1.msra.mxu0 0.0
    %6050 = vmatprep.subr.mxu0 0.0
    %6051 = vmatpush1.msra.mxu0 0.0
    %6052 = vmatprep.subr.mxu0 0.0
    %6053 = vmatpush1.msra.mxu0 0.0
    %6054 = vmatprep.subr.mxu0 0.0
    %6055 = vmatpush1.msra.mxu0 0.0
    %6056 = vmatprep.subr.mxu0 0.0
    %6057 = vmatpush1.msra.mxu0 0.0
    %6058 = vmatprep.subr.mxu0 0.0
    %6059 = vmatpush1.msra.mxu0 0.0
    %6060 = vmatprep.subr.mxu0 0.0
    %6061 = vmatpush1.msra.mxu0 0.0
    %6062 = vmatprep.subr.mxu0 0.0
    %6063 = vmatpush1.msra.mxu0 0.0
    %6064 = vmatprep.subr.mxu0 0.0
    %6065 = vmatpush1.msra.mxu0 0.0
    %6066 = vmatprep.subr.mxu0 0.0
    %6067 = vmatpush1.msra.mxu0 0.0
    %6068 = vmatprep.subr.mxu0 0.0
    %6069 = vmatpush1.msra.mxu0 0.0
    %6070 = vmatprep.subr.mxu0 0.0
    %6071 = vmatpush1.msra.mxu0 0.0
    %6072 = vmatprep.subr.mxu0 0.0
    %6073 = vmatpush1.msra.mxu0 0.0
    %6074 = vmatprep.subr.mxu0 0.0
    %6075 = vmatpush1.msra.mxu0 0.0
    %6076 = vmatprep.subr.mxu0 0.0
    %6077 = vmatpush1.msra.mxu0 0.0
    %6078 = vmatprep.subr.mxu0 0.0
    %6079 = vmatpush1.msra.mxu0 0.0
    %6080 = vmatprep.subr.mxu0 0.0
    %6081 = vmatpush1.msra.mxu0 0.0
    %6082 = vmatprep.subr.mxu0 0.0
    %6083 = vmatpush1.msra.mxu0 0.0
    %6084 = vmatprep.subr.mxu0 0.0
    %6085 = vmatpush1.msra.mxu0 0.0
    %6086 = vmatprep.subr.mxu0 0.0
    %6087 = vmatpush1.msra.mxu0 0.0
    %6088 = vmatprep.subr.mxu0 0.0
    %6089 = vmatpush1.msra.mxu0 0.0
    %6090 = vmatprep.subr.mxu0 0.0
    %6091 = vmatpush1.msra.mxu0 0.0
    %6092 = vmatprep.subr.mxu0 0.0
    %6093 = vmatpush1.msra.mxu0 0.0
    %6094 = vmatprep.subr.mxu0 0.0
    %6095 = vmatpush1.msra.mxu0 0.0
    %6096 = vmatprep.subr.mxu0 0.0
    %6097 = vmatpush1.msra.mxu0 0.0
    %6098 = vmatprep.subr.mxu0 0.0
    %6099 = vmatpush1.msra.mxu0 0.0
    %6100 = vmatprep.subr.mxu0 0.0
    %6101 = vmatpush1.msra.mxu0 0.0
    %6102 = vmatprep.subr.mxu0 0.0
    %6103 = vmatpush1.msra.mxu0 0.0
    %6104 = vmatprep.subr.mxu0 0.0
    %6105 = vmatpush1.msra.mxu0 0.0
    %6106 = vmatprep.subr.mxu0 0.0
    %6107 = vmatpush1.msra.mxu0 0.0
    %6108 = vmatprep.mubr.f32.mxu0 0.0
    %6109 = vmatmul.mubr.f32.gmra.mrb[0].mxu0 %v6042
    %v6110 = vpop.f32.mrb[0].mxu0
    %v6111 = vadd.f32 0.0, %v6110
    %v6112 = vpop.f32.mrb[0].mxu0
    %6113 = vdwg.mxu0
    %6115 = vrot.lane.b32.xlu0 %v6111, 24
    %v6116 = vpop.permute.xlu0 %6115
    %6118 = vst.msk [vmem:[#allocation3 + $0x8] sm:$0xff] %vm3611, %v6116
    %v6119 = vld [vmem:[#allocation3] sm:$0xff]
    %v6120 = vld [vmem:[#allocation3 + $0x8] sm:$0xff]
    %v6121 = vld [vmem:[#allocation39] sm:$0xff]
    %v6122 = vld [vmem:[#allocation39 + $0x8] sm:$0xff]
    %v6123 = vld [vmem:[#allocation39 + $0x10] sm:$0xff]
    %v6124 = vld [vmem:[#allocation39 + $0x18] sm:$0xff]
    %v6125 = vld [vmem:[#allocation30] sm:$0x1]
    %v6127 = vlaneseq
    %v6128 = vshrl.u32 %v6127, 7
    %v6129 = vsub.s32 0, %v6128
    %v6130 = vrot.slane %v6125, %v6129
    %v6133 = vsel %vm571, %v6119, 0
    %v6136 = vsel %vm571, %v6120, 0
    %6138 = vmatprep.subr.mxu0 0.0
    %6139 = vmatpush1.msra.mxu0 %v6121
    %6140 = vmatprep.subr.mxu0 0.0
    %6141 = vmatpush1.msra.mxu0 %v6122
    %6142 = vmatprep.subr.mxu0 0.0
    %6143 = vmatpush1.msra.mxu0 %v6123
    %6144 = vmatprep.subr.mxu0 0.0
    %6145 = vmatpush1.msra.mxu0 %v6124
    %6146 = vmatprep.subr.mxu0 0.0
    %6147 = vmatpush1.msra.mxu0 0.0
    %6148 = vmatprep.subr.mxu0 0.0
    %6149 = vmatpush1.msra.mxu0 0.0
    %6150 = vmatprep.subr.mxu0 0.0
    %6151 = vmatpush1.msra.mxu0 0.0
    %6152 = vmatprep.subr.mxu0 0.0
    %6153 = vmatpush1.msra.mxu0 0.0
    %6154 = vmatprep.subr.mxu0 0.0
    %6155 = vmatpush1.msra.mxu0 0.0
    %6156 = vmatprep.subr.mxu0 0.0
    %6157 = vmatpush1.msra.mxu0 0.0
    %6158 = vmatprep.subr.mxu0 0.0
    %6159 = vmatpush1.msra.mxu0 0.0
    %6160 = vmatprep.subr.mxu0 0.0
    %6161 = vmatpush1.msra.mxu0 0.0
    %6162 = vmatprep.subr.mxu0 0.0
    %6163 = vmatpush1.msra.mxu0 0.0
    %6164 = vmatprep.subr.mxu0 0.0
    %6165 = vmatpush1.msra.mxu0 0.0
    %6166 = vmatprep.subr.mxu0 0.0
    %6167 = vmatpush1.msra.mxu0 0.0
    %6168 = vmatprep.subr.mxu0 0.0
    %6169 = vmatpush1.msra.mxu0 0.0
    %6170 = vmatprep.subr.mxu0 0.0
    %6171 = vmatpush1.msra.mxu0 0.0
    %6172 = vmatprep.subr.mxu0 0.0
    %6173 = vmatpush1.msra.mxu0 0.0
    %6174 = vmatprep.subr.mxu0 0.0
    %6175 = vmatpush1.msra.mxu0 0.0
    %6176 = vmatprep.subr.mxu0 0.0
    %6177 = vmatpush1.msra.mxu0 0.0
    %6178 = vmatprep.subr.mxu0 0.0
    %6179 = vmatpush1.msra.mxu0 0.0
    %6180 = vmatprep.subr.mxu0 0.0
    %6181 = vmatpush1.msra.mxu0 0.0
    %6182 = vmatprep.subr.mxu0 0.0
    %6183 = vmatpush1.msra.mxu0 0.0
    %6184 = vmatprep.subr.mxu0 0.0
    %6185 = vmatpush1.msra.mxu0 0.0
    %6186 = vmatprep.subr.mxu0 0.0
    %6187 = vmatpush1.msra.mxu0 0.0
    %6188 = vmatprep.subr.mxu0 0.0
    %6189 = vmatpush1.msra.mxu0 0.0
    %6190 = vmatprep.subr.mxu0 0.0
    %6191 = vmatpush1.msra.mxu0 0.0
    %6192 = vmatprep.subr.mxu0 0.0
    %6193 = vmatpush1.msra.mxu0 0.0
    %6194 = vmatprep.subr.mxu0 0.0
    %6195 = vmatpush1.msra.mxu0 0.0
    %6196 = vmatprep.subr.mxu0 0.0
    %6197 = vmatpush1.msra.mxu0 0.0
    %6198 = vmatprep.subr.mxu0 0.0
    %6199 = vmatpush1.msra.mxu0 0.0
    %6200 = vmatprep.subr.mxu0 0.0
    %6201 = vmatpush1.msra.mxu0 0.0
    %6202 = vmatprep.mubr.f32.mxu0 0.0
    %6203 = vmatmul.mubr.f32.gmra.mrb[0].mxu0 %v6133
    %v6204 = vpop.f32.mrb[0].mxu0
    %v6205 = vadd.f32 %v6130, %v6204
    %v6206 = vpop.f32.mrb[0].mxu0
    %6207 = vmatprep.mubr.f32.mxu0 0.0
    %6208 = vmatmul.mubr.f32.gmra.mrb[0].mxu0 %v6136
    %v6209 = vpop.f32.mrb[0].mxu0
    %v6210 = vadd.f32 %v6130, %v6209
    %v6211 = vpop.f32.mrb[0].mxu0
    %6212 = vdwg.mxu0
    %v6213 = vadd.f32 %v4623, %v6205
    %v6214 = vadd.f32 %v4624, %v6210
    %v6215 = vld [vmem:[#allocation37] sm:$0x1]
    %v6216 = vld [vmem:[#allocation36] sm:$0x1]
    %v6217 = vsel %vm571, %v6213, 0.0
    %6218 = vadd.xlane.f32.xlu0 %v6217
    %v6219 = vpop.xlane.xlu0 %6218
    %v6220 = vsel %vm571, %v6214, 0.0
    %6221 = vadd.xlane.f32.xlu0 %v6220
    %v6222 = vpop.xlane.xlu0 %6221
    %v6223 = vmul.f32 %v6219, %v2801
    %v6224 = vmul.f32 %v6222, %v2801
    %v6225 = vsub.f32 %v6213, %v6223
    %v6226 = vsub.f32 %v6214, %v6224
    %v6227 = vmul.f32 %v6225, %v6225
    %v6228 = vmul.f32 %v6226, %v6226
    %v6229 = vsel %vm571, %v6227, 0.0
    %6230 = vadd.xlane.f32.xlu0 %v6229
    %v6231 = vpop.xlane.xlu0 %6230
    %v6232 = vsel %vm571, %v6228, 0.0
    %6233 = vadd.xlane.f32.xlu0 %v6232
    %v6234 = vpop.xlane.xlu0 %6233
    %v6235 = vmul.f32 %v6231, %v2801
    %v6236 = vmul.f32 %v6234, %v2801
    %v6237 = vadd.f32 %v6235, 1e-05
    %v6238 = vadd.f32 %v6236, 1e-05
    %v6239 = vrsqrt.pop %v6237
    %v6240 = vrsqrt.pop %v6238
    %v6241 = vmul.f32 %v6225, %v6239
    %v6242 = vmul.f32 %v6226, %v6240
    %v6244 = vlaneseq
    %v6245 = vshrl.u32 %v6244, 7
    %v6246 = vsub.s32 0, %v6245
    %v6247 = vrot.slane %v6215, %v6246
    %v6249 = vmul.f32 %v6241, %v6247
    %v6250 = vmul.f32 %v6242, %v6247
    %v6252 = vlaneseq
    %v6253 = vshrl.u32 %v6252, 7
    %v6254 = vsub.s32 0, %v6253
    %v6255 = vrot.slane %v6216, %v6254
    %v6257 = vadd.f32 %v6249, %v6255
    %v6258 = vadd.f32 %v6250, %v6255
    %v6259 = vld [vmem:[%s67] sm:$0xff]
    %v6260 = vld [vmem:[%s67 + $0x8] sm:$0xff]
    %v6261 = vld [vmem:[%s67 + $0x10] sm:$0xff]
    %v6262 = vld [vmem:[%s67 + $0x18] sm:$0xff]
    %v6263 = vld [vmem:[#allocation27] sm:$0x1]
    %v6265 = vlaneseq
    %v6266 = vshrl.u32 %v6265, 7
    %v6267 = vsub.s32 0, %v6266
    %v6268 = vrot.slane %v6263, %v6267
    %v6271 = vsel %vm571, %v6257, 0
    %v6274 = vsel %vm571, %v6258, 0
    %6276 = vmatprep.subr.mxu0 0.0
    %6277 = vmatpush1.msra.mxu0 %v6259
    %6278 = vmatprep.subr.mxu0 0.0
    %6279 = vmatpush1.msra.mxu0 %v6260
    %6280 = vmatprep.subr.mxu0 0.0
    %6281 = vmatpush1.msra.mxu0 %v6261
    %6282 = vmatprep.subr.mxu0 0.0
    %6283 = vmatpush1.msra.mxu0 %v6262
    %6284 = vmatprep.subr.mxu0 0.0
    %6285 = vmatpush1.msra.mxu0 0.0
    %6286 = vmatprep.subr.mxu0 0.0
    %6287 = vmatpush1.msra.mxu0 0.0
    %6288 = vmatprep.subr.mxu0 0.0
    %6289 = vmatpush1.msra.mxu0 0.0
    %6290 = vmatprep.subr.mxu0 0.0
    %6291 = vmatpush1.msra.mxu0 0.0
    %6292 = vmatprep.subr.mxu0 0.0
    %6293 = vmatpush1.msra.mxu0 0.0
    %6294 = vmatprep.subr.mxu0 0.0
    %6295 = vmatpush1.msra.mxu0 0.0
    %6296 = vmatprep.subr.mxu0 0.0
    %6297 = vmatpush1.msra.mxu0 0.0
    %6298 = vmatprep.subr.mxu0 0.0
    %6299 = vmatpush1.msra.mxu0 0.0
    %6300 = vmatprep.subr.mxu0 0.0
    %6301 = vmatpush1.msra.mxu0 0.0
    %6302 = vmatprep.subr.mxu0 0.0
    %6303 = vmatpush1.msra.mxu0 0.0
    %6304 = vmatprep.subr.mxu0 0.0
    %6305 = vmatpush1.msra.mxu0 0.0
    %6306 = vmatprep.subr.mxu0 0.0
    %6307 = vmatpush1.msra.mxu0 0.0
    %6308 = vmatprep.subr.mxu0 0.0
    %6309 = vmatpush1.msra.mxu0 0.0
    %6310 = vmatprep.subr.mxu0 0.0
    %6311 = vmatpush1.msra.mxu0 0.0
    %6312 = vmatprep.subr.mxu0 0.0
    %6313 = vmatpush1.msra.mxu0 0.0
    %6314 = vmatprep.subr.mxu0 0.0
    %6315 = vmatpush1.msra.mxu0 0.0
    %6316 = vmatprep.subr.mxu0 0.0
    %6317 = vmatpush1.msra.mxu0 0.0
    %6318 = vmatprep.subr.mxu0 0.0
    %6319 = vmatpush1.msra.mxu0 0.0
    %6320 = vmatprep.subr.mxu0 0.0
    %6321 = vmatpush1.msra.mxu0 0.0
    %6322 = vmatprep.subr.mxu0 0.0
    %6323 = vmatpush1.msra.mxu0 0.0
    %6324 = vmatprep.subr.mxu0 0.0
    %6325 = vmatpush1.msra.mxu0 0.0
    %6326 = vmatprep.subr.mxu0 0.0
    %6327 = vmatpush1.msra.mxu0 0.0
    %6328 = vmatprep.subr.mxu0 0.0
    %6329 = vmatpush1.msra.mxu0 0.0
    %6330 = vmatprep.subr.mxu0 0.0
    %6331 = vmatpush1.msra.mxu0 0.0
    %6332 = vmatprep.subr.mxu0 0.0
    %6333 = vmatpush1.msra.mxu0 0.0
    %6334 = vmatprep.subr.mxu0 0.0
    %6335 = vmatpush1.msra.mxu0 0.0
    %6336 = vmatprep.subr.mxu0 0.0
    %6337 = vmatpush1.msra.mxu0 0.0
    %6338 = vmatprep.subr.mxu0 0.0
    %6339 = vmatpush1.msra.mxu0 0.0
    %6340 = vmatprep.mubr.f32.mxu0 0.0
    %6341 = vmatmul.mubr.f32.gmra.mrb[0].mxu0 %v6271
    %v6342 = vpop.f32.mrb[0].mxu0
    %v6343 = vadd.f32 %v6268, %v6342
    %v6344 = vpop.f32.mrb[0].mxu0
    %6345 = vmatprep.mubr.f32.mxu0 0.0
    %6346 = vmatmul.mubr.f32.gmra.mrb[0].mxu0 %v6274
    %v6347 = vpop.f32.mrb[0].mxu0
    %v6348 = vadd.f32 %v6268, %v6347
    %v6349 = vpop.f32.mrb[0].mxu0
    %6350 = vdwg.mxu0
    %v6351 = vmax.f32 %v6343, 0.0
    %v6352 = vmax.f32 %v6348, 0.0
    %v6353 = vld [vmem:[%s69] sm:$0xff]
    %v6354 = vld [vmem:[%s69 + $0x8] sm:$0xff]
    %v6355 = vld [vmem:[%s69 + $0x10] sm:$0xff]
    %v6356 = vld [vmem:[%s69 + $0x18] sm:$0xff]
    %v6357 = vld [vmem:[%s69 + $0x20] sm:$0xff]
    %v6358 = vld [vmem:[%s69 + $0x28] sm:$0xff]
    %v6359 = vld [vmem:[%s69 + $0x30] sm:$0xff]
    %v6360 = vld [vmem:[%s69 + $0x38] sm:$0xff]
    %v6361 = vld [vmem:[#allocation28] sm:$0x1]
    %v6363 = vlaneseq
    %v6364 = vshrl.u32 %v6363, 7
    %v6365 = vsub.s32 0, %v6364
    %v6366 = vrot.slane %v6361, %v6365
    %v6369 = vsel %vm4541, %v6351, 0
    %v6372 = vsel %vm4541, %v6352, 0
    %6374 = vmatprep.subr.mxu0 0.0
    %6375 = vmatpush1.msra.mxu0 %v6353
    %6376 = vmatprep.subr.mxu0 0.0
    %6377 = vmatpush1.msra.mxu0 %v6354
    %6378 = vmatprep.subr.mxu0 0.0
    %6379 = vmatpush1.msra.mxu0 %v6355
    %6380 = vmatprep.subr.mxu0 0.0
    %6381 = vmatpush1.msra.mxu0 %v6356
    %6382 = vmatprep.subr.mxu0 0.0
    %6383 = vmatpush1.msra.mxu0 %v6357
    %6384 = vmatprep.subr.mxu0 0.0
    %6385 = vmatpush1.msra.mxu0 %v6358
    %6386 = vmatprep.subr.mxu0 0.0
    %6387 = vmatpush1.msra.mxu0 %v6359
    %6388 = vmatprep.subr.mxu0 0.0
    %6389 = vmatpush1.msra.mxu0 %v6360
    %6390 = vmatprep.subr.mxu0 0.0
    %6391 = vmatpush1.msra.mxu0 0.0
    %6392 = vmatprep.subr.mxu0 0.0
    %6393 = vmatpush1.msra.mxu0 0.0
    %6394 = vmatprep.subr.mxu0 0.0
    %6395 = vmatpush1.msra.mxu0 0.0
    %6396 = vmatprep.subr.mxu0 0.0
    %6397 = vmatpush1.msra.mxu0 0.0
    %6398 = vmatprep.subr.mxu0 0.0
    %6399 = vmatpush1.msra.mxu0 0.0
    %6400 = vmatprep.subr.mxu0 0.0
    %6401 = vmatpush1.msra.mxu0 0.0
    %6402 = vmatprep.subr.mxu0 0.0
    %6403 = vmatpush1.msra.mxu0 0.0
    %6404 = vmatprep.subr.mxu0 0.0
    %6405 = vmatpush1.msra.mxu0 0.0
    %6406 = vmatprep.subr.mxu0 0.0
    %6407 = vmatpush1.msra.mxu0 0.0
    %6408 = vmatprep.subr.mxu0 0.0
    %6409 = vmatpush1.msra.mxu0 0.0
    %6410 = vmatprep.subr.mxu0 0.0
    %6411 = vmatpush1.msra.mxu0 0.0
    %6412 = vmatprep.subr.mxu0 0.0
    %6413 = vmatpush1.msra.mxu0 0.0
    %6414 = vmatprep.subr.mxu0 0.0
    %6415 = vmatpush1.msra.mxu0 0.0
    %6416 = vmatprep.subr.mxu0 0.0
    %6417 = vmatpush1.msra.mxu0 0.0
    %6418 = vmatprep.subr.mxu0 0.0
    %6419 = vmatpush1.msra.mxu0 0.0
    %6420 = vmatprep.subr.mxu0 0.0
    %6421 = vmatpush1.msra.mxu0 0.0
    %6422 = vmatprep.subr.mxu0 0.0
    %6423 = vmatpush1.msra.mxu0 0.0
    %6424 = vmatprep.subr.mxu0 0.0
    %6425 = vmatpush1.msra.mxu0 0.0
    %6426 = vmatprep.subr.mxu0 0.0
    %6427 = vmatpush1.msra.mxu0 0.0
    %6428 = vmatprep.subr.mxu0 0.0
    %6429 = vmatpush1.msra.mxu0 0.0
    %6430 = vmatprep.subr.mxu0 0.0
    %6431 = vmatpush1.msra.mxu0 0.0
    %6432 = vmatprep.subr.mxu0 0.0
    %6433 = vmatpush1.msra.mxu0 0.0
    %6434 = vmatprep.subr.mxu0 0.0
    %6435 = vmatpush1.msra.mxu0 0.0
    %6436 = vmatprep.subr.mxu0 0.0
    %6437 = vmatpush1.msra.mxu0 0.0
    %6438 = vmatprep.mubr.f32.mxu0 0.0
    %6439 = vmatmul.mubr.f32.gmra.mrb[0].mxu0 %v6369
    %v6440 = vpop.f32.mrb[0].mxu0
    %v6441 = vadd.f32 %v6366, %v6440
    %v6442 = vpop.f32.mrb[0].mxu0
    %6443 = vmatprep.mubr.f32.mxu0 0.0
    %6444 = vmatmul.mubr.f32.gmra.mrb[0].mxu0 %v6372
    %v6445 = vpop.f32.mrb[0].mxu0
    %v6446 = vadd.f32 %v6366, %v6445
    %v6447 = vpop.f32.mrb[0].mxu0
    %6448 = vdwg.mxu0
    %v6449 = vadd.f32 %v6213, %v6441
    %v6450 = vadd.f32 %v6214, %v6446
    %v6451 = vld [vmem:[%s81] sm:$0xff]
    %v6452 = vld [vmem:[%s81 + $0x8] sm:$0xf]
    %v6454 = vsel %vm2933, %v6451, 0
    %v6457 = vsel %vm2933, %v6452, 0
    %6459 = vmatprep.subr.mxu0 0.0
    %6460 = vmatpush1.msra.mxu0 %v6449
    %6461 = vmatprep.subr.mxu0 0.0
    %6462 = vmatpush1.msra.mxu0 0.0
    %6463 = vmatprep.subr.mxu0 0.0
    %6464 = vmatpush1.msra.mxu0 0.0
    %6465 = vmatprep.subr.mxu0 0.0
    %6466 = vmatpush1.msra.mxu0 0.0
    %6467 = vmatprep.subr.mxu0 0.0
    %6468 = vmatpush1.msra.mxu0 0.0
    %6469 = vmatprep.subr.mxu0 0.0
    %6470 = vmatpush1.msra.mxu0 0.0
    %6471 = vmatprep.subr.mxu0 0.0
    %6472 = vmatpush1.msra.mxu0 0.0
    %6473 = vmatprep.subr.mxu0 0.0
    %6474 = vmatpush1.msra.mxu0 0.0
    %6475 = vmatprep.subr.mxu0 0.0
    %6476 = vmatpush1.msra.mxu0 0.0
    %6477 = vmatprep.subr.mxu0 0.0
    %6478 = vmatpush1.msra.mxu0 0.0
    %6479 = vmatprep.subr.mxu0 0.0
    %6480 = vmatpush1.msra.mxu0 0.0
    %6481 = vmatprep.subr.mxu0 0.0
    %6482 = vmatpush1.msra.mxu0 0.0
    %6483 = vmatprep.subr.mxu0 0.0
    %6484 = vmatpush1.msra.mxu0 0.0
    %6485 = vmatprep.subr.mxu0 0.0
    %6486 = vmatpush1.msra.mxu0 0.0
    %6487 = vmatprep.subr.mxu0 0.0
    %6488 = vmatpush1.msra.mxu0 0.0
    %6489 = vmatprep.subr.mxu0 0.0
    %6490 = vmatpush1.msra.mxu0 0.0
    %6491 = vmatprep.subr.mxu0 0.0
    %6492 = vmatpush1.msra.mxu0 0.0
    %6493 = vmatprep.subr.mxu0 0.0
    %6494 = vmatpush1.msra.mxu0 0.0
    %6495 = vmatprep.subr.mxu0 0.0
    %6496 = vmatpush1.msra.mxu0 0.0
    %6497 = vmatprep.subr.mxu0 0.0
    %6498 = vmatpush1.msra.mxu0 0.0
    %6499 = vmatprep.subr.mxu0 0.0
    %6500 = vmatpush1.msra.mxu0 0.0
    %6501 = vmatprep.subr.mxu0 0.0
    %6502 = vmatpush1.msra.mxu0 0.0
    %6503 = vmatprep.subr.mxu0 0.0
    %6504 = vmatpush1.msra.mxu0 0.0
    %6505 = vmatprep.subr.mxu0 0.0
    %6506 = vmatpush1.msra.mxu0 0.0
    %6507 = vmatprep.subr.mxu0 0.0
    %6508 = vmatpush1.msra.mxu0 0.0
    %6509 = vmatprep.subr.mxu0 0.0
    %6510 = vmatpush1.msra.mxu0 0.0
    %6511 = vmatprep.subr.mxu0 0.0
    %6512 = vmatpush1.msra.mxu0 0.0
    %6513 = vmatprep.subr.mxu0 0.0
    %6514 = vmatpush1.msra.mxu0 0.0
    %6515 = vmatprep.subr.mxu0 0.0
    %6516 = vmatpush1.msra.mxu0 0.0
    %6517 = vmatprep.subr.mxu0 0.0
    %6518 = vmatpush1.msra.mxu0 0.0
    %6519 = vmatprep.subr.mxu0 0.0
    %6520 = vmatpush1.msra.mxu0 0.0
    %6521 = vmatprep.subr.mxu0 0.0
    %6522 = vmatpush1.msra.mxu0 0.0
    %6523 = vmatprep.mubr.f32.mxu0 0.0
    %6524 = vmatmul.mubr.f32.gmra.mrb[0].mxu0 %v6454
    %v6525 = vpop.f32.mrb[0].mxu0
    %v6526 = vadd.f32 0.0, %v6525
    %v6527 = vpop.f32.mrb[0].mxu0
    %6528 = vmatprep.mubr.f32.mxu0 0.0
    %6529 = vmatmul.mubr.f32.gmra.mrb[0].mxu0 %v6457
    %v6530 = vpop.f32.mrb[0].mxu0
    %v6531 = vadd.f32 0.0, %v6530
    %v6532 = vpop.f32.mrb[0].mxu0
    %6533 = vdwg.mxu0
    %v6534 = vld [vmem:[%s3] sm:$0x1]
    %v6535 = vld [vmem:[%s5] sm:$0xff]
    %v6536 = vld [vmem:[%s5 + $0x8] sm:$0xff]
    %v6537 = vld [vmem:[%s5 + $0x10] sm:$0xff]
    %v6538 = vld [vmem:[%s5 + $0x18] sm:$0xff]
    %s6539 = scalar_lea.vmem %s5, 32
    %v6540 = vld [vmem:[%s6539] sm:$0xff]
    %v6541 = vld [vmem:[%s6539 + $0x8] sm:$0xff]
    %v6542 = vld [vmem:[%s6539 + $0x10] sm:$0xff]
    %v6543 = vld [vmem:[%s6539 + $0x18] sm:$0xff]
    %vm6546 = vcmask 1046528
    %v6547 = vrot.slane %v6526, 1
    %v6548 = vrot.slane %v6531, 1
    %v6549 = vsel %vm6546, %v6547, %v6548
    %v6550 = vsel %vm571, %v6549, 0
    %6552 = vmatprep.subr.mxu0 0.0
    %6553 = vmatpush1.msra.mxu0 %v6540
    %6554 = vmatprep.subr.mxu0 0.0
    %6555 = vmatpush1.msra.mxu0 %v6541
    %6556 = vmatprep.subr.mxu0 0.0
    %6557 = vmatpush1.msra.mxu0 %v6542
    %6558 = vmatprep.subr.mxu0 0.0
    %6559 = vmatpush1.msra.mxu0 %v6543
    %6560 = vmatprep.subr.mxu0 0.0
    %6561 = vmatpush1.msra.mxu0 0.0
    %6562 = vmatprep.subr.mxu0 0.0
    %6563 = vmatpush1.msra.mxu0 0.0
    %6564 = vmatprep.subr.mxu0 0.0
    %6565 = vmatpush1.msra.mxu0 0.0
    %6566 = vmatprep.subr.mxu0 0.0
    %6567 = vmatpush1.msra.mxu0 0.0
    %6568 = vmatprep.subr.mxu0 0.0
    %6569 = vmatpush1.msra.mxu0 0.0
    %6570 = vmatprep.subr.mxu0 0.0
    %6571 = vmatpush1.msra.mxu0 0.0
    %6572 = vmatprep.subr.mxu0 0.0
    %6573 = vmatpush1.msra.mxu0 0.0
    %6574 = vmatprep.subr.mxu0 0.0
    %6575 = vmatpush1.msra.mxu0 0.0
    %6576 = vmatprep.subr.mxu0 0.0
    %6577 = vmatpush1.msra.mxu0 0.0
    %6578 = vmatprep.subr.mxu0 0.0
    %6579 = vmatpush1.msra.mxu0 0.0
    %6580 = vmatprep.subr.mxu0 0.0
    %6581 = vmatpush1.msra.mxu0 0.0
    %6582 = vmatprep.subr.mxu0 0.0
    %6583 = vmatpush1.msra.mxu0 0.0
    %6584 = vmatprep.subr.mxu0 0.0
    %6585 = vmatpush1.msra.mxu0 0.0
    %6586 = vmatprep.subr.mxu0 0.0
    %6587 = vmatpush1.msra.mxu0 0.0
    %6588 = vmatprep.subr.mxu0 0.0
    %6589 = vmatpush1.msra.mxu0 0.0
    %6590 = vmatprep.subr.mxu0 0.0
    %6591 = vmatpush1.msra.mxu0 0.0
    %6592 = vmatprep.subr.mxu0 0.0
    %6593 = vmatpush1.msra.mxu0 0.0
    %6594 = vmatprep.subr.mxu0 0.0
    %6595 = vmatpush1.msra.mxu0 0.0
    %6596 = vmatprep.subr.mxu0 0.0
    %6597 = vmatpush1.msra.mxu0 0.0
    %6598 = vmatprep.subr.mxu0 0.0
    %6599 = vmatpush1.msra.mxu0 0.0
    %6600 = vmatprep.subr.mxu0 0.0
    %6601 = vmatpush1.msra.mxu0 0.0
    %6602 = vmatprep.subr.mxu0 0.0
    %6603 = vmatpush1.msra.mxu0 0.0
    %6604 = vmatprep.subr.mxu0 0.0
    %6605 = vmatpush1.msra.mxu0 0.0
    %6606 = vmatprep.subr.mxu0 0.0
    %6607 = vmatpush1.msra.mxu0 0.0
    %6608 = vmatprep.subr.mxu0 0.0
    %6609 = vmatpush1.msra.mxu0 0.0
    %6610 = vmatprep.subr.mxu0 0.0
    %6611 = vmatpush1.msra.mxu0 0.0
    %6612 = vmatprep.subr.mxu0 0.0
    %6613 = vmatpush1.msra.mxu0 0.0
    %6614 = vmatprep.subr.mxu0 0.0
    %6615 = vmatpush1.msra.mxu0 0.0
    %6616 = vmatprep.mubr.f32.mxu0 0.0
    %6617 = vmatmul.mubr.f32.gmra.mrb[0].mxu0 %v6550
    %v6618 = vpop.f32.mrb[0].mxu0
    %v6619 = vadd.f32 0.0, %v6618
    %v6620 = vpop.f32.mrb[0].mxu0
    %6621 = vdwg.mxu0
    %v6622 = vsel %vm571, %v6526, 0
    %6624 = vmatprep.subr.mxu0 0.0
    %6625 = vmatpush1.msra.mxu0 %v6535
    %6626 = vmatprep.subr.mxu0 0.0
    %6627 = vmatpush1.msra.mxu0 %v6536
    %6628 = vmatprep.subr.mxu0 0.0
    %6629 = vmatpush1.msra.mxu0 %v6537
    %6630 = vmatprep.subr.mxu0 0.0
    %6631 = vmatpush1.msra.mxu0 %v6538
    %6632 = vmatprep.subr.mxu0 0.0
    %6633 = vmatpush1.msra.mxu0 0.0
    %6634 = vmatprep.subr.mxu0 0.0
    %6635 = vmatpush1.msra.mxu0 0.0
    %6636 = vmatprep.subr.mxu0 0.0
    %6637 = vmatpush1.msra.mxu0 0.0
    %6638 = vmatprep.subr.mxu0 0.0
    %6639 = vmatpush1.msra.mxu0 0.0
    %6640 = vmatprep.subr.mxu0 0.0
    %6641 = vmatpush1.msra.mxu0 0.0
    %6642 = vmatprep.subr.mxu0 0.0
    %6643 = vmatpush1.msra.mxu0 0.0
    %6644 = vmatprep.subr.mxu0 0.0
    %6645 = vmatpush1.msra.mxu0 0.0
    %6646 = vmatprep.subr.mxu0 0.0
    %6647 = vmatpush1.msra.mxu0 0.0
    %6648 = vmatprep.subr.mxu0 0.0
    %6649 = vmatpush1.msra.mxu0 0.0
    %6650 = vmatprep.subr.mxu0 0.0
    %6651 = vmatpush1.msra.mxu0 0.0
    %6652 = vmatprep.subr.mxu0 0.0
    %6653 = vmatpush1.msra.mxu0 0.0
    %6654 = vmatprep.subr.mxu0 0.0
    %6655 = vmatpush1.msra.mxu0 0.0
    %6656 = vmatprep.subr.mxu0 0.0
    %6657 = vmatpush1.msra.mxu0 0.0
    %6658 = vmatprep.subr.mxu0 0.0
    %6659 = vmatpush1.msra.mxu0 0.0
    %6660 = vmatprep.subr.mxu0 0.0
    %6661 = vmatpush1.msra.mxu0 0.0
    %6662 = vmatprep.subr.mxu0 0.0
    %6663 = vmatpush1.msra.mxu0 0.0
    %6664 = vmatprep.subr.mxu0 0.0
    %6665 = vmatpush1.msra.mxu0 0.0
    %6666 = vmatprep.subr.mxu0 0.0
    %6667 = vmatpush1.msra.mxu0 0.0
    %6668 = vmatprep.subr.mxu0 0.0
    %6669 = vmatpush1.msra.mxu0 0.0
    %6670 = vmatprep.subr.mxu0 0.0
    %6671 = vmatpush1.msra.mxu0 0.0
    %6672 = vmatprep.subr.mxu0 0.0
    %6673 = vmatpush1.msra.mxu0 0.0
    %6674 = vmatprep.subr.mxu0 0.0
    %6675 = vmatpush1.msra.mxu0 0.0
    %6676 = vmatprep.subr.mxu0 0.0
    %6677 = vmatpush1.msra.mxu0 0.0
    %6678 = vmatprep.subr.mxu0 0.0
    %6679 = vmatpush1.msra.mxu0 0.0
    %6680 = vmatprep.subr.mxu0 0.0
    %6681 = vmatpush1.msra.mxu0 0.0
    %6682 = vmatprep.subr.mxu0 0.0
    %6683 = vmatpush1.msra.mxu0 0.0
    %6684 = vmatprep.subr.mxu0 0.0
    %6685 = vmatpush1.msra.mxu0 0.0
    %6686 = vmatprep.subr.mxu0 0.0
    %6687 = vmatpush1.msra.mxu0 0.0
    %6688 = vmatprep.mubr.f32.mxu0 0.0
    %6689 = vmatmul.mubr.f32.gmra.mrb[0].mxu0 %v6622
    %v6690 = vpop.f32.mrb[0].mxu0
    %v6691 = vadd.f32 %v6619, %v6690
    %v6692 = vpop.f32.mrb[0].mxu0
    %6693 = vdwg.mxu0
    %s6694 = scalar_lea.vmem %s5, 64
    %v6695 = vld [vmem:[%s6694] sm:$0xff]
    %v6696 = vld [vmem:[%s6694 + $0x8] sm:$0xff]
    %v6697 = vld [vmem:[%s6694 + $0x10] sm:$0xff]
    %v6698 = vld [vmem:[%s6694 + $0x18] sm:$0xff]
    %vm6699 = vcmask 1045504
    %v6700 = vrot.slane %v6526, 2
    %v6701 = vrot.slane %v6531, 2
    %v6702 = vsel %vm6699, %v6700, %v6701
    %v6703 = vsel %vm571, %v6702, 0
    %6705 = vmatprep.subr.mxu0 0.0
    %6706 = vmatpush1.msra.mxu0 %v6695
    %6707 = vmatprep.subr.mxu0 0.0
    %6708 = vmatpush1.msra.mxu0 %v6696
    %6709 = vmatprep.subr.mxu0 0.0
    %6710 = vmatpush1.msra.mxu0 %v6697
    %6711 = vmatprep.subr.mxu0 0.0
    %6712 = vmatpush1.msra.mxu0 %v6698
    %6713 = vmatprep.subr.mxu0 0.0
    %6714 = vmatpush1.msra.mxu0 0.0
    %6715 = vmatprep.subr.mxu0 0.0
    %6716 = vmatpush1.msra.mxu0 0.0
    %6717 = vmatprep.subr.mxu0 0.0
    %6718 = vmatpush1.msra.mxu0 0.0
    %6719 = vmatprep.subr.mxu0 0.0
    %6720 = vmatpush1.msra.mxu0 0.0
    %6721 = vmatprep.subr.mxu0 0.0
    %6722 = vmatpush1.msra.mxu0 0.0
    %6723 = vmatprep.subr.mxu0 0.0
    %6724 = vmatpush1.msra.mxu0 0.0
    %6725 = vmatprep.subr.mxu0 0.0
    %6726 = vmatpush1.msra.mxu0 0.0
    %6727 = vmatprep.subr.mxu0 0.0
    %6728 = vmatpush1.msra.mxu0 0.0
    %6729 = vmatprep.subr.mxu0 0.0
    %6730 = vmatpush1.msra.mxu0 0.0
    %6731 = vmatprep.subr.mxu0 0.0
    %6732 = vmatpush1.msra.mxu0 0.0
    %6733 = vmatprep.subr.mxu0 0.0
    %6734 = vmatpush1.msra.mxu0 0.0
    %6735 = vmatprep.subr.mxu0 0.0
    %6736 = vmatpush1.msra.mxu0 0.0
    %6737 = vmatprep.subr.mxu0 0.0
    %6738 = vmatpush1.msra.mxu0 0.0
    %6739 = vmatprep.subr.mxu0 0.0
    %6740 = vmatpush1.msra.mxu0 0.0
    %6741 = vmatprep.subr.mxu0 0.0
    %6742 = vmatpush1.msra.mxu0 0.0
    %6743 = vmatprep.subr.mxu0 0.0
    %6744 = vmatpush1.msra.mxu0 0.0
    %6745 = vmatprep.subr.mxu0 0.0
    %6746 = vmatpush1.msra.mxu0 0.0
    %6747 = vmatprep.subr.mxu0 0.0
    %6748 = vmatpush1.msra.mxu0 0.0
    %6749 = vmatprep.subr.mxu0 0.0
    %6750 = vmatpush1.msra.mxu0 0.0
    %6751 = vmatprep.subr.mxu0 0.0
    %6752 = vmatpush1.msra.mxu0 0.0
    %6753 = vmatprep.subr.mxu0 0.0
    %6754 = vmatpush1.msra.mxu0 0.0
    %6755 = vmatprep.subr.mxu0 0.0
    %6756 = vmatpush1.msra.mxu0 0.0
    %6757 = vmatprep.subr.mxu0 0.0
    %6758 = vmatpush1.msra.mxu0 0.0
    %6759 = vmatprep.subr.mxu0 0.0
    %6760 = vmatpush1.msra.mxu0 0.0
    %6761 = vmatprep.subr.mxu0 0.0
    %6762 = vmatpush1.msra.mxu0 0.0
    %6763 = vmatprep.subr.mxu0 0.0
    %6764 = vmatpush1.msra.mxu0 0.0
    %6765 = vmatprep.subr.mxu0 0.0
    %6766 = vmatpush1.msra.mxu0 0.0
    %6767 = vmatprep.subr.mxu0 0.0
    %6768 = vmatpush1.msra.mxu0 0.0
    %6769 = vmatprep.mubr.f32.mxu0 0.0
    %6770 = vmatmul.mubr.f32.gmra.mrb[0].mxu0 %v6703
    %v6771 = vpop.f32.mrb[0].mxu0
    %v6772 = vadd.f32 0.0, %v6771
    %v6773 = vpop.f32.mrb[0].mxu0
    %6774 = vdwg.mxu0
    %v6775 = vadd.f32 %v6691, %v6772
    %s6776 = scalar_lea.vmem %s5, 96
    %v6777 = vld [vmem:[%s6776] sm:$0xff]
    %v6778 = vld [vmem:[%s6776 + $0x8] sm:$0xff]
    %v6779 = vld [vmem:[%s6776 + $0x10] sm:$0xff]
    %v6780 = vld [vmem:[%s6776 + $0x18] sm:$0xff]
    %vm6781 = vcmask 1044480
    %v6782 = vrot.slane %v6526, 3
    %v6783 = vrot.slane %v6531, 3
    %v6784 = vsel %vm6781, %v6782, %v6783
    %v6785 = vsel %vm571, %v6784, 0
    %6787 = vmatprep.subr.mxu0 0.0
    %6788 = vmatpush1.msra.mxu0 %v6777
    %6789 = vmatprep.subr.mxu0 0.0
    %6790 = vmatpush1.msra.mxu0 %v6778
    %6791 = vmatprep.subr.mxu0 0.0
    %6792 = vmatpush1.msra.mxu0 %v6779
    %6793 = vmatprep.subr.mxu0 0.0
    %6794 = vmatpush1.msra.mxu0 %v6780
    %6795 = vmatprep.subr.mxu0 0.0
    %6796 = vmatpush1.msra.mxu0 0.0
    %6797 = vmatprep.subr.mxu0 0.0
    %6798 = vmatpush1.msra.mxu0 0.0
    %6799 = vmatprep.subr.mxu0 0.0
    %6800 = vmatpush1.msra.mxu0 0.0
    %6801 = vmatprep.subr.mxu0 0.0
    %6802 = vmatpush1.msra.mxu0 0.0
    %6803 = vmatprep.subr.mxu0 0.0
    %6804 = vmatpush1.msra.mxu0 0.0
    %6805 = vmatprep.subr.mxu0 0.0
    %6806 = vmatpush1.msra.mxu0 0.0
    %6807 = vmatprep.subr.mxu0 0.0
    %6808 = vmatpush1.msra.mxu0 0.0
    %6809 = vmatprep.subr.mxu0 0.0
    %6810 = vmatpush1.msra.mxu0 0.0
    %6811 = vmatprep.subr.mxu0 0.0
    %6812 = vmatpush1.msra.mxu0 0.0
    %6813 = vmatprep.subr.mxu0 0.0
    %6814 = vmatpush1.msra.mxu0 0.0
    %6815 = vmatprep.subr.mxu0 0.0
    %6816 = vmatpush1.msra.mxu0 0.0
    %6817 = vmatprep.subr.mxu0 0.0
    %6818 = vmatpush1.msra.mxu0 0.0
    %6819 = vmatprep.subr.mxu0 0.0
    %6820 = vmatpush1.msra.mxu0 0.0
    %6821 = vmatprep.subr.mxu0 0.0
    %6822 = vmatpush1.msra.mxu0 0.0
    %6823 = vmatprep.subr.mxu0 0.0
    %6824 = vmatpush1.msra.mxu0 0.0
    %6825 = vmatprep.subr.mxu0 0.0
    %6826 = vmatpush1.msra.mxu0 0.0
    %6827 = vmatprep.subr.mxu0 0.0
    %6828 = vmatpush1.msra.mxu0 0.0
    %6829 = vmatprep.subr.mxu0 0.0
    %6830 = vmatpush1.msra.mxu0 0.0
    %6831 = vmatprep.subr.mxu0 0.0
    %6832 = vmatpush1.msra.mxu0 0.0
    %6833 = vmatprep.subr.mxu0 0.0
    %6834 = vmatpush1.msra.mxu0 0.0
    %6835 = vmatprep.subr.mxu0 0.0
    %6836 = vmatpush1.msra.mxu0 0.0
    %6837 = vmatprep.subr.mxu0 0.0
    %6838 = vmatpush1.msra.mxu0 0.0
    %6839 = vmatprep.subr.mxu0 0.0
    %6840 = vmatpush1.msra.mxu0 0.0
    %6841 = vmatprep.subr.mxu0 0.0
    %6842 = vmatpush1.msra.mxu0 0.0
    %6843 = vmatprep.subr.mxu0 0.0
    %6844 = vmatpush1.msra.mxu0 0.0
    %6845 = vmatprep.subr.mxu0 0.0
    %6846 = vmatpush1.msra.mxu0 0.0
    %6847 = vmatprep.subr.mxu0 0.0
    %6848 = vmatpush1.msra.mxu0 0.0
    %6849 = vmatprep.subr.mxu0 0.0
    %6850 = vmatpush1.msra.mxu0 0.0
    %6851 = vmatprep.mubr.f32.mxu0 0.0
    %6852 = vmatmul.mubr.f32.gmra.mrb[0].mxu0 %v6785
    %v6853 = vpop.f32.mrb[0].mxu0
    %v6854 = vadd.f32 0.0, %v6853
    %v6855 = vpop.f32.mrb[0].mxu0
    %6856 = vdwg.mxu0
    %v6857 = vadd.f32 %v6775, %v6854
    %s6858 = scalar_lea.vmem %s5, 128
    %v6859 = vld [vmem:[%s6858] sm:$0xff]
    %v6860 = vld [vmem:[%s6858 + $0x8] sm:$0xff]
    %v6861 = vld [vmem:[%s6858 + $0x10] sm:$0xff]
    %v6862 = vld [vmem:[%s6858 + $0x18] sm:$0xff]
    %v6863 = vrot.slane %v6526, 4
    %v6864 = vrot.slane %v6531, 4
    %v6865 = vsel %vm984, %v6863, %v6864
    %v6866 = vsel %vm571, %v6865, 0
    %6868 = vmatprep.subr.mxu0 0.0
    %6869 = vmatpush1.msra.mxu0 %v6859
    %6870 = vmatprep.subr.mxu0 0.0
    %6871 = vmatpush1.msra.mxu0 %v6860
    %6872 = vmatprep.subr.mxu0 0.0
    %6873 = vmatpush1.msra.mxu0 %v6861
    %6874 = vmatprep.subr.mxu0 0.0
    %6875 = vmatpush1.msra.mxu0 %v6862
    %6876 = vmatprep.subr.mxu0 0.0
    %6877 = vmatpush1.msra.mxu0 0.0
    %6878 = vmatprep.subr.mxu0 0.0
    %6879 = vmatpush1.msra.mxu0 0.0
    %6880 = vmatprep.subr.mxu0 0.0
    %6881 = vmatpush1.msra.mxu0 0.0
    %6882 = vmatprep.subr.mxu0 0.0
    %6883 = vmatpush1.msra.mxu0 0.0
    %6884 = vmatprep.subr.mxu0 0.0
    %6885 = vmatpush1.msra.mxu0 0.0
    %6886 = vmatprep.subr.mxu0 0.0
    %6887 = vmatpush1.msra.mxu0 0.0
    %6888 = vmatprep.subr.mxu0 0.0
    %6889 = vmatpush1.msra.mxu0 0.0
    %6890 = vmatprep.subr.mxu0 0.0
    %6891 = vmatpush1.msra.mxu0 0.0
    %6892 = vmatprep.subr.mxu0 0.0
    %6893 = vmatpush1.msra.mxu0 0.0
    %6894 = vmatprep.subr.mxu0 0.0
    %6895 = vmatpush1.msra.mxu0 0.0
    %6896 = vmatprep.subr.mxu0 0.0
    %6897 = vmatpush1.msra.mxu0 0.0
    %6898 = vmatprep.subr.mxu0 0.0
    %6899 = vmatpush1.msra.mxu0 0.0
    %6900 = vmatprep.subr.mxu0 0.0
    %6901 = vmatpush1.msra.mxu0 0.0
    %6902 = vmatprep.subr.mxu0 0.0
    %6903 = vmatpush1.msra.mxu0 0.0
    %6904 = vmatprep.subr.mxu0 0.0
    %6905 = vmatpush1.msra.mxu0 0.0
    %6906 = vmatprep.subr.mxu0 0.0
    %6907 = vmatpush1.msra.mxu0 0.0
    %6908 = vmatprep.subr.mxu0 0.0
    %6909 = vmatpush1.msra.mxu0 0.0
    %6910 = vmatprep.subr.mxu0 0.0
    %6911 = vmatpush1.msra.mxu0 0.0
    %6912 = vmatprep.subr.mxu0 0.0
    %6913 = vmatpush1.msra.mxu0 0.0
    %6914 = vmatprep.subr.mxu0 0.0
    %6915 = vmatpush1.msra.mxu0 0.0
    %6916 = vmatprep.subr.mxu0 0.0
    %6917 = vmatpush1.msra.mxu0 0.0
    %6918 = vmatprep.subr.mxu0 0.0
    %6919 = vmatpush1.msra.mxu0 0.0
    %6920 = vmatprep.subr.mxu0 0.0
    %6921 = vmatpush1.msra.mxu0 0.0
    %6922 = vmatprep.subr.mxu0 0.0
    %6923 = vmatpush1.msra.mxu0 0.0
    %6924 = vmatprep.subr.mxu0 0.0
    %6925 = vmatpush1.msra.mxu0 0.0
    %6926 = vmatprep.subr.mxu0 0.0
    %6927 = vmatpush1.msra.mxu0 0.0
    %6928 = vmatprep.subr.mxu0 0.0
    %6929 = vmatpush1.msra.mxu0 0.0
    %6930 = vmatprep.subr.mxu0 0.0
    %6931 = vmatpush1.msra.mxu0 0.0
    %6932 = vmatprep.mubr.f32.mxu0 0.0
    %6933 = vmatmul.mubr.f32.gmra.mrb[0].mxu0 %v6866
    %v6934 = vpop.f32.mrb[0].mxu0
    %v6935 = vadd.f32 0.0, %v6934
    %v6936 = vpop.f32.mrb[0].mxu0
    %6937 = vdwg.mxu0
    %v6938 = vadd.f32 %v6857, %v6935
    %v6940 = vlaneseq
    %v6941 = vshrl.u32 %v6940, 7
    %v6942 = vsub.s32 0, %v6941
    %v6943 = vrot.slane %v6534, %v6942
    %v6945 = vadd.f32 %v6938, %v6943
    %vm6946 = vcmask 130048
    %6947 = vst.msk [vmem:[#allocation45] sm:$0xff] %vm6946, %v6945
    %v6948 = vld [vmem:[%s81] sm:$0xff]
    %v6949 = vld [vmem:[%s81 + $0x8] sm:$0xf]
    %v6951 = vsel %vm2933, %v6948, 0
    %v6954 = vsel %vm2933, %v6949, 0
    %6956 = vmatprep.subr.mxu0 0.0
    %6957 = vmatpush1.msra.mxu0 %v6450
    %6958 = vmatprep.subr.mxu0 0.0
    %6959 = vmatpush1.msra.mxu0 0.0
    %6960 = vmatprep.subr.mxu0 0.0
    %6961 = vmatpush1.msra.mxu0 0.0
    %6962 = vmatprep.subr.mxu0 0.0
    %6963 = vmatpush1.msra.mxu0 0.0
    %6964 = vmatprep.subr.mxu0 0.0
    %6965 = vmatpush1.msra.mxu0 0.0
    %6966 = vmatprep.subr.mxu0 0.0
    %6967 = vmatpush1.msra.mxu0 0.0
    %6968 = vmatprep.subr.mxu0 0.0
    %6969 = vmatpush1.msra.mxu0 0.0
    %6970 = vmatprep.subr.mxu0 0.0
    %6971 = vmatpush1.msra.mxu0 0.0
    %6972 = vmatprep.subr.mxu0 0.0
    %6973 = vmatpush1.msra.mxu0 0.0
    %6974 = vmatprep.subr.mxu0 0.0
    %6975 = vmatpush1.msra.mxu0 0.0
    %6976 = vmatprep.subr.mxu0 0.0
    %6977 = vmatpush1.msra.mxu0 0.0
    %6978 = vmatprep.subr.mxu0 0.0
    %6979 = vmatpush1.msra.mxu0 0.0
    %6980 = vmatprep.subr.mxu0 0.0
    %6981 = vmatpush1.msra.mxu0 0.0
    %6982 = vmatprep.subr.mxu0 0.0
    %6983 = vmatpush1.msra.mxu0 0.0
    %6984 = vmatprep.subr.mxu0 0.0
    %6985 = vmatpush1.msra.mxu0 0.0
    %6986 = vmatprep.subr.mxu0 0.0
    %6987 = vmatpush1.msra.mxu0 0.0
    %6988 = vmatprep.subr.mxu0 0.0
    %6989 = vmatpush1.msra.mxu0 0.0
    %6990 = vmatprep.subr.mxu0 0.0
    %6991 = vmatpush1.msra.mxu0 0.0
    %6992 = vmatprep.subr.mxu0 0.0
    %6993 = vmatpush1.msra.mxu0 0.0
    %6994 = vmatprep.subr.mxu0 0.0
    %6995 = vmatpush1.msra.mxu0 0.0
    %6996 = vmatprep.subr.mxu0 0.0
    %6997 = vmatpush1.msra.mxu0 0.0
    %6998 = vmatprep.subr.mxu0 0.0
    %6999 = vmatpush1.msra.mxu0 0.0
    %7000 = vmatprep.subr.mxu0 0.0
    %7001 = vmatpush1.msra.mxu0 0.0
    %7002 = vmatprep.subr.mxu0 0.0
    %7003 = vmatpush1.msra.mxu0 0.0
    %7004 = vmatprep.subr.mxu0 0.0
    %7005 = vmatpush1.msra.mxu0 0.0
    %7006 = vmatprep.subr.mxu0 0.0
    %7007 = vmatpush1.msra.mxu0 0.0
    %7008 = vmatprep.subr.mxu0 0.0
    %7009 = vmatpush1.msra.mxu0 0.0
    %7010 = vmatprep.subr.mxu0 0.0
    %7011 = vmatpush1.msra.mxu0 0.0
    %7012 = vmatprep.subr.mxu0 0.0
    %7013 = vmatpush1.msra.mxu0 0.0
    %7014 = vmatprep.subr.mxu0 0.0
    %7015 = vmatpush1.msra.mxu0 0.0
    %7016 = vmatprep.subr.mxu0 0.0
    %7017 = vmatpush1.msra.mxu0 0.0
    %7018 = vmatprep.subr.mxu0 0.0
    %7019 = vmatpush1.msra.mxu0 0.0
    %7020 = vmatprep.mubr.f32.mxu0 0.0
    %7021 = vmatmul.mubr.f32.gmra.mrb[0].mxu0 %v6951
    %v7022 = vpop.f32.mrb[0].mxu0
    %v7023 = vadd.f32 0.0, %v7022
    %v7024 = vpop.f32.mrb[0].mxu0
    %7025 = vmatprep.mubr.f32.mxu0 0.0
    %7026 = vmatmul.mubr.f32.gmra.mrb[0].mxu0 %v6954
    %v7027 = vpop.f32.mrb[0].mxu0
    %v7028 = vadd.f32 0.0, %v7027
    %v7029 = vpop.f32.mrb[0].mxu0
    %7030 = vdwg.mxu0
    %v7031 = vld [vmem:[%s3] sm:$0x1]
    %v7032 = vld [vmem:[%s5] sm:$0xff]
    %v7033 = vld [vmem:[%s5 + $0x8] sm:$0xff]
    %v7034 = vld [vmem:[%s5 + $0x10] sm:$0xff]
    %v7035 = vld [vmem:[%s5 + $0x18] sm:$0xff]
    %v7036 = vld [vmem:[%s6539] sm:$0xff]
    %v7037 = vld [vmem:[%s6539 + $0x8] sm:$0xff]
    %v7038 = vld [vmem:[%s6539 + $0x10] sm:$0xff]
    %v7039 = vld [vmem:[%s6539 + $0x18] sm:$0xff]
    %v7042 = vrot.slane %v7023, 1
    %v7043 = vrot.slane %v7028, 1
    %v7044 = vsel %vm6546, %v7042, %v7043
    %v7045 = vsel %vm571, %v7044, 0
    %7047 = vmatprep.subr.mxu0 0.0
    %7048 = vmatpush1.msra.mxu0 %v7036
    %7049 = vmatprep.subr.mxu0 0.0
    %7050 = vmatpush1.msra.mxu0 %v7037
    %7051 = vmatprep.subr.mxu0 0.0
    %7052 = vmatpush1.msra.mxu0 %v7038
    %7053 = vmatprep.subr.mxu0 0.0
    %7054 = vmatpush1.msra.mxu0 %v7039
    %7055 = vmatprep.subr.mxu0 0.0
    %7056 = vmatpush1.msra.mxu0 0.0
    %7057 = vmatprep.subr.mxu0 0.0
    %7058 = vmatpush1.msra.mxu0 0.0
    %7059 = vmatprep.subr.mxu0 0.0
    %7060 = vmatpush1.msra.mxu0 0.0
    %7061 = vmatprep.subr.mxu0 0.0
    %7062 = vmatpush1.msra.mxu0 0.0
    %7063 = vmatprep.subr.mxu0 0.0
    %7064 = vmatpush1.msra.mxu0 0.0
    %7065 = vmatprep.subr.mxu0 0.0
    %7066 = vmatpush1.msra.mxu0 0.0
    %7067 = vmatprep.subr.mxu0 0.0
    %7068 = vmatpush1.msra.mxu0 0.0
    %7069 = vmatprep.subr.mxu0 0.0
    %7070 = vmatpush1.msra.mxu0 0.0
    %7071 = vmatprep.subr.mxu0 0.0
    %7072 = vmatpush1.msra.mxu0 0.0
    %7073 = vmatprep.subr.mxu0 0.0
    %7074 = vmatpush1.msra.mxu0 0.0
    %7075 = vmatprep.subr.mxu0 0.0
    %7076 = vmatpush1.msra.mxu0 0.0
    %7077 = vmatprep.subr.mxu0 0.0
    %7078 = vmatpush1.msra.mxu0 0.0
    %7079 = vmatprep.subr.mxu0 0.0
    %7080 = vmatpush1.msra.mxu0 0.0
    %7081 = vmatprep.subr.mxu0 0.0
    %7082 = vmatpush1.msra.mxu0 0.0
    %7083 = vmatprep.subr.mxu0 0.0
    %7084 = vmatpush1.msra.mxu0 0.0
    %7085 = vmatprep.subr.mxu0 0.0
    %7086 = vmatpush1.msra.mxu0 0.0
    %7087 = vmatprep.subr.mxu0 0.0
    %7088 = vmatpush1.msra.mxu0 0.0
    %7089 = vmatprep.subr.mxu0 0.0
    %7090 = vmatpush1.msra.mxu0 0.0
    %7091 = vmatprep.subr.mxu0 0.0
    %7092 = vmatpush1.msra.mxu0 0.0
    %7093 = vmatprep.subr.mxu0 0.0
    %7094 = vmatpush1.msra.mxu0 0.0
    %7095 = vmatprep.subr.mxu0 0.0
    %7096 = vmatpush1.msra.mxu0 0.0
    %7097 = vmatprep.subr.mxu0 0.0
    %7098 = vmatpush1.msra.mxu0 0.0
    %7099 = vmatprep.subr.mxu0 0.0
    %7100 = vmatpush1.msra.mxu0 0.0
    %7101 = vmatprep.subr.mxu0 0.0
    %7102 = vmatpush1.msra.mxu0 0.0
    %7103 = vmatprep.subr.mxu0 0.0
    %7104 = vmatpush1.msra.mxu0 0.0
    %7105 = vmatprep.subr.mxu0 0.0
    %7106 = vmatpush1.msra.mxu0 0.0
    %7107 = vmatprep.subr.mxu0 0.0
    %7108 = vmatpush1.msra.mxu0 0.0
    %7109 = vmatprep.subr.mxu0 0.0
    %7110 = vmatpush1.msra.mxu0 0.0
    %7111 = vmatprep.mubr.f32.mxu0 0.0
    %7112 = vmatmul.mubr.f32.gmra.mrb[0].mxu0 %v7045
    %v7113 = vpop.f32.mrb[0].mxu0
    %v7114 = vadd.f32 0.0, %v7113
    %v7115 = vpop.f32.mrb[0].mxu0
    %7116 = vdwg.mxu0
    %v7117 = vsel %vm571, %v7023, 0
    %7119 = vmatprep.subr.mxu0 0.0
    %7120 = vmatpush1.msra.mxu0 %v7032
    %7121 = vmatprep.subr.mxu0 0.0
    %7122 = vmatpush1.msra.mxu0 %v7033
    %7123 = vmatprep.subr.mxu0 0.0
    %7124 = vmatpush1.msra.mxu0 %v7034
    %7125 = vmatprep.subr.mxu0 0.0
    %7126 = vmatpush1.msra.mxu0 %v7035
    %7127 = vmatprep.subr.mxu0 0.0
    %7128 = vmatpush1.msra.mxu0 0.0
    %7129 = vmatprep.subr.mxu0 0.0
    %7130 = vmatpush1.msra.mxu0 0.0
    %7131 = vmatprep.subr.mxu0 0.0
    %7132 = vmatpush1.msra.mxu0 0.0
    %7133 = vmatprep.subr.mxu0 0.0
    %7134 = vmatpush1.msra.mxu0 0.0
    %7135 = vmatprep.subr.mxu0 0.0
    %7136 = vmatpush1.msra.mxu0 0.0
    %7137 = vmatprep.subr.mxu0 0.0
    %7138 = vmatpush1.msra.mxu0 0.0
    %7139 = vmatprep.subr.mxu0 0.0
    %7140 = vmatpush1.msra.mxu0 0.0
    %7141 = vmatprep.subr.mxu0 0.0
    %7142 = vmatpush1.msra.mxu0 0.0
    %7143 = vmatprep.subr.mxu0 0.0
    %7144 = vmatpush1.msra.mxu0 0.0
    %7145 = vmatprep.subr.mxu0 0.0
    %7146 = vmatpush1.msra.mxu0 0.0
    %7147 = vmatprep.subr.mxu0 0.0
    %7148 = vmatpush1.msra.mxu0 0.0
    %7149 = vmatprep.subr.mxu0 0.0
    %7150 = vmatpush1.msra.mxu0 0.0
    %7151 = vmatprep.subr.mxu0 0.0
    %7152 = vmatpush1.msra.mxu0 0.0
    %7153 = vmatprep.subr.mxu0 0.0
    %7154 = vmatpush1.msra.mxu0 0.0
    %7155 = vmatprep.subr.mxu0 0.0
    %7156 = vmatpush1.msra.mxu0 0.0
    %7157 = vmatprep.subr.mxu0 0.0
    %7158 = vmatpush1.msra.mxu0 0.0
    %7159 = vmatprep.subr.mxu0 0.0
    %7160 = vmatpush1.msra.mxu0 0.0
    %7161 = vmatprep.subr.mxu0 0.0
    %7162 = vmatpush1.msra.mxu0 0.0
    %7163 = vmatprep.subr.mxu0 0.0
    %7164 = vmatpush1.msra.mxu0 0.0
    %7165 = vmatprep.subr.mxu0 0.0
    %7166 = vmatpush1.msra.mxu0 0.0
    %7167 = vmatprep.subr.mxu0 0.0
    %7168 = vmatpush1.msra.mxu0 0.0
    %7169 = vmatprep.subr.mxu0 0.0
    %7170 = vmatpush1.msra.mxu0 0.0
    %7171 = vmatprep.subr.mxu0 0.0
    %7172 = vmatpush1.msra.mxu0 0.0
    %7173 = vmatprep.subr.mxu0 0.0
    %7174 = vmatpush1.msra.mxu0 0.0
    %7175 = vmatprep.subr.mxu0 0.0
    %7176 = vmatpush1.msra.mxu0 0.0
    %7177 = vmatprep.subr.mxu0 0.0
    %7178 = vmatpush1.msra.mxu0 0.0
    %7179 = vmatprep.subr.mxu0 0.0
    %7180 = vmatpush1.msra.mxu0 0.0
    %7181 = vmatprep.subr.mxu0 0.0
    %7182 = vmatpush1.msra.mxu0 0.0
    %7183 = vmatprep.mubr.f32.mxu0 0.0
    %7184 = vmatmul.mubr.f32.gmra.mrb[0].mxu0 %v7117
    %v7185 = vpop.f32.mrb[0].mxu0
    %v7186 = vadd.f32 %v7114, %v7185
    %v7187 = vpop.f32.mrb[0].mxu0
    %7188 = vdwg.mxu0
    %v7189 = vld [vmem:[%s6694] sm:$0xff]
    %v7190 = vld [vmem:[%s6694 + $0x8] sm:$0xff]
    %v7191 = vld [vmem:[%s6694 + $0x10] sm:$0xff]
    %v7192 = vld [vmem:[%s6694 + $0x18] sm:$0xff]
    %v7193 = vrot.slane %v7023, 2
    %v7194 = vrot.slane %v7028, 2
    %v7195 = vsel %vm6699, %v7193, %v7194
    %v7196 = vsel %vm571, %v7195, 0
    %7198 = vmatprep.subr.mxu0 0.0
    %7199 = vmatpush1.msra.mxu0 %v7189
    %7200 = vmatprep.subr.mxu0 0.0
    %7201 = vmatpush1.msra.mxu0 %v7190
    %7202 = vmatprep.subr.mxu0 0.0
    %7203 = vmatpush1.msra.mxu0 %v7191
    %7204 = vmatprep.subr.mxu0 0.0
    %7205 = vmatpush1.msra.mxu0 %v7192
    %7206 = vmatprep.subr.mxu0 0.0
    %7207 = vmatpush1.msra.mxu0 0.0
    %7208 = vmatprep.subr.mxu0 0.0
    %7209 = vmatpush1.msra.mxu0 0.0
    %7210 = vmatprep.subr.mxu0 0.0
    %7211 = vmatpush1.msra.mxu0 0.0
    %7212 = vmatprep.subr.mxu0 0.0
    %7213 = vmatpush1.msra.mxu0 0.0
    %7214 = vmatprep.subr.mxu0 0.0
    %7215 = vmatpush1.msra.mxu0 0.0
    %7216 = vmatprep.subr.mxu0 0.0
    %7217 = vmatpush1.msra.mxu0 0.0
    %7218 = vmatprep.subr.mxu0 0.0
    %7219 = vmatpush1.msra.mxu0 0.0
    %7220 = vmatprep.subr.mxu0 0.0
    %7221 = vmatpush1.msra.mxu0 0.0
    %7222 = vmatprep.subr.mxu0 0.0
    %7223 = vmatpush1.msra.mxu0 0.0
    %7224 = vmatprep.subr.mxu0 0.0
    %7225 = vmatpush1.msra.mxu0 0.0
    %7226 = vmatprep.subr.mxu0 0.0
    %7227 = vmatpush1.msra.mxu0 0.0
    %7228 = vmatprep.subr.mxu0 0.0
    %7229 = vmatpush1.msra.mxu0 0.0
    %7230 = vmatprep.subr.mxu0 0.0
    %7231 = vmatpush1.msra.mxu0 0.0
    %7232 = vmatprep.subr.mxu0 0.0
    %7233 = vmatpush1.msra.mxu0 0.0
    %7234 = vmatprep.subr.mxu0 0.0
    %7235 = vmatpush1.msra.mxu0 0.0
    %7236 = vmatprep.subr.mxu0 0.0
    %7237 = vmatpush1.msra.mxu0 0.0
    %7238 = vmatprep.subr.mxu0 0.0
    %7239 = vmatpush1.msra.mxu0 0.0
    %7240 = vmatprep.subr.mxu0 0.0
    %7241 = vmatpush1.msra.mxu0 0.0
    %7242 = vmatprep.subr.mxu0 0.0
    %7243 = vmatpush1.msra.mxu0 0.0
    %7244 = vmatprep.subr.mxu0 0.0
    %7245 = vmatpush1.msra.mxu0 0.0
    %7246 = vmatprep.subr.mxu0 0.0
    %7247 = vmatpush1.msra.mxu0 0.0
    %7248 = vmatprep.subr.mxu0 0.0
    %7249 = vmatpush1.msra.mxu0 0.0
    %7250 = vmatprep.subr.mxu0 0.0
    %7251 = vmatpush1.msra.mxu0 0.0
    %7252 = vmatprep.subr.mxu0 0.0
    %7253 = vmatpush1.msra.mxu0 0.0
    %7254 = vmatprep.subr.mxu0 0.0
    %7255 = vmatpush1.msra.mxu0 0.0
    %7256 = vmatprep.subr.mxu0 0.0
    %7257 = vmatpush1.msra.mxu0 0.0
    %7258 = vmatprep.subr.mxu0 0.0
    %7259 = vmatpush1.msra.mxu0 0.0
    %7260 = vmatprep.subr.mxu0 0.0
    %7261 = vmatpush1.msra.mxu0 0.0
    %7262 = vmatprep.mubr.f32.mxu0 0.0
    %7263 = vmatmul.mubr.f32.gmra.mrb[0].mxu0 %v7196
    %v7264 = vpop.f32.mrb[0].mxu0
    %v7265 = vadd.f32 0.0, %v7264
    %v7266 = vpop.f32.mrb[0].mxu0
    %7267 = vdwg.mxu0
    %v7268 = vadd.f32 %v7186, %v7265
    %v7269 = vld [vmem:[%s6776] sm:$0xff]
    %v7270 = vld [vmem:[%s6776 + $0x8] sm:$0xff]
    %v7271 = vld [vmem:[%s6776 + $0x10] sm:$0xff]
    %v7272 = vld [vmem:[%s6776 + $0x18] sm:$0xff]
    %v7273 = vrot.slane %v7023, 3
    %v7274 = vrot.slane %v7028, 3
    %v7275 = vsel %vm6781, %v7273, %v7274
    %v7276 = vsel %vm571, %v7275, 0
    %7278 = vmatprep.subr.mxu0 0.0
    %7279 = vmatpush1.msra.mxu0 %v7269
    %7280 = vmatprep.subr.mxu0 0.0
    %7281 = vmatpush1.msra.mxu0 %v7270
    %7282 = vmatprep.subr.mxu0 0.0
    %7283 = vmatpush1.msra.mxu0 %v7271
    %7284 = vmatprep.subr.mxu0 0.0
    %7285 = vmatpush1.msra.mxu0 %v7272
    %7286 = vmatprep.subr.mxu0 0.0
    %7287 = vmatpush1.msra.mxu0 0.0
    %7288 = vmatprep.subr.mxu0 0.0
    %7289 = vmatpush1.msra.mxu0 0.0
    %7290 = vmatprep.subr.mxu0 0.0
    %7291 = vmatpush1.msra.mxu0 0.0
    %7292 = vmatprep.subr.mxu0 0.0
    %7293 = vmatpush1.msra.mxu0 0.0
    %7294 = vmatprep.subr.mxu0 0.0
    %7295 = vmatpush1.msra.mxu0 0.0
    %7296 = vmatprep.subr.mxu0 0.0
    %7297 = vmatpush1.msra.mxu0 0.0
    %7298 = vmatprep.subr.mxu0 0.0
    %7299 = vmatpush1.msra.mxu0 0.0
    %7300 = vmatprep.subr.mxu0 0.0
    %7301 = vmatpush1.msra.mxu0 0.0
    %7302 = vmatprep.subr.mxu0 0.0
    %7303 = vmatpush1.msra.mxu0 0.0
    %7304 = vmatprep.subr.mxu0 0.0
    %7305 = vmatpush1.msra.mxu0 0.0
    %7306 = vmatprep.subr.mxu0 0.0
    %7307 = vmatpush1.msra.mxu0 0.0
    %7308 = vmatprep.subr.mxu0 0.0
    %7309 = vmatpush1.msra.mxu0 0.0
    %7310 = vmatprep.subr.mxu0 0.0
    %7311 = vmatpush1.msra.mxu0 0.0
    %7312 = vmatprep.subr.mxu0 0.0
    %7313 = vmatpush1.msra.mxu0 0.0
    %7314 = vmatprep.subr.mxu0 0.0
    %7315 = vmatpush1.msra.mxu0 0.0
    %7316 = vmatprep.subr.mxu0 0.0
    %7317 = vmatpush1.msra.mxu0 0.0
    %7318 = vmatprep.subr.mxu0 0.0
    %7319 = vmatpush1.msra.mxu0 0.0
    %7320 = vmatprep.subr.mxu0 0.0
    %7321 = vmatpush1.msra.mxu0 0.0
    %7322 = vmatprep.subr.mxu0 0.0
    %7323 = vmatpush1.msra.mxu0 0.0
    %7324 = vmatprep.subr.mxu0 0.0
    %7325 = vmatpush1.msra.mxu0 0.0
    %7326 = vmatprep.subr.mxu0 0.0
    %7327 = vmatpush1.msra.mxu0 0.0
    %7328 = vmatprep.subr.mxu0 0.0
    %7329 = vmatpush1.msra.mxu0 0.0
    %7330 = vmatprep.subr.mxu0 0.0
    %7331 = vmatpush1.msra.mxu0 0.0
    %7332 = vmatprep.subr.mxu0 0.0
    %7333 = vmatpush1.msra.mxu0 0.0
    %7334 = vmatprep.subr.mxu0 0.0
    %7335 = vmatpush1.msra.mxu0 0.0
    %7336 = vmatprep.subr.mxu0 0.0
    %7337 = vmatpush1.msra.mxu0 0.0
    %7338 = vmatprep.subr.mxu0 0.0
    %7339 = vmatpush1.msra.mxu0 0.0
    %7340 = vmatprep.subr.mxu0 0.0
    %7341 = vmatpush1.msra.mxu0 0.0
    %7342 = vmatprep.mubr.f32.mxu0 0.0
    %7343 = vmatmul.mubr.f32.gmra.mrb[0].mxu0 %v7276
    %v7344 = vpop.f32.mrb[0].mxu0
    %v7345 = vadd.f32 0.0, %v7344
    %v7346 = vpop.f32.mrb[0].mxu0
    %7347 = vdwg.mxu0
    %v7348 = vadd.f32 %v7268, %v7345
    %v7349 = vld [vmem:[%s6858] sm:$0xff]
    %v7350 = vld [vmem:[%s6858 + $0x8] sm:$0xff]
    %v7351 = vld [vmem:[%s6858 + $0x10] sm:$0xff]
    %v7352 = vld [vmem:[%s6858 + $0x18] sm:$0xff]
    %v7353 = vrot.slane %v7023, 4
    %v7354 = vrot.slane %v7028, 4
    %v7355 = vsel %vm984, %v7353, %v7354
    %v7356 = vsel %vm571, %v7355, 0
    %7358 = vmatprep.subr.mxu0 0.0
    %7359 = vmatpush1.msra.mxu0 %v7349
    %7360 = vmatprep.subr.mxu0 0.0
    %7361 = vmatpush1.msra.mxu0 %v7350
    %7362 = vmatprep.subr.mxu0 0.0
    %7363 = vmatpush1.msra.mxu0 %v7351
    %7364 = vmatprep.subr.mxu0 0.0
    %7365 = vmatpush1.msra.mxu0 %v7352
    %7366 = vmatprep.subr.mxu0 0.0
    %7367 = vmatpush1.msra.mxu0 0.0
    %7368 = vmatprep.subr.mxu0 0.0
    %7369 = vmatpush1.msra.mxu0 0.0
    %7370 = vmatprep.subr.mxu0 0.0
    %7371 = vmatpush1.msra.mxu0 0.0
    %7372 = vmatprep.subr.mxu0 0.0
    %7373 = vmatpush1.msra.mxu0 0.0
    %7374 = vmatprep.subr.mxu0 0.0
    %7375 = vmatpush1.msra.mxu0 0.0
    %7376 = vmatprep.subr.mxu0 0.0
    %7377 = vmatpush1.msra.mxu0 0.0
    %7378 = vmatprep.subr.mxu0 0.0
    %7379 = vmatpush1.msra.mxu0 0.0
    %7380 = vmatprep.subr.mxu0 0.0
    %7381 = vmatpush1.msra.mxu0 0.0
    %7382 = vmatprep.subr.mxu0 0.0
    %7383 = vmatpush1.msra.mxu0 0.0
    %7384 = vmatprep.subr.mxu0 0.0
    %7385 = vmatpush1.msra.mxu0 0.0
    %7386 = vmatprep.subr.mxu0 0.0
    %7387 = vmatpush1.msra.mxu0 0.0
    %7388 = vmatprep.subr.mxu0 0.0
    %7389 = vmatpush1.msra.mxu0 0.0
    %7390 = vmatprep.subr.mxu0 0.0
    %7391 = vmatpush1.msra.mxu0 0.0
    %7392 = vmatprep.subr.mxu0 0.0
    %7393 = vmatpush1.msra.mxu0 0.0
    %7394 = vmatprep.subr.mxu0 0.0
    %7395 = vmatpush1.msra.mxu0 0.0
    %7396 = vmatprep.subr.mxu0 0.0
    %7397 = vmatpush1.msra.mxu0 0.0
    %7398 = vmatprep.subr.mxu0 0.0
    %7399 = vmatpush1.msra.mxu0 0.0
    %7400 = vmatprep.subr.mxu0 0.0
    %7401 = vmatpush1.msra.mxu0 0.0
    %7402 = vmatprep.subr.mxu0 0.0
    %7403 = vmatpush1.msra.mxu0 0.0
    %7404 = vmatprep.subr.mxu0 0.0
    %7405 = vmatpush1.msra.mxu0 0.0
    %7406 = vmatprep.subr.mxu0 0.0
    %7407 = vmatpush1.msra.mxu0 0.0
    %7408 = vmatprep.subr.mxu0 0.0
    %7409 = vmatpush1.msra.mxu0 0.0
    %7410 = vmatprep.subr.mxu0 0.0
    %7411 = vmatpush1.msra.mxu0 0.0
    %7412 = vmatprep.subr.mxu0 0.0
    %7413 = vmatpush1.msra.mxu0 0.0
    %7414 = vmatprep.subr.mxu0 0.0
    %7415 = vmatpush1.msra.mxu0 0.0
    %7416 = vmatprep.subr.mxu0 0.0
    %7417 = vmatpush1.msra.mxu0 0.0
    %7418 = vmatprep.subr.mxu0 0.0
    %7419 = vmatpush1.msra.mxu0 0.0
    %7420 = vmatprep.subr.mxu0 0.0
    %7421 = vmatpush1.msra.mxu0 0.0
    %7422 = vmatprep.mubr.f32.mxu0 0.0
    %7423 = vmatmul.mubr.f32.gmra.mrb[0].mxu0 %v7356
    %v7424 = vpop.f32.mrb[0].mxu0
    %v7425 = vadd.f32 0.0, %v7424
    %v7426 = vpop.f32.mrb[0].mxu0
    %7427 = vdwg.mxu0
    %v7428 = vadd.f32 %v7348, %v7425
    %v7430 = vlaneseq
    %v7431 = vshrl.u32 %v7430, 7
    %v7432 = vsub.s32 0, %v7431
    %v7433 = vrot.slane %v7031, %v7432
    %v7435 = vadd.f32 %v7428, %v7433
    %s7436 = scalar_lea.vmem [#allocation45], 8
    %7437 = vst.msk [vmem:[%s7436] sm:$0xff] %vm6946, %v7435
    // Predicated region
    $region274: #{transformer_decoder_forward.1} parent=1 // pred_check
      _
    $region275: #{transformer_decoder_forward.1} parent=1 // pred_check_branch
      %7439 = sbr.rel (0) target = $region277
    $region276: #{transformer_decoder_forward.1} parent=1 // pred_region
      %s7441 = ssub.s32 256, 256
      %7442 = vsyncadd [#allocation6], %s7441
      %s7443 = sshll.u32 [#allocation45], 4
      %s7444 = int_to_ptr.vmem [resolvable:$true] %s7443
      %7449 = dma.vmem_to_hbm [thread:$0]  %s7444, 256, %s85, [#allocation6], 128, 128, 8
    $region277: #{transformer_decoder_forward.1} parent=1 // pred_fallthru
      _
    // Predicated region
    $region278: #{transformer_decoder_forward.1} parent=1 // pred_check
      _
    $region279: #{transformer_decoder_forward.1} parent=1 // pred_check_branch
      %7451 = sbr.rel (0) target = $region281
    $region280: #{transformer_decoder_forward.1} parent=1 // pred_region
      %7452 = dma.done [#allocation6], 256
    $region281: #{transformer_decoder_forward.1} parent=1 // pred_fallthru
      _
    %7453 = vsyncpa [#allocation5], 1
    %7454 = vsyncpa [#allocation8], 1
    %7455 = vsyncpa [#allocation11], 1
    %7456 = vsyncpa [#allocation14], 1
    %7457 = vsyncpa [#allocation17], 1
    %7458 = vsyncpa [#allocation20], 1
    %7459 = vsyncpa [#allocation23], 1
    %7460 = vsyncpa [#allocation26], 1
    %7461 = vsyncpa [#allocation29], 1
    %7462 = vsyncpa [#allocation32], 1
    %7463 = vsyncpa [#allocation35], 1
    %7464 = vsyncpa [#allocation38], 1
    %7465 = vsyncpa [#allocation41], 1
    %7466 = vsyncpa [#allocation44], 1
    %7467 = vsyncpa [#allocation6], 1

</llo_original>
